<compile_context>
chip_gen: v7x
topology: tpu7x:2x2x1
jax: 0.10.0
libtpu: 0.0.40
codegen_flags: <defaults>
</compile_context>

<pallas_src>
import jax
import jax.numpy as jnp
import numpy as np
from jax.experimental import pallas as pl
from jax.experimental.pallas import tpu as pltpu

# Hyperparameters implied by the module's forward: x.view(-1, 32, 32*3)
IN_DIM = 32 * 3     # 96
SEQ = 32
HIDDEN = 32
N_LAYER = 2
N_CLASS = 10
SUBLANES = 8        # f32 sublane count — batch padding granularity


def lstm_kernel(x_ref, wih0_ref, b0_ref, wpack_ref, b1_ref, wlin_ref, blin_ref,
                out_ref, xproj_ref, hcat_ref):
    # x_ref     : (T*Bp, D)    rows grouped by timestep (row = t*Bp + b), Bp % 8 == 0
    # wih0_ref  : (D, 4H)      layer-0 input weights (transposed)
    # b0_ref    : (1, 4H)      layer-0 combined bias
    # wpack_ref : (2H, 8H)     packed wavefront weights:
    #                            cols 0:4H  = [whh0_t ; zeros(H,4H)]
    #                            cols 4H:8H = [wih1_t ; whh1_t]
    # b1_ref    : (1, 4H)      layer-1 combined bias
    # wlin_ref  : (H, C)       final linear weights (transposed)
    # blin_ref  : (1, C)
    # xproj_ref : (T*Bp, 4H)   scratch: precomputed layer-0 input projection (+b0)
    # hcat_ref  : (Bp, 2H)     scratch: persistent [h0 | h1] matmul operand
    Bp = hcat_ref.shape[0]
    H = HIDDEN
    G = 4 * H

    # ---- one big MXU matmul: layer-0 input projection for all timesteps ----
    xproj_ref[...] = (
        jnp.dot(x_ref[...], wih0_ref[...], preferred_element_type=jnp.float32)
        + b0_ref[...])

    # ---- hoisted loads / broadcasts (once, not per timestep) ----
    wpack = wpack_ref[...]                           # (2H, 8H)
    b1 = jnp.broadcast_to(b1_ref[...], (Bp, G))      # (Bp, 4H)

    def cell(gates, c):
        # full-width sigmoid (one EUP push on a (Bp,128) tile), narrow tanh on g
        s = jax.nn.sigmoid(gates)
        gg = jnp.tanh(gates[:, 2 * H:3 * H])
        c_new = s[:, H:2 * H] * c + s[:, 0:H] * gg
        h_new = s[:, 3 * H:4 * H] * jnp.tanh(c_new)
        return h_new, c_new

    c0 = jnp.zeros((Bp, H), jnp.float32)
    c1 = jnp.zeros((Bp, H), jnp.float32)
    hcat_ref[...] = jnp.zeros_like(hcat_ref)         # [h0 | h1] = 0

    # ---- prologue: t=0, layer-0 only (h0(-1)=0 => gates = xproj(0)) ----
    h0, c0 = cell(xproj_ref[pl.ds(0, Bp), :], c0)
    hcat_ref[:, 0:H] = h0                            # hcat = [h0(0) | h1(-1)=0]

    # ---- wavefront macro-steps: one fused MXU push per step ----
    # step s: layer-1 at t=s-1 and layer-0 at t=s, both from hcat = [h0(s-1)|h1(s-2)]
    for s in range(1, SEQ):
        packed = jnp.dot(hcat_ref[...], wpack,
                         preferred_element_type=jnp.float32)      # (Bp, 8H)
        # layer-1, t = s-1
        h1, c1 = cell(packed[:, G:2 * G] + b1, c1)
        # layer-0, t = s   (static, sublane-aligned xproj slice: s*Bp % 8 == 0)
        h0, c0 = cell(packed[:, 0:G] + xproj_ref[pl.ds(s * Bp, Bp), :], c0)
        hcat_ref[:, 0:H] = h0
        hcat_ref[:, H:2 * H] = h1

    # ---- epilogue: layer-1 at t = SEQ-1 ----
    packed = jnp.dot(hcat_ref[...], wpack, preferred_element_type=jnp.float32)
    h1, c1 = cell(packed[:, G:2 * G] + b1, c1)

    # ---- final linear on last-timestep top-layer hidden state ----
    out_ref[...] = (jnp.dot(h1, wlin_ref[...], preferred_element_type=jnp.float32)
                    + blin_ref[...])


def init_params(key):
    k = 1.0 / np.sqrt(HIDDEN)
    keys = jax.random.split(key, 12)

    def u(kk, shape):
        return jax.random.uniform(kk, shape, jnp.float32, minval=-k, maxval=k)

    # PyTorch shapes: weight_ih_l0 (4H, IN_DIM), weight_hh_l* (4H, H), biases (4H,)
    w_ih0 = u(keys[0], (4 * HIDDEN, IN_DIM))
    w_hh0 = u(keys[1], (4 * HIDDEN, HIDDEN))
    b_ih0 = u(keys[2], (4 * HIDDEN,))
    b_hh0 = u(keys[3], (4 * HIDDEN,))
    w_ih1 = u(keys[4], (4 * HIDDEN, HIDDEN))
    w_hh1 = u(keys[5], (4 * HIDDEN, HIDDEN))
    b_ih1 = u(keys[6], (4 * HIDDEN,))
    b_hh1 = u(keys[7], (4 * HIDDEN,))
    w_lin = u(keys[8], (N_CLASS, HIDDEN))
    b_lin = u(keys[9], (N_CLASS,))

    # packed wavefront weight (2H, 8H):
    #   cols 0:4H  -> layer-0 recurrent term (rows H:2H zero)
    #   cols 4H:8H -> layer-1 fused input+recurrent term
    wpack = jnp.concatenate(
        [jnp.concatenate([w_hh0.T, jnp.zeros((HIDDEN, 4 * HIDDEN), jnp.float32)],
                         axis=0),
         jnp.concatenate([w_ih1.T, w_hh1.T], axis=0)],
        axis=1)

    return {
        # pre-transposed for (B, in) @ (in, out); biases combined & 2-D
        "wih0_t": w_ih0.T, "whh0_t": w_hh0.T, "b0": (b_ih0 + b_hh0)[None, :],
        "wih1_t": w_ih1.T, "whh1_t": w_hh1.T, "b1": (b_ih1 + b_hh1)[None, :],
        "wpack": wpack,
        "wlin_t": w_lin.T, "blin": b_lin[None, :],
    }


def lstmnet_forward(x, params):
    # forward semantics of the PyTorch module: x.view(-1, 32, 32*3)
    x = x.reshape(-1, SEQ, IN_DIM).astype(jnp.float32)
    B = x.shape[0]
    # pad batch to the f32 sublane count so every per-step tile is an unmasked
    # (8,128) vreg and every xproj slice is sublane-aligned (rows independent)
    Bp = ((B + SUBLANES - 1) // SUBLANES) * SUBLANES
    if Bp != B:
        x = jnp.pad(x, ((0, Bp - B), (0, 0), (0, 0)))
    # time-major then flatten to (T*Bp, D): row index = t*Bp + b
    x_2d = jnp.transpose(x, (1, 0, 2)).reshape(SEQ * Bp, IN_DIM)

    vmem = pl.BlockSpec(memory_space=pltpu.MemorySpace.VMEM)
    out = pl.pallas_call(
        lstm_kernel,
        out_shape=jax.ShapeDtypeStruct((Bp, N_CLASS), jnp.float32),
        in_specs=[vmem] * 7,
        out_specs=vmem,
        scratch_shapes=[pltpu.VMEM((SEQ * Bp, 4 * HIDDEN), jnp.float32),
                        pltpu.VMEM((Bp, 2 * HIDDEN), jnp.float32)],
    )(x_2d,
      params["wih0_t"], params["b0"],
      params["wpack"], params["b1"],
      params["wlin_t"], params["blin"])
    return out[:B]


def lstmnet_ref(x, params):
    # Pure-JAX reference with PyTorch nn.LSTM math (independent of the fusion).
    x = x.reshape(-1, SEQ, IN_DIM).astype(jnp.float32)
    B, H = x.shape[0], HIDDEN

    def cell(x_t, h, c, wih_t, whh_t, b):
        gates = x_t @ wih_t + h @ whh_t + b
        i = jax.nn.sigmoid(gates[:, 0:H])
        f = jax.nn.sigmoid(gates[:, H:2 * H])
        g = jnp.tanh(gates[:, 2 * H:3 * H])
        o = jax.nn.sigmoid(gates[:, 3 * H:4 * H])
        c = f * c + i * g
        return o * jnp.tanh(c), c

    h0 = c0 = h1 = c1 = jnp.zeros((B, H), jnp.float32)
    for t in range(SEQ):
        h0, c0 = cell(x[:, t, :], h0, c0,
                      params["wih0_t"], params["whh0_t"], params["b0"])
        h1, c1 = cell(h0, h1, c1,
                      params["wih1_t"], params["whh1_t"], params["b1"])
    return h1 @ params["wlin_t"] + params["blin"]


if __name__ == "__main__":
    key = jax.random.PRNGKey(0)
    kx, kp = jax.random.split(key)
    # CIFAR-like input, matches x.view(-1, 32, 32*3): (2, 3, 32, 32) -> (2, 32, 96)
    x = jax.random.normal(kx, (2, 3, 32, 32), jnp.float32)
    params = init_params(kp)

    out = lstmnet_forward(x, params)
    out = jax.block_until_ready(out)

    ref = lstmnet_ref(x, params)
    np.testing.assert_allclose(np.asarray(out), np.asarray(ref),
                               rtol=1e-4, atol=1e-4)
    assert out.shape == (2, N_CLASS) and out.dtype == jnp.float32
    print("KERNEL_OK")
</pallas_src>

<mosaic_0001>
module attributes {stable_mosaic.version = 11 : i64} {
  func.func @lstm_kernel(%arg0: memref<256x96xf32, #tpu.memory_space<vmem>>, %arg1: memref<96x128xf32, #tpu.memory_space<vmem>>, %arg2: memref<1x128xf32, #tpu.memory_space<vmem>>, %arg3: memref<64x256xf32, #tpu.memory_space<vmem>>, %arg4: memref<1x128xf32, #tpu.memory_space<vmem>>, %arg5: memref<32x10xf32, #tpu.memory_space<vmem>>, %arg6: memref<1x10xf32, #tpu.memory_space<vmem>>, %arg7: memref<8x10xf32, #tpu.memory_space<vmem>>, %arg8: memref<256x128xf32, #tpu.memory_space<vmem>>, %arg9: memref<8x64xf32, #tpu.memory_space<vmem>>) attributes {dimension_semantics = [], scalar_prefetch = 0 : i64, scratch_operands = 2 : i64, tpu.core_type = #tpu.core_type<tc>} {
    %c0 = arith.constant 0 : index
    %c0_0 = arith.constant 0 : index
    %0 = vector.load %arg0[%c0, %c0_0] : memref<256x96xf32, #tpu.memory_space<vmem>>, vector<256x96xf32>
    %c0_1 = arith.constant 0 : index
    %c0_2 = arith.constant 0 : index
    %1 = vector.load %arg1[%c0_1, %c0_2] : memref<96x128xf32, #tpu.memory_space<vmem>>, vector<96x128xf32>
    %cst = arith.constant dense<0.000000e+00> : vector<256x128xf32>
    %2 = tpu.matmul %0, %1, %cst {dimension_numbers = #tpu.dot_dimension_numbers<[1], [0], [0], [1], [0, 0, 1, 1], [], []>} : vector<256x96xf32>, vector<96x128xf32>, vector<256x128xf32> -> vector<256x128xf32>
    %c0_3 = arith.constant 0 : index
    %c0_4 = arith.constant 0 : index
    %3 = vector.load %arg2[%c0_3, %c0_4] : memref<1x128xf32, #tpu.memory_space<vmem>>, vector<1x128xf32>
    %4 = vector.broadcast %3 : vector<1x128xf32> to vector<256x128xf32>
    %5 = arith.addf %2, %4 : vector<256x128xf32>
    %c0_5 = arith.constant 0 : index
    %c0_6 = arith.constant 0 : index
    %6 = vector.load %arg8[%c0_5, %c0_6] : memref<256x128xf32, #tpu.memory_space<vmem>>, vector<256x128xf32>
    tpu.vector_store %arg8[%c0_5, %c0_6], %5 {strides = array<i32>} : memref<256x128xf32, #tpu.memory_space<vmem>>, vector<256x128xf32>,
    %c0_7 = arith.constant 0 : index
    %c0_8 = arith.constant 0 : index
    %7 = vector.load %arg3[%c0_7, %c0_8] : memref<64x256xf32, #tpu.memory_space<vmem>>, vector<64x256xf32>
    %c0_9 = arith.constant 0 : index
    %c0_10 = arith.constant 0 : index
    %8 = vector.load %arg4[%c0_9, %c0_10] : memref<1x128xf32, #tpu.memory_space<vmem>>, vector<1x128xf32>
    %9 = vector.shape_cast %8 : vector<1x128xf32> to vector<1x128xf32>
    %10 = vector.broadcast %9 : vector<1x128xf32> to vector<8x128xf32>
    %cst_11 = arith.constant 0.000000e+00 : f32
    %11 = vector.broadcast %cst_11 : f32 to vector<8x32xf32>
    %cst_12 = arith.constant 0.000000e+00 : f32
    %12 = vector.broadcast %cst_12 : f32 to vector<8x32xf32>
    %cst_13 = arith.constant 0.000000e+00 : f32
    %13 = vector.broadcast %cst_13 : f32 to vector<8x64xf32>
    %c0_14 = arith.constant 0 : index
    %c0_15 = arith.constant 0 : index
    %14 = vector.load %arg9[%c0_14, %c0_15] : memref<8x64xf32, #tpu.memory_space<vmem>>, vector<8x64xf32>
    tpu.vector_store %arg9[%c0_14, %c0_15], %13 {strides = array<i32>} : memref<8x64xf32, #tpu.memory_space<vmem>>, vector<8x64xf32>,
    %c0_16 = arith.constant 0 : index
    %c0_17 = arith.constant 0 : index
    %15 = vector.load %arg8[%c0_16, %c0_17] : memref<256x128xf32, #tpu.memory_space<vmem>>, vector<8x128xf32>
    %16 = arith.negf %15 : vector<8x128xf32>
    %17 = math.exp %16 : vector<8x128xf32>
    %cst_18 = arith.constant 1.000000e+00 : f32
    %18 = vector.broadcast %cst_18 : f32 to vector<8x128xf32>
    %19 = arith.addf %18, %17 : vector<8x128xf32>
    %20 = arith.divf %18, %19 : vector<8x128xf32>
    %21 = vector.extract_strided_slice %15 {offsets = [0, 64], sizes = [8, 32], strides = [1, 1]} : vector<8x128xf32> to vector<8x32xf32>
    %22 = math.tanh %21 : vector<8x32xf32>
    %23 = vector.extract_strided_slice %20 {offsets = [0, 32], sizes = [8, 32], strides = [1, 1]} : vector<8x128xf32> to vector<8x32xf32>
    %24 = arith.mulf %23, %11 : vector<8x32xf32>
    %25 = vector.extract_strided_slice %20 {offsets = [0, 0], sizes = [8, 32], strides = [1, 1]} : vector<8x128xf32> to vector<8x32xf32>
    %26 = arith.mulf %25, %22 : vector<8x32xf32>
    %27 = arith.addf %24, %26 : vector<8x32xf32>
    %28 = vector.extract_strided_slice %20 {offsets = [0, 96], sizes = [8, 32], strides = [1, 1]} : vector<8x128xf32> to vector<8x32xf32>
    %29 = math.tanh %27 : vector<8x32xf32>
    %30 = arith.mulf %28, %29 : vector<8x32xf32>
    %c0_19 = arith.constant 0 : index
    %c0_20 = arith.constant 0 : index
    %31 = vector.load %arg9[%c0_19, %c0_20] : memref<8x64xf32, #tpu.memory_space<vmem>>, vector<8x32xf32>
    tpu.vector_store %arg9[%c0_19, %c0_20], %30 {strides = array<i32>} : memref<8x64xf32, #tpu.memory_space<vmem>>, vector<8x32xf32>,
    %c0_21 = arith.constant 0 : index
    %c0_22 = arith.constant 0 : index
    %32 = vector.load %arg9[%c0_21, %c0_22] : memref<8x64xf32, #tpu.memory_space<vmem>>, vector<8x64xf32>
    %cst_23 = arith.constant dense<0.000000e+00> : vector<8x256xf32>
    %33 = tpu.matmul %32, %7, %cst_23 {dimension_numbers = #tpu.dot_dimension_numbers<[1], [0], [0], [1], [0, 0, 1, 1], [], []>} : vector<8x64xf32>, vector<64x256xf32>, vector<8x256xf32> -> vector<8x256xf32>
    %34 = vector.extract_strided_slice %33 {offsets = [0, 128], sizes = [8, 128], strides = [1, 1]} : vector<8x256xf32> to vector<8x128xf32>
    %35 = arith.addf %34, %10 : vector<8x128xf32>
    %36 = arith.negf %35 : vector<8x128xf32>
    %37 = math.exp %36 : vector<8x128xf32>
    %cst_24 = arith.constant 1.000000e+00 : f32
    %38 = vector.broadcast %cst_24 : f32 to vector<8x128xf32>
    %39 = arith.addf %38, %37 : vector<8x128xf32>
    %40 = arith.divf %38, %39 : vector<8x128xf32>
    %41 = vector.extract_strided_slice %35 {offsets = [0, 64], sizes = [8, 32], strides = [1, 1]} : vector<8x128xf32> to vector<8x32xf32>
    %42 = math.tanh %41 : vector<8x32xf32>
    %43 = vector.extract_strided_slice %40 {offsets = [0, 32], sizes = [8, 32], strides = [1, 1]} : vector<8x128xf32> to vector<8x32xf32>
    %44 = arith.mulf %43, %12 : vector<8x32xf32>
    %45 = vector.extract_strided_slice %40 {offsets = [0, 0], sizes = [8, 32], strides = [1, 1]} : vector<8x128xf32> to vector<8x32xf32>
    %46 = arith.mulf %45, %42 : vector<8x32xf32>
    %47 = arith.addf %44, %46 : vector<8x32xf32>
    %48 = vector.extract_strided_slice %40 {offsets = [0, 96], sizes = [8, 32], strides = [1, 1]} : vector<8x128xf32> to vector<8x32xf32>
    %49 = math.tanh %47 : vector<8x32xf32>
    %50 = arith.mulf %48, %49 : vector<8x32xf32>
    %51 = vector.extract_strided_slice %33 {offsets = [0, 0], sizes = [8, 128], strides = [1, 1]} : vector<8x256xf32> to vector<8x128xf32>
    %c8 = arith.constant 8 : index
    %c0_25 = arith.constant 0 : index
    %52 = vector.load %arg8[%c8, %c0_25] : memref<256x128xf32, #tpu.memory_space<vmem>>, vector<8x128xf32>
    %53 = arith.addf %51, %52 : vector<8x128xf32>
    %54 = arith.negf %53 : vector<8x128xf32>
    %55 = math.exp %54 : vector<8x128xf32>
    %cst_26 = arith.constant 1.000000e+00 : f32
    %56 = vector.broadcast %cst_26 : f32 to vector<8x128xf32>
    %57 = arith.addf %56, %55 : vector<8x128xf32>
    %58 = arith.divf %56, %57 : vector<8x128xf32>
    %59 = vector.extract_strided_slice %53 {offsets = [0, 64], sizes = [8, 32], strides = [1, 1]} : vector<8x128xf32> to vector<8x32xf32>
    %60 = math.tanh %59 : vector<8x32xf32>
    %61 = vector.extract_strided_slice %58 {offsets = [0, 32], sizes = [8, 32], strides = [1, 1]} : vector<8x128xf32> to vector<8x32xf32>
    %62 = arith.mulf %61, %27 : vector<8x32xf32>
    %63 = vector.extract_strided_slice %58 {offsets = [0, 0], sizes = [8, 32], strides = [1, 1]} : vector<8x128xf32> to vector<8x32xf32>
    %64 = arith.mulf %63, %60 : vector<8x32xf32>
    %65 = arith.addf %62, %64 : vector<8x32xf32>
    %66 = vector.extract_strided_slice %58 {offsets = [0, 96], sizes = [8, 32], strides = [1, 1]} : vector<8x128xf32> to vector<8x32xf32>
    %67 = math.tanh %65 : vector<8x32xf32>
    %68 = arith.mulf %66, %67 : vector<8x32xf32>
    %c0_27 = arith.constant 0 : index
    %c0_28 = arith.constant 0 : index
    %69 = vector.load %arg9[%c0_27, %c0_28] : memref<8x64xf32, #tpu.memory_space<vmem>>, vector<8x32xf32>
    tpu.vector_store %arg9[%c0_27, %c0_28], %68 {strides = array<i32>} : memref<8x64xf32, #tpu.memory_space<vmem>>, vector<8x32xf32>,
    %c0_29 = arith.constant 0 : index
    %c32 = arith.constant 32 : index
    %70 = vector.load %arg9[%c0_29, %c32] : memref<8x64xf32, #tpu.memory_space<vmem>>, vector<8x32xf32>
    tpu.vector_store %arg9[%c0_29, %c32], %50 {strides = array<i32>} : memref<8x64xf32, #tpu.memory_space<vmem>>, vector<8x32xf32>,
    %c0_30 = arith.constant 0 : index
    %c0_31 = arith.constant 0 : index
    %71 = vector.load %arg9[%c0_30, %c0_31] : memref<8x64xf32, #tpu.memory_space<vmem>>, vector<8x64xf32>
    %cst_32 = arith.constant dense<0.000000e+00> : vector<8x256xf32>
    %72 = tpu.matmul %71, %7, %cst_32 {dimension_numbers = #tpu.dot_dimension_numbers<[1], [0], [0], [1], [0, 0, 1, 1], [], []>} : vector<8x64xf32>, vector<64x256xf32>, vector<8x256xf32> -> vector<8x256xf32>
    %73 = vector.extract_strided_slice %72 {offsets = [0, 128], sizes = [8, 128], strides = [1, 1]} : vector<8x256xf32> to vector<8x128xf32>
    %74 = arith.addf %73, %10 : vector<8x128xf32>
    %75 = arith.negf %74 : vector<8x128xf32>
    %76 = math.exp %75 : vector<8x128xf32>
    %cst_33 = arith.constant 1.000000e+00 : f32
    %77 = vector.broadcast %cst_33 : f32 to vector<8x128xf32>
    %78 = arith.addf %77, %76 : vector<8x128xf32>
    %79 = arith.divf %77, %78 : vector<8x128xf32>
    %80 = vector.extract_strided_slice %74 {offsets = [0, 64], sizes = [8, 32], strides = [1, 1]} : vector<8x128xf32> to vector<8x32xf32>
    %81 = math.tanh %80 : vector<8x32xf32>
    %82 = vector.extract_strided_slice %79 {offsets = [0, 32], sizes = [8, 32], strides = [1, 1]} : vector<8x128xf32> to vector<8x32xf32>
    %83 = arith.mulf %82, %47 : vector<8x32xf32>
    %84 = vector.extract_strided_slice %79 {offsets = [0, 0], sizes = [8, 32], strides = [1, 1]} : vector<8x128xf32> to vector<8x32xf32>
    %85 = arith.mulf %84, %81 : vector<8x32xf32>
    %86 = arith.addf %83, %85 : vector<8x32xf32>
    %87 = vector.extract_strided_slice %79 {offsets = [0, 96], sizes = [8, 32], strides = [1, 1]} : vector<8x128xf32> to vector<8x32xf32>
    %88 = math.tanh %86 : vector<8x32xf32>
    %89 = arith.mulf %87, %88 : vector<8x32xf32>
    %90 = vector.extract_strided_slice %72 {offsets = [0, 0], sizes = [8, 128], strides = [1, 1]} : vector<8x256xf32> to vector<8x128xf32>
    %c16 = arith.constant 16 : index
    %c0_34 = arith.constant 0 : index
    %91 = vector.load %arg8[%c16, %c0_34] : memref<256x128xf32, #tpu.memory_space<vmem>>, vector<8x128xf32>
    %92 = arith.addf %90, %91 : vector<8x128xf32>
    %93 = arith.negf %92 : vector<8x128xf32>
    %94 = math.exp %93 : vector<8x128xf32>
    %cst_35 = arith.constant 1.000000e+00 : f32
    %95 = vector.broadcast %cst_35 : f32 to vector<8x128xf32>
    %96 = arith.addf %95, %94 : vector<8x128xf32>
    %97 = arith.divf %95, %96 : vector<8x128xf32>
    %98 = vector.extract_strided_slice %92 {offsets = [0, 64], sizes = [8, 32], strides = [1, 1]} : vector<8x128xf32> to vector<8x32xf32>
    %99 = math.tanh %98 : vector<8x32xf32>
    %100 = vector.extract_strided_slice %97 {offsets = [0, 32], sizes = [8, 32], strides = [1, 1]} : vector<8x128xf32> to vector<8x32xf32>
    %101 = arith.mulf %100, %65 : vector<8x32xf32>
    %102 = vector.extract_strided_slice %97 {offsets = [0, 0], sizes = [8, 32], strides = [1, 1]} : vector<8x128xf32> to vector<8x32xf32>
    %103 = arith.mulf %102, %99 : vector<8x32xf32>
    %104 = arith.addf %101, %103 : vector<8x32xf32>
    %105 = vector.extract_strided_slice %97 {offsets = [0, 96], sizes = [8, 32], strides = [1, 1]} : vector<8x128xf32> to vector<8x32xf32>
    %106 = math.tanh %104 : vector<8x32xf32>
    %107 = arith.mulf %105, %106 : vector<8x32xf32>
    %c0_36 = arith.constant 0 : index
    %c0_37 = arith.constant 0 : index
    %108 = vector.load %arg9[%c0_36, %c0_37] : memref<8x64xf32, #tpu.memory_space<vmem>>, vector<8x32xf32>
    tpu.vector_store %arg9[%c0_36, %c0_37], %107 {strides = array<i32>} : memref<8x64xf32, #tpu.memory_space<vmem>>, vector<8x32xf32>,
    %c0_38 = arith.constant 0 : index
    %c32_39 = arith.constant 32 : index
    %109 = vector.load %arg9[%c0_38, %c32_39] : memref<8x64xf32, #tpu.memory_space<vmem>>, vector<8x32xf32>
    tpu.vector_store %arg9[%c0_38, %c32_39], %89 {strides = array<i32>} : memref<8x64xf32, #tpu.memory_space<vmem>>, vector<8x32xf32>,
    %c0_40 = arith.constant 0 : index
    %c0_41 = arith.constant 0 : index
    %110 = vector.load %arg9[%c0_40, %c0_41] : memref<8x64xf32, #tpu.memory_space<vmem>>, vector<8x64xf32>
    %cst_42 = arith.constant dense<0.000000e+00> : vector<8x256xf32>
    %111 = tpu.matmul %110, %7, %cst_42 {dimension_numbers = #tpu.dot_dimension_numbers<[1], [0], [0], [1], [0, 0, 1, 1], [], []>} : vector<8x64xf32>, vector<64x256xf32>, vector<8x256xf32> -> vector<8x256xf32>
    %112 = vector.extract_strided_slice %111 {offsets = [0, 128], sizes = [8, 128], strides = [1, 1]} : vector<8x256xf32> to vector<8x128xf32>
    %113 = arith.addf %112, %10 : vector<8x128xf32>
    %114 = arith.negf %113 : vector<8x128xf32>
    %115 = math.exp %114 : vector<8x128xf32>
    %cst_43 = arith.constant 1.000000e+00 : f32
    %116 = vector.broadcast %cst_43 : f32 to vector<8x128xf32>
    %117 = arith.addf %116, %115 : vector<8x128xf32>
    %118 = arith.divf %116, %117 : vector<8x128xf32>
    %119 = vector.extract_strided_slice %113 {offsets = [0, 64], sizes = [8, 32], strides = [1, 1]} : vector<8x128xf32> to vector<8x32xf32>
    %120 = math.tanh %119 : vector<8x32xf32>
    %121 = vector.extract_strided_slice %118 {offsets = [0, 32], sizes = [8, 32], strides = [1, 1]} : vector<8x128xf32> to vector<8x32xf32>
    %122 = arith.mulf %121, %86 : vector<8x32xf32>
    %123 = vector.extract_strided_slice %118 {offsets = [0, 0], sizes = [8, 32], strides = [1, 1]} : vector<8x128xf32> to vector<8x32xf32>
    %124 = arith.mulf %123, %120 : vector<8x32xf32>
    %125 = arith.addf %122, %124 : vector<8x32xf32>
    %126 = vector.extract_strided_slice %118 {offsets = [0, 96], sizes = [8, 32], strides = [1, 1]} : vector<8x128xf32> to vector<8x32xf32>
    %127 = math.tanh %125 : vector<8x32xf32>
    %128 = arith.mulf %126, %127 : vector<8x32xf32>
    %129 = vector.extract_strided_slice %111 {offsets = [0, 0], sizes = [8, 128], strides = [1, 1]} : vector<8x256xf32> to vector<8x128xf32>
    %c24 = arith.constant 24 : index
    %c0_44 = arith.constant 0 : index
    %130 = vector.load %arg8[%c24, %c0_44] : memref<256x128xf32, #tpu.memory_space<vmem>>, vector<8x128xf32>
    %131 = arith.addf %129, %130 : vector<8x128xf32>
    %132 = arith.negf %131 : vector<8x128xf32>
    %133 = math.exp %132 : vector<8x128xf32>
    %cst_45 = arith.constant 1.000000e+00 : f32
    %134 = vector.broadcast %cst_45 : f32 to vector<8x128xf32>
    %135 = arith.addf %134, %133 : vector<8x128xf32>
    %136 = arith.divf %134, %135 : vector<8x128xf32>
    %137 = vector.extract_strided_slice %131 {offsets = [0, 64], sizes = [8, 32], strides = [1, 1]} : vector<8x128xf32> to vector<8x32xf32>
    %138 = math.tanh %137 : vector<8x32xf32>
    %139 = vector.extract_strided_slice %136 {offsets = [0, 32], sizes = [8, 32], strides = [1, 1]} : vector<8x128xf32> to vector<8x32xf32>
    %140 = arith.mulf %139, %104 : vector<8x32xf32>
    %141 = vector.extract_strided_slice %136 {offsets = [0, 0], sizes = [8, 32], strides = [1, 1]} : vector<8x128xf32> to vector<8x32xf32>
    %142 = arith.mulf %141, %138 : vector<8x32xf32>
    %143 = arith.addf %140, %142 : vector<8x32xf32>
    %144 = vector.extract_strided_slice %136 {offsets = [0, 96], sizes = [8, 32], strides = [1, 1]} : vector<8x128xf32> to vector<8x32xf32>
    %145 = math.tanh %143 : vector<8x32xf32>
    %146 = arith.mulf %144, %145 : vector<8x32xf32>
    %c0_46 = arith.constant 0 : index
    %c0_47 = arith.constant 0 : index
    %147 = vector.load %arg9[%c0_46, %c0_47] : memref<8x64xf32, #tpu.memory_space<vmem>>, vector<8x32xf32>
    tpu.vector_store %arg9[%c0_46, %c0_47], %146 {strides = array<i32>} : memref<8x64xf32, #tpu.memory_space<vmem>>, vector<8x32xf32>,
    %c0_48 = arith.constant 0 : index
    %c32_49 = arith.constant 32 : index
    %148 = vector.load %arg9[%c0_48, %c32_49] : memref<8x64xf32, #tpu.memory_space<vmem>>, vector<8x32xf32>
    tpu.vector_store %arg9[%c0_48, %c32_49], %128 {strides = array<i32>} : memref<8x64xf32, #tpu.memory_space<vmem>>, vector<8x32xf32>,
    %c0_50 = arith.constant 0 : index
    %c0_51 = arith.constant 0 : index
    %149 = vector.load %arg9[%c0_50, %c0_51] : memref<8x64xf32, #tpu.memory_space<vmem>>, vector<8x64xf32>
    %cst_52 = arith.constant dense<0.000000e+00> : vector<8x256xf32>
    %150 = tpu.matmul %149, %7, %cst_52 {dimension_numbers = #tpu.dot_dimension_numbers<[1], [0], [0], [1], [0, 0, 1, 1], [], []>} : vector<8x64xf32>, vector<64x256xf32>, vector<8x256xf32> -> vector<8x256xf32>
    %151 = vector.extract_strided_slice %150 {offsets = [0, 128], sizes = [8, 128], strides = [1, 1]} : vector<8x256xf32> to vector<8x128xf32>
    %152 = arith.addf %151, %10 : vector<8x128xf32>
    %153 = arith.negf %152 : vector<8x128xf32>
    %154 = math.exp %153 : vector<8x128xf32>
    %cst_53 = arith.constant 1.000000e+00 : f32
    %155 = vector.broadcast %cst_53 : f32 to vector<8x128xf32>
    %156 = arith.addf %155, %154 : vector<8x128xf32>
    %157 = arith.divf %155, %156 : vector<8x128xf32>
    %158 = vector.extract_strided_slice %152 {offsets = [0, 64], sizes = [8, 32], strides = [1, 1]} : vector<8x128xf32> to vector<8x32xf32>
    %159 = math.tanh %158 : vector<8x32xf32>
    %160 = vector.extract_strided_slice %157 {offsets = [0, 32], sizes = [8, 32], strides = [1, 1]} : vector<8x128xf32> to vector<8x32xf32>
    %161 = arith.mulf %160, %125 : vector<8x32xf32>
    %162 = vector.extract_strided_slice %157 {offsets = [0, 0], sizes = [8, 32], strides = [1, 1]} : vector<8x128xf32> to vector<8x32xf32>
    %163 = arith.mulf %162, %159 : vector<8x32xf32>
    %164 = arith.addf %161, %163 : vector<8x32xf32>
    %165 = vector.extract_strided_slice %157 {offsets = [0, 96], sizes = [8, 32], strides = [1, 1]} : vector<8x128xf32> to vector<8x32xf32>
    %166 = math.tanh %164 : vector<8x32xf32>
    %167 = arith.mulf %165, %166 : vector<8x32xf32>
    %168 = vector.extract_strided_slice %150 {offsets = [0, 0], sizes = [8, 128], strides = [1, 1]} : vector<8x256xf32> to vector<8x128xf32>
    %c32_54 = arith.constant 32 : index
    %c0_55 = arith.constant 0 : index
    %169 = vector.load %arg8[%c32_54, %c0_55] : memref<256x128xf32, #tpu.memory_space<vmem>>, vector<8x128xf32>
    %170 = arith.addf %168, %169 : vector<8x128xf32>
    %171 = arith.negf %170 : vector<8x128xf32>
    %172 = math.exp %171 : vector<8x128xf32>
    %cst_56 = arith.constant 1.000000e+00 : f32
    %173 = vector.broadcast %cst_56 : f32 to vector<8x128xf32>
    %174 = arith.addf %173, %172 : vector<8x128xf32>
    %175 = arith.divf %173, %174 : vector<8x128xf32>
    %176 = vector.extract_strided_slice %170 {offsets = [0, 64], sizes = [8, 32], strides = [1, 1]} : vector<8x128xf32> to vector<8x32xf32>
    %177 = math.tanh %176 : vector<8x32xf32>
    %178 = vector.extract_strided_slice %175 {offsets = [0, 32], sizes = [8, 32], strides = [1, 1]} : vector<8x128xf32> to vector<8x32xf32>
    %179 = arith.mulf %178, %143 : vector<8x32xf32>
    %180 = vector.extract_strided_slice %175 {offsets = [0, 0], sizes = [8, 32], strides = [1, 1]} : vector<8x128xf32> to vector<8x32xf32>
    %181 = arith.mulf %180, %177 : vector<8x32xf32>
    %182 = arith.addf %179, %181 : vector<8x32xf32>
    %183 = vector.extract_strided_slice %175 {offsets = [0, 96], sizes = [8, 32], strides = [1, 1]} : vector<8x128xf32> to vector<8x32xf32>
    %184 = math.tanh %182 : vector<8x32xf32>
    %185 = arith.mulf %183, %184 : vector<8x32xf32>
    %c0_57 = arith.constant 0 : index
    %c0_58 = arith.constant 0 : index
    %186 = vector.load %arg9[%c0_57, %c0_58] : memref<8x64xf32, #tpu.memory_space<vmem>>, vector<8x32xf32>
    tpu.vector_store %arg9[%c0_57, %c0_58], %185 {strides = array<i32>} : memref<8x64xf32, #tpu.memory_space<vmem>>, vector<8x32xf32>,
    %c0_59 = arith.constant 0 : index
    %c32_60 = arith.constant 32 : index
    %187 = vector.load %arg9[%c0_59, %c32_60] : memref<8x64xf32, #tpu.memory_space<vmem>>, vector<8x32xf32>
    tpu.vector_store %arg9[%c0_59, %c32_60], %167 {strides = array<i32>} : memref<8x64xf32, #tpu.memory_space<vmem>>, vector<8x32xf32>,
    %c0_61 = arith.constant 0 : index
    %c0_62 = arith.constant 0 : index
    %188 = vector.load %arg9[%c0_61, %c0_62] : memref<8x64xf32, #tpu.memory_space<vmem>>, vector<8x64xf32>
    %cst_63 = arith.constant dense<0.000000e+00> : vector<8x256xf32>
    %189 = tpu.matmul %188, %7, %cst_63 {dimension_numbers = #tpu.dot_dimension_numbers<[1], [0], [0], [1], [0, 0, 1, 1], [], []>} : vector<8x64xf32>, vector<64x256xf32>, vector<8x256xf32> -> vector<8x256xf32>
    %190 = vector.extract_strided_slice %189 {offsets = [0, 128], sizes = [8, 128], strides = [1, 1]} : vector<8x256xf32> to vector<8x128xf32>
    %191 = arith.addf %190, %10 : vector<8x128xf32>
    %192 = arith.negf %191 : vector<8x128xf32>
    %193 = math.exp %192 : vector<8x128xf32>
    %cst_64 = arith.constant 1.000000e+00 : f32
    %194 = vector.broadcast %cst_64 : f32 to vector<8x128xf32>
    %195 = arith.addf %194, %193 : vector<8x128xf32>
    %196 = arith.divf %194, %195 : vector<8x128xf32>
    %197 = vector.extract_strided_slice %191 {offsets = [0, 64], sizes = [8, 32], strides = [1, 1]} : vector<8x128xf32> to vector<8x32xf32>
    %198 = math.tanh %197 : vector<8x32xf32>
    %199 = vector.extract_strided_slice %196 {offsets = [0, 32], sizes = [8, 32], strides = [1, 1]} : vector<8x128xf32> to vector<8x32xf32>
    %200 = arith.mulf %199, %164 : vector<8x32xf32>
    %201 = vector.extract_strided_slice %196 {offsets = [0, 0], sizes = [8, 32], strides = [1, 1]} : vector<8x128xf32> to vector<8x32xf32>
    %202 = arith.mulf %201, %198 : vector<8x32xf32>
    %203 = arith.addf %200, %202 : vector<8x32xf32>
    %204 = vector.extract_strided_slice %196 {offsets = [0, 96], sizes = [8, 32], strides = [1, 1]} : vector<8x128xf32> to vector<8x32xf32>
    %205 = math.tanh %203 : vector<8x32xf32>
    %206 = arith.mulf %204, %205 : vector<8x32xf32>
    %207 = vector.extract_strided_slice %189 {offsets = [0, 0], sizes = [8, 128], strides = [1, 1]} : vector<8x256xf32> to vector<8x128xf32>
    %c40 = arith.constant 40 : index
    %c0_65 = arith.constant 0 : index
    %208 = vector.load %arg8[%c40, %c0_65] : memref<256x128xf32, #tpu.memory_space<vmem>>, vector<8x128xf32>
    %209 = arith.addf %207, %208 : vector<8x128xf32>
    %210 = arith.negf %209 : vector<8x128xf32>
    %211 = math.exp %210 : vector<8x128xf32>
    %cst_66 = arith.constant 1.000000e+00 : f32
    %212 = vector.broadcast %cst_66 : f32 to vector<8x128xf32>
    %213 = arith.addf %212, %211 : vector<8x128xf32>
    %214 = arith.divf %212, %213 : vector<8x128xf32>
    %215 = vector.extract_strided_slice %209 {offsets = [0, 64], sizes = [8, 32], strides = [1, 1]} : vector<8x128xf32> to vector<8x32xf32>
    %216 = math.tanh %215 : vector<8x32xf32>
    %217 = vector.extract_strided_slice %214 {offsets = [0, 32], sizes = [8, 32], strides = [1, 1]} : vector<8x128xf32> to vector<8x32xf32>
    %218 = arith.mulf %217, %182 : vector<8x32xf32>
    %219 = vector.extract_strided_slice %214 {offsets = [0, 0], sizes = [8, 32], strides = [1, 1]} : vector<8x128xf32> to vector<8x32xf32>
    %220 = arith.mulf %219, %216 : vector<8x32xf32>
    %221 = arith.addf %218, %220 : vector<8x32xf32>
    %222 = vector.extract_strided_slice %214 {offsets = [0, 96], sizes = [8, 32], strides = [1, 1]} : vector<8x128xf32> to vector<8x32xf32>
    %223 = math.tanh %221 : vector<8x32xf32>
    %224 = arith.mulf %222, %223 : vector<8x32xf32>
    %c0_67 = arith.constant 0 : index
    %c0_68 = arith.constant 0 : index
    %225 = vector.load %arg9[%c0_67, %c0_68] : memref<8x64xf32, #tpu.memory_space<vmem>>, vector<8x32xf32>
    tpu.vector_store %arg9[%c0_67, %c0_68], %224 {strides = array<i32>} : memref<8x64xf32, #tpu.memory_space<vmem>>, vector<8x32xf32>,
    %c0_69 = arith.constant 0 : index
    %c32_70 = arith.constant 32 : index
    %226 = vector.load %arg9[%c0_69, %c32_70] : memref<8x64xf32, #tpu.memory_space<vmem>>, vector<8x32xf32>
    tpu.vector_store %arg9[%c0_69, %c32_70], %206 {strides = array<i32>} : memref<8x64xf32, #tpu.memory_space<vmem>>, vector<8x32xf32>,
    %c0_71 = arith.constant 0 : index
    %c0_72 = arith.constant 0 : index
    %227 = vector.load %arg9[%c0_71, %c0_72] : memref<8x64xf32, #tpu.memory_space<vmem>>, vector<8x64xf32>
    %cst_73 = arith.constant dense<0.000000e+00> : vector<8x256xf32>
    %228 = tpu.matmul %227, %7, %cst_73 {dimension_numbers = #tpu.dot_dimension_numbers<[1], [0], [0], [1], [0, 0, 1, 1], [], []>} : vector<8x64xf32>, vector<64x256xf32>, vector<8x256xf32> -> vector<8x256xf32>
    %229 = vector.extract_strided_slice %228 {offsets = [0, 128], sizes = [8, 128], strides = [1, 1]} : vector<8x256xf32> to vector<8x128xf32>
    %230 = arith.addf %229, %10 : vector<8x128xf32>
    %231 = arith.negf %230 : vector<8x128xf32>
    %232 = math.exp %231 : vector<8x128xf32>
    %cst_74 = arith.constant 1.000000e+00 : f32
    %233 = vector.broadcast %cst_74 : f32 to vector<8x128xf32>
    %234 = arith.addf %233, %232 : vector<8x128xf32>
    %235 = arith.divf %233, %234 : vector<8x128xf32>
    %236 = vector.extract_strided_slice %230 {offsets = [0, 64], sizes = [8, 32], strides = [1, 1]} : vector<8x128xf32> to vector<8x32xf32>
    %237 = math.tanh %236 : vector<8x32xf32>
    %238 = vector.extract_strided_slice %235 {offsets = [0, 32], sizes = [8, 32], strides = [1, 1]} : vector<8x128xf32> to vector<8x32xf32>
    %239 = arith.mulf %238, %203 : vector<8x32xf32>
    %240 = vector.extract_strided_slice %235 {offsets = [0, 0], sizes = [8, 32], strides = [1, 1]} : vector<8x128xf32> to vector<8x32xf32>
    %241 = arith.mulf %240, %237 : vector<8x32xf32>
    %242 = arith.addf %239, %241 : vector<8x32xf32>
    %243 = vector.extract_strided_slice %235 {offsets = [0, 96], sizes = [8, 32], strides = [1, 1]} : vector<8x128xf32> to vector<8x32xf32>
    %244 = math.tanh %242 : vector<8x32xf32>
    %245 = arith.mulf %243, %244 : vector<8x32xf32>
    %246 = vector.extract_strided_slice %228 {offsets = [0, 0], sizes = [8, 128], strides = [1, 1]} : vector<8x256xf32> to vector<8x128xf32>
    %c48 = arith.constant 48 : index
    %c0_75 = arith.constant 0 : index
    %247 = vector.load %arg8[%c48, %c0_75] : memref<256x128xf32, #tpu.memory_space<vmem>>, vector<8x128xf32>
    %248 = arith.addf %246, %247 : vector<8x128xf32>
    %249 = arith.negf %248 : vector<8x128xf32>
    %250 = math.exp %249 : vector<8x128xf32>
    %cst_76 = arith.constant 1.000000e+00 : f32
    %251 = vector.broadcast %cst_76 : f32 to vector<8x128xf32>
    %252 = arith.addf %251, %250 : vector<8x128xf32>
    %253 = arith.divf %251, %252 : vector<8x128xf32>
    %254 = vector.extract_strided_slice %248 {offsets = [0, 64], sizes = [8, 32], strides = [1, 1]} : vector<8x128xf32> to vector<8x32xf32>
    %255 = math.tanh %254 : vector<8x32xf32>
    %256 = vector.extract_strided_slice %253 {offsets = [0, 32], sizes = [8, 32], strides = [1, 1]} : vector<8x128xf32> to vector<8x32xf32>
    %257 = arith.mulf %256, %221 : vector<8x32xf32>
    %258 = vector.extract_strided_slice %253 {offsets = [0, 0], sizes = [8, 32], strides = [1, 1]} : vector<8x128xf32> to vector<8x32xf32>
    %259 = arith.mulf %258, %255 : vector<8x32xf32>
    %260 = arith.addf %257, %259 : vector<8x32xf32>
    %261 = vector.extract_strided_slice %253 {offsets = [0, 96], sizes = [8, 32], strides = [1, 1]} : vector<8x128xf32> to vector<8x32xf32>
    %262 = math.tanh %260 : vector<8x32xf32>
    %263 = arith.mulf %261, %262 : vector<8x32xf32>
    %c0_77 = arith.constant 0 : index
    %c0_78 = arith.constant 0 : index
    %264 = vector.load %arg9[%c0_77, %c0_78] : memref<8x64xf32, #tpu.memory_space<vmem>>, vector<8x32xf32>
    tpu.vector_store %arg9[%c0_77, %c0_78], %263 {strides = array<i32>} : memref<8x64xf32, #tpu.memory_space<vmem>>, vector<8x32xf32>,
    %c0_79 = arith.constant 0 : index
    %c32_80 = arith.constant 32 : index
    %265 = vector.load %arg9[%c0_79, %c32_80] : memref<8x64xf32, #tpu.memory_space<vmem>>, vector<8x32xf32>
    tpu.vector_store %arg9[%c0_79, %c32_80], %245 {strides = array<i32>} : memref<8x64xf32, #tpu.memory_space<vmem>>, vector<8x32xf32>,
    %c0_81 = arith.constant 0 : index
    %c0_82 = arith.constant 0 : index
    %266 = vector.load %arg9[%c0_81, %c0_82] : memref<8x64xf32, #tpu.memory_space<vmem>>, vector<8x64xf32>
    %cst_83 = arith.constant dense<0.000000e+00> : vector<8x256xf32>
    %267 = tpu.matmul %266, %7, %cst_83 {dimension_numbers = #tpu.dot_dimension_numbers<[1], [0], [0], [1], [0, 0, 1, 1], [], []>} : vector<8x64xf32>, vector<64x256xf32>, vector<8x256xf32> -> vector<8x256xf32>
    %268 = vector.extract_strided_slice %267 {offsets = [0, 128], sizes = [8, 128], strides = [1, 1]} : vector<8x256xf32> to vector<8x128xf32>
    %269 = arith.addf %268, %10 : vector<8x128xf32>
    %270 = arith.negf %269 : vector<8x128xf32>
    %271 = math.exp %270 : vector<8x128xf32>
    %cst_84 = arith.constant 1.000000e+00 : f32
    %272 = vector.broadcast %cst_84 : f32 to vector<8x128xf32>
    %273 = arith.addf %272, %271 : vector<8x128xf32>
    %274 = arith.divf %272, %273 : vector<8x128xf32>
    %275 = vector.extract_strided_slice %269 {offsets = [0, 64], sizes = [8, 32], strides = [1, 1]} : vector<8x128xf32> to vector<8x32xf32>
    %276 = math.tanh %275 : vector<8x32xf32>
    %277 = vector.extract_strided_slice %274 {offsets = [0, 32], sizes = [8, 32], strides = [1, 1]} : vector<8x128xf32> to vector<8x32xf32>
    %278 = arith.mulf %277, %242 : vector<8x32xf32>
    %279 = vector.extract_strided_slice %274 {offsets = [0, 0], sizes = [8, 32], strides = [1, 1]} : vector<8x128xf32> to vector<8x32xf32>
    %280 = arith.mulf %279, %276 : vector<8x32xf32>
    %281 = arith.addf %278, %280 : vector<8x32xf32>
    %282 = vector.extract_strided_slice %274 {offsets = [0, 96], sizes = [8, 32], strides = [1, 1]} : vector<8x128xf32> to vector<8x32xf32>
    %283 = math.tanh %281 : vector<8x32xf32>
    %284 = arith.mulf %282, %283 : vector<8x32xf32>
    %285 = vector.extract_strided_slice %267 {offsets = [0, 0], sizes = [8, 128], strides = [1, 1]} : vector<8x256xf32> to vector<8x128xf32>
    %c56 = arith.constant 56 : index
    %c0_85 = arith.constant 0 : index
    %286 = vector.load %arg8[%c56, %c0_85] : memref<256x128xf32, #tpu.memory_space<vmem>>, vector<8x128xf32>
    %287 = arith.addf %285, %286 : vector<8x128xf32>
    %288 = arith.negf %287 : vector<8x128xf32>
    %289 = math.exp %288 : vector<8x128xf32>
    %cst_86 = arith.constant 1.000000e+00 : f32
    %290 = vector.broadcast %cst_86 : f32 to vector<8x128xf32>
    %291 = arith.addf %290, %289 : vector<8x128xf32>
    %292 = arith.divf %290, %291 : vector<8x128xf32>
    %293 = vector.extract_strided_slice %287 {offsets = [0, 64], sizes = [8, 32], strides = [1, 1]} : vector<8x128xf32> to vector<8x32xf32>
    %294 = math.tanh %293 : vector<8x32xf32>
    %295 = vector.extract_strided_slice %292 {offsets = [0, 32], sizes = [8, 32], strides = [1, 1]} : vector<8x128xf32> to vector<8x32xf32>
    %296 = arith.mulf %295, %260 : vector<8x32xf32>
    %297 = vector.extract_strided_slice %292 {offsets = [0, 0], sizes = [8, 32], strides = [1, 1]} : vector<8x128xf32> to vector<8x32xf32>
    %298 = arith.mulf %297, %294 : vector<8x32xf32>
    %299 = arith.addf %296, %298 : vector<8x32xf32>
    %300 = vector.extract_strided_slice %292 {offsets = [0, 96], sizes = [8, 32], strides = [1, 1]} : vector<8x128xf32> to vector<8x32xf32>
    %301 = math.tanh %299 : vector<8x32xf32>
    %302 = arith.mulf %300, %301 : vector<8x32xf32>
    %c0_87 = arith.constant 0 : index
    %c0_88 = arith.constant 0 : index
    %303 = vector.load %arg9[%c0_87, %c0_88] : memref<8x64xf32, #tpu.memory_space<vmem>>, vector<8x32xf32>
    tpu.vector_store %arg9[%c0_87, %c0_88], %302 {strides = array<i32>} : memref<8x64xf32, #tpu.memory_space<vmem>>, vector<8x32xf32>,
    %c0_89 = arith.constant 0 : index
    %c32_90 = arith.constant 32 : index
    %304 = vector.load %arg9[%c0_89, %c32_90] : memref<8x64xf32, #tpu.memory_space<vmem>>, vector<8x32xf32>
    tpu.vector_store %arg9[%c0_89, %c32_90], %284 {strides = array<i32>} : memref<8x64xf32, #tpu.memory_space<vmem>>, vector<8x32xf32>,
    %c0_91 = arith.constant 0 : index
    %c0_92 = arith.constant 0 : index
    %305 = vector.load %arg9[%c0_91, %c0_92] : memref<8x64xf32, #tpu.memory_space<vmem>>, vector<8x64xf32>
    %cst_93 = arith.constant dense<0.000000e+00> : vector<8x256xf32>
    %306 = tpu.matmul %305, %7, %cst_93 {dimension_numbers = #tpu.dot_dimension_numbers<[1], [0], [0], [1], [0, 0, 1, 1], [], []>} : vector<8x64xf32>, vector<64x256xf32>, vector<8x256xf32> -> vector<8x256xf32>
    %307 = vector.extract_strided_slice %306 {offsets = [0, 128], sizes = [8, 128], strides = [1, 1]} : vector<8x256xf32> to vector<8x128xf32>
    %308 = arith.addf %307, %10 : vector<8x128xf32>
    %309 = arith.negf %308 : vector<8x128xf32>
    %310 = math.exp %309 : vector<8x128xf32>
    %cst_94 = arith.constant 1.000000e+00 : f32
    %311 = vector.broadcast %cst_94 : f32 to vector<8x128xf32>
    %312 = arith.addf %311, %310 : vector<8x128xf32>
    %313 = arith.divf %311, %312 : vector<8x128xf32>
    %314 = vector.extract_strided_slice %308 {offsets = [0, 64], sizes = [8, 32], strides = [1, 1]} : vector<8x128xf32> to vector<8x32xf32>
    %315 = math.tanh %314 : vector<8x32xf32>
    %316 = vector.extract_strided_slice %313 {offsets = [0, 32], sizes = [8, 32], strides = [1, 1]} : vector<8x128xf32> to vector<8x32xf32>
    %317 = arith.mulf %316, %281 : vector<8x32xf32>
    %318 = vector.extract_strided_slice %313 {offsets = [0, 0], sizes = [8, 32], strides = [1, 1]} : vector<8x128xf32> to vector<8x32xf32>
    %319 = arith.mulf %318, %315 : vector<8x32xf32>
    %320 = arith.addf %317, %319 : vector<8x32xf32>
    %321 = vector.extract_strided_slice %313 {offsets = [0, 96], sizes = [8, 32], strides = [1, 1]} : vector<8x128xf32> to vector<8x32xf32>
    %322 = math.tanh %320 : vector<8x32xf32>
    %323 = arith.mulf %321, %322 : vector<8x32xf32>
    %324 = vector.extract_strided_slice %306 {offsets = [0, 0], sizes = [8, 128], strides = [1, 1]} : vector<8x256xf32> to vector<8x128xf32>
    %c64 = arith.constant 64 : index
    %c0_95 = arith.constant 0 : index
    %325 = vector.load %arg8[%c64, %c0_95] : memref<256x128xf32, #tpu.memory_space<vmem>>, vector<8x128xf32>
    %326 = arith.addf %324, %325 : vector<8x128xf32>
    %327 = arith.negf %326 : vector<8x128xf32>
    %328 = math.exp %327 : vector<8x128xf32>
    %cst_96 = arith.constant 1.000000e+00 : f32
    %329 = vector.broadcast %cst_96 : f32 to vector<8x128xf32>
    %330 = arith.addf %329, %328 : vector<8x128xf32>
    %331 = arith.divf %329, %330 : vector<8x128xf32>
    %332 = vector.extract_strided_slice %326 {offsets = [0, 64], sizes = [8, 32], strides = [1, 1]} : vector<8x128xf32> to vector<8x32xf32>
    %333 = math.tanh %332 : vector<8x32xf32>
    %334 = vector.extract_strided_slice %331 {offsets = [0, 32], sizes = [8, 32], strides = [1, 1]} : vector<8x128xf32> to vector<8x32xf32>
    %335 = arith.mulf %334, %299 : vector<8x32xf32>
    %336 = vector.extract_strided_slice %331 {offsets = [0, 0], sizes = [8, 32], strides = [1, 1]} : vector<8x128xf32> to vector<8x32xf32>
    %337 = arith.mulf %336, %333 : vector<8x32xf32>
    %338 = arith.addf %335, %337 : vector<8x32xf32>
    %339 = vector.extract_strided_slice %331 {offsets = [0, 96], sizes = [8, 32], strides = [1, 1]} : vector<8x128xf32> to vector<8x32xf32>
    %340 = math.tanh %338 : vector<8x32xf32>
    %341 = arith.mulf %339, %340 : vector<8x32xf32>
    %c0_97 = arith.constant 0 : index
    %c0_98 = arith.constant 0 : index
    %342 = vector.load %arg9[%c0_97, %c0_98] : memref<8x64xf32, #tpu.memory_space<vmem>>, vector<8x32xf32>
    tpu.vector_store %arg9[%c0_97, %c0_98], %341 {strides = array<i32>} : memref<8x64xf32, #tpu.memory_space<vmem>>, vector<8x32xf32>,
    %c0_99 = arith.constant 0 : index
    %c32_100 = arith.constant 32 : index
    %343 = vector.load %arg9[%c0_99, %c32_100] : memref<8x64xf32, #tpu.memory_space<vmem>>, vector<8x32xf32>
    tpu.vector_store %arg9[%c0_99, %c32_100], %323 {strides = array<i32>} : memref<8x64xf32, #tpu.memory_space<vmem>>, vector<8x32xf32>,
    %c0_101 = arith.constant 0 : index
    %c0_102 = arith.constant 0 : index
    %344 = vector.load %arg9[%c0_101, %c0_102] : memref<8x64xf32, #tpu.memory_space<vmem>>, vector<8x64xf32>
    %cst_103 = arith.constant dense<0.000000e+00> : vector<8x256xf32>
    %345 = tpu.matmul %344, %7, %cst_103 {dimension_numbers = #tpu.dot_dimension_numbers<[1], [0], [0], [1], [0, 0, 1, 1], [], []>} : vector<8x64xf32>, vector<64x256xf32>, vector<8x256xf32> -> vector<8x256xf32>
    %346 = vector.extract_strided_slice %345 {offsets = [0, 128], sizes = [8, 128], strides = [1, 1]} : vector<8x256xf32> to vector<8x128xf32>
    %347 = arith.addf %346, %10 : vector<8x128xf32>
    %348 = arith.negf %347 : vector<8x128xf32>
    %349 = math.exp %348 : vector<8x128xf32>
    %cst_104 = arith.constant 1.000000e+00 : f32
    %350 = vector.broadcast %cst_104 : f32 to vector<8x128xf32>
    %351 = arith.addf %350, %349 : vector<8x128xf32>
    %352 = arith.divf %350, %351 : vector<8x128xf32>
    %353 = vector.extract_strided_slice %347 {offsets = [0, 64], sizes = [8, 32], strides = [1, 1]} : vector<8x128xf32> to vector<8x32xf32>
    %354 = math.tanh %353 : vector<8x32xf32>
    %355 = vector.extract_strided_slice %352 {offsets = [0, 32], sizes = [8, 32], strides = [1, 1]} : vector<8x128xf32> to vector<8x32xf32>
    %356 = arith.mulf %355, %320 : vector<8x32xf32>
    %357 = vector.extract_strided_slice %352 {offsets = [0, 0], sizes = [8, 32], strides = [1, 1]} : vector<8x128xf32> to vector<8x32xf32>
    %358 = arith.mulf %357, %354 : vector<8x32xf32>
    %359 = arith.addf %356, %358 : vector<8x32xf32>
    %360 = vector.extract_strided_slice %352 {offsets = [0, 96], sizes = [8, 32], strides = [1, 1]} : vector<8x128xf32> to vector<8x32xf32>
    %361 = math.tanh %359 : vector<8x32xf32>
    %362 = arith.mulf %360, %361 : vector<8x32xf32>
    %363 = vector.extract_strided_slice %345 {offsets = [0, 0], sizes = [8, 128], strides = [1, 1]} : vector<8x256xf32> to vector<8x128xf32>
    %c72 = arith.constant 72 : index
    %c0_105 = arith.constant 0 : index
    %364 = vector.load %arg8[%c72, %c0_105] : memref<256x128xf32, #tpu.memory_space<vmem>>, vector<8x128xf32>
    %365 = arith.addf %363, %364 : vector<8x128xf32>
    %366 = arith.negf %365 : vector<8x128xf32>
    %367 = math.exp %366 : vector<8x128xf32>
    %cst_106 = arith.constant 1.000000e+00 : f32
    %368 = vector.broadcast %cst_106 : f32 to vector<8x128xf32>
    %369 = arith.addf %368, %367 : vector<8x128xf32>
    %370 = arith.divf %368, %369 : vector<8x128xf32>
    %371 = vector.extract_strided_slice %365 {offsets = [0, 64], sizes = [8, 32], strides = [1, 1]} : vector<8x128xf32> to vector<8x32xf32>
    %372 = math.tanh %371 : vector<8x32xf32>
    %373 = vector.extract_strided_slice %370 {offsets = [0, 32], sizes = [8, 32], strides = [1, 1]} : vector<8x128xf32> to vector<8x32xf32>
    %374 = arith.mulf %373, %338 : vector<8x32xf32>
    %375 = vector.extract_strided_slice %370 {offsets = [0, 0], sizes = [8, 32], strides = [1, 1]} : vector<8x128xf32> to vector<8x32xf32>
    %376 = arith.mulf %375, %372 : vector<8x32xf32>
    %377 = arith.addf %374, %376 : vector<8x32xf32>
    %378 = vector.extract_strided_slice %370 {offsets = [0, 96], sizes = [8, 32], strides = [1, 1]} : vector<8x128xf32> to vector<8x32xf32>
    %379 = math.tanh %377 : vector<8x32xf32>
    %380 = arith.mulf %378, %379 : vector<8x32xf32>
    %c0_107 = arith.constant 0 : index
    %c0_108 = arith.constant 0 : index
    %381 = vector.load %arg9[%c0_107, %c0_108] : memref<8x64xf32, #tpu.memory_space<vmem>>, vector<8x32xf32>
    tpu.vector_store %arg9[%c0_107, %c0_108], %380 {strides = array<i32>} : memref<8x64xf32, #tpu.memory_space<vmem>>, vector<8x32xf32>,
    %c0_109 = arith.constant 0 : index
    %c32_110 = arith.constant 32 : index
    %382 = vector.load %arg9[%c0_109, %c32_110] : memref<8x64xf32, #tpu.memory_space<vmem>>, vector<8x32xf32>
    tpu.vector_store %arg9[%c0_109, %c32_110], %362 {strides = array<i32>} : memref<8x64xf32, #tpu.memory_space<vmem>>, vector<8x32xf32>,
    %c0_111 = arith.constant 0 : index
    %c0_112 = arith.constant 0 : index
    %383 = vector.load %arg9[%c0_111, %c0_112] : memref<8x64xf32, #tpu.memory_space<vmem>>, vector<8x64xf32>
    %cst_113 = arith.constant dense<0.000000e+00> : vector<8x256xf32>
    %384 = tpu.matmul %383, %7, %cst_113 {dimension_numbers = #tpu.dot_dimension_numbers<[1], [0], [0], [1], [0, 0, 1, 1], [], []>} : vector<8x64xf32>, vector<64x256xf32>, vector<8x256xf32> -> vector<8x256xf32>
    %385 = vector.extract_strided_slice %384 {offsets = [0, 128], sizes = [8, 128], strides = [1, 1]} : vector<8x256xf32> to vector<8x128xf32>
    %386 = arith.addf %385, %10 : vector<8x128xf32>
    %387 = arith.negf %386 : vector<8x128xf32>
    %388 = math.exp %387 : vector<8x128xf32>
    %cst_114 = arith.constant 1.000000e+00 : f32
    %389 = vector.broadcast %cst_114 : f32 to vector<8x128xf32>
    %390 = arith.addf %389, %388 : vector<8x128xf32>
    %391 = arith.divf %389, %390 : vector<8x128xf32>
    %392 = vector.extract_strided_slice %386 {offsets = [0, 64], sizes = [8, 32], strides = [1, 1]} : vector<8x128xf32> to vector<8x32xf32>
    %393 = math.tanh %392 : vector<8x32xf32>
    %394 = vector.extract_strided_slice %391 {offsets = [0, 32], sizes = [8, 32], strides = [1, 1]} : vector<8x128xf32> to vector<8x32xf32>
    %395 = arith.mulf %394, %359 : vector<8x32xf32>
    %396 = vector.extract_strided_slice %391 {offsets = [0, 0], sizes = [8, 32], strides = [1, 1]} : vector<8x128xf32> to vector<8x32xf32>
    %397 = arith.mulf %396, %393 : vector<8x32xf32>
    %398 = arith.addf %395, %397 : vector<8x32xf32>
    %399 = vector.extract_strided_slice %391 {offsets = [0, 96], sizes = [8, 32], strides = [1, 1]} : vector<8x128xf32> to vector<8x32xf32>
    %400 = math.tanh %398 : vector<8x32xf32>
    %401 = arith.mulf %399, %400 : vector<8x32xf32>
    %402 = vector.extract_strided_slice %384 {offsets = [0, 0], sizes = [8, 128], strides = [1, 1]} : vector<8x256xf32> to vector<8x128xf32>
    %c80 = arith.constant 80 : index
    %c0_115 = arith.constant 0 : index
    %403 = vector.load %arg8[%c80, %c0_115] : memref<256x128xf32, #tpu.memory_space<vmem>>, vector<8x128xf32>
    %404 = arith.addf %402, %403 : vector<8x128xf32>
    %405 = arith.negf %404 : vector<8x128xf32>
    %406 = math.exp %405 : vector<8x128xf32>
    %cst_116 = arith.constant 1.000000e+00 : f32
    %407 = vector.broadcast %cst_116 : f32 to vector<8x128xf32>
    %408 = arith.addf %407, %406 : vector<8x128xf32>
    %409 = arith.divf %407, %408 : vector<8x128xf32>
    %410 = vector.extract_strided_slice %404 {offsets = [0, 64], sizes = [8, 32], strides = [1, 1]} : vector<8x128xf32> to vector<8x32xf32>
    %411 = math.tanh %410 : vector<8x32xf32>
    %412 = vector.extract_strided_slice %409 {offsets = [0, 32], sizes = [8, 32], strides = [1, 1]} : vector<8x128xf32> to vector<8x32xf32>
    %413 = arith.mulf %412, %377 : vector<8x32xf32>
    %414 = vector.extract_strided_slice %409 {offsets = [0, 0], sizes = [8, 32], strides = [1, 1]} : vector<8x128xf32> to vector<8x32xf32>
    %415 = arith.mulf %414, %411 : vector<8x32xf32>
    %416 = arith.addf %413, %415 : vector<8x32xf32>
    %417 = vector.extract_strided_slice %409 {offsets = [0, 96], sizes = [8, 32], strides = [1, 1]} : vector<8x128xf32> to vector<8x32xf32>
    %418 = math.tanh %416 : vector<8x32xf32>
    %419 = arith.mulf %417, %418 : vector<8x32xf32>
    %c0_117 = arith.constant 0 : index
    %c0_118 = arith.constant 0 : index
    %420 = vector.load %arg9[%c0_117, %c0_118] : memref<8x64xf32, #tpu.memory_space<vmem>>, vector<8x32xf32>
    tpu.vector_store %arg9[%c0_117, %c0_118], %419 {strides = array<i32>} : memref<8x64xf32, #tpu.memory_space<vmem>>, vector<8x32xf32>,
    %c0_119 = arith.constant 0 : index
    %c32_120 = arith.constant 32 : index
    %421 = vector.load %arg9[%c0_119, %c32_120] : memref<8x64xf32, #tpu.memory_space<vmem>>, vector<8x32xf32>
    tpu.vector_store %arg9[%c0_119, %c32_120], %401 {strides = array<i32>} : memref<8x64xf32, #tpu.memory_space<vmem>>, vector<8x32xf32>,
    %c0_121 = arith.constant 0 : index
    %c0_122 = arith.constant 0 : index
    %422 = vector.load %arg9[%c0_121, %c0_122] : memref<8x64xf32, #tpu.memory_space<vmem>>, vector<8x64xf32>
    %cst_123 = arith.constant dense<0.000000e+00> : vector<8x256xf32>
    %423 = tpu.matmul %422, %7, %cst_123 {dimension_numbers = #tpu.dot_dimension_numbers<[1], [0], [0], [1], [0, 0, 1, 1], [], []>} : vector<8x64xf32>, vector<64x256xf32>, vector<8x256xf32> -> vector<8x256xf32>
    %424 = vector.extract_strided_slice %423 {offsets = [0, 128], sizes = [8, 128], strides = [1, 1]} : vector<8x256xf32> to vector<8x128xf32>
    %425 = arith.addf %424, %10 : vector<8x128xf32>
    %426 = arith.negf %425 : vector<8x128xf32>
    %427 = math.exp %426 : vector<8x128xf32>
    %cst_124 = arith.constant 1.000000e+00 : f32
    %428 = vector.broadcast %cst_124 : f32 to vector<8x128xf32>
    %429 = arith.addf %428, %427 : vector<8x128xf32>
    %430 = arith.divf %428, %429 : vector<8x128xf32>
    %431 = vector.extract_strided_slice %425 {offsets = [0, 64], sizes = [8, 32], strides = [1, 1]} : vector<8x128xf32> to vector<8x32xf32>
    %432 = math.tanh %431 : vector<8x32xf32>
    %433 = vector.extract_strided_slice %430 {offsets = [0, 32], sizes = [8, 32], strides = [1, 1]} : vector<8x128xf32> to vector<8x32xf32>
    %434 = arith.mulf %433, %398 : vector<8x32xf32>
    %435 = vector.extract_strided_slice %430 {offsets = [0, 0], sizes = [8, 32], strides = [1, 1]} : vector<8x128xf32> to vector<8x32xf32>
    %436 = arith.mulf %435, %432 : vector<8x32xf32>
    %437 = arith.addf %434, %436 : vector<8x32xf32>
    %438 = vector.extract_strided_slice %430 {offsets = [0, 96], sizes = [8, 32], strides = [1, 1]} : vector<8x128xf32> to vector<8x32xf32>
    %439 = math.tanh %437 : vector<8x32xf32>
    %440 = arith.mulf %438, %439 : vector<8x32xf32>
    %441 = vector.extract_strided_slice %423 {offsets = [0, 0], sizes = [8, 128], strides = [1, 1]} : vector<8x256xf32> to vector<8x128xf32>
    %c88 = arith.constant 88 : index
    %c0_125 = arith.constant 0 : index
    %442 = vector.load %arg8[%c88, %c0_125] : memref<256x128xf32, #tpu.memory_space<vmem>>, vector<8x128xf32>
    %443 = arith.addf %441, %442 : vector<8x128xf32>
    %444 = arith.negf %443 : vector<8x128xf32>
    %445 = math.exp %444 : vector<8x128xf32>
    %cst_126 = arith.constant 1.000000e+00 : f32
    %446 = vector.broadcast %cst_126 : f32 to vector<8x128xf32>
    %447 = arith.addf %446, %445 : vector<8x128xf32>
    %448 = arith.divf %446, %447 : vector<8x128xf32>
    %449 = vector.extract_strided_slice %443 {offsets = [0, 64], sizes = [8, 32], strides = [1, 1]} : vector<8x128xf32> to vector<8x32xf32>
    %450 = math.tanh %449 : vector<8x32xf32>
    %451 = vector.extract_strided_slice %448 {offsets = [0, 32], sizes = [8, 32], strides = [1, 1]} : vector<8x128xf32> to vector<8x32xf32>
    %452 = arith.mulf %451, %416 : vector<8x32xf32>
    %453 = vector.extract_strided_slice %448 {offsets = [0, 0], sizes = [8, 32], strides = [1, 1]} : vector<8x128xf32> to vector<8x32xf32>
    %454 = arith.mulf %453, %450 : vector<8x32xf32>
    %455 = arith.addf %452, %454 : vector<8x32xf32>
    %456 = vector.extract_strided_slice %448 {offsets = [0, 96], sizes = [8, 32], strides = [1, 1]} : vector<8x128xf32> to vector<8x32xf32>
    %457 = math.tanh %455 : vector<8x32xf32>
    %458 = arith.mulf %456, %457 : vector<8x32xf32>
    %c0_127 = arith.constant 0 : index
    %c0_128 = arith.constant 0 : index
    %459 = vector.load %arg9[%c0_127, %c0_128] : memref<8x64xf32, #tpu.memory_space<vmem>>, vector<8x32xf32>
    tpu.vector_store %arg9[%c0_127, %c0_128], %458 {strides = array<i32>} : memref<8x64xf32, #tpu.memory_space<vmem>>, vector<8x32xf32>,
    %c0_129 = arith.constant 0 : index
    %c32_130 = arith.constant 32 : index
    %460 = vector.load %arg9[%c0_129, %c32_130] : memref<8x64xf32, #tpu.memory_space<vmem>>, vector<8x32xf32>
    tpu.vector_store %arg9[%c0_129, %c32_130], %440 {strides = array<i32>} : memref<8x64xf32, #tpu.memory_space<vmem>>, vector<8x32xf32>,
    %c0_131 = arith.constant 0 : index
    %c0_132 = arith.constant 0 : index
    %461 = vector.load %arg9[%c0_131, %c0_132] : memref<8x64xf32, #tpu.memory_space<vmem>>, vector<8x64xf32>
    %cst_133 = arith.constant dense<0.000000e+00> : vector<8x256xf32>
    %462 = tpu.matmul %461, %7, %cst_133 {dimension_numbers = #tpu.dot_dimension_numbers<[1], [0], [0], [1], [0, 0, 1, 1], [], []>} : vector<8x64xf32>, vector<64x256xf32>, vector<8x256xf32> -> vector<8x256xf32>
    %463 = vector.extract_strided_slice %462 {offsets = [0, 128], sizes = [8, 128], strides = [1, 1]} : vector<8x256xf32> to vector<8x128xf32>
    %464 = arith.addf %463, %10 : vector<8x128xf32>
    %465 = arith.negf %464 : vector<8x128xf32>
    %466 = math.exp %465 : vector<8x128xf32>
    %cst_134 = arith.constant 1.000000e+00 : f32
    %467 = vector.broadcast %cst_134 : f32 to vector<8x128xf32>
    %468 = arith.addf %467, %466 : vector<8x128xf32>
    %469 = arith.divf %467, %468 : vector<8x128xf32>
    %470 = vector.extract_strided_slice %464 {offsets = [0, 64], sizes = [8, 32], strides = [1, 1]} : vector<8x128xf32> to vector<8x32xf32>
    %471 = math.tanh %470 : vector<8x32xf32>
    %472 = vector.extract_strided_slice %469 {offsets = [0, 32], sizes = [8, 32], strides = [1, 1]} : vector<8x128xf32> to vector<8x32xf32>
    %473 = arith.mulf %472, %437 : vector<8x32xf32>
    %474 = vector.extract_strided_slice %469 {offsets = [0, 0], sizes = [8, 32], strides = [1, 1]} : vector<8x128xf32> to vector<8x32xf32>
    %475 = arith.mulf %474, %471 : vector<8x32xf32>
    %476 = arith.addf %473, %475 : vector<8x32xf32>
    %477 = vector.extract_strided_slice %469 {offsets = [0, 96], sizes = [8, 32], strides = [1, 1]} : vector<8x128xf32> to vector<8x32xf32>
    %478 = math.tanh %476 : vector<8x32xf32>
    %479 = arith.mulf %477, %478 : vector<8x32xf32>
    %480 = vector.extract_strided_slice %462 {offsets = [0, 0], sizes = [8, 128], strides = [1, 1]} : vector<8x256xf32> to vector<8x128xf32>
    %c96 = arith.constant 96 : index
    %c0_135 = arith.constant 0 : index
    %481 = vector.load %arg8[%c96, %c0_135] : memref<256x128xf32, #tpu.memory_space<vmem>>, vector<8x128xf32>
    %482 = arith.addf %480, %481 : vector<8x128xf32>
    %483 = arith.negf %482 : vector<8x128xf32>
    %484 = math.exp %483 : vector<8x128xf32>
    %cst_136 = arith.constant 1.000000e+00 : f32
    %485 = vector.broadcast %cst_136 : f32 to vector<8x128xf32>
    %486 = arith.addf %485, %484 : vector<8x128xf32>
    %487 = arith.divf %485, %486 : vector<8x128xf32>
    %488 = vector.extract_strided_slice %482 {offsets = [0, 64], sizes = [8, 32], strides = [1, 1]} : vector<8x128xf32> to vector<8x32xf32>
    %489 = math.tanh %488 : vector<8x32xf32>
    %490 = vector.extract_strided_slice %487 {offsets = [0, 32], sizes = [8, 32], strides = [1, 1]} : vector<8x128xf32> to vector<8x32xf32>
    %491 = arith.mulf %490, %455 : vector<8x32xf32>
    %492 = vector.extract_strided_slice %487 {offsets = [0, 0], sizes = [8, 32], strides = [1, 1]} : vector<8x128xf32> to vector<8x32xf32>
    %493 = arith.mulf %492, %489 : vector<8x32xf32>
    %494 = arith.addf %491, %493 : vector<8x32xf32>
    %495 = vector.extract_strided_slice %487 {offsets = [0, 96], sizes = [8, 32], strides = [1, 1]} : vector<8x128xf32> to vector<8x32xf32>
    %496 = math.tanh %494 : vector<8x32xf32>
    %497 = arith.mulf %495, %496 : vector<8x32xf32>
    %c0_137 = arith.constant 0 : index
    %c0_138 = arith.constant 0 : index
    %498 = vector.load %arg9[%c0_137, %c0_138] : memref<8x64xf32, #tpu.memory_space<vmem>>, vector<8x32xf32>
    tpu.vector_store %arg9[%c0_137, %c0_138], %497 {strides = array<i32>} : memref<8x64xf32, #tpu.memory_space<vmem>>, vector<8x32xf32>,
    %c0_139 = arith.constant 0 : index
    %c32_140 = arith.constant 32 : index
    %499 = vector.load %arg9[%c0_139, %c32_140] : memref<8x64xf32, #tpu.memory_space<vmem>>, vector<8x32xf32>
    tpu.vector_store %arg9[%c0_139, %c32_140], %479 {strides = array<i32>} : memref<8x64xf32, #tpu.memory_space<vmem>>, vector<8x32xf32>,
    %c0_141 = arith.constant 0 : index
    %c0_142 = arith.constant 0 : index
    %500 = vector.load %arg9[%c0_141, %c0_142] : memref<8x64xf32, #tpu.memory_space<vmem>>, vector<8x64xf32>
    %cst_143 = arith.constant dense<0.000000e+00> : vector<8x256xf32>
    %501 = tpu.matmul %500, %7, %cst_143 {dimension_numbers = #tpu.dot_dimension_numbers<[1], [0], [0], [1], [0, 0, 1, 1], [], []>} : vector<8x64xf32>, vector<64x256xf32>, vector<8x256xf32> -> vector<8x256xf32>
    %502 = vector.extract_strided_slice %501 {offsets = [0, 128], sizes = [8, 128], strides = [1, 1]} : vector<8x256xf32> to vector<8x128xf32>
    %503 = arith.addf %502, %10 : vector<8x128xf32>
    %504 = arith.negf %503 : vector<8x128xf32>
    %505 = math.exp %504 : vector<8x128xf32>
    %cst_144 = arith.constant 1.000000e+00 : f32
    %506 = vector.broadcast %cst_144 : f32 to vector<8x128xf32>
    %507 = arith.addf %506, %505 : vector<8x128xf32>
    %508 = arith.divf %506, %507 : vector<8x128xf32>
    %509 = vector.extract_strided_slice %503 {offsets = [0, 64], sizes = [8, 32], strides = [1, 1]} : vector<8x128xf32> to vector<8x32xf32>
    %510 = math.tanh %509 : vector<8x32xf32>
    %511 = vector.extract_strided_slice %508 {offsets = [0, 32], sizes = [8, 32], strides = [1, 1]} : vector<8x128xf32> to vector<8x32xf32>
    %512 = arith.mulf %511, %476 : vector<8x32xf32>
    %513 = vector.extract_strided_slice %508 {offsets = [0, 0], sizes = [8, 32], strides = [1, 1]} : vector<8x128xf32> to vector<8x32xf32>
    %514 = arith.mulf %513, %510 : vector<8x32xf32>
    %515 = arith.addf %512, %514 : vector<8x32xf32>
    %516 = vector.extract_strided_slice %508 {offsets = [0, 96], sizes = [8, 32], strides = [1, 1]} : vector<8x128xf32> to vector<8x32xf32>
    %517 = math.tanh %515 : vector<8x32xf32>
    %518 = arith.mulf %516, %517 : vector<8x32xf32>
    %519 = vector.extract_strided_slice %501 {offsets = [0, 0], sizes = [8, 128], strides = [1, 1]} : vector<8x256xf32> to vector<8x128xf32>
    %c104 = arith.constant 104 : index
    %c0_145 = arith.constant 0 : index
    %520 = vector.load %arg8[%c104, %c0_145] : memref<256x128xf32, #tpu.memory_space<vmem>>, vector<8x128xf32>
    %521 = arith.addf %519, %520 : vector<8x128xf32>
    %522 = arith.negf %521 : vector<8x128xf32>
    %523 = math.exp %522 : vector<8x128xf32>
    %cst_146 = arith.constant 1.000000e+00 : f32
    %524 = vector.broadcast %cst_146 : f32 to vector<8x128xf32>
    %525 = arith.addf %524, %523 : vector<8x128xf32>
    %526 = arith.divf %524, %525 : vector<8x128xf32>
    %527 = vector.extract_strided_slice %521 {offsets = [0, 64], sizes = [8, 32], strides = [1, 1]} : vector<8x128xf32> to vector<8x32xf32>
    %528 = math.tanh %527 : vector<8x32xf32>
    %529 = vector.extract_strided_slice %526 {offsets = [0, 32], sizes = [8, 32], strides = [1, 1]} : vector<8x128xf32> to vector<8x32xf32>
    %530 = arith.mulf %529, %494 : vector<8x32xf32>
    %531 = vector.extract_strided_slice %526 {offsets = [0, 0], sizes = [8, 32], strides = [1, 1]} : vector<8x128xf32> to vector<8x32xf32>
    %532 = arith.mulf %531, %528 : vector<8x32xf32>
    %533 = arith.addf %530, %532 : vector<8x32xf32>
    %534 = vector.extract_strided_slice %526 {offsets = [0, 96], sizes = [8, 32], strides = [1, 1]} : vector<8x128xf32> to vector<8x32xf32>
    %535 = math.tanh %533 : vector<8x32xf32>
    %536 = arith.mulf %534, %535 : vector<8x32xf32>
    %c0_147 = arith.constant 0 : index
    %c0_148 = arith.constant 0 : index
    %537 = vector.load %arg9[%c0_147, %c0_148] : memref<8x64xf32, #tpu.memory_space<vmem>>, vector<8x32xf32>
    tpu.vector_store %arg9[%c0_147, %c0_148], %536 {strides = array<i32>} : memref<8x64xf32, #tpu.memory_space<vmem>>, vector<8x32xf32>,
    %c0_149 = arith.constant 0 : index
    %c32_150 = arith.constant 32 : index
    %538 = vector.load %arg9[%c0_149, %c32_150] : memref<8x64xf32, #tpu.memory_space<vmem>>, vector<8x32xf32>
    tpu.vector_store %arg9[%c0_149, %c32_150], %518 {strides = array<i32>} : memref<8x64xf32, #tpu.memory_space<vmem>>, vector<8x32xf32>,
    %c0_151 = arith.constant 0 : index
    %c0_152 = arith.constant 0 : index
    %539 = vector.load %arg9[%c0_151, %c0_152] : memref<8x64xf32, #tpu.memory_space<vmem>>, vector<8x64xf32>
    %cst_153 = arith.constant dense<0.000000e+00> : vector<8x256xf32>
    %540 = tpu.matmul %539, %7, %cst_153 {dimension_numbers = #tpu.dot_dimension_numbers<[1], [0], [0], [1], [0, 0, 1, 1], [], []>} : vector<8x64xf32>, vector<64x256xf32>, vector<8x256xf32> -> vector<8x256xf32>
    %541 = vector.extract_strided_slice %540 {offsets = [0, 128], sizes = [8, 128], strides = [1, 1]} : vector<8x256xf32> to vector<8x128xf32>
    %542 = arith.addf %541, %10 : vector<8x128xf32>
    %543 = arith.negf %542 : vector<8x128xf32>
    %544 = math.exp %543 : vector<8x128xf32>
    %cst_154 = arith.constant 1.000000e+00 : f32
    %545 = vector.broadcast %cst_154 : f32 to vector<8x128xf32>
    %546 = arith.addf %545, %544 : vector<8x128xf32>
    %547 = arith.divf %545, %546 : vector<8x128xf32>
    %548 = vector.extract_strided_slice %542 {offsets = [0, 64], sizes = [8, 32], strides = [1, 1]} : vector<8x128xf32> to vector<8x32xf32>
    %549 = math.tanh %548 : vector<8x32xf32>
    %550 = vector.extract_strided_slice %547 {offsets = [0, 32], sizes = [8, 32], strides = [1, 1]} : vector<8x128xf32> to vector<8x32xf32>
    %551 = arith.mulf %550, %515 : vector<8x32xf32>
    %552 = vector.extract_strided_slice %547 {offsets = [0, 0], sizes = [8, 32], strides = [1, 1]} : vector<8x128xf32> to vector<8x32xf32>
    %553 = arith.mulf %552, %549 : vector<8x32xf32>
    %554 = arith.addf %551, %553 : vector<8x32xf32>
    %555 = vector.extract_strided_slice %547 {offsets = [0, 96], sizes = [8, 32], strides = [1, 1]} : vector<8x128xf32> to vector<8x32xf32>
    %556 = math.tanh %554 : vector<8x32xf32>
    %557 = arith.mulf %555, %556 : vector<8x32xf32>
    %558 = vector.extract_strided_slice %540 {offsets = [0, 0], sizes = [8, 128], strides = [1, 1]} : vector<8x256xf32> to vector<8x128xf32>
    %c112 = arith.constant 112 : index
    %c0_155 = arith.constant 0 : index
    %559 = vector.load %arg8[%c112, %c0_155] : memref<256x128xf32, #tpu.memory_space<vmem>>, vector<8x128xf32>
    %560 = arith.addf %558, %559 : vector<8x128xf32>
    %561 = arith.negf %560 : vector<8x128xf32>
    %562 = math.exp %561 : vector<8x128xf32>
    %cst_156 = arith.constant 1.000000e+00 : f32
    %563 = vector.broadcast %cst_156 : f32 to vector<8x128xf32>
    %564 = arith.addf %563, %562 : vector<8x128xf32>
    %565 = arith.divf %563, %564 : vector<8x128xf32>
    %566 = vector.extract_strided_slice %560 {offsets = [0, 64], sizes = [8, 32], strides = [1, 1]} : vector<8x128xf32> to vector<8x32xf32>
    %567 = math.tanh %566 : vector<8x32xf32>
    %568 = vector.extract_strided_slice %565 {offsets = [0, 32], sizes = [8, 32], strides = [1, 1]} : vector<8x128xf32> to vector<8x32xf32>
    %569 = arith.mulf %568, %533 : vector<8x32xf32>
    %570 = vector.extract_strided_slice %565 {offsets = [0, 0], sizes = [8, 32], strides = [1, 1]} : vector<8x128xf32> to vector<8x32xf32>
    %571 = arith.mulf %570, %567 : vector<8x32xf32>
    %572 = arith.addf %569, %571 : vector<8x32xf32>
    %573 = vector.extract_strided_slice %565 {offsets = [0, 96], sizes = [8, 32], strides = [1, 1]} : vector<8x128xf32> to vector<8x32xf32>
    %574 = math.tanh %572 : vector<8x32xf32>
    %575 = arith.mulf %573, %574 : vector<8x32xf32>
    %c0_157 = arith.constant 0 : index
    %c0_158 = arith.constant 0 : index
    %576 = vector.load %arg9[%c0_157, %c0_158] : memref<8x64xf32, #tpu.memory_space<vmem>>, vector<8x32xf32>
    tpu.vector_store %arg9[%c0_157, %c0_158], %575 {strides = array<i32>} : memref<8x64xf32, #tpu.memory_space<vmem>>, vector<8x32xf32>,
    %c0_159 = arith.constant 0 : index
    %c32_160 = arith.constant 32 : index
    %577 = vector.load %arg9[%c0_159, %c32_160] : memref<8x64xf32, #tpu.memory_space<vmem>>, vector<8x32xf32>
    tpu.vector_store %arg9[%c0_159, %c32_160], %557 {strides = array<i32>} : memref<8x64xf32, #tpu.memory_space<vmem>>, vector<8x32xf32>,
    %c0_161 = arith.constant 0 : index
    %c0_162 = arith.constant 0 : index
    %578 = vector.load %arg9[%c0_161, %c0_162] : memref<8x64xf32, #tpu.memory_space<vmem>>, vector<8x64xf32>
    %cst_163 = arith.constant dense<0.000000e+00> : vector<8x256xf32>
    %579 = tpu.matmul %578, %7, %cst_163 {dimension_numbers = #tpu.dot_dimension_numbers<[1], [0], [0], [1], [0, 0, 1, 1], [], []>} : vector<8x64xf32>, vector<64x256xf32>, vector<8x256xf32> -> vector<8x256xf32>
    %580 = vector.extract_strided_slice %579 {offsets = [0, 128], sizes = [8, 128], strides = [1, 1]} : vector<8x256xf32> to vector<8x128xf32>
    %581 = arith.addf %580, %10 : vector<8x128xf32>
    %582 = arith.negf %581 : vector<8x128xf32>
    %583 = math.exp %582 : vector<8x128xf32>
    %cst_164 = arith.constant 1.000000e+00 : f32
    %584 = vector.broadcast %cst_164 : f32 to vector<8x128xf32>
    %585 = arith.addf %584, %583 : vector<8x128xf32>
    %586 = arith.divf %584, %585 : vector<8x128xf32>
    %587 = vector.extract_strided_slice %581 {offsets = [0, 64], sizes = [8, 32], strides = [1, 1]} : vector<8x128xf32> to vector<8x32xf32>
    %588 = math.tanh %587 : vector<8x32xf32>
    %589 = vector.extract_strided_slice %586 {offsets = [0, 32], sizes = [8, 32], strides = [1, 1]} : vector<8x128xf32> to vector<8x32xf32>
    %590 = arith.mulf %589, %554 : vector<8x32xf32>
    %591 = vector.extract_strided_slice %586 {offsets = [0, 0], sizes = [8, 32], strides = [1, 1]} : vector<8x128xf32> to vector<8x32xf32>
    %592 = arith.mulf %591, %588 : vector<8x32xf32>
    %593 = arith.addf %590, %592 : vector<8x32xf32>
    %594 = vector.extract_strided_slice %586 {offsets = [0, 96], sizes = [8, 32], strides = [1, 1]} : vector<8x128xf32> to vector<8x32xf32>
    %595 = math.tanh %593 : vector<8x32xf32>
    %596 = arith.mulf %594, %595 : vector<8x32xf32>
    %597 = vector.extract_strided_slice %579 {offsets = [0, 0], sizes = [8, 128], strides = [1, 1]} : vector<8x256xf32> to vector<8x128xf32>
    %c120 = arith.constant 120 : index
    %c0_165 = arith.constant 0 : index
    %598 = vector.load %arg8[%c120, %c0_165] : memref<256x128xf32, #tpu.memory_space<vmem>>, vector<8x128xf32>
    %599 = arith.addf %597, %598 : vector<8x128xf32>
    %600 = arith.negf %599 : vector<8x128xf32>
    %601 = math.exp %600 : vector<8x128xf32>
    %cst_166 = arith.constant 1.000000e+00 : f32
    %602 = vector.broadcast %cst_166 : f32 to vector<8x128xf32>
    %603 = arith.addf %602, %601 : vector<8x128xf32>
    %604 = arith.divf %602, %603 : vector<8x128xf32>
    %605 = vector.extract_strided_slice %599 {offsets = [0, 64], sizes = [8, 32], strides = [1, 1]} : vector<8x128xf32> to vector<8x32xf32>
    %606 = math.tanh %605 : vector<8x32xf32>
    %607 = vector.extract_strided_slice %604 {offsets = [0, 32], sizes = [8, 32], strides = [1, 1]} : vector<8x128xf32> to vector<8x32xf32>
    %608 = arith.mulf %607, %572 : vector<8x32xf32>
    %609 = vector.extract_strided_slice %604 {offsets = [0, 0], sizes = [8, 32], strides = [1, 1]} : vector<8x128xf32> to vector<8x32xf32>
    %610 = arith.mulf %609, %606 : vector<8x32xf32>
    %611 = arith.addf %608, %610 : vector<8x32xf32>
    %612 = vector.extract_strided_slice %604 {offsets = [0, 96], sizes = [8, 32], strides = [1, 1]} : vector<8x128xf32> to vector<8x32xf32>
    %613 = math.tanh %611 : vector<8x32xf32>
    %614 = arith.mulf %612, %613 : vector<8x32xf32>
    %c0_167 = arith.constant 0 : index
    %c0_168 = arith.constant 0 : index
    %615 = vector.load %arg9[%c0_167, %c0_168] : memref<8x64xf32, #tpu.memory_space<vmem>>, vector<8x32xf32>
    tpu.vector_store %arg9[%c0_167, %c0_168], %614 {strides = array<i32>} : memref<8x64xf32, #tpu.memory_space<vmem>>, vector<8x32xf32>,
    %c0_169 = arith.constant 0 : index
    %c32_170 = arith.constant 32 : index
    %616 = vector.load %arg9[%c0_169, %c32_170] : memref<8x64xf32, #tpu.memory_space<vmem>>, vector<8x32xf32>
    tpu.vector_store %arg9[%c0_169, %c32_170], %596 {strides = array<i32>} : memref<8x64xf32, #tpu.memory_space<vmem>>, vector<8x32xf32>,
    %c0_171 = arith.constant 0 : index
    %c0_172 = arith.constant 0 : index
    %617 = vector.load %arg9[%c0_171, %c0_172] : memref<8x64xf32, #tpu.memory_space<vmem>>, vector<8x64xf32>
    %cst_173 = arith.constant dense<0.000000e+00> : vector<8x256xf32>
    %618 = tpu.matmul %617, %7, %cst_173 {dimension_numbers = #tpu.dot_dimension_numbers<[1], [0], [0], [1], [0, 0, 1, 1], [], []>} : vector<8x64xf32>, vector<64x256xf32>, vector<8x256xf32> -> vector<8x256xf32>
    %619 = vector.extract_strided_slice %618 {offsets = [0, 128], sizes = [8, 128], strides = [1, 1]} : vector<8x256xf32> to vector<8x128xf32>
    %620 = arith.addf %619, %10 : vector<8x128xf32>
    %621 = arith.negf %620 : vector<8x128xf32>
    %622 = math.exp %621 : vector<8x128xf32>
    %cst_174 = arith.constant 1.000000e+00 : f32
    %623 = vector.broadcast %cst_174 : f32 to vector<8x128xf32>
    %624 = arith.addf %623, %622 : vector<8x128xf32>
    %625 = arith.divf %623, %624 : vector<8x128xf32>
    %626 = vector.extract_strided_slice %620 {offsets = [0, 64], sizes = [8, 32], strides = [1, 1]} : vector<8x128xf32> to vector<8x32xf32>
    %627 = math.tanh %626 : vector<8x32xf32>
    %628 = vector.extract_strided_slice %625 {offsets = [0, 32], sizes = [8, 32], strides = [1, 1]} : vector<8x128xf32> to vector<8x32xf32>
    %629 = arith.mulf %628, %593 : vector<8x32xf32>
    %630 = vector.extract_strided_slice %625 {offsets = [0, 0], sizes = [8, 32], strides = [1, 1]} : vector<8x128xf32> to vector<8x32xf32>
    %631 = arith.mulf %630, %627 : vector<8x32xf32>
    %632 = arith.addf %629, %631 : vector<8x32xf32>
    %633 = vector.extract_strided_slice %625 {offsets = [0, 96], sizes = [8, 32], strides = [1, 1]} : vector<8x128xf32> to vector<8x32xf32>
    %634 = math.tanh %632 : vector<8x32xf32>
    %635 = arith.mulf %633, %634 : vector<8x32xf32>
    %636 = vector.extract_strided_slice %618 {offsets = [0, 0], sizes = [8, 128], strides = [1, 1]} : vector<8x256xf32> to vector<8x128xf32>
    %c128 = arith.constant 128 : index
    %c0_175 = arith.constant 0 : index
    %637 = vector.load %arg8[%c128, %c0_175] : memref<256x128xf32, #tpu.memory_space<vmem>>, vector<8x128xf32>
    %638 = arith.addf %636, %637 : vector<8x128xf32>
    %639 = arith.negf %638 : vector<8x128xf32>
    %640 = math.exp %639 : vector<8x128xf32>
    %cst_176 = arith.constant 1.000000e+00 : f32
    %641 = vector.broadcast %cst_176 : f32 to vector<8x128xf32>
    %642 = arith.addf %641, %640 : vector<8x128xf32>
    %643 = arith.divf %641, %642 : vector<8x128xf32>
    %644 = vector.extract_strided_slice %638 {offsets = [0, 64], sizes = [8, 32], strides = [1, 1]} : vector<8x128xf32> to vector<8x32xf32>
    %645 = math.tanh %644 : vector<8x32xf32>
    %646 = vector.extract_strided_slice %643 {offsets = [0, 32], sizes = [8, 32], strides = [1, 1]} : vector<8x128xf32> to vector<8x32xf32>
    %647 = arith.mulf %646, %611 : vector<8x32xf32>
    %648 = vector.extract_strided_slice %643 {offsets = [0, 0], sizes = [8, 32], strides = [1, 1]} : vector<8x128xf32> to vector<8x32xf32>
    %649 = arith.mulf %648, %645 : vector<8x32xf32>
    %650 = arith.addf %647, %649 : vector<8x32xf32>
    %651 = vector.extract_strided_slice %643 {offsets = [0, 96], sizes = [8, 32], strides = [1, 1]} : vector<8x128xf32> to vector<8x32xf32>
    %652 = math.tanh %650 : vector<8x32xf32>
    %653 = arith.mulf %651, %652 : vector<8x32xf32>
    %c0_177 = arith.constant 0 : index
    %c0_178 = arith.constant 0 : index
    %654 = vector.load %arg9[%c0_177, %c0_178] : memref<8x64xf32, #tpu.memory_space<vmem>>, vector<8x32xf32>
    tpu.vector_store %arg9[%c0_177, %c0_178], %653 {strides = array<i32>} : memref<8x64xf32, #tpu.memory_space<vmem>>, vector<8x32xf32>,
    %c0_179 = arith.constant 0 : index
    %c32_180 = arith.constant 32 : index
    %655 = vector.load %arg9[%c0_179, %c32_180] : memref<8x64xf32, #tpu.memory_space<vmem>>, vector<8x32xf32>
    tpu.vector_store %arg9[%c0_179, %c32_180], %635 {strides = array<i32>} : memref<8x64xf32, #tpu.memory_space<vmem>>, vector<8x32xf32>,
    %c0_181 = arith.constant 0 : index
    %c0_182 = arith.constant 0 : index
    %656 = vector.load %arg9[%c0_181, %c0_182] : memref<8x64xf32, #tpu.memory_space<vmem>>, vector<8x64xf32>
    %cst_183 = arith.constant dense<0.000000e+00> : vector<8x256xf32>
    %657 = tpu.matmul %656, %7, %cst_183 {dimension_numbers = #tpu.dot_dimension_numbers<[1], [0], [0], [1], [0, 0, 1, 1], [], []>} : vector<8x64xf32>, vector<64x256xf32>, vector<8x256xf32> -> vector<8x256xf32>
    %658 = vector.extract_strided_slice %657 {offsets = [0, 128], sizes = [8, 128], strides = [1, 1]} : vector<8x256xf32> to vector<8x128xf32>
    %659 = arith.addf %658, %10 : vector<8x128xf32>
    %660 = arith.negf %659 : vector<8x128xf32>
    %661 = math.exp %660 : vector<8x128xf32>
    %cst_184 = arith.constant 1.000000e+00 : f32
    %662 = vector.broadcast %cst_184 : f32 to vector<8x128xf32>
    %663 = arith.addf %662, %661 : vector<8x128xf32>
    %664 = arith.divf %662, %663 : vector<8x128xf32>
    %665 = vector.extract_strided_slice %659 {offsets = [0, 64], sizes = [8, 32], strides = [1, 1]} : vector<8x128xf32> to vector<8x32xf32>
    %666 = math.tanh %665 : vector<8x32xf32>
    %667 = vector.extract_strided_slice %664 {offsets = [0, 32], sizes = [8, 32], strides = [1, 1]} : vector<8x128xf32> to vector<8x32xf32>
    %668 = arith.mulf %667, %632 : vector<8x32xf32>
    %669 = vector.extract_strided_slice %664 {offsets = [0, 0], sizes = [8, 32], strides = [1, 1]} : vector<8x128xf32> to vector<8x32xf32>
    %670 = arith.mulf %669, %666 : vector<8x32xf32>
    %671 = arith.addf %668, %670 : vector<8x32xf32>
    %672 = vector.extract_strided_slice %664 {offsets = [0, 96], sizes = [8, 32], strides = [1, 1]} : vector<8x128xf32> to vector<8x32xf32>
    %673 = math.tanh %671 : vector<8x32xf32>
    %674 = arith.mulf %672, %673 : vector<8x32xf32>
    %675 = vector.extract_strided_slice %657 {offsets = [0, 0], sizes = [8, 128], strides = [1, 1]} : vector<8x256xf32> to vector<8x128xf32>
    %c136 = arith.constant 136 : index
    %c0_185 = arith.constant 0 : index
    %676 = vector.load %arg8[%c136, %c0_185] : memref<256x128xf32, #tpu.memory_space<vmem>>, vector<8x128xf32>
    %677 = arith.addf %675, %676 : vector<8x128xf32>
    %678 = arith.negf %677 : vector<8x128xf32>
    %679 = math.exp %678 : vector<8x128xf32>
    %cst_186 = arith.constant 1.000000e+00 : f32
    %680 = vector.broadcast %cst_186 : f32 to vector<8x128xf32>
    %681 = arith.addf %680, %679 : vector<8x128xf32>
    %682 = arith.divf %680, %681 : vector<8x128xf32>
    %683 = vector.extract_strided_slice %677 {offsets = [0, 64], sizes = [8, 32], strides = [1, 1]} : vector<8x128xf32> to vector<8x32xf32>
    %684 = math.tanh %683 : vector<8x32xf32>
    %685 = vector.extract_strided_slice %682 {offsets = [0, 32], sizes = [8, 32], strides = [1, 1]} : vector<8x128xf32> to vector<8x32xf32>
    %686 = arith.mulf %685, %650 : vector<8x32xf32>
    %687 = vector.extract_strided_slice %682 {offsets = [0, 0], sizes = [8, 32], strides = [1, 1]} : vector<8x128xf32> to vector<8x32xf32>
    %688 = arith.mulf %687, %684 : vector<8x32xf32>
    %689 = arith.addf %686, %688 : vector<8x32xf32>
    %690 = vector.extract_strided_slice %682 {offsets = [0, 96], sizes = [8, 32], strides = [1, 1]} : vector<8x128xf32> to vector<8x32xf32>
    %691 = math.tanh %689 : vector<8x32xf32>
    %692 = arith.mulf %690, %691 : vector<8x32xf32>
    %c0_187 = arith.constant 0 : index
    %c0_188 = arith.constant 0 : index
    %693 = vector.load %arg9[%c0_187, %c0_188] : memref<8x64xf32, #tpu.memory_space<vmem>>, vector<8x32xf32>
    tpu.vector_store %arg9[%c0_187, %c0_188], %692 {strides = array<i32>} : memref<8x64xf32, #tpu.memory_space<vmem>>, vector<8x32xf32>,
    %c0_189 = arith.constant 0 : index
    %c32_190 = arith.constant 32 : index
    %694 = vector.load %arg9[%c0_189, %c32_190] : memref<8x64xf32, #tpu.memory_space<vmem>>, vector<8x32xf32>
    tpu.vector_store %arg9[%c0_189, %c32_190], %674 {strides = array<i32>} : memref<8x64xf32, #tpu.memory_space<vmem>>, vector<8x32xf32>,
    %c0_191 = arith.constant 0 : index
    %c0_192 = arith.constant 0 : index
    %695 = vector.load %arg9[%c0_191, %c0_192] : memref<8x64xf32, #tpu.memory_space<vmem>>, vector<8x64xf32>
    %cst_193 = arith.constant dense<0.000000e+00> : vector<8x256xf32>
    %696 = tpu.matmul %695, %7, %cst_193 {dimension_numbers = #tpu.dot_dimension_numbers<[1], [0], [0], [1], [0, 0, 1, 1], [], []>} : vector<8x64xf32>, vector<64x256xf32>, vector<8x256xf32> -> vector<8x256xf32>
    %697 = vector.extract_strided_slice %696 {offsets = [0, 128], sizes = [8, 128], strides = [1, 1]} : vector<8x256xf32> to vector<8x128xf32>
    %698 = arith.addf %697, %10 : vector<8x128xf32>
    %699 = arith.negf %698 : vector<8x128xf32>
    %700 = math.exp %699 : vector<8x128xf32>
    %cst_194 = arith.constant 1.000000e+00 : f32
    %701 = vector.broadcast %cst_194 : f32 to vector<8x128xf32>
    %702 = arith.addf %701, %700 : vector<8x128xf32>
    %703 = arith.divf %701, %702 : vector<8x128xf32>
    %704 = vector.extract_strided_slice %698 {offsets = [0, 64], sizes = [8, 32], strides = [1, 1]} : vector<8x128xf32> to vector<8x32xf32>
    %705 = math.tanh %704 : vector<8x32xf32>
    %706 = vector.extract_strided_slice %703 {offsets = [0, 32], sizes = [8, 32], strides = [1, 1]} : vector<8x128xf32> to vector<8x32xf32>
    %707 = arith.mulf %706, %671 : vector<8x32xf32>
    %708 = vector.extract_strided_slice %703 {offsets = [0, 0], sizes = [8, 32], strides = [1, 1]} : vector<8x128xf32> to vector<8x32xf32>
    %709 = arith.mulf %708, %705 : vector<8x32xf32>
    %710 = arith.addf %707, %709 : vector<8x32xf32>
    %711 = vector.extract_strided_slice %703 {offsets = [0, 96], sizes = [8, 32], strides = [1, 1]} : vector<8x128xf32> to vector<8x32xf32>
    %712 = math.tanh %710 : vector<8x32xf32>
    %713 = arith.mulf %711, %712 : vector<8x32xf32>
    %714 = vector.extract_strided_slice %696 {offsets = [0, 0], sizes = [8, 128], strides = [1, 1]} : vector<8x256xf32> to vector<8x128xf32>
    %c144 = arith.constant 144 : index
    %c0_195 = arith.constant 0 : index
    %715 = vector.load %arg8[%c144, %c0_195] : memref<256x128xf32, #tpu.memory_space<vmem>>, vector<8x128xf32>
    %716 = arith.addf %714, %715 : vector<8x128xf32>
    %717 = arith.negf %716 : vector<8x128xf32>
    %718 = math.exp %717 : vector<8x128xf32>
    %cst_196 = arith.constant 1.000000e+00 : f32
    %719 = vector.broadcast %cst_196 : f32 to vector<8x128xf32>
    %720 = arith.addf %719, %718 : vector<8x128xf32>
    %721 = arith.divf %719, %720 : vector<8x128xf32>
    %722 = vector.extract_strided_slice %716 {offsets = [0, 64], sizes = [8, 32], strides = [1, 1]} : vector<8x128xf32> to vector<8x32xf32>
    %723 = math.tanh %722 : vector<8x32xf32>
    %724 = vector.extract_strided_slice %721 {offsets = [0, 32], sizes = [8, 32], strides = [1, 1]} : vector<8x128xf32> to vector<8x32xf32>
    %725 = arith.mulf %724, %689 : vector<8x32xf32>
    %726 = vector.extract_strided_slice %721 {offsets = [0, 0], sizes = [8, 32], strides = [1, 1]} : vector<8x128xf32> to vector<8x32xf32>
    %727 = arith.mulf %726, %723 : vector<8x32xf32>
    %728 = arith.addf %725, %727 : vector<8x32xf32>
    %729 = vector.extract_strided_slice %721 {offsets = [0, 96], sizes = [8, 32], strides = [1, 1]} : vector<8x128xf32> to vector<8x32xf32>
    %730 = math.tanh %728 : vector<8x32xf32>
    %731 = arith.mulf %729, %730 : vector<8x32xf32>
    %c0_197 = arith.constant 0 : index
    %c0_198 = arith.constant 0 : index
    %732 = vector.load %arg9[%c0_197, %c0_198] : memref<8x64xf32, #tpu.memory_space<vmem>>, vector<8x32xf32>
    tpu.vector_store %arg9[%c0_197, %c0_198], %731 {strides = array<i32>} : memref<8x64xf32, #tpu.memory_space<vmem>>, vector<8x32xf32>,
    %c0_199 = arith.constant 0 : index
    %c32_200 = arith.constant 32 : index
    %733 = vector.load %arg9[%c0_199, %c32_200] : memref<8x64xf32, #tpu.memory_space<vmem>>, vector<8x32xf32>
    tpu.vector_store %arg9[%c0_199, %c32_200], %713 {strides = array<i32>} : memref<8x64xf32, #tpu.memory_space<vmem>>, vector<8x32xf32>,
    %c0_201 = arith.constant 0 : index
    %c0_202 = arith.constant 0 : index
    %734 = vector.load %arg9[%c0_201, %c0_202] : memref<8x64xf32, #tpu.memory_space<vmem>>, vector<8x64xf32>
    %cst_203 = arith.constant dense<0.000000e+00> : vector<8x256xf32>
    %735 = tpu.matmul %734, %7, %cst_203 {dimension_numbers = #tpu.dot_dimension_numbers<[1], [0], [0], [1], [0, 0, 1, 1], [], []>} : vector<8x64xf32>, vector<64x256xf32>, vector<8x256xf32> -> vector<8x256xf32>
    %736 = vector.extract_strided_slice %735 {offsets = [0, 128], sizes = [8, 128], strides = [1, 1]} : vector<8x256xf32> to vector<8x128xf32>
    %737 = arith.addf %736, %10 : vector<8x128xf32>
    %738 = arith.negf %737 : vector<8x128xf32>
    %739 = math.exp %738 : vector<8x128xf32>
    %cst_204 = arith.constant 1.000000e+00 : f32
    %740 = vector.broadcast %cst_204 : f32 to vector<8x128xf32>
    %741 = arith.addf %740, %739 : vector<8x128xf32>
    %742 = arith.divf %740, %741 : vector<8x128xf32>
    %743 = vector.extract_strided_slice %737 {offsets = [0, 64], sizes = [8, 32], strides = [1, 1]} : vector<8x128xf32> to vector<8x32xf32>
    %744 = math.tanh %743 : vector<8x32xf32>
    %745 = vector.extract_strided_slice %742 {offsets = [0, 32], sizes = [8, 32], strides = [1, 1]} : vector<8x128xf32> to vector<8x32xf32>
    %746 = arith.mulf %745, %710 : vector<8x32xf32>
    %747 = vector.extract_strided_slice %742 {offsets = [0, 0], sizes = [8, 32], strides = [1, 1]} : vector<8x128xf32> to vector<8x32xf32>
    %748 = arith.mulf %747, %744 : vector<8x32xf32>
    %749 = arith.addf %746, %748 : vector<8x32xf32>
    %750 = vector.extract_strided_slice %742 {offsets = [0, 96], sizes = [8, 32], strides = [1, 1]} : vector<8x128xf32> to vector<8x32xf32>
    %751 = math.tanh %749 : vector<8x32xf32>
    %752 = arith.mulf %750, %751 : vector<8x32xf32>
    %753 = vector.extract_strided_slice %735 {offsets = [0, 0], sizes = [8, 128], strides = [1, 1]} : vector<8x256xf32> to vector<8x128xf32>
    %c152 = arith.constant 152 : index
    %c0_205 = arith.constant 0 : index
    %754 = vector.load %arg8[%c152, %c0_205] : memref<256x128xf32, #tpu.memory_space<vmem>>, vector<8x128xf32>
    %755 = arith.addf %753, %754 : vector<8x128xf32>
    %756 = arith.negf %755 : vector<8x128xf32>
    %757 = math.exp %756 : vector<8x128xf32>
    %cst_206 = arith.constant 1.000000e+00 : f32
    %758 = vector.broadcast %cst_206 : f32 to vector<8x128xf32>
    %759 = arith.addf %758, %757 : vector<8x128xf32>
    %760 = arith.divf %758, %759 : vector<8x128xf32>
    %761 = vector.extract_strided_slice %755 {offsets = [0, 64], sizes = [8, 32], strides = [1, 1]} : vector<8x128xf32> to vector<8x32xf32>
    %762 = math.tanh %761 : vector<8x32xf32>
    %763 = vector.extract_strided_slice %760 {offsets = [0, 32], sizes = [8, 32], strides = [1, 1]} : vector<8x128xf32> to vector<8x32xf32>
    %764 = arith.mulf %763, %728 : vector<8x32xf32>
    %765 = vector.extract_strided_slice %760 {offsets = [0, 0], sizes = [8, 32], strides = [1, 1]} : vector<8x128xf32> to vector<8x32xf32>
    %766 = arith.mulf %765, %762 : vector<8x32xf32>
    %767 = arith.addf %764, %766 : vector<8x32xf32>
    %768 = vector.extract_strided_slice %760 {offsets = [0, 96], sizes = [8, 32], strides = [1, 1]} : vector<8x128xf32> to vector<8x32xf32>
    %769 = math.tanh %767 : vector<8x32xf32>
    %770 = arith.mulf %768, %769 : vector<8x32xf32>
    %c0_207 = arith.constant 0 : index
    %c0_208 = arith.constant 0 : index
    %771 = vector.load %arg9[%c0_207, %c0_208] : memref<8x64xf32, #tpu.memory_space<vmem>>, vector<8x32xf32>
    tpu.vector_store %arg9[%c0_207, %c0_208], %770 {strides = array<i32>} : memref<8x64xf32, #tpu.memory_space<vmem>>, vector<8x32xf32>,
    %c0_209 = arith.constant 0 : index
    %c32_210 = arith.constant 32 : index
    %772 = vector.load %arg9[%c0_209, %c32_210] : memref<8x64xf32, #tpu.memory_space<vmem>>, vector<8x32xf32>
    tpu.vector_store %arg9[%c0_209, %c32_210], %752 {strides = array<i32>} : memref<8x64xf32, #tpu.memory_space<vmem>>, vector<8x32xf32>,
    %c0_211 = arith.constant 0 : index
    %c0_212 = arith.constant 0 : index
    %773 = vector.load %arg9[%c0_211, %c0_212] : memref<8x64xf32, #tpu.memory_space<vmem>>, vector<8x64xf32>
    %cst_213 = arith.constant dense<0.000000e+00> : vector<8x256xf32>
    %774 = tpu.matmul %773, %7, %cst_213 {dimension_numbers = #tpu.dot_dimension_numbers<[1], [0], [0], [1], [0, 0, 1, 1], [], []>} : vector<8x64xf32>, vector<64x256xf32>, vector<8x256xf32> -> vector<8x256xf32>
    %775 = vector.extract_strided_slice %774 {offsets = [0, 128], sizes = [8, 128], strides = [1, 1]} : vector<8x256xf32> to vector<8x128xf32>
    %776 = arith.addf %775, %10 : vector<8x128xf32>
    %777 = arith.negf %776 : vector<8x128xf32>
    %778 = math.exp %777 : vector<8x128xf32>
    %cst_214 = arith.constant 1.000000e+00 : f32
    %779 = vector.broadcast %cst_214 : f32 to vector<8x128xf32>
    %780 = arith.addf %779, %778 : vector<8x128xf32>
    %781 = arith.divf %779, %780 : vector<8x128xf32>
    %782 = vector.extract_strided_slice %776 {offsets = [0, 64], sizes = [8, 32], strides = [1, 1]} : vector<8x128xf32> to vector<8x32xf32>
    %783 = math.tanh %782 : vector<8x32xf32>
    %784 = vector.extract_strided_slice %781 {offsets = [0, 32], sizes = [8, 32], strides = [1, 1]} : vector<8x128xf32> to vector<8x32xf32>
    %785 = arith.mulf %784, %749 : vector<8x32xf32>
    %786 = vector.extract_strided_slice %781 {offsets = [0, 0], sizes = [8, 32], strides = [1, 1]} : vector<8x128xf32> to vector<8x32xf32>
    %787 = arith.mulf %786, %783 : vector<8x32xf32>
    %788 = arith.addf %785, %787 : vector<8x32xf32>
    %789 = vector.extract_strided_slice %781 {offsets = [0, 96], sizes = [8, 32], strides = [1, 1]} : vector<8x128xf32> to vector<8x32xf32>
    %790 = math.tanh %788 : vector<8x32xf32>
    %791 = arith.mulf %789, %790 : vector<8x32xf32>
    %792 = vector.extract_strided_slice %774 {offsets = [0, 0], sizes = [8, 128], strides = [1, 1]} : vector<8x256xf32> to vector<8x128xf32>
    %c160 = arith.constant 160 : index
    %c0_215 = arith.constant 0 : index
    %793 = vector.load %arg8[%c160, %c0_215] : memref<256x128xf32, #tpu.memory_space<vmem>>, vector<8x128xf32>
    %794 = arith.addf %792, %793 : vector<8x128xf32>
    %795 = arith.negf %794 : vector<8x128xf32>
    %796 = math.exp %795 : vector<8x128xf32>
    %cst_216 = arith.constant 1.000000e+00 : f32
    %797 = vector.broadcast %cst_216 : f32 to vector<8x128xf32>
    %798 = arith.addf %797, %796 : vector<8x128xf32>
    %799 = arith.divf %797, %798 : vector<8x128xf32>
    %800 = vector.extract_strided_slice %794 {offsets = [0, 64], sizes = [8, 32], strides = [1, 1]} : vector<8x128xf32> to vector<8x32xf32>
    %801 = math.tanh %800 : vector<8x32xf32>
    %802 = vector.extract_strided_slice %799 {offsets = [0, 32], sizes = [8, 32], strides = [1, 1]} : vector<8x128xf32> to vector<8x32xf32>
    %803 = arith.mulf %802, %767 : vector<8x32xf32>
    %804 = vector.extract_strided_slice %799 {offsets = [0, 0], sizes = [8, 32], strides = [1, 1]} : vector<8x128xf32> to vector<8x32xf32>
    %805 = arith.mulf %804, %801 : vector<8x32xf32>
    %806 = arith.addf %803, %805 : vector<8x32xf32>
    %807 = vector.extract_strided_slice %799 {offsets = [0, 96], sizes = [8, 32], strides = [1, 1]} : vector<8x128xf32> to vector<8x32xf32>
    %808 = math.tanh %806 : vector<8x32xf32>
    %809 = arith.mulf %807, %808 : vector<8x32xf32>
    %c0_217 = arith.constant 0 : index
    %c0_218 = arith.constant 0 : index
    %810 = vector.load %arg9[%c0_217, %c0_218] : memref<8x64xf32, #tpu.memory_space<vmem>>, vector<8x32xf32>
    tpu.vector_store %arg9[%c0_217, %c0_218], %809 {strides = array<i32>} : memref<8x64xf32, #tpu.memory_space<vmem>>, vector<8x32xf32>,
    %c0_219 = arith.constant 0 : index
    %c32_220 = arith.constant 32 : index
    %811 = vector.load %arg9[%c0_219, %c32_220] : memref<8x64xf32, #tpu.memory_space<vmem>>, vector<8x32xf32>
    tpu.vector_store %arg9[%c0_219, %c32_220], %791 {strides = array<i32>} : memref<8x64xf32, #tpu.memory_space<vmem>>, vector<8x32xf32>,
    %c0_221 = arith.constant 0 : index
    %c0_222 = arith.constant 0 : index
    %812 = vector.load %arg9[%c0_221, %c0_222] : memref<8x64xf32, #tpu.memory_space<vmem>>, vector<8x64xf32>
    %cst_223 = arith.constant dense<0.000000e+00> : vector<8x256xf32>
    %813 = tpu.matmul %812, %7, %cst_223 {dimension_numbers = #tpu.dot_dimension_numbers<[1], [0], [0], [1], [0, 0, 1, 1], [], []>} : vector<8x64xf32>, vector<64x256xf32>, vector<8x256xf32> -> vector<8x256xf32>
    %814 = vector.extract_strided_slice %813 {offsets = [0, 128], sizes = [8, 128], strides = [1, 1]} : vector<8x256xf32> to vector<8x128xf32>
    %815 = arith.addf %814, %10 : vector<8x128xf32>
    %816 = arith.negf %815 : vector<8x128xf32>
    %817 = math.exp %816 : vector<8x128xf32>
    %cst_224 = arith.constant 1.000000e+00 : f32
    %818 = vector.broadcast %cst_224 : f32 to vector<8x128xf32>
    %819 = arith.addf %818, %817 : vector<8x128xf32>
    %820 = arith.divf %818, %819 : vector<8x128xf32>
    %821 = vector.extract_strided_slice %815 {offsets = [0, 64], sizes = [8, 32], strides = [1, 1]} : vector<8x128xf32> to vector<8x32xf32>
    %822 = math.tanh %821 : vector<8x32xf32>
    %823 = vector.extract_strided_slice %820 {offsets = [0, 32], sizes = [8, 32], strides = [1, 1]} : vector<8x128xf32> to vector<8x32xf32>
    %824 = arith.mulf %823, %788 : vector<8x32xf32>
    %825 = vector.extract_strided_slice %820 {offsets = [0, 0], sizes = [8, 32], strides = [1, 1]} : vector<8x128xf32> to vector<8x32xf32>
    %826 = arith.mulf %825, %822 : vector<8x32xf32>
    %827 = arith.addf %824, %826 : vector<8x32xf32>
    %828 = vector.extract_strided_slice %820 {offsets = [0, 96], sizes = [8, 32], strides = [1, 1]} : vector<8x128xf32> to vector<8x32xf32>
    %829 = math.tanh %827 : vector<8x32xf32>
    %830 = arith.mulf %828, %829 : vector<8x32xf32>
    %831 = vector.extract_strided_slice %813 {offsets = [0, 0], sizes = [8, 128], strides = [1, 1]} : vector<8x256xf32> to vector<8x128xf32>
    %c168 = arith.constant 168 : index
    %c0_225 = arith.constant 0 : index
    %832 = vector.load %arg8[%c168, %c0_225] : memref<256x128xf32, #tpu.memory_space<vmem>>, vector<8x128xf32>
    %833 = arith.addf %831, %832 : vector<8x128xf32>
    %834 = arith.negf %833 : vector<8x128xf32>
    %835 = math.exp %834 : vector<8x128xf32>
    %cst_226 = arith.constant 1.000000e+00 : f32
    %836 = vector.broadcast %cst_226 : f32 to vector<8x128xf32>
    %837 = arith.addf %836, %835 : vector<8x128xf32>
    %838 = arith.divf %836, %837 : vector<8x128xf32>
    %839 = vector.extract_strided_slice %833 {offsets = [0, 64], sizes = [8, 32], strides = [1, 1]} : vector<8x128xf32> to vector<8x32xf32>
    %840 = math.tanh %839 : vector<8x32xf32>
    %841 = vector.extract_strided_slice %838 {offsets = [0, 32], sizes = [8, 32], strides = [1, 1]} : vector<8x128xf32> to vector<8x32xf32>
    %842 = arith.mulf %841, %806 : vector<8x32xf32>
    %843 = vector.extract_strided_slice %838 {offsets = [0, 0], sizes = [8, 32], strides = [1, 1]} : vector<8x128xf32> to vector<8x32xf32>
    %844 = arith.mulf %843, %840 : vector<8x32xf32>
    %845 = arith.addf %842, %844 : vector<8x32xf32>
    %846 = vector.extract_strided_slice %838 {offsets = [0, 96], sizes = [8, 32], strides = [1, 1]} : vector<8x128xf32> to vector<8x32xf32>
    %847 = math.tanh %845 : vector<8x32xf32>
    %848 = arith.mulf %846, %847 : vector<8x32xf32>
    %c0_227 = arith.constant 0 : index
    %c0_228 = arith.constant 0 : index
    %849 = vector.load %arg9[%c0_227, %c0_228] : memref<8x64xf32, #tpu.memory_space<vmem>>, vector<8x32xf32>
    tpu.vector_store %arg9[%c0_227, %c0_228], %848 {strides = array<i32>} : memref<8x64xf32, #tpu.memory_space<vmem>>, vector<8x32xf32>,
    %c0_229 = arith.constant 0 : index
    %c32_230 = arith.constant 32 : index
    %850 = vector.load %arg9[%c0_229, %c32_230] : memref<8x64xf32, #tpu.memory_space<vmem>>, vector<8x32xf32>
    tpu.vector_store %arg9[%c0_229, %c32_230], %830 {strides = array<i32>} : memref<8x64xf32, #tpu.memory_space<vmem>>, vector<8x32xf32>,
    %c0_231 = arith.constant 0 : index
    %c0_232 = arith.constant 0 : index
    %851 = vector.load %arg9[%c0_231, %c0_232] : memref<8x64xf32, #tpu.memory_space<vmem>>, vector<8x64xf32>
    %cst_233 = arith.constant dense<0.000000e+00> : vector<8x256xf32>
    %852 = tpu.matmul %851, %7, %cst_233 {dimension_numbers = #tpu.dot_dimension_numbers<[1], [0], [0], [1], [0, 0, 1, 1], [], []>} : vector<8x64xf32>, vector<64x256xf32>, vector<8x256xf32> -> vector<8x256xf32>
    %853 = vector.extract_strided_slice %852 {offsets = [0, 128], sizes = [8, 128], strides = [1, 1]} : vector<8x256xf32> to vector<8x128xf32>
    %854 = arith.addf %853, %10 : vector<8x128xf32>
    %855 = arith.negf %854 : vector<8x128xf32>
    %856 = math.exp %855 : vector<8x128xf32>
    %cst_234 = arith.constant 1.000000e+00 : f32
    %857 = vector.broadcast %cst_234 : f32 to vector<8x128xf32>
    %858 = arith.addf %857, %856 : vector<8x128xf32>
    %859 = arith.divf %857, %858 : vector<8x128xf32>
    %860 = vector.extract_strided_slice %854 {offsets = [0, 64], sizes = [8, 32], strides = [1, 1]} : vector<8x128xf32> to vector<8x32xf32>
    %861 = math.tanh %860 : vector<8x32xf32>
    %862 = vector.extract_strided_slice %859 {offsets = [0, 32], sizes = [8, 32], strides = [1, 1]} : vector<8x128xf32> to vector<8x32xf32>
    %863 = arith.mulf %862, %827 : vector<8x32xf32>
    %864 = vector.extract_strided_slice %859 {offsets = [0, 0], sizes = [8, 32], strides = [1, 1]} : vector<8x128xf32> to vector<8x32xf32>
    %865 = arith.mulf %864, %861 : vector<8x32xf32>
    %866 = arith.addf %863, %865 : vector<8x32xf32>
    %867 = vector.extract_strided_slice %859 {offsets = [0, 96], sizes = [8, 32], strides = [1, 1]} : vector<8x128xf32> to vector<8x32xf32>
    %868 = math.tanh %866 : vector<8x32xf32>
    %869 = arith.mulf %867, %868 : vector<8x32xf32>
    %870 = vector.extract_strided_slice %852 {offsets = [0, 0], sizes = [8, 128], strides = [1, 1]} : vector<8x256xf32> to vector<8x128xf32>
    %c176 = arith.constant 176 : index
    %c0_235 = arith.constant 0 : index
    %871 = vector.load %arg8[%c176, %c0_235] : memref<256x128xf32, #tpu.memory_space<vmem>>, vector<8x128xf32>
    %872 = arith.addf %870, %871 : vector<8x128xf32>
    %873 = arith.negf %872 : vector<8x128xf32>
    %874 = math.exp %873 : vector<8x128xf32>
    %cst_236 = arith.constant 1.000000e+00 : f32
    %875 = vector.broadcast %cst_236 : f32 to vector<8x128xf32>
    %876 = arith.addf %875, %874 : vector<8x128xf32>
    %877 = arith.divf %875, %876 : vector<8x128xf32>
    %878 = vector.extract_strided_slice %872 {offsets = [0, 64], sizes = [8, 32], strides = [1, 1]} : vector<8x128xf32> to vector<8x32xf32>
    %879 = math.tanh %878 : vector<8x32xf32>
    %880 = vector.extract_strided_slice %877 {offsets = [0, 32], sizes = [8, 32], strides = [1, 1]} : vector<8x128xf32> to vector<8x32xf32>
    %881 = arith.mulf %880, %845 : vector<8x32xf32>
    %882 = vector.extract_strided_slice %877 {offsets = [0, 0], sizes = [8, 32], strides = [1, 1]} : vector<8x128xf32> to vector<8x32xf32>
    %883 = arith.mulf %882, %879 : vector<8x32xf32>
    %884 = arith.addf %881, %883 : vector<8x32xf32>
    %885 = vector.extract_strided_slice %877 {offsets = [0, 96], sizes = [8, 32], strides = [1, 1]} : vector<8x128xf32> to vector<8x32xf32>
    %886 = math.tanh %884 : vector<8x32xf32>
    %887 = arith.mulf %885, %886 : vector<8x32xf32>
    %c0_237 = arith.constant 0 : index
    %c0_238 = arith.constant 0 : index
    %888 = vector.load %arg9[%c0_237, %c0_238] : memref<8x64xf32, #tpu.memory_space<vmem>>, vector<8x32xf32>
    tpu.vector_store %arg9[%c0_237, %c0_238], %887 {strides = array<i32>} : memref<8x64xf32, #tpu.memory_space<vmem>>, vector<8x32xf32>,
    %c0_239 = arith.constant 0 : index
    %c32_240 = arith.constant 32 : index
    %889 = vector.load %arg9[%c0_239, %c32_240] : memref<8x64xf32, #tpu.memory_space<vmem>>, vector<8x32xf32>
    tpu.vector_store %arg9[%c0_239, %c32_240], %869 {strides = array<i32>} : memref<8x64xf32, #tpu.memory_space<vmem>>, vector<8x32xf32>,
    %c0_241 = arith.constant 0 : index
    %c0_242 = arith.constant 0 : index
    %890 = vector.load %arg9[%c0_241, %c0_242] : memref<8x64xf32, #tpu.memory_space<vmem>>, vector<8x64xf32>
    %cst_243 = arith.constant dense<0.000000e+00> : vector<8x256xf32>
    %891 = tpu.matmul %890, %7, %cst_243 {dimension_numbers = #tpu.dot_dimension_numbers<[1], [0], [0], [1], [0, 0, 1, 1], [], []>} : vector<8x64xf32>, vector<64x256xf32>, vector<8x256xf32> -> vector<8x256xf32>
    %892 = vector.extract_strided_slice %891 {offsets = [0, 128], sizes = [8, 128], strides = [1, 1]} : vector<8x256xf32> to vector<8x128xf32>
    %893 = arith.addf %892, %10 : vector<8x128xf32>
    %894 = arith.negf %893 : vector<8x128xf32>
    %895 = math.exp %894 : vector<8x128xf32>
    %cst_244 = arith.constant 1.000000e+00 : f32
    %896 = vector.broadcast %cst_244 : f32 to vector<8x128xf32>
    %897 = arith.addf %896, %895 : vector<8x128xf32>
    %898 = arith.divf %896, %897 : vector<8x128xf32>
    %899 = vector.extract_strided_slice %893 {offsets = [0, 64], sizes = [8, 32], strides = [1, 1]} : vector<8x128xf32> to vector<8x32xf32>
    %900 = math.tanh %899 : vector<8x32xf32>
    %901 = vector.extract_strided_slice %898 {offsets = [0, 32], sizes = [8, 32], strides = [1, 1]} : vector<8x128xf32> to vector<8x32xf32>
    %902 = arith.mulf %901, %866 : vector<8x32xf32>
    %903 = vector.extract_strided_slice %898 {offsets = [0, 0], sizes = [8, 32], strides = [1, 1]} : vector<8x128xf32> to vector<8x32xf32>
    %904 = arith.mulf %903, %900 : vector<8x32xf32>
    %905 = arith.addf %902, %904 : vector<8x32xf32>
    %906 = vector.extract_strided_slice %898 {offsets = [0, 96], sizes = [8, 32], strides = [1, 1]} : vector<8x128xf32> to vector<8x32xf32>
    %907 = math.tanh %905 : vector<8x32xf32>
    %908 = arith.mulf %906, %907 : vector<8x32xf32>
    %909 = vector.extract_strided_slice %891 {offsets = [0, 0], sizes = [8, 128], strides = [1, 1]} : vector<8x256xf32> to vector<8x128xf32>
    %c184 = arith.constant 184 : index
    %c0_245 = arith.constant 0 : index
    %910 = vector.load %arg8[%c184, %c0_245] : memref<256x128xf32, #tpu.memory_space<vmem>>, vector<8x128xf32>
    %911 = arith.addf %909, %910 : vector<8x128xf32>
    %912 = arith.negf %911 : vector<8x128xf32>
    %913 = math.exp %912 : vector<8x128xf32>
    %cst_246 = arith.constant 1.000000e+00 : f32
    %914 = vector.broadcast %cst_246 : f32 to vector<8x128xf32>
    %915 = arith.addf %914, %913 : vector<8x128xf32>
    %916 = arith.divf %914, %915 : vector<8x128xf32>
    %917 = vector.extract_strided_slice %911 {offsets = [0, 64], sizes = [8, 32], strides = [1, 1]} : vector<8x128xf32> to vector<8x32xf32>
    %918 = math.tanh %917 : vector<8x32xf32>
    %919 = vector.extract_strided_slice %916 {offsets = [0, 32], sizes = [8, 32], strides = [1, 1]} : vector<8x128xf32> to vector<8x32xf32>
    %920 = arith.mulf %919, %884 : vector<8x32xf32>
    %921 = vector.extract_strided_slice %916 {offsets = [0, 0], sizes = [8, 32], strides = [1, 1]} : vector<8x128xf32> to vector<8x32xf32>
    %922 = arith.mulf %921, %918 : vector<8x32xf32>
    %923 = arith.addf %920, %922 : vector<8x32xf32>
    %924 = vector.extract_strided_slice %916 {offsets = [0, 96], sizes = [8, 32], strides = [1, 1]} : vector<8x128xf32> to vector<8x32xf32>
    %925 = math.tanh %923 : vector<8x32xf32>
    %926 = arith.mulf %924, %925 : vector<8x32xf32>
    %c0_247 = arith.constant 0 : index
    %c0_248 = arith.constant 0 : index
    %927 = vector.load %arg9[%c0_247, %c0_248] : memref<8x64xf32, #tpu.memory_space<vmem>>, vector<8x32xf32>
    tpu.vector_store %arg9[%c0_247, %c0_248], %926 {strides = array<i32>} : memref<8x64xf32, #tpu.memory_space<vmem>>, vector<8x32xf32>,
    %c0_249 = arith.constant 0 : index
    %c32_250 = arith.constant 32 : index
    %928 = vector.load %arg9[%c0_249, %c32_250] : memref<8x64xf32, #tpu.memory_space<vmem>>, vector<8x32xf32>
    tpu.vector_store %arg9[%c0_249, %c32_250], %908 {strides = array<i32>} : memref<8x64xf32, #tpu.memory_space<vmem>>, vector<8x32xf32>,
    %c0_251 = arith.constant 0 : index
    %c0_252 = arith.constant 0 : index
    %929 = vector.load %arg9[%c0_251, %c0_252] : memref<8x64xf32, #tpu.memory_space<vmem>>, vector<8x64xf32>
    %cst_253 = arith.constant dense<0.000000e+00> : vector<8x256xf32>
    %930 = tpu.matmul %929, %7, %cst_253 {dimension_numbers = #tpu.dot_dimension_numbers<[1], [0], [0], [1], [0, 0, 1, 1], [], []>} : vector<8x64xf32>, vector<64x256xf32>, vector<8x256xf32> -> vector<8x256xf32>
    %931 = vector.extract_strided_slice %930 {offsets = [0, 128], sizes = [8, 128], strides = [1, 1]} : vector<8x256xf32> to vector<8x128xf32>
    %932 = arith.addf %931, %10 : vector<8x128xf32>
    %933 = arith.negf %932 : vector<8x128xf32>
    %934 = math.exp %933 : vector<8x128xf32>
    %cst_254 = arith.constant 1.000000e+00 : f32
    %935 = vector.broadcast %cst_254 : f32 to vector<8x128xf32>
    %936 = arith.addf %935, %934 : vector<8x128xf32>
    %937 = arith.divf %935, %936 : vector<8x128xf32>
    %938 = vector.extract_strided_slice %932 {offsets = [0, 64], sizes = [8, 32], strides = [1, 1]} : vector<8x128xf32> to vector<8x32xf32>
    %939 = math.tanh %938 : vector<8x32xf32>
    %940 = vector.extract_strided_slice %937 {offsets = [0, 32], sizes = [8, 32], strides = [1, 1]} : vector<8x128xf32> to vector<8x32xf32>
    %941 = arith.mulf %940, %905 : vector<8x32xf32>
    %942 = vector.extract_strided_slice %937 {offsets = [0, 0], sizes = [8, 32], strides = [1, 1]} : vector<8x128xf32> to vector<8x32xf32>
    %943 = arith.mulf %942, %939 : vector<8x32xf32>
    %944 = arith.addf %941, %943 : vector<8x32xf32>
    %945 = vector.extract_strided_slice %937 {offsets = [0, 96], sizes = [8, 32], strides = [1, 1]} : vector<8x128xf32> to vector<8x32xf32>
    %946 = math.tanh %944 : vector<8x32xf32>
    %947 = arith.mulf %945, %946 : vector<8x32xf32>
    %948 = vector.extract_strided_slice %930 {offsets = [0, 0], sizes = [8, 128], strides = [1, 1]} : vector<8x256xf32> to vector<8x128xf32>
    %c192 = arith.constant 192 : index
    %c0_255 = arith.constant 0 : index
    %949 = vector.load %arg8[%c192, %c0_255] : memref<256x128xf32, #tpu.memory_space<vmem>>, vector<8x128xf32>
    %950 = arith.addf %948, %949 : vector<8x128xf32>
    %951 = arith.negf %950 : vector<8x128xf32>
    %952 = math.exp %951 : vector<8x128xf32>
    %cst_256 = arith.constant 1.000000e+00 : f32
    %953 = vector.broadcast %cst_256 : f32 to vector<8x128xf32>
    %954 = arith.addf %953, %952 : vector<8x128xf32>
    %955 = arith.divf %953, %954 : vector<8x128xf32>
    %956 = vector.extract_strided_slice %950 {offsets = [0, 64], sizes = [8, 32], strides = [1, 1]} : vector<8x128xf32> to vector<8x32xf32>
    %957 = math.tanh %956 : vector<8x32xf32>
    %958 = vector.extract_strided_slice %955 {offsets = [0, 32], sizes = [8, 32], strides = [1, 1]} : vector<8x128xf32> to vector<8x32xf32>
    %959 = arith.mulf %958, %923 : vector<8x32xf32>
    %960 = vector.extract_strided_slice %955 {offsets = [0, 0], sizes = [8, 32], strides = [1, 1]} : vector<8x128xf32> to vector<8x32xf32>
    %961 = arith.mulf %960, %957 : vector<8x32xf32>
    %962 = arith.addf %959, %961 : vector<8x32xf32>
    %963 = vector.extract_strided_slice %955 {offsets = [0, 96], sizes = [8, 32], strides = [1, 1]} : vector<8x128xf32> to vector<8x32xf32>
    %964 = math.tanh %962 : vector<8x32xf32>
    %965 = arith.mulf %963, %964 : vector<8x32xf32>
    %c0_257 = arith.constant 0 : index
    %c0_258 = arith.constant 0 : index
    %966 = vector.load %arg9[%c0_257, %c0_258] : memref<8x64xf32, #tpu.memory_space<vmem>>, vector<8x32xf32>
    tpu.vector_store %arg9[%c0_257, %c0_258], %965 {strides = array<i32>} : memref<8x64xf32, #tpu.memory_space<vmem>>, vector<8x32xf32>,
    %c0_259 = arith.constant 0 : index
    %c32_260 = arith.constant 32 : index
    %967 = vector.load %arg9[%c0_259, %c32_260] : memref<8x64xf32, #tpu.memory_space<vmem>>, vector<8x32xf32>
    tpu.vector_store %arg9[%c0_259, %c32_260], %947 {strides = array<i32>} : memref<8x64xf32, #tpu.memory_space<vmem>>, vector<8x32xf32>,
    %c0_261 = arith.constant 0 : index
    %c0_262 = arith.constant 0 : index
    %968 = vector.load %arg9[%c0_261, %c0_262] : memref<8x64xf32, #tpu.memory_space<vmem>>, vector<8x64xf32>
    %cst_263 = arith.constant dense<0.000000e+00> : vector<8x256xf32>
    %969 = tpu.matmul %968, %7, %cst_263 {dimension_numbers = #tpu.dot_dimension_numbers<[1], [0], [0], [1], [0, 0, 1, 1], [], []>} : vector<8x64xf32>, vector<64x256xf32>, vector<8x256xf32> -> vector<8x256xf32>
    %970 = vector.extract_strided_slice %969 {offsets = [0, 128], sizes = [8, 128], strides = [1, 1]} : vector<8x256xf32> to vector<8x128xf32>
    %971 = arith.addf %970, %10 : vector<8x128xf32>
    %972 = arith.negf %971 : vector<8x128xf32>
    %973 = math.exp %972 : vector<8x128xf32>
    %cst_264 = arith.constant 1.000000e+00 : f32
    %974 = vector.broadcast %cst_264 : f32 to vector<8x128xf32>
    %975 = arith.addf %974, %973 : vector<8x128xf32>
    %976 = arith.divf %974, %975 : vector<8x128xf32>
    %977 = vector.extract_strided_slice %971 {offsets = [0, 64], sizes = [8, 32], strides = [1, 1]} : vector<8x128xf32> to vector<8x32xf32>
    %978 = math.tanh %977 : vector<8x32xf32>
    %979 = vector.extract_strided_slice %976 {offsets = [0, 32], sizes = [8, 32], strides = [1, 1]} : vector<8x128xf32> to vector<8x32xf32>
    %980 = arith.mulf %979, %944 : vector<8x32xf32>
    %981 = vector.extract_strided_slice %976 {offsets = [0, 0], sizes = [8, 32], strides = [1, 1]} : vector<8x128xf32> to vector<8x32xf32>
    %982 = arith.mulf %981, %978 : vector<8x32xf32>
    %983 = arith.addf %980, %982 : vector<8x32xf32>
    %984 = vector.extract_strided_slice %976 {offsets = [0, 96], sizes = [8, 32], strides = [1, 1]} : vector<8x128xf32> to vector<8x32xf32>
    %985 = math.tanh %983 : vector<8x32xf32>
    %986 = arith.mulf %984, %985 : vector<8x32xf32>
    %987 = vector.extract_strided_slice %969 {offsets = [0, 0], sizes = [8, 128], strides = [1, 1]} : vector<8x256xf32> to vector<8x128xf32>
    %c200 = arith.constant 200 : index
    %c0_265 = arith.constant 0 : index
    %988 = vector.load %arg8[%c200, %c0_265] : memref<256x128xf32, #tpu.memory_space<vmem>>, vector<8x128xf32>
    %989 = arith.addf %987, %988 : vector<8x128xf32>
    %990 = arith.negf %989 : vector<8x128xf32>
    %991 = math.exp %990 : vector<8x128xf32>
    %cst_266 = arith.constant 1.000000e+00 : f32
    %992 = vector.broadcast %cst_266 : f32 to vector<8x128xf32>
    %993 = arith.addf %992, %991 : vector<8x128xf32>
    %994 = arith.divf %992, %993 : vector<8x128xf32>
    %995 = vector.extract_strided_slice %989 {offsets = [0, 64], sizes = [8, 32], strides = [1, 1]} : vector<8x128xf32> to vector<8x32xf32>
    %996 = math.tanh %995 : vector<8x32xf32>
    %997 = vector.extract_strided_slice %994 {offsets = [0, 32], sizes = [8, 32], strides = [1, 1]} : vector<8x128xf32> to vector<8x32xf32>
    %998 = arith.mulf %997, %962 : vector<8x32xf32>
    %999 = vector.extract_strided_slice %994 {offsets = [0, 0], sizes = [8, 32], strides = [1, 1]} : vector<8x128xf32> to vector<8x32xf32>
    %1000 = arith.mulf %999, %996 : vector<8x32xf32>
    %1001 = arith.addf %998, %1000 : vector<8x32xf32>
    %1002 = vector.extract_strided_slice %994 {offsets = [0, 96], sizes = [8, 32], strides = [1, 1]} : vector<8x128xf32> to vector<8x32xf32>
    %1003 = math.tanh %1001 : vector<8x32xf32>
    %1004 = arith.mulf %1002, %1003 : vector<8x32xf32>
    %c0_267 = arith.constant 0 : index
    %c0_268 = arith.constant 0 : index
    %1005 = vector.load %arg9[%c0_267, %c0_268] : memref<8x64xf32, #tpu.memory_space<vmem>>, vector<8x32xf32>
    tpu.vector_store %arg9[%c0_267, %c0_268], %1004 {strides = array<i32>} : memref<8x64xf32, #tpu.memory_space<vmem>>, vector<8x32xf32>,
    %c0_269 = arith.constant 0 : index
    %c32_270 = arith.constant 32 : index
    %1006 = vector.load %arg9[%c0_269, %c32_270] : memref<8x64xf32, #tpu.memory_space<vmem>>, vector<8x32xf32>
    tpu.vector_store %arg9[%c0_269, %c32_270], %986 {strides = array<i32>} : memref<8x64xf32, #tpu.memory_space<vmem>>, vector<8x32xf32>,
    %c0_271 = arith.constant 0 : index
    %c0_272 = arith.constant 0 : index
    %1007 = vector.load %arg9[%c0_271, %c0_272] : memref<8x64xf32, #tpu.memory_space<vmem>>, vector<8x64xf32>
    %cst_273 = arith.constant dense<0.000000e+00> : vector<8x256xf32>
    %1008 = tpu.matmul %1007, %7, %cst_273 {dimension_numbers = #tpu.dot_dimension_numbers<[1], [0], [0], [1], [0, 0, 1, 1], [], []>} : vector<8x64xf32>, vector<64x256xf32>, vector<8x256xf32> -> vector<8x256xf32>
    %1009 = vector.extract_strided_slice %1008 {offsets = [0, 128], sizes = [8, 128], strides = [1, 1]} : vector<8x256xf32> to vector<8x128xf32>
    %1010 = arith.addf %1009, %10 : vector<8x128xf32>
    %1011 = arith.negf %1010 : vector<8x128xf32>
    %1012 = math.exp %1011 : vector<8x128xf32>
    %cst_274 = arith.constant 1.000000e+00 : f32
    %1013 = vector.broadcast %cst_274 : f32 to vector<8x128xf32>
    %1014 = arith.addf %1013, %1012 : vector<8x128xf32>
    %1015 = arith.divf %1013, %1014 : vector<8x128xf32>
    %1016 = vector.extract_strided_slice %1010 {offsets = [0, 64], sizes = [8, 32], strides = [1, 1]} : vector<8x128xf32> to vector<8x32xf32>
    %1017 = math.tanh %1016 : vector<8x32xf32>
    %1018 = vector.extract_strided_slice %1015 {offsets = [0, 32], sizes = [8, 32], strides = [1, 1]} : vector<8x128xf32> to vector<8x32xf32>
    %1019 = arith.mulf %1018, %983 : vector<8x32xf32>
    %1020 = vector.extract_strided_slice %1015 {offsets = [0, 0], sizes = [8, 32], strides = [1, 1]} : vector<8x128xf32> to vector<8x32xf32>
    %1021 = arith.mulf %1020, %1017 : vector<8x32xf32>
    %1022 = arith.addf %1019, %1021 : vector<8x32xf32>
    %1023 = vector.extract_strided_slice %1015 {offsets = [0, 96], sizes = [8, 32], strides = [1, 1]} : vector<8x128xf32> to vector<8x32xf32>
    %1024 = math.tanh %1022 : vector<8x32xf32>
    %1025 = arith.mulf %1023, %1024 : vector<8x32xf32>
    %1026 = vector.extract_strided_slice %1008 {offsets = [0, 0], sizes = [8, 128], strides = [1, 1]} : vector<8x256xf32> to vector<8x128xf32>
    %c208 = arith.constant 208 : index
    %c0_275 = arith.constant 0 : index
    %1027 = vector.load %arg8[%c208, %c0_275] : memref<256x128xf32, #tpu.memory_space<vmem>>, vector<8x128xf32>
    %1028 = arith.addf %1026, %1027 : vector<8x128xf32>
    %1029 = arith.negf %1028 : vector<8x128xf32>
    %1030 = math.exp %1029 : vector<8x128xf32>
    %cst_276 = arith.constant 1.000000e+00 : f32
    %1031 = vector.broadcast %cst_276 : f32 to vector<8x128xf32>
    %1032 = arith.addf %1031, %1030 : vector<8x128xf32>
    %1033 = arith.divf %1031, %1032 : vector<8x128xf32>
    %1034 = vector.extract_strided_slice %1028 {offsets = [0, 64], sizes = [8, 32], strides = [1, 1]} : vector<8x128xf32> to vector<8x32xf32>
    %1035 = math.tanh %1034 : vector<8x32xf32>
    %1036 = vector.extract_strided_slice %1033 {offsets = [0, 32], sizes = [8, 32], strides = [1, 1]} : vector<8x128xf32> to vector<8x32xf32>
    %1037 = arith.mulf %1036, %1001 : vector<8x32xf32>
    %1038 = vector.extract_strided_slice %1033 {offsets = [0, 0], sizes = [8, 32], strides = [1, 1]} : vector<8x128xf32> to vector<8x32xf32>
    %1039 = arith.mulf %1038, %1035 : vector<8x32xf32>
    %1040 = arith.addf %1037, %1039 : vector<8x32xf32>
    %1041 = vector.extract_strided_slice %1033 {offsets = [0, 96], sizes = [8, 32], strides = [1, 1]} : vector<8x128xf32> to vector<8x32xf32>
    %1042 = math.tanh %1040 : vector<8x32xf32>
    %1043 = arith.mulf %1041, %1042 : vector<8x32xf32>
    %c0_277 = arith.constant 0 : index
    %c0_278 = arith.constant 0 : index
    %1044 = vector.load %arg9[%c0_277, %c0_278] : memref<8x64xf32, #tpu.memory_space<vmem>>, vector<8x32xf32>
    tpu.vector_store %arg9[%c0_277, %c0_278], %1043 {strides = array<i32>} : memref<8x64xf32, #tpu.memory_space<vmem>>, vector<8x32xf32>,
    %c0_279 = arith.constant 0 : index
    %c32_280 = arith.constant 32 : index
    %1045 = vector.load %arg9[%c0_279, %c32_280] : memref<8x64xf32, #tpu.memory_space<vmem>>, vector<8x32xf32>
    tpu.vector_store %arg9[%c0_279, %c32_280], %1025 {strides = array<i32>} : memref<8x64xf32, #tpu.memory_space<vmem>>, vector<8x32xf32>,
    %c0_281 = arith.constant 0 : index
    %c0_282 = arith.constant 0 : index
    %1046 = vector.load %arg9[%c0_281, %c0_282] : memref<8x64xf32, #tpu.memory_space<vmem>>, vector<8x64xf32>
    %cst_283 = arith.constant dense<0.000000e+00> : vector<8x256xf32>
    %1047 = tpu.matmul %1046, %7, %cst_283 {dimension_numbers = #tpu.dot_dimension_numbers<[1], [0], [0], [1], [0, 0, 1, 1], [], []>} : vector<8x64xf32>, vector<64x256xf32>, vector<8x256xf32> -> vector<8x256xf32>
    %1048 = vector.extract_strided_slice %1047 {offsets = [0, 128], sizes = [8, 128], strides = [1, 1]} : vector<8x256xf32> to vector<8x128xf32>
    %1049 = arith.addf %1048, %10 : vector<8x128xf32>
    %1050 = arith.negf %1049 : vector<8x128xf32>
    %1051 = math.exp %1050 : vector<8x128xf32>
    %cst_284 = arith.constant 1.000000e+00 : f32
    %1052 = vector.broadcast %cst_284 : f32 to vector<8x128xf32>
    %1053 = arith.addf %1052, %1051 : vector<8x128xf32>
    %1054 = arith.divf %1052, %1053 : vector<8x128xf32>
    %1055 = vector.extract_strided_slice %1049 {offsets = [0, 64], sizes = [8, 32], strides = [1, 1]} : vector<8x128xf32> to vector<8x32xf32>
    %1056 = math.tanh %1055 : vector<8x32xf32>
    %1057 = vector.extract_strided_slice %1054 {offsets = [0, 32], sizes = [8, 32], strides = [1, 1]} : vector<8x128xf32> to vector<8x32xf32>
    %1058 = arith.mulf %1057, %1022 : vector<8x32xf32>
    %1059 = vector.extract_strided_slice %1054 {offsets = [0, 0], sizes = [8, 32], strides = [1, 1]} : vector<8x128xf32> to vector<8x32xf32>
    %1060 = arith.mulf %1059, %1056 : vector<8x32xf32>
    %1061 = arith.addf %1058, %1060 : vector<8x32xf32>
    %1062 = vector.extract_strided_slice %1054 {offsets = [0, 96], sizes = [8, 32], strides = [1, 1]} : vector<8x128xf32> to vector<8x32xf32>
    %1063 = math.tanh %1061 : vector<8x32xf32>
    %1064 = arith.mulf %1062, %1063 : vector<8x32xf32>
    %1065 = vector.extract_strided_slice %1047 {offsets = [0, 0], sizes = [8, 128], strides = [1, 1]} : vector<8x256xf32> to vector<8x128xf32>
    %c216 = arith.constant 216 : index
    %c0_285 = arith.constant 0 : index
    %1066 = vector.load %arg8[%c216, %c0_285] : memref<256x128xf32, #tpu.memory_space<vmem>>, vector<8x128xf32>
    %1067 = arith.addf %1065, %1066 : vector<8x128xf32>
    %1068 = arith.negf %1067 : vector<8x128xf32>
    %1069 = math.exp %1068 : vector<8x128xf32>
    %cst_286 = arith.constant 1.000000e+00 : f32
    %1070 = vector.broadcast %cst_286 : f32 to vector<8x128xf32>
    %1071 = arith.addf %1070, %1069 : vector<8x128xf32>
    %1072 = arith.divf %1070, %1071 : vector<8x128xf32>
    %1073 = vector.extract_strided_slice %1067 {offsets = [0, 64], sizes = [8, 32], strides = [1, 1]} : vector<8x128xf32> to vector<8x32xf32>
    %1074 = math.tanh %1073 : vector<8x32xf32>
    %1075 = vector.extract_strided_slice %1072 {offsets = [0, 32], sizes = [8, 32], strides = [1, 1]} : vector<8x128xf32> to vector<8x32xf32>
    %1076 = arith.mulf %1075, %1040 : vector<8x32xf32>
    %1077 = vector.extract_strided_slice %1072 {offsets = [0, 0], sizes = [8, 32], strides = [1, 1]} : vector<8x128xf32> to vector<8x32xf32>
    %1078 = arith.mulf %1077, %1074 : vector<8x32xf32>
    %1079 = arith.addf %1076, %1078 : vector<8x32xf32>
    %1080 = vector.extract_strided_slice %1072 {offsets = [0, 96], sizes = [8, 32], strides = [1, 1]} : vector<8x128xf32> to vector<8x32xf32>
    %1081 = math.tanh %1079 : vector<8x32xf32>
    %1082 = arith.mulf %1080, %1081 : vector<8x32xf32>
    %c0_287 = arith.constant 0 : index
    %c0_288 = arith.constant 0 : index
    %1083 = vector.load %arg9[%c0_287, %c0_288] : memref<8x64xf32, #tpu.memory_space<vmem>>, vector<8x32xf32>
    tpu.vector_store %arg9[%c0_287, %c0_288], %1082 {strides = array<i32>} : memref<8x64xf32, #tpu.memory_space<vmem>>, vector<8x32xf32>,
    %c0_289 = arith.constant 0 : index
    %c32_290 = arith.constant 32 : index
    %1084 = vector.load %arg9[%c0_289, %c32_290] : memref<8x64xf32, #tpu.memory_space<vmem>>, vector<8x32xf32>
    tpu.vector_store %arg9[%c0_289, %c32_290], %1064 {strides = array<i32>} : memref<8x64xf32, #tpu.memory_space<vmem>>, vector<8x32xf32>,
    %c0_291 = arith.constant 0 : index
    %c0_292 = arith.constant 0 : index
    %1085 = vector.load %arg9[%c0_291, %c0_292] : memref<8x64xf32, #tpu.memory_space<vmem>>, vector<8x64xf32>
    %cst_293 = arith.constant dense<0.000000e+00> : vector<8x256xf32>
    %1086 = tpu.matmul %1085, %7, %cst_293 {dimension_numbers = #tpu.dot_dimension_numbers<[1], [0], [0], [1], [0, 0, 1, 1], [], []>} : vector<8x64xf32>, vector<64x256xf32>, vector<8x256xf32> -> vector<8x256xf32>
    %1087 = vector.extract_strided_slice %1086 {offsets = [0, 128], sizes = [8, 128], strides = [1, 1]} : vector<8x256xf32> to vector<8x128xf32>
    %1088 = arith.addf %1087, %10 : vector<8x128xf32>
    %1089 = arith.negf %1088 : vector<8x128xf32>
    %1090 = math.exp %1089 : vector<8x128xf32>
    %cst_294 = arith.constant 1.000000e+00 : f32
    %1091 = vector.broadcast %cst_294 : f32 to vector<8x128xf32>
    %1092 = arith.addf %1091, %1090 : vector<8x128xf32>
    %1093 = arith.divf %1091, %1092 : vector<8x128xf32>
    %1094 = vector.extract_strided_slice %1088 {offsets = [0, 64], sizes = [8, 32], strides = [1, 1]} : vector<8x128xf32> to vector<8x32xf32>
    %1095 = math.tanh %1094 : vector<8x32xf32>
    %1096 = vector.extract_strided_slice %1093 {offsets = [0, 32], sizes = [8, 32], strides = [1, 1]} : vector<8x128xf32> to vector<8x32xf32>
    %1097 = arith.mulf %1096, %1061 : vector<8x32xf32>
    %1098 = vector.extract_strided_slice %1093 {offsets = [0, 0], sizes = [8, 32], strides = [1, 1]} : vector<8x128xf32> to vector<8x32xf32>
    %1099 = arith.mulf %1098, %1095 : vector<8x32xf32>
    %1100 = arith.addf %1097, %1099 : vector<8x32xf32>
    %1101 = vector.extract_strided_slice %1093 {offsets = [0, 96], sizes = [8, 32], strides = [1, 1]} : vector<8x128xf32> to vector<8x32xf32>
    %1102 = math.tanh %1100 : vector<8x32xf32>
    %1103 = arith.mulf %1101, %1102 : vector<8x32xf32>
    %1104 = vector.extract_strided_slice %1086 {offsets = [0, 0], sizes = [8, 128], strides = [1, 1]} : vector<8x256xf32> to vector<8x128xf32>
    %c224 = arith.constant 224 : index
    %c0_295 = arith.constant 0 : index
    %1105 = vector.load %arg8[%c224, %c0_295] : memref<256x128xf32, #tpu.memory_space<vmem>>, vector<8x128xf32>
    %1106 = arith.addf %1104, %1105 : vector<8x128xf32>
    %1107 = arith.negf %1106 : vector<8x128xf32>
    %1108 = math.exp %1107 : vector<8x128xf32>
    %cst_296 = arith.constant 1.000000e+00 : f32
    %1109 = vector.broadcast %cst_296 : f32 to vector<8x128xf32>
    %1110 = arith.addf %1109, %1108 : vector<8x128xf32>
    %1111 = arith.divf %1109, %1110 : vector<8x128xf32>
    %1112 = vector.extract_strided_slice %1106 {offsets = [0, 64], sizes = [8, 32], strides = [1, 1]} : vector<8x128xf32> to vector<8x32xf32>
    %1113 = math.tanh %1112 : vector<8x32xf32>
    %1114 = vector.extract_strided_slice %1111 {offsets = [0, 32], sizes = [8, 32], strides = [1, 1]} : vector<8x128xf32> to vector<8x32xf32>
    %1115 = arith.mulf %1114, %1079 : vector<8x32xf32>
    %1116 = vector.extract_strided_slice %1111 {offsets = [0, 0], sizes = [8, 32], strides = [1, 1]} : vector<8x128xf32> to vector<8x32xf32>
    %1117 = arith.mulf %1116, %1113 : vector<8x32xf32>
    %1118 = arith.addf %1115, %1117 : vector<8x32xf32>
    %1119 = vector.extract_strided_slice %1111 {offsets = [0, 96], sizes = [8, 32], strides = [1, 1]} : vector<8x128xf32> to vector<8x32xf32>
    %1120 = math.tanh %1118 : vector<8x32xf32>
    %1121 = arith.mulf %1119, %1120 : vector<8x32xf32>
    %c0_297 = arith.constant 0 : index
    %c0_298 = arith.constant 0 : index
    %1122 = vector.load %arg9[%c0_297, %c0_298] : memref<8x64xf32, #tpu.memory_space<vmem>>, vector<8x32xf32>
    tpu.vector_store %arg9[%c0_297, %c0_298], %1121 {strides = array<i32>} : memref<8x64xf32, #tpu.memory_space<vmem>>, vector<8x32xf32>,
    %c0_299 = arith.constant 0 : index
    %c32_300 = arith.constant 32 : index
    %1123 = vector.load %arg9[%c0_299, %c32_300] : memref<8x64xf32, #tpu.memory_space<vmem>>, vector<8x32xf32>
    tpu.vector_store %arg9[%c0_299, %c32_300], %1103 {strides = array<i32>} : memref<8x64xf32, #tpu.memory_space<vmem>>, vector<8x32xf32>,
    %c0_301 = arith.constant 0 : index
    %c0_302 = arith.constant 0 : index
    %1124 = vector.load %arg9[%c0_301, %c0_302] : memref<8x64xf32, #tpu.memory_space<vmem>>, vector<8x64xf32>
    %cst_303 = arith.constant dense<0.000000e+00> : vector<8x256xf32>
    %1125 = tpu.matmul %1124, %7, %cst_303 {dimension_numbers = #tpu.dot_dimension_numbers<[1], [0], [0], [1], [0, 0, 1, 1], [], []>} : vector<8x64xf32>, vector<64x256xf32>, vector<8x256xf32> -> vector<8x256xf32>
    %1126 = vector.extract_strided_slice %1125 {offsets = [0, 128], sizes = [8, 128], strides = [1, 1]} : vector<8x256xf32> to vector<8x128xf32>
    %1127 = arith.addf %1126, %10 : vector<8x128xf32>
    %1128 = arith.negf %1127 : vector<8x128xf32>
    %1129 = math.exp %1128 : vector<8x128xf32>
    %cst_304 = arith.constant 1.000000e+00 : f32
    %1130 = vector.broadcast %cst_304 : f32 to vector<8x128xf32>
    %1131 = arith.addf %1130, %1129 : vector<8x128xf32>
    %1132 = arith.divf %1130, %1131 : vector<8x128xf32>
    %1133 = vector.extract_strided_slice %1127 {offsets = [0, 64], sizes = [8, 32], strides = [1, 1]} : vector<8x128xf32> to vector<8x32xf32>
    %1134 = math.tanh %1133 : vector<8x32xf32>
    %1135 = vector.extract_strided_slice %1132 {offsets = [0, 32], sizes = [8, 32], strides = [1, 1]} : vector<8x128xf32> to vector<8x32xf32>
    %1136 = arith.mulf %1135, %1100 : vector<8x32xf32>
    %1137 = vector.extract_strided_slice %1132 {offsets = [0, 0], sizes = [8, 32], strides = [1, 1]} : vector<8x128xf32> to vector<8x32xf32>
    %1138 = arith.mulf %1137, %1134 : vector<8x32xf32>
    %1139 = arith.addf %1136, %1138 : vector<8x32xf32>
    %1140 = vector.extract_strided_slice %1132 {offsets = [0, 96], sizes = [8, 32], strides = [1, 1]} : vector<8x128xf32> to vector<8x32xf32>
    %1141 = math.tanh %1139 : vector<8x32xf32>
    %1142 = arith.mulf %1140, %1141 : vector<8x32xf32>
    %1143 = vector.extract_strided_slice %1125 {offsets = [0, 0], sizes = [8, 128], strides = [1, 1]} : vector<8x256xf32> to vector<8x128xf32>
    %c232 = arith.constant 232 : index
    %c0_305 = arith.constant 0 : index
    %1144 = vector.load %arg8[%c232, %c0_305] : memref<256x128xf32, #tpu.memory_space<vmem>>, vector<8x128xf32>
    %1145 = arith.addf %1143, %1144 : vector<8x128xf32>
    %1146 = arith.negf %1145 : vector<8x128xf32>
    %1147 = math.exp %1146 : vector<8x128xf32>
    %cst_306 = arith.constant 1.000000e+00 : f32
    %1148 = vector.broadcast %cst_306 : f32 to vector<8x128xf32>
    %1149 = arith.addf %1148, %1147 : vector<8x128xf32>
    %1150 = arith.divf %1148, %1149 : vector<8x128xf32>
    %1151 = vector.extract_strided_slice %1145 {offsets = [0, 64], sizes = [8, 32], strides = [1, 1]} : vector<8x128xf32> to vector<8x32xf32>
    %1152 = math.tanh %1151 : vector<8x32xf32>
    %1153 = vector.extract_strided_slice %1150 {offsets = [0, 32], sizes = [8, 32], strides = [1, 1]} : vector<8x128xf32> to vector<8x32xf32>
    %1154 = arith.mulf %1153, %1118 : vector<8x32xf32>
    %1155 = vector.extract_strided_slice %1150 {offsets = [0, 0], sizes = [8, 32], strides = [1, 1]} : vector<8x128xf32> to vector<8x32xf32>
    %1156 = arith.mulf %1155, %1152 : vector<8x32xf32>
    %1157 = arith.addf %1154, %1156 : vector<8x32xf32>
    %1158 = vector.extract_strided_slice %1150 {offsets = [0, 96], sizes = [8, 32], strides = [1, 1]} : vector<8x128xf32> to vector<8x32xf32>
    %1159 = math.tanh %1157 : vector<8x32xf32>
    %1160 = arith.mulf %1158, %1159 : vector<8x32xf32>
    %c0_307 = arith.constant 0 : index
    %c0_308 = arith.constant 0 : index
    %1161 = vector.load %arg9[%c0_307, %c0_308] : memref<8x64xf32, #tpu.memory_space<vmem>>, vector<8x32xf32>
    tpu.vector_store %arg9[%c0_307, %c0_308], %1160 {strides = array<i32>} : memref<8x64xf32, #tpu.memory_space<vmem>>, vector<8x32xf32>,
    %c0_309 = arith.constant 0 : index
    %c32_310 = arith.constant 32 : index
    %1162 = vector.load %arg9[%c0_309, %c32_310] : memref<8x64xf32, #tpu.memory_space<vmem>>, vector<8x32xf32>
    tpu.vector_store %arg9[%c0_309, %c32_310], %1142 {strides = array<i32>} : memref<8x64xf32, #tpu.memory_space<vmem>>, vector<8x32xf32>,
    %c0_311 = arith.constant 0 : index
    %c0_312 = arith.constant 0 : index
    %1163 = vector.load %arg9[%c0_311, %c0_312] : memref<8x64xf32, #tpu.memory_space<vmem>>, vector<8x64xf32>
    %cst_313 = arith.constant dense<0.000000e+00> : vector<8x256xf32>
    %1164 = tpu.matmul %1163, %7, %cst_313 {dimension_numbers = #tpu.dot_dimension_numbers<[1], [0], [0], [1], [0, 0, 1, 1], [], []>} : vector<8x64xf32>, vector<64x256xf32>, vector<8x256xf32> -> vector<8x256xf32>
    %1165 = vector.extract_strided_slice %1164 {offsets = [0, 128], sizes = [8, 128], strides = [1, 1]} : vector<8x256xf32> to vector<8x128xf32>
    %1166 = arith.addf %1165, %10 : vector<8x128xf32>
    %1167 = arith.negf %1166 : vector<8x128xf32>
    %1168 = math.exp %1167 : vector<8x128xf32>
    %cst_314 = arith.constant 1.000000e+00 : f32
    %1169 = vector.broadcast %cst_314 : f32 to vector<8x128xf32>
    %1170 = arith.addf %1169, %1168 : vector<8x128xf32>
    %1171 = arith.divf %1169, %1170 : vector<8x128xf32>
    %1172 = vector.extract_strided_slice %1166 {offsets = [0, 64], sizes = [8, 32], strides = [1, 1]} : vector<8x128xf32> to vector<8x32xf32>
    %1173 = math.tanh %1172 : vector<8x32xf32>
    %1174 = vector.extract_strided_slice %1171 {offsets = [0, 32], sizes = [8, 32], strides = [1, 1]} : vector<8x128xf32> to vector<8x32xf32>
    %1175 = arith.mulf %1174, %1139 : vector<8x32xf32>
    %1176 = vector.extract_strided_slice %1171 {offsets = [0, 0], sizes = [8, 32], strides = [1, 1]} : vector<8x128xf32> to vector<8x32xf32>
    %1177 = arith.mulf %1176, %1173 : vector<8x32xf32>
    %1178 = arith.addf %1175, %1177 : vector<8x32xf32>
    %1179 = vector.extract_strided_slice %1171 {offsets = [0, 96], sizes = [8, 32], strides = [1, 1]} : vector<8x128xf32> to vector<8x32xf32>
    %1180 = math.tanh %1178 : vector<8x32xf32>
    %1181 = arith.mulf %1179, %1180 : vector<8x32xf32>
    %1182 = vector.extract_strided_slice %1164 {offsets = [0, 0], sizes = [8, 128], strides = [1, 1]} : vector<8x256xf32> to vector<8x128xf32>
    %c240 = arith.constant 240 : index
    %c0_315 = arith.constant 0 : index
    %1183 = vector.load %arg8[%c240, %c0_315] : memref<256x128xf32, #tpu.memory_space<vmem>>, vector<8x128xf32>
    %1184 = arith.addf %1182, %1183 : vector<8x128xf32>
    %1185 = arith.negf %1184 : vector<8x128xf32>
    %1186 = math.exp %1185 : vector<8x128xf32>
    %cst_316 = arith.constant 1.000000e+00 : f32
    %1187 = vector.broadcast %cst_316 : f32 to vector<8x128xf32>
    %1188 = arith.addf %1187, %1186 : vector<8x128xf32>
    %1189 = arith.divf %1187, %1188 : vector<8x128xf32>
    %1190 = vector.extract_strided_slice %1184 {offsets = [0, 64], sizes = [8, 32], strides = [1, 1]} : vector<8x128xf32> to vector<8x32xf32>
    %1191 = math.tanh %1190 : vector<8x32xf32>
    %1192 = vector.extract_strided_slice %1189 {offsets = [0, 32], sizes = [8, 32], strides = [1, 1]} : vector<8x128xf32> to vector<8x32xf32>
    %1193 = arith.mulf %1192, %1157 : vector<8x32xf32>
    %1194 = vector.extract_strided_slice %1189 {offsets = [0, 0], sizes = [8, 32], strides = [1, 1]} : vector<8x128xf32> to vector<8x32xf32>
    %1195 = arith.mulf %1194, %1191 : vector<8x32xf32>
    %1196 = arith.addf %1193, %1195 : vector<8x32xf32>
    %1197 = vector.extract_strided_slice %1189 {offsets = [0, 96], sizes = [8, 32], strides = [1, 1]} : vector<8x128xf32> to vector<8x32xf32>
    %1198 = math.tanh %1196 : vector<8x32xf32>
    %1199 = arith.mulf %1197, %1198 : vector<8x32xf32>
    %c0_317 = arith.constant 0 : index
    %c0_318 = arith.constant 0 : index
    %1200 = vector.load %arg9[%c0_317, %c0_318] : memref<8x64xf32, #tpu.memory_space<vmem>>, vector<8x32xf32>
    tpu.vector_store %arg9[%c0_317, %c0_318], %1199 {strides = array<i32>} : memref<8x64xf32, #tpu.memory_space<vmem>>, vector<8x32xf32>,
    %c0_319 = arith.constant 0 : index
    %c32_320 = arith.constant 32 : index
    %1201 = vector.load %arg9[%c0_319, %c32_320] : memref<8x64xf32, #tpu.memory_space<vmem>>, vector<8x32xf32>
    tpu.vector_store %arg9[%c0_319, %c32_320], %1181 {strides = array<i32>} : memref<8x64xf32, #tpu.memory_space<vmem>>, vector<8x32xf32>,
    %c0_321 = arith.constant 0 : index
    %c0_322 = arith.constant 0 : index
    %1202 = vector.load %arg9[%c0_321, %c0_322] : memref<8x64xf32, #tpu.memory_space<vmem>>, vector<8x64xf32>
    %cst_323 = arith.constant dense<0.000000e+00> : vector<8x256xf32>
    %1203 = tpu.matmul %1202, %7, %cst_323 {dimension_numbers = #tpu.dot_dimension_numbers<[1], [0], [0], [1], [0, 0, 1, 1], [], []>} : vector<8x64xf32>, vector<64x256xf32>, vector<8x256xf32> -> vector<8x256xf32>
    %1204 = vector.extract_strided_slice %1203 {offsets = [0, 128], sizes = [8, 128], strides = [1, 1]} : vector<8x256xf32> to vector<8x128xf32>
    %1205 = arith.addf %1204, %10 : vector<8x128xf32>
    %1206 = arith.negf %1205 : vector<8x128xf32>
    %1207 = math.exp %1206 : vector<8x128xf32>
    %cst_324 = arith.constant 1.000000e+00 : f32
    %1208 = vector.broadcast %cst_324 : f32 to vector<8x128xf32>
    %1209 = arith.addf %1208, %1207 : vector<8x128xf32>
    %1210 = arith.divf %1208, %1209 : vector<8x128xf32>
    %1211 = vector.extract_strided_slice %1205 {offsets = [0, 64], sizes = [8, 32], strides = [1, 1]} : vector<8x128xf32> to vector<8x32xf32>
    %1212 = math.tanh %1211 : vector<8x32xf32>
    %1213 = vector.extract_strided_slice %1210 {offsets = [0, 32], sizes = [8, 32], strides = [1, 1]} : vector<8x128xf32> to vector<8x32xf32>
    %1214 = arith.mulf %1213, %1178 : vector<8x32xf32>
    %1215 = vector.extract_strided_slice %1210 {offsets = [0, 0], sizes = [8, 32], strides = [1, 1]} : vector<8x128xf32> to vector<8x32xf32>
    %1216 = arith.mulf %1215, %1212 : vector<8x32xf32>
    %1217 = arith.addf %1214, %1216 : vector<8x32xf32>
    %1218 = vector.extract_strided_slice %1210 {offsets = [0, 96], sizes = [8, 32], strides = [1, 1]} : vector<8x128xf32> to vector<8x32xf32>
    %1219 = math.tanh %1217 : vector<8x32xf32>
    %1220 = arith.mulf %1218, %1219 : vector<8x32xf32>
    %1221 = vector.extract_strided_slice %1203 {offsets = [0, 0], sizes = [8, 128], strides = [1, 1]} : vector<8x256xf32> to vector<8x128xf32>
    %c248 = arith.constant 248 : index
    %c0_325 = arith.constant 0 : index
    %1222 = vector.load %arg8[%c248, %c0_325] : memref<256x128xf32, #tpu.memory_space<vmem>>, vector<8x128xf32>
    %1223 = arith.addf %1221, %1222 : vector<8x128xf32>
    %1224 = arith.negf %1223 : vector<8x128xf32>
    %1225 = math.exp %1224 : vector<8x128xf32>
    %cst_326 = arith.constant 1.000000e+00 : f32
    %1226 = vector.broadcast %cst_326 : f32 to vector<8x128xf32>
    %1227 = arith.addf %1226, %1225 : vector<8x128xf32>
    %1228 = arith.divf %1226, %1227 : vector<8x128xf32>
    %1229 = vector.extract_strided_slice %1223 {offsets = [0, 64], sizes = [8, 32], strides = [1, 1]} : vector<8x128xf32> to vector<8x32xf32>
    %1230 = math.tanh %1229 : vector<8x32xf32>
    %1231 = vector.extract_strided_slice %1228 {offsets = [0, 32], sizes = [8, 32], strides = [1, 1]} : vector<8x128xf32> to vector<8x32xf32>
    %1232 = arith.mulf %1231, %1196 : vector<8x32xf32>
    %1233 = vector.extract_strided_slice %1228 {offsets = [0, 0], sizes = [8, 32], strides = [1, 1]} : vector<8x128xf32> to vector<8x32xf32>
    %1234 = arith.mulf %1233, %1230 : vector<8x32xf32>
    %1235 = arith.addf %1232, %1234 : vector<8x32xf32>
    %1236 = vector.extract_strided_slice %1228 {offsets = [0, 96], sizes = [8, 32], strides = [1, 1]} : vector<8x128xf32> to vector<8x32xf32>
    %1237 = math.tanh %1235 : vector<8x32xf32>
    %1238 = arith.mulf %1236, %1237 : vector<8x32xf32>
    %c0_327 = arith.constant 0 : index
    %c0_328 = arith.constant 0 : index
    %1239 = vector.load %arg9[%c0_327, %c0_328] : memref<8x64xf32, #tpu.memory_space<vmem>>, vector<8x32xf32>
    tpu.vector_store %arg9[%c0_327, %c0_328], %1238 {strides = array<i32>} : memref<8x64xf32, #tpu.memory_space<vmem>>, vector<8x32xf32>,
    %c0_329 = arith.constant 0 : index
    %c32_330 = arith.constant 32 : index
    %1240 = vector.load %arg9[%c0_329, %c32_330] : memref<8x64xf32, #tpu.memory_space<vmem>>, vector<8x32xf32>
    tpu.vector_store %arg9[%c0_329, %c32_330], %1220 {strides = array<i32>} : memref<8x64xf32, #tpu.memory_space<vmem>>, vector<8x32xf32>,
    %c0_331 = arith.constant 0 : index
    %c0_332 = arith.constant 0 : index
    %1241 = vector.load %arg9[%c0_331, %c0_332] : memref<8x64xf32, #tpu.memory_space<vmem>>, vector<8x64xf32>
    %cst_333 = arith.constant dense<0.000000e+00> : vector<8x256xf32>
    %1242 = tpu.matmul %1241, %7, %cst_333 {dimension_numbers = #tpu.dot_dimension_numbers<[1], [0], [0], [1], [0, 0, 1, 1], [], []>} : vector<8x64xf32>, vector<64x256xf32>, vector<8x256xf32> -> vector<8x256xf32>
    %1243 = vector.extract_strided_slice %1242 {offsets = [0, 128], sizes = [8, 128], strides = [1, 1]} : vector<8x256xf32> to vector<8x128xf32>
    %1244 = arith.addf %1243, %10 : vector<8x128xf32>
    %1245 = arith.negf %1244 : vector<8x128xf32>
    %1246 = math.exp %1245 : vector<8x128xf32>
    %cst_334 = arith.constant 1.000000e+00 : f32
    %1247 = vector.broadcast %cst_334 : f32 to vector<8x128xf32>
    %1248 = arith.addf %1247, %1246 : vector<8x128xf32>
    %1249 = arith.divf %1247, %1248 : vector<8x128xf32>
    %1250 = vector.extract_strided_slice %1244 {offsets = [0, 64], sizes = [8, 32], strides = [1, 1]} : vector<8x128xf32> to vector<8x32xf32>
    %1251 = math.tanh %1250 : vector<8x32xf32>
    %1252 = vector.extract_strided_slice %1249 {offsets = [0, 32], sizes = [8, 32], strides = [1, 1]} : vector<8x128xf32> to vector<8x32xf32>
    %1253 = arith.mulf %1252, %1217 : vector<8x32xf32>
    %1254 = vector.extract_strided_slice %1249 {offsets = [0, 0], sizes = [8, 32], strides = [1, 1]} : vector<8x128xf32> to vector<8x32xf32>
    %1255 = arith.mulf %1254, %1251 : vector<8x32xf32>
    %1256 = arith.addf %1253, %1255 : vector<8x32xf32>
    %1257 = vector.extract_strided_slice %1249 {offsets = [0, 96], sizes = [8, 32], strides = [1, 1]} : vector<8x128xf32> to vector<8x32xf32>
    %1258 = math.tanh %1256 : vector<8x32xf32>
    %1259 = arith.mulf %1257, %1258 : vector<8x32xf32>
    %c0_335 = arith.constant 0 : index
    %c0_336 = arith.constant 0 : index
    %1260 = vector.load %arg5[%c0_335, %c0_336] : memref<32x10xf32, #tpu.memory_space<vmem>>, vector<32x10xf32>
    %cst_337 = arith.constant dense<0.000000e+00> : vector<8x10xf32>
    %1261 = tpu.matmul %1259, %1260, %cst_337 {dimension_numbers = #tpu.dot_dimension_numbers<[1], [0], [0], [1], [0, 0, 1, 1], [], []>} : vector<8x32xf32>, vector<32x10xf32>, vector<8x10xf32> -> vector<8x10xf32>
    %c0_338 = arith.constant 0 : index
    %c0_339 = arith.constant 0 : index
    %1262 = vector.load %arg6[%c0_338, %c0_339] : memref<1x10xf32, #tpu.memory_space<vmem>>, vector<1x10xf32>
    %1263 = vector.broadcast %1262 : vector<1x10xf32> to vector<8x10xf32>
    %1264 = arith.addf %1261, %1263 : vector<8x10xf32>
    %c0_340 = arith.constant 0 : index
    %c0_341 = arith.constant 0 : index
    %1265 = vector.load %arg7[%c0_340, %c0_341] : memref<8x10xf32, #tpu.memory_space<vmem>>, vector<8x10xf32>
    tpu.vector_store %arg7[%c0_340, %c0_341], %1264 {strides = array<i32>} : memref<8x10xf32, #tpu.memory_space<vmem>>, vector<8x10xf32>,
    return
  }
}

</mosaic_0001>

<llo_original>
// kernel: tpu_custom_call.1
$region0: #{tpu_custom_call.1}
  #allocation0 [shape = 'u32[]', space=smem, size = 0x4, offset = 0x4, fixed_abs, tag = 'smem constant byte address 0x4 - core index']
  #allocation1 [shape = 'u32[144,128]{1,0:T(1,128)}', space=vmem, size = 0x12000, scoped, tag = 'internal scratch']
  #allocation2 [shape = 'f32[256,128]{1,0:T(8,128)}', space=vmem, size = 0x20000, scoped, tag = 'scratch operand']
  #allocation3 [shape = 'f32[8,64]{1,0:T(8,128)}', space=vmem, size = 0x1000, scoped, tag = 'scratch operand']
  %s0 = inlined_call_operand.vmem [shape: f32[256,96], index: 0, kind: input, shape index: {}]
  %s1 = inlined_call_operand.vmem [shape: f32[96,128], index: 1, kind: input, shape index: {}]
  %s2 = inlined_call_operand.vmem [shape: f32[1,128], index: 2, kind: input, shape index: {}]
  %s3 = inlined_call_operand.vmem [shape: f32[64,256], index: 3, kind: input, shape index: {}]
  %s4 = inlined_call_operand.vmem [shape: f32[1,128], index: 4, kind: input, shape index: {}]
  %s5 = inlined_call_operand.vmem [shape: f32[32,10], index: 5, kind: input, shape index: {}]
  %s6 = inlined_call_operand.vmem [shape: f32[1,10], index: 6, kind: input, shape index: {}]
  %s7 = inlined_call_operand.hbm [shape: f32[8,10], index: 7, kind: output, shape index: {}]
  %s8 = sld [smem:[#allocation0]]
  $region38: #{tpu_custom_call.1} parent=0
    _
  %s10 = ssub.s32 1, %s8
  %s11 = scalar_select 0, %s10, %s8
  $region1: #{tpu_custom_call.1} parent=0
    #allocation4 [shape = 'u8[4096]{0}', space=vmem, size = 0x1000, scoped, tag = 'output window, operand 0, single buffered']
    #allocation5 [shape = 's32[1]{0}', space=sflag, size = 0x4, scoped, tag = 'scoped memory for tpu_custom_call.1']
    %12 = vsyncpa [#allocation5], 0
    // Predicated region
    $region2: #{tpu_custom_call.1} parent=1 // pred_check
      _
    $region3: #{tpu_custom_call.1} parent=1 // pred_check_branch
      %14 = sbr.rel (0) target = $region5
    $region4: #{tpu_custom_call.1} parent=1 // pred_region
      _
    $region5: #{tpu_custom_call.1} parent=1 // pred_fallthru
      _
    // Predicated region
    $region6: #{tpu_custom_call.1} parent=1 // pred_check
      _
    $region7: #{tpu_custom_call.1} parent=1 // pred_check_branch
      %16 = sbr.rel (0) target = $region9
    $region8: #{tpu_custom_call.1} parent=1 // pred_region
      _
    $region9: #{tpu_custom_call.1} parent=1 // pred_fallthru
      _
    // Predicated region
    $region10: #{tpu_custom_call.1} parent=1 // pred_check
      _
    $region11: #{tpu_custom_call.1} parent=1 // pred_check_branch
      %18 = sbr.rel (0) target = $region13
    $region12: #{tpu_custom_call.1} parent=1 // pred_region
      _
    $region13: #{tpu_custom_call.1} parent=1 // pred_fallthru
      _
    // Predicated region
    $region14: #{tpu_custom_call.1} parent=1 // pred_check
      _
    $region15: #{tpu_custom_call.1} parent=1 // pred_check_branch
      %20 = sbr.rel (0) target = $region17
    $region16: #{tpu_custom_call.1} parent=1 // pred_region
      _
    $region17: #{tpu_custom_call.1} parent=1 // pred_fallthru
      _
    // Predicated region
    $region18: #{tpu_custom_call.1} parent=1 // pred_check
      _
    $region19: #{tpu_custom_call.1} parent=1 // pred_check_branch
      %22 = sbr.rel (0) target = $region21
    $region20: #{tpu_custom_call.1} parent=1 // pred_region
      _
    $region21: #{tpu_custom_call.1} parent=1 // pred_fallthru
      _
    // Predicated region
    $region22: #{tpu_custom_call.1} parent=1 // pred_check
      _
    $region23: #{tpu_custom_call.1} parent=1 // pred_check_branch
      %24 = sbr.rel (0) target = $region25
    $region24: #{tpu_custom_call.1} parent=1 // pred_region
      _
    $region25: #{tpu_custom_call.1} parent=1 // pred_fallthru
      _
    // Predicated region
    $region26: #{tpu_custom_call.1} parent=1 // pred_check
      _
    $region27: #{tpu_custom_call.1} parent=1 // pred_check_branch
      %26 = sbr.rel (0) target = $region29
    $region28: #{tpu_custom_call.1} parent=1 // pred_region
      _
    $region29: #{tpu_custom_call.1} parent=1 // pred_fallthru
      _
    %v27 = vld [vmem:[%s0] sm:$0xff]
    %v28 = vld [vmem:[%s0 + $0x8] sm:$0xff]
    %v29 = vld [vmem:[%s0 + $0x10] sm:$0xff]
    %v30 = vld [vmem:[%s0 + $0x18] sm:$0xff]
    %v31 = vld [vmem:[%s0 + $0x20] sm:$0xff]
    %v32 = vld [vmem:[%s0 + $0x28] sm:$0xff]
    %v33 = vld [vmem:[%s0 + $0x30] sm:$0xff]
    %v34 = vld [vmem:[%s0 + $0x38] sm:$0xff]
    %v35 = vld [vmem:[%s0 + $0x40] sm:$0xff]
    %v36 = vld [vmem:[%s0 + $0x48] sm:$0xff]
    %v37 = vld [vmem:[%s0 + $0x50] sm:$0xff]
    %v38 = vld [vmem:[%s0 + $0x58] sm:$0xff]
    %v39 = vld [vmem:[%s0 + $0x60] sm:$0xff]
    %v40 = vld [vmem:[%s0 + $0x68] sm:$0xff]
    %v41 = vld [vmem:[%s0 + $0x70] sm:$0xff]
    %v42 = vld [vmem:[%s0 + $0x78] sm:$0xff]
    %v43 = vld [vmem:[%s0 + $0x80] sm:$0xff]
    %v44 = vld [vmem:[%s0 + $0x88] sm:$0xff]
    %v45 = vld [vmem:[%s0 + $0x90] sm:$0xff]
    %v46 = vld [vmem:[%s0 + $0x98] sm:$0xff]
    %v47 = vld [vmem:[%s0 + $0xa0] sm:$0xff]
    %v48 = vld [vmem:[%s0 + $0xa8] sm:$0xff]
    %v49 = vld [vmem:[%s0 + $0xb0] sm:$0xff]
    %v50 = vld [vmem:[%s0 + $0xb8] sm:$0xff]
    %v51 = vld [vmem:[%s0 + $0xc0] sm:$0xff]
    %v52 = vld [vmem:[%s0 + $0xc8] sm:$0xff]
    %v53 = vld [vmem:[%s0 + $0xd0] sm:$0xff]
    %v54 = vld [vmem:[%s0 + $0xd8] sm:$0xff]
    %v55 = vld [vmem:[%s0 + $0xe0] sm:$0xff]
    %v56 = vld [vmem:[%s0 + $0xe8] sm:$0xff]
    %v57 = vld [vmem:[%s0 + $0xf0] sm:$0xff]
    %v58 = vld [vmem:[%s0 + $0xf8] sm:$0xff]
    %v59 = vld [vmem:[%s1] sm:$0xff]
    %v60 = vld [vmem:[%s1 + $0x8] sm:$0xff]
    %v61 = vld [vmem:[%s1 + $0x10] sm:$0xff]
    %v62 = vld [vmem:[%s1 + $0x18] sm:$0xff]
    %v63 = vld [vmem:[%s1 + $0x20] sm:$0xff]
    %v64 = vld [vmem:[%s1 + $0x28] sm:$0xff]
    %v65 = vld [vmem:[%s1 + $0x30] sm:$0xff]
    %v66 = vld [vmem:[%s1 + $0x38] sm:$0xff]
    %v67 = vld [vmem:[%s1 + $0x40] sm:$0xff]
    %v68 = vld [vmem:[%s1 + $0x48] sm:$0xff]
    %v69 = vld [vmem:[%s1 + $0x50] sm:$0xff]
    %v70 = vld [vmem:[%s1 + $0x58] sm:$0xff]
    %v71 = vld [vmem:[%s2] sm:$0x1]
    %v73 = vlaneseq
    %v74 = vshrl.u32 %v73, 7
    %v75 = vsub.s32 0, %v74
    %v76 = vrot.slane %v71, %v75
    %vm78 = vcmask 785408
    %v80 = vsel %vm78, %v27, 0
    %v83 = vsel %vm78, %v28, 0
    %v86 = vsel %vm78, %v29, 0
    %v89 = vsel %vm78, %v30, 0
    %v92 = vsel %vm78, %v31, 0
    %v95 = vsel %vm78, %v32, 0
    %v98 = vsel %vm78, %v33, 0
    %v101 = vsel %vm78, %v34, 0
    %v104 = vsel %vm78, %v35, 0
    %v107 = vsel %vm78, %v36, 0
    %v110 = vsel %vm78, %v37, 0
    %v113 = vsel %vm78, %v38, 0
    %v116 = vsel %vm78, %v39, 0
    %v119 = vsel %vm78, %v40, 0
    %v122 = vsel %vm78, %v41, 0
    %v125 = vsel %vm78, %v42, 0
    %v128 = vsel %vm78, %v43, 0
    %v131 = vsel %vm78, %v44, 0
    %v134 = vsel %vm78, %v45, 0
    %v137 = vsel %vm78, %v46, 0
    %v140 = vsel %vm78, %v47, 0
    %v143 = vsel %vm78, %v48, 0
    %v146 = vsel %vm78, %v49, 0
    %v149 = vsel %vm78, %v50, 0
    %v152 = vsel %vm78, %v51, 0
    %v155 = vsel %vm78, %v52, 0
    %v158 = vsel %vm78, %v53, 0
    %v161 = vsel %vm78, %v54, 0
    %v164 = vsel %vm78, %v55, 0
    %v167 = vsel %vm78, %v56, 0
    %v170 = vsel %vm78, %v57, 0
    %v173 = vsel %vm78, %v58, 0
    %175 = vmatprep.subr.mxu0 0.0
    %176 = vmatpush1.msra.mxu0 %v59
    %177 = vmatprep.subr.mxu0 0.0
    %178 = vmatpush1.msra.mxu0 %v60
    %179 = vmatprep.subr.mxu0 0.0
    %180 = vmatpush1.msra.mxu0 %v61
    %181 = vmatprep.subr.mxu0 0.0
    %182 = vmatpush1.msra.mxu0 %v62
    %183 = vmatprep.subr.mxu0 0.0
    %184 = vmatpush1.msra.mxu0 %v63
    %185 = vmatprep.subr.mxu0 0.0
    %186 = vmatpush1.msra.mxu0 %v64
    %187 = vmatprep.subr.mxu0 0.0
    %188 = vmatpush1.msra.mxu0 %v65
    %189 = vmatprep.subr.mxu0 0.0
    %190 = vmatpush1.msra.mxu0 %v66
    %191 = vmatprep.subr.mxu0 0.0
    %192 = vmatpush1.msra.mxu0 %v67
    %193 = vmatprep.subr.mxu0 0.0
    %194 = vmatpush1.msra.mxu0 %v68
    %195 = vmatprep.subr.mxu0 0.0
    %196 = vmatpush1.msra.mxu0 %v69
    %197 = vmatprep.subr.mxu0 0.0
    %198 = vmatpush1.msra.mxu0 %v70
    %199 = vmatprep.subr.mxu0 0.0
    %200 = vmatpush1.msra.mxu0 0.0
    %201 = vmatprep.subr.mxu0 0.0
    %202 = vmatpush1.msra.mxu0 0.0
    %203 = vmatprep.subr.mxu0 0.0
    %204 = vmatpush1.msra.mxu0 0.0
    %205 = vmatprep.subr.mxu0 0.0
    %206 = vmatpush1.msra.mxu0 0.0
    %207 = vmatprep.subr.mxu0 0.0
    %208 = vmatpush1.msra.mxu0 0.0
    %209 = vmatprep.subr.mxu0 0.0
    %210 = vmatpush1.msra.mxu0 0.0
    %211 = vmatprep.subr.mxu0 0.0
    %212 = vmatpush1.msra.mxu0 0.0
    %213 = vmatprep.subr.mxu0 0.0
    %214 = vmatpush1.msra.mxu0 0.0
    %215 = vmatprep.subr.mxu0 0.0
    %216 = vmatpush1.msra.mxu0 0.0
    %217 = vmatprep.subr.mxu0 0.0
    %218 = vmatpush1.msra.mxu0 0.0
    %219 = vmatprep.subr.mxu0 0.0
    %220 = vmatpush1.msra.mxu0 0.0
    %221 = vmatprep.subr.mxu0 0.0
    %222 = vmatpush1.msra.mxu0 0.0
    %223 = vmatprep.subr.mxu0 0.0
    %224 = vmatpush1.msra.mxu0 0.0
    %225 = vmatprep.subr.mxu0 0.0
    %226 = vmatpush1.msra.mxu0 0.0
    %227 = vmatprep.subr.mxu0 0.0
    %228 = vmatpush1.msra.mxu0 0.0
    %229 = vmatprep.subr.mxu0 0.0
    %230 = vmatpush1.msra.mxu0 0.0
    %231 = vmatprep.subr.mxu0 0.0
    %232 = vmatpush1.msra.mxu0 0.0
    %233 = vmatprep.subr.mxu0 0.0
    %234 = vmatpush1.msra.mxu0 0.0
    %235 = vmatprep.subr.mxu0 0.0
    %236 = vmatpush1.msra.mxu0 0.0
    %237 = vmatprep.subr.mxu0 0.0
    %238 = vmatpush1.msra.mxu0 0.0
    %239 = vmatprep.mubr.f32.mxu0 0.0
    %240 = vmatmul.mubr.f32.gmra.mrb[0].mxu0 %v80
    %v241 = vpop.f32.mrb[0].mxu0
    %v242 = vadd.f32 %v76, %v241
    %v243 = vpop.f32.mrb[0].mxu0
    %244 = vmatprep.mubr.f32.mxu0 0.0
    %245 = vmatmul.mubr.f32.gmra.mrb[0].mxu0 %v83
    %v246 = vpop.f32.mrb[0].mxu0
    %v247 = vadd.f32 %v76, %v246
    %v248 = vpop.f32.mrb[0].mxu0
    %249 = vmatprep.mubr.f32.mxu0 0.0
    %250 = vmatmul.mubr.f32.gmra.mrb[0].mxu0 %v86
    %v251 = vpop.f32.mrb[0].mxu0
    %v252 = vadd.f32 %v76, %v251
    %v253 = vpop.f32.mrb[0].mxu0
    %254 = vmatprep.mubr.f32.mxu0 0.0
    %255 = vmatmul.mubr.f32.gmra.mrb[0].mxu0 %v89
    %v256 = vpop.f32.mrb[0].mxu0
    %v257 = vadd.f32 %v76, %v256
    %v258 = vpop.f32.mrb[0].mxu0
    %259 = vmatprep.mubr.f32.mxu0 0.0
    %260 = vmatmul.mubr.f32.gmra.mrb[0].mxu0 %v92
    %v261 = vpop.f32.mrb[0].mxu0
    %v262 = vadd.f32 %v76, %v261
    %v263 = vpop.f32.mrb[0].mxu0
    %264 = vmatprep.mubr.f32.mxu0 0.0
    %265 = vmatmul.mubr.f32.gmra.mrb[0].mxu0 %v95
    %v266 = vpop.f32.mrb[0].mxu0
    %v267 = vadd.f32 %v76, %v266
    %v268 = vpop.f32.mrb[0].mxu0
    %269 = vmatprep.mubr.f32.mxu0 0.0
    %270 = vmatmul.mubr.f32.gmra.mrb[0].mxu0 %v98
    %v271 = vpop.f32.mrb[0].mxu0
    %v272 = vadd.f32 %v76, %v271
    %v273 = vpop.f32.mrb[0].mxu0
    %274 = vmatprep.mubr.f32.mxu0 0.0
    %275 = vmatmul.mubr.f32.gmra.mrb[0].mxu0 %v101
    %v276 = vpop.f32.mrb[0].mxu0
    %v277 = vadd.f32 %v76, %v276
    %v278 = vpop.f32.mrb[0].mxu0
    %279 = vmatprep.mubr.f32.mxu0 0.0
    %280 = vmatmul.mubr.f32.gmra.mrb[0].mxu0 %v104
    %v281 = vpop.f32.mrb[0].mxu0
    %v282 = vadd.f32 %v76, %v281
    %v283 = vpop.f32.mrb[0].mxu0
    %284 = vmatprep.mubr.f32.mxu0 0.0
    %285 = vmatmul.mubr.f32.gmra.mrb[0].mxu0 %v107
    %v286 = vpop.f32.mrb[0].mxu0
    %v287 = vadd.f32 %v76, %v286
    %v288 = vpop.f32.mrb[0].mxu0
    %289 = vmatprep.mubr.f32.mxu0 0.0
    %290 = vmatmul.mubr.f32.gmra.mrb[0].mxu0 %v110
    %v291 = vpop.f32.mrb[0].mxu0
    %v292 = vadd.f32 %v76, %v291
    %v293 = vpop.f32.mrb[0].mxu0
    %294 = vmatprep.mubr.f32.mxu0 0.0
    %295 = vmatmul.mubr.f32.gmra.mrb[0].mxu0 %v113
    %v296 = vpop.f32.mrb[0].mxu0
    %v297 = vadd.f32 %v76, %v296
    %v298 = vpop.f32.mrb[0].mxu0
    %299 = vmatprep.mubr.f32.mxu0 0.0
    %300 = vmatmul.mubr.f32.gmra.mrb[0].mxu0 %v116
    %v301 = vpop.f32.mrb[0].mxu0
    %v302 = vadd.f32 %v76, %v301
    %v303 = vpop.f32.mrb[0].mxu0
    %304 = vmatprep.mubr.f32.mxu0 0.0
    %305 = vmatmul.mubr.f32.gmra.mrb[0].mxu0 %v119
    %v306 = vpop.f32.mrb[0].mxu0
    %v307 = vadd.f32 %v76, %v306
    %v308 = vpop.f32.mrb[0].mxu0
    %309 = vmatprep.mubr.f32.mxu0 0.0
    %310 = vmatmul.mubr.f32.gmra.mrb[0].mxu0 %v122
    %v311 = vpop.f32.mrb[0].mxu0
    %v312 = vadd.f32 %v76, %v311
    %v313 = vpop.f32.mrb[0].mxu0
    %314 = vmatprep.mubr.f32.mxu0 0.0
    %315 = vmatmul.mubr.f32.gmra.mrb[0].mxu0 %v125
    %v316 = vpop.f32.mrb[0].mxu0
    %v317 = vadd.f32 %v76, %v316
    %v318 = vpop.f32.mrb[0].mxu0
    %319 = vmatprep.mubr.f32.mxu0 0.0
    %320 = vmatmul.mubr.f32.gmra.mrb[0].mxu0 %v128
    %v321 = vpop.f32.mrb[0].mxu0
    %v322 = vadd.f32 %v76, %v321
    %v323 = vpop.f32.mrb[0].mxu0
    %324 = vmatprep.mubr.f32.mxu0 0.0
    %325 = vmatmul.mubr.f32.gmra.mrb[0].mxu0 %v131
    %v326 = vpop.f32.mrb[0].mxu0
    %v327 = vadd.f32 %v76, %v326
    %v328 = vpop.f32.mrb[0].mxu0
    %329 = vmatprep.mubr.f32.mxu0 0.0
    %330 = vmatmul.mubr.f32.gmra.mrb[0].mxu0 %v134
    %v331 = vpop.f32.mrb[0].mxu0
    %v332 = vadd.f32 %v76, %v331
    %v333 = vpop.f32.mrb[0].mxu0
    %334 = vmatprep.mubr.f32.mxu0 0.0
    %335 = vmatmul.mubr.f32.gmra.mrb[0].mxu0 %v137
    %v336 = vpop.f32.mrb[0].mxu0
    %v337 = vadd.f32 %v76, %v336
    %v338 = vpop.f32.mrb[0].mxu0
    %339 = vmatprep.mubr.f32.mxu0 0.0
    %340 = vmatmul.mubr.f32.gmra.mrb[0].mxu0 %v140
    %v341 = vpop.f32.mrb[0].mxu0
    %v342 = vadd.f32 %v76, %v341
    %v343 = vpop.f32.mrb[0].mxu0
    %344 = vmatprep.mubr.f32.mxu0 0.0
    %345 = vmatmul.mubr.f32.gmra.mrb[0].mxu0 %v143
    %v346 = vpop.f32.mrb[0].mxu0
    %v347 = vadd.f32 %v76, %v346
    %v348 = vpop.f32.mrb[0].mxu0
    %349 = vmatprep.mubr.f32.mxu0 0.0
    %350 = vmatmul.mubr.f32.gmra.mrb[0].mxu0 %v146
    %v351 = vpop.f32.mrb[0].mxu0
    %v352 = vadd.f32 %v76, %v351
    %v353 = vpop.f32.mrb[0].mxu0
    %354 = vmatprep.mubr.f32.mxu0 0.0
    %355 = vmatmul.mubr.f32.gmra.mrb[0].mxu0 %v149
    %v356 = vpop.f32.mrb[0].mxu0
    %v357 = vadd.f32 %v76, %v356
    %v358 = vpop.f32.mrb[0].mxu0
    %359 = vmatprep.mubr.f32.mxu0 0.0
    %360 = vmatmul.mubr.f32.gmra.mrb[0].mxu0 %v152
    %v361 = vpop.f32.mrb[0].mxu0
    %v362 = vadd.f32 %v76, %v361
    %v363 = vpop.f32.mrb[0].mxu0
    %364 = vmatprep.mubr.f32.mxu0 0.0
    %365 = vmatmul.mubr.f32.gmra.mrb[0].mxu0 %v155
    %v366 = vpop.f32.mrb[0].mxu0
    %v367 = vadd.f32 %v76, %v366
    %v368 = vpop.f32.mrb[0].mxu0
    %369 = vmatprep.mubr.f32.mxu0 0.0
    %370 = vmatmul.mubr.f32.gmra.mrb[0].mxu0 %v158
    %v371 = vpop.f32.mrb[0].mxu0
    %v372 = vadd.f32 %v76, %v371
    %v373 = vpop.f32.mrb[0].mxu0
    %374 = vmatprep.mubr.f32.mxu0 0.0
    %375 = vmatmul.mubr.f32.gmra.mrb[0].mxu0 %v161
    %v376 = vpop.f32.mrb[0].mxu0
    %v377 = vadd.f32 %v76, %v376
    %v378 = vpop.f32.mrb[0].mxu0
    %379 = vmatprep.mubr.f32.mxu0 0.0
    %380 = vmatmul.mubr.f32.gmra.mrb[0].mxu0 %v164
    %v381 = vpop.f32.mrb[0].mxu0
    %v382 = vadd.f32 %v76, %v381
    %v383 = vpop.f32.mrb[0].mxu0
    %384 = vmatprep.mubr.f32.mxu0 0.0
    %385 = vmatmul.mubr.f32.gmra.mrb[0].mxu0 %v167
    %v386 = vpop.f32.mrb[0].mxu0
    %v387 = vadd.f32 %v76, %v386
    %v388 = vpop.f32.mrb[0].mxu0
    %389 = vmatprep.mubr.f32.mxu0 0.0
    %390 = vmatmul.mubr.f32.gmra.mrb[0].mxu0 %v170
    %v391 = vpop.f32.mrb[0].mxu0
    %v392 = vadd.f32 %v76, %v391
    %v393 = vpop.f32.mrb[0].mxu0
    %394 = vmatprep.mubr.f32.mxu0 0.0
    %395 = vmatmul.mubr.f32.gmra.mrb[0].mxu0 %v173
    %v396 = vpop.f32.mrb[0].mxu0
    %v397 = vadd.f32 %v76, %v396
    %v398 = vpop.f32.mrb[0].mxu0
    %399 = vdwg.mxu0
    %400 = vst [vmem:[#allocation2] sm:$0xff] %v242
    %401 = vst [vmem:[#allocation2 + $0x8] sm:$0xff] %v247
    %402 = vst [vmem:[#allocation2 + $0x10] sm:$0xff] %v252
    %403 = vst [vmem:[#allocation2 + $0x18] sm:$0xff] %v257
    %404 = vst [vmem:[#allocation2 + $0x20] sm:$0xff] %v262
    %405 = vst [vmem:[#allocation2 + $0x28] sm:$0xff] %v267
    %406 = vst [vmem:[#allocation2 + $0x30] sm:$0xff] %v272
    %407 = vst [vmem:[#allocation2 + $0x38] sm:$0xff] %v277
    %408 = vst [vmem:[#allocation2 + $0x40] sm:$0xff] %v282
    %409 = vst [vmem:[#allocation2 + $0x48] sm:$0xff] %v287
    %410 = vst [vmem:[#allocation2 + $0x50] sm:$0xff] %v292
    %411 = vst [vmem:[#allocation2 + $0x58] sm:$0xff] %v297
    %412 = vst [vmem:[#allocation2 + $0x60] sm:$0xff] %v302
    %413 = vst [vmem:[#allocation2 + $0x68] sm:$0xff] %v307
    %414 = vst [vmem:[#allocation2 + $0x70] sm:$0xff] %v312
    %415 = vst [vmem:[#allocation2 + $0x78] sm:$0xff] %v317
    %416 = vst [vmem:[#allocation2 + $0x80] sm:$0xff] %v322
    %417 = vst [vmem:[#allocation2 + $0x88] sm:$0xff] %v327
    %418 = vst [vmem:[#allocation2 + $0x90] sm:$0xff] %v332
    %419 = vst [vmem:[#allocation2 + $0x98] sm:$0xff] %v337
    %420 = vst [vmem:[#allocation2 + $0xa0] sm:$0xff] %v342
    %421 = vst [vmem:[#allocation2 + $0xa8] sm:$0xff] %v347
    %422 = vst [vmem:[#allocation2 + $0xb0] sm:$0xff] %v352
    %423 = vst [vmem:[#allocation2 + $0xb8] sm:$0xff] %v357
    %424 = vst [vmem:[#allocation2 + $0xc0] sm:$0xff] %v362
    %425 = vst [vmem:[#allocation2 + $0xc8] sm:$0xff] %v367
    %426 = vst [vmem:[#allocation2 + $0xd0] sm:$0xff] %v372
    %427 = vst [vmem:[#allocation2 + $0xd8] sm:$0xff] %v377
    %428 = vst [vmem:[#allocation2 + $0xe0] sm:$0xff] %v382
    %429 = vst [vmem:[#allocation2 + $0xe8] sm:$0xff] %v387
    %430 = vst [vmem:[#allocation2 + $0xf0] sm:$0xff] %v392
    %431 = vst [vmem:[#allocation2 + $0xf8] sm:$0xff] %v397
    %v432 = vld [vmem:[%s3] sm:$0xff]
    %v433 = vld [vmem:[%s3 + $0x8] sm:$0xff]
    %v434 = vld [vmem:[%s3 + $0x10] sm:$0xff]
    %v435 = vld [vmem:[%s3 + $0x18] sm:$0xff]
    %v436 = vld [vmem:[%s3 + $0x20] sm:$0xff]
    %v437 = vld [vmem:[%s3 + $0x28] sm:$0xff]
    %v438 = vld [vmem:[%s3 + $0x30] sm:$0xff]
    %v439 = vld [vmem:[%s3 + $0x38] sm:$0xff]
    %v440 = vld [vmem:[%s3 + $0x40] sm:$0xff]
    %v441 = vld [vmem:[%s3 + $0x48] sm:$0xff]
    %v442 = vld [vmem:[%s3 + $0x50] sm:$0xff]
    %v443 = vld [vmem:[%s3 + $0x58] sm:$0xff]
    %v444 = vld [vmem:[%s3 + $0x60] sm:$0xff]
    %v445 = vld [vmem:[%s3 + $0x68] sm:$0xff]
    %v446 = vld [vmem:[%s3 + $0x70] sm:$0xff]
    %v447 = vld [vmem:[%s3 + $0x78] sm:$0xff]
    %v448 = vld [vmem:[%s4] sm:$0x1]
    %v450 = vlaneseq
    %v451 = vshrl.u32 %v450, 7
    %v452 = vsub.s32 0, %v451
    %v453 = vrot.slane %v448, %v452
    %vm455 = vcmask 523264
    %456 = vst.msk [vmem:[#allocation3] sm:$0xff] %vm455, 0.0
    %v457 = vld [vmem:[#allocation2] sm:$0xff]
    %v458 = vxor.u32 %v457, 2147483648
    %v459 = vmul.f32 %v458, 1.442695
    %v460 = vpow.pop %v459
    %v461 = vadd.f32 %v460, 1.0
    %v462 = vrcp.pop %v461
    %v463 = vmul.f32 1.0, %v462
    %v464 = vtanh.pop %v457
    %v465 = vmul.f32 %v463, 0.0
    %467 = vrot.lane.b32.xlu0 %v464, 64
    %v468 = vpop.permute.xlu0 %467
    %v470 = vmul.f32 %v463, %v468
    %472 = vrot.lane.b32.xlu0 %v470, 32
    %v473 = vpop.permute.xlu0 %472
    %v475 = vadd.f32 %v465, %v473
    %v476 = vtanh.pop %v475
    %478 = vrot.lane.b32.xlu0 %v476, 64
    %v479 = vpop.permute.xlu0 %478
    %v481 = vmul.f32 %v463, %v479
    %483 = vrot.lane.b32.xlu0 %v481, 32
    %v484 = vpop.permute.xlu0 %483
    %vm486 = vcmask 261120
    %487 = vst.msk [vmem:[#allocation3] sm:$0xff] %vm486, %v484
    %v488 = vld [vmem:[#allocation3] sm:$0xff]
    %v490 = vsel %vm455, %v488, 0
    %492 = vmatprep.subr.mxu0 %v433
    %493 = vmatpush1.msra.mxu0 %v432
    %494 = vmatprep.subr.mxu0 %v435
    %495 = vmatpush1.msra.mxu0 %v434
    %496 = vmatprep.subr.mxu0 %v437
    %497 = vmatpush1.msra.mxu0 %v436
    %498 = vmatprep.subr.mxu0 %v439
    %499 = vmatpush1.msra.mxu0 %v438
    %500 = vmatprep.subr.mxu0 %v441
    %501 = vmatpush1.msra.mxu0 %v440
    %502 = vmatprep.subr.mxu0 %v443
    %503 = vmatpush1.msra.mxu0 %v442
    %504 = vmatprep.subr.mxu0 %v445
    %505 = vmatpush1.msra.mxu0 %v444
    %506 = vmatprep.subr.mxu0 %v447
    %507 = vmatpush1.msra.mxu0 %v446
    %508 = vmatprep.subr.mxu0 0.0
    %509 = vmatpush1.msra.mxu0 0.0
    %510 = vmatprep.subr.mxu0 0.0
    %511 = vmatpush1.msra.mxu0 0.0
    %512 = vmatprep.subr.mxu0 0.0
    %513 = vmatpush1.msra.mxu0 0.0
    %514 = vmatprep.subr.mxu0 0.0
    %515 = vmatpush1.msra.mxu0 0.0
    %516 = vmatprep.subr.mxu0 0.0
    %517 = vmatpush1.msra.mxu0 0.0
    %518 = vmatprep.subr.mxu0 0.0
    %519 = vmatpush1.msra.mxu0 0.0
    %520 = vmatprep.subr.mxu0 0.0
    %521 = vmatpush1.msra.mxu0 0.0
    %522 = vmatprep.subr.mxu0 0.0
    %523 = vmatpush1.msra.mxu0 0.0
    %524 = vmatprep.subr.mxu0 0.0
    %525 = vmatpush1.msra.mxu0 0.0
    %526 = vmatprep.subr.mxu0 0.0
    %527 = vmatpush1.msra.mxu0 0.0
    %528 = vmatprep.subr.mxu0 0.0
    %529 = vmatpush1.msra.mxu0 0.0
    %530 = vmatprep.subr.mxu0 0.0
    %531 = vmatpush1.msra.mxu0 0.0
    %532 = vmatprep.subr.mxu0 0.0
    %533 = vmatpush1.msra.mxu0 0.0
    %534 = vmatprep.subr.mxu0 0.0
    %535 = vmatpush1.msra.mxu0 0.0
    %536 = vmatprep.subr.mxu0 0.0
    %537 = vmatpush1.msra.mxu0 0.0
    %538 = vmatprep.subr.mxu0 0.0
    %539 = vmatpush1.msra.mxu0 0.0
    %540 = vmatprep.subr.mxu0 0.0
    %541 = vmatpush1.msra.mxu0 0.0
    %542 = vmatprep.subr.mxu0 0.0
    %543 = vmatpush1.msra.mxu0 0.0
    %544 = vmatprep.subr.mxu0 0.0
    %545 = vmatpush1.msra.mxu0 0.0
    %546 = vmatprep.subr.mxu0 0.0
    %547 = vmatpush1.msra.mxu0 0.0
    %548 = vmatprep.subr.mxu0 0.0
    %549 = vmatpush1.msra.mxu0 0.0
    %550 = vmatprep.subr.mxu0 0.0
    %551 = vmatpush1.msra.mxu0 0.0
    %552 = vmatprep.subr.mxu0 0.0
    %553 = vmatpush1.msra.mxu0 0.0
    %554 = vmatprep.subr.mxu0 0.0
    %555 = vmatpush1.msra.mxu0 0.0
    %556 = vmatprep.mubr.f32.mxu0 0.0
    %557 = vmatmul.mubr.f32.gmra.mrb[0].mxu0 %v490
    %v558 = vpop.f32.mrb[0].mxu0
    %v559 = vadd.f32 0.0, %v558
    %v560 = vpop.f32.mrb[0].mxu0
    %v561 = vadd.f32 0.0, %v560
    %562 = vdwg.mxu0
    %v563 = vadd.f32 %v561, %v453
    %v564 = vxor.u32 %v563, 2147483648
    %v565 = vmul.f32 %v564, 1.442695
    %v566 = vpow.pop %v565
    %v567 = vadd.f32 %v566, 1.0
    %v568 = vrcp.pop %v567
    %v569 = vmul.f32 1.0, %v568
    %v570 = vtanh.pop %v563
    %v571 = vmul.f32 %v569, 0.0
    %573 = vrot.lane.b32.xlu0 %v570, 64
    %v574 = vpop.permute.xlu0 %573
    %v576 = vmul.f32 %v569, %v574
    %578 = vrot.lane.b32.xlu0 %v576, 32
    %v579 = vpop.permute.xlu0 %578
    %v581 = vadd.f32 %v571, %v579
    %v582 = vtanh.pop %v581
    %584 = vrot.lane.b32.xlu0 %v582, 64
    %v585 = vpop.permute.xlu0 %584
    %v587 = vmul.f32 %v569, %v585
    %v588 = vld [vmem:[#allocation2 + $0x8] sm:$0xff]
    %v589 = vadd.f32 %v559, %v588
    %v590 = vxor.u32 %v589, 2147483648
    %v591 = vmul.f32 %v590, 1.442695
    %v592 = vpow.pop %v591
    %v593 = vadd.f32 %v592, 1.0
    %v594 = vrcp.pop %v593
    %v595 = vmul.f32 1.0, %v594
    %v596 = vtanh.pop %v589
    %v597 = vmul.f32 %v595, %v475
    %599 = vrot.lane.b32.xlu0 %v596, 64
    %v600 = vpop.permute.xlu0 %599
    %v602 = vmul.f32 %v595, %v600
    %604 = vrot.lane.b32.xlu0 %v602, 32
    %v605 = vpop.permute.xlu0 %604
    %v607 = vadd.f32 %v597, %v605
    %v608 = vtanh.pop %v607
    %610 = vrot.lane.b32.xlu0 %v608, 64
    %v611 = vpop.permute.xlu0 %610
    %v613 = vmul.f32 %v595, %v611
    %615 = vrot.lane.b32.xlu0 %v613, 32
    %v616 = vpop.permute.xlu0 %615
    %618 = vst.msk [vmem:[#allocation3] sm:$0xff] %vm486, %v616
    %620 = vrot.lane.b32.xlu0 %v587, 64
    %v621 = vpop.permute.xlu0 %620
    %vm623 = vcmask 523520
    %624 = vst.msk [vmem:[#allocation3] sm:$0xff] %vm623, %v621
    %v625 = vld [vmem:[#allocation3] sm:$0xff]
    %v627 = vsel %vm455, %v625, 0
    %629 = vmatprep.subr.mxu0 %v433
    %630 = vmatpush1.msra.mxu0 %v432
    %631 = vmatprep.subr.mxu0 %v435
    %632 = vmatpush1.msra.mxu0 %v434
    %633 = vmatprep.subr.mxu0 %v437
    %634 = vmatpush1.msra.mxu0 %v436
    %635 = vmatprep.subr.mxu0 %v439
    %636 = vmatpush1.msra.mxu0 %v438
    %637 = vmatprep.subr.mxu0 %v441
    %638 = vmatpush1.msra.mxu0 %v440
    %639 = vmatprep.subr.mxu0 %v443
    %640 = vmatpush1.msra.mxu0 %v442
    %641 = vmatprep.subr.mxu0 %v445
    %642 = vmatpush1.msra.mxu0 %v444
    %643 = vmatprep.subr.mxu0 %v447
    %644 = vmatpush1.msra.mxu0 %v446
    %645 = vmatprep.subr.mxu0 0.0
    %646 = vmatpush1.msra.mxu0 0.0
    %647 = vmatprep.subr.mxu0 0.0
    %648 = vmatpush1.msra.mxu0 0.0
    %649 = vmatprep.subr.mxu0 0.0
    %650 = vmatpush1.msra.mxu0 0.0
    %651 = vmatprep.subr.mxu0 0.0
    %652 = vmatpush1.msra.mxu0 0.0
    %653 = vmatprep.subr.mxu0 0.0
    %654 = vmatpush1.msra.mxu0 0.0
    %655 = vmatprep.subr.mxu0 0.0
    %656 = vmatpush1.msra.mxu0 0.0
    %657 = vmatprep.subr.mxu0 0.0
    %658 = vmatpush1.msra.mxu0 0.0
    %659 = vmatprep.subr.mxu0 0.0
    %660 = vmatpush1.msra.mxu0 0.0
    %661 = vmatprep.subr.mxu0 0.0
    %662 = vmatpush1.msra.mxu0 0.0
    %663 = vmatprep.subr.mxu0 0.0
    %664 = vmatpush1.msra.mxu0 0.0
    %665 = vmatprep.subr.mxu0 0.0
    %666 = vmatpush1.msra.mxu0 0.0
    %667 = vmatprep.subr.mxu0 0.0
    %668 = vmatpush1.msra.mxu0 0.0
    %669 = vmatprep.subr.mxu0 0.0
    %670 = vmatpush1.msra.mxu0 0.0
    %671 = vmatprep.subr.mxu0 0.0
    %672 = vmatpush1.msra.mxu0 0.0
    %673 = vmatprep.subr.mxu0 0.0
    %674 = vmatpush1.msra.mxu0 0.0
    %675 = vmatprep.subr.mxu0 0.0
    %676 = vmatpush1.msra.mxu0 0.0
    %677 = vmatprep.subr.mxu0 0.0
    %678 = vmatpush1.msra.mxu0 0.0
    %679 = vmatprep.subr.mxu0 0.0
    %680 = vmatpush1.msra.mxu0 0.0
    %681 = vmatprep.subr.mxu0 0.0
    %682 = vmatpush1.msra.mxu0 0.0
    %683 = vmatprep.subr.mxu0 0.0
    %684 = vmatpush1.msra.mxu0 0.0
    %685 = vmatprep.subr.mxu0 0.0
    %686 = vmatpush1.msra.mxu0 0.0
    %687 = vmatprep.subr.mxu0 0.0
    %688 = vmatpush1.msra.mxu0 0.0
    %689 = vmatprep.subr.mxu0 0.0
    %690 = vmatpush1.msra.mxu0 0.0
    %691 = vmatprep.subr.mxu0 0.0
    %692 = vmatpush1.msra.mxu0 0.0
    %693 = vmatprep.mubr.f32.mxu0 0.0
    %694 = vmatmul.mubr.f32.gmra.mrb[0].mxu0 %v627
    %v695 = vpop.f32.mrb[0].mxu0
    %v696 = vadd.f32 0.0, %v695
    %v697 = vpop.f32.mrb[0].mxu0
    %v698 = vadd.f32 0.0, %v697
    %699 = vdwg.mxu0
    %v700 = vadd.f32 %v698, %v453
    %v701 = vxor.u32 %v700, 2147483648
    %v702 = vmul.f32 %v701, 1.442695
    %v703 = vpow.pop %v702
    %v704 = vadd.f32 %v703, 1.0
    %v705 = vrcp.pop %v704
    %v706 = vmul.f32 1.0, %v705
    %v707 = vtanh.pop %v700
    %v708 = vmul.f32 %v706, %v581
    %710 = vrot.lane.b32.xlu0 %v707, 64
    %v711 = vpop.permute.xlu0 %710
    %v713 = vmul.f32 %v706, %v711
    %715 = vrot.lane.b32.xlu0 %v713, 32
    %v716 = vpop.permute.xlu0 %715
    %v718 = vadd.f32 %v708, %v716
    %v719 = vtanh.pop %v718
    %721 = vrot.lane.b32.xlu0 %v719, 64
    %v722 = vpop.permute.xlu0 %721
    %v724 = vmul.f32 %v706, %v722
    %v725 = vld [vmem:[#allocation2 + $0x10] sm:$0xff]
    %v726 = vadd.f32 %v696, %v725
    %v727 = vxor.u32 %v726, 2147483648
    %v728 = vmul.f32 %v727, 1.442695
    %v729 = vpow.pop %v728
    %v730 = vadd.f32 %v729, 1.0
    %v731 = vrcp.pop %v730
    %v732 = vmul.f32 1.0, %v731
    %v733 = vtanh.pop %v726
    %v734 = vmul.f32 %v732, %v607
    %736 = vrot.lane.b32.xlu0 %v733, 64
    %v737 = vpop.permute.xlu0 %736
    %v739 = vmul.f32 %v732, %v737
    %741 = vrot.lane.b32.xlu0 %v739, 32
    %v742 = vpop.permute.xlu0 %741
    %v744 = vadd.f32 %v734, %v742
    %v745 = vtanh.pop %v744
    %747 = vrot.lane.b32.xlu0 %v745, 64
    %v748 = vpop.permute.xlu0 %747
    %v750 = vmul.f32 %v732, %v748
    %752 = vrot.lane.b32.xlu0 %v750, 32
    %v753 = vpop.permute.xlu0 %752
    %755 = vst.msk [vmem:[#allocation3] sm:$0xff] %vm486, %v753
    %757 = vrot.lane.b32.xlu0 %v724, 64
    %v758 = vpop.permute.xlu0 %757
    %760 = vst.msk [vmem:[#allocation3] sm:$0xff] %vm623, %v758
    %v761 = vld [vmem:[#allocation3] sm:$0xff]
    %v763 = vsel %vm455, %v761, 0
    %765 = vmatprep.subr.mxu0 %v433
    %766 = vmatpush1.msra.mxu0 %v432
    %767 = vmatprep.subr.mxu0 %v435
    %768 = vmatpush1.msra.mxu0 %v434
    %769 = vmatprep.subr.mxu0 %v437
    %770 = vmatpush1.msra.mxu0 %v436
    %771 = vmatprep.subr.mxu0 %v439
    %772 = vmatpush1.msra.mxu0 %v438
    %773 = vmatprep.subr.mxu0 %v441
    %774 = vmatpush1.msra.mxu0 %v440
    %775 = vmatprep.subr.mxu0 %v443
    %776 = vmatpush1.msra.mxu0 %v442
    %777 = vmatprep.subr.mxu0 %v445
    %778 = vmatpush1.msra.mxu0 %v444
    %779 = vmatprep.subr.mxu0 %v447
    %780 = vmatpush1.msra.mxu0 %v446
    %781 = vmatprep.subr.mxu0 0.0
    %782 = vmatpush1.msra.mxu0 0.0
    %783 = vmatprep.subr.mxu0 0.0
    %784 = vmatpush1.msra.mxu0 0.0
    %785 = vmatprep.subr.mxu0 0.0
    %786 = vmatpush1.msra.mxu0 0.0
    %787 = vmatprep.subr.mxu0 0.0
    %788 = vmatpush1.msra.mxu0 0.0
    %789 = vmatprep.subr.mxu0 0.0
    %790 = vmatpush1.msra.mxu0 0.0
    %791 = vmatprep.subr.mxu0 0.0
    %792 = vmatpush1.msra.mxu0 0.0
    %793 = vmatprep.subr.mxu0 0.0
    %794 = vmatpush1.msra.mxu0 0.0
    %795 = vmatprep.subr.mxu0 0.0
    %796 = vmatpush1.msra.mxu0 0.0
    %797 = vmatprep.subr.mxu0 0.0
    %798 = vmatpush1.msra.mxu0 0.0
    %799 = vmatprep.subr.mxu0 0.0
    %800 = vmatpush1.msra.mxu0 0.0
    %801 = vmatprep.subr.mxu0 0.0
    %802 = vmatpush1.msra.mxu0 0.0
    %803 = vmatprep.subr.mxu0 0.0
    %804 = vmatpush1.msra.mxu0 0.0
    %805 = vmatprep.subr.mxu0 0.0
    %806 = vmatpush1.msra.mxu0 0.0
    %807 = vmatprep.subr.mxu0 0.0
    %808 = vmatpush1.msra.mxu0 0.0
    %809 = vmatprep.subr.mxu0 0.0
    %810 = vmatpush1.msra.mxu0 0.0
    %811 = vmatprep.subr.mxu0 0.0
    %812 = vmatpush1.msra.mxu0 0.0
    %813 = vmatprep.subr.mxu0 0.0
    %814 = vmatpush1.msra.mxu0 0.0
    %815 = vmatprep.subr.mxu0 0.0
    %816 = vmatpush1.msra.mxu0 0.0
    %817 = vmatprep.subr.mxu0 0.0
    %818 = vmatpush1.msra.mxu0 0.0
    %819 = vmatprep.subr.mxu0 0.0
    %820 = vmatpush1.msra.mxu0 0.0
    %821 = vmatprep.subr.mxu0 0.0
    %822 = vmatpush1.msra.mxu0 0.0
    %823 = vmatprep.subr.mxu0 0.0
    %824 = vmatpush1.msra.mxu0 0.0
    %825 = vmatprep.subr.mxu0 0.0
    %826 = vmatpush1.msra.mxu0 0.0
    %827 = vmatprep.subr.mxu0 0.0
    %828 = vmatpush1.msra.mxu0 0.0
    %829 = vmatprep.mubr.f32.mxu0 0.0
    %830 = vmatmul.mubr.f32.gmra.mrb[0].mxu0 %v763
    %v831 = vpop.f32.mrb[0].mxu0
    %v832 = vadd.f32 0.0, %v831
    %v833 = vpop.f32.mrb[0].mxu0
    %v834 = vadd.f32 0.0, %v833
    %835 = vdwg.mxu0
    %v836 = vadd.f32 %v834, %v453
    %v837 = vxor.u32 %v836, 2147483648
    %v838 = vmul.f32 %v837, 1.442695
    %v839 = vpow.pop %v838
    %v840 = vadd.f32 %v839, 1.0
    %v841 = vrcp.pop %v840
    %v842 = vmul.f32 1.0, %v841
    %v843 = vtanh.pop %v836
    %v844 = vmul.f32 %v842, %v718
    %846 = vrot.lane.b32.xlu0 %v843, 64
    %v847 = vpop.permute.xlu0 %846
    %v849 = vmul.f32 %v842, %v847
    %851 = vrot.lane.b32.xlu0 %v849, 32
    %v852 = vpop.permute.xlu0 %851
    %v854 = vadd.f32 %v844, %v852
    %v855 = vtanh.pop %v854
    %857 = vrot.lane.b32.xlu0 %v855, 64
    %v858 = vpop.permute.xlu0 %857
    %v860 = vmul.f32 %v842, %v858
    %v861 = vld [vmem:[#allocation2 + $0x18] sm:$0xff]
    %v862 = vadd.f32 %v832, %v861
    %v863 = vxor.u32 %v862, 2147483648
    %v864 = vmul.f32 %v863, 1.442695
    %v865 = vpow.pop %v864
    %v866 = vadd.f32 %v865, 1.0
    %v867 = vrcp.pop %v866
    %v868 = vmul.f32 1.0, %v867
    %v869 = vtanh.pop %v862
    %v870 = vmul.f32 %v868, %v744
    %872 = vrot.lane.b32.xlu0 %v869, 64
    %v873 = vpop.permute.xlu0 %872
    %v875 = vmul.f32 %v868, %v873
    %877 = vrot.lane.b32.xlu0 %v875, 32
    %v878 = vpop.permute.xlu0 %877
    %v880 = vadd.f32 %v870, %v878
    %v881 = vtanh.pop %v880
    %883 = vrot.lane.b32.xlu0 %v881, 64
    %v884 = vpop.permute.xlu0 %883
    %v886 = vmul.f32 %v868, %v884
    %888 = vrot.lane.b32.xlu0 %v886, 32
    %v889 = vpop.permute.xlu0 %888
    %891 = vst.msk [vmem:[#allocation3] sm:$0xff] %vm486, %v889
    %893 = vrot.lane.b32.xlu0 %v860, 64
    %v894 = vpop.permute.xlu0 %893
    %896 = vst.msk [vmem:[#allocation3] sm:$0xff] %vm623, %v894
    %v897 = vld [vmem:[#allocation3] sm:$0xff]
    %v899 = vsel %vm455, %v897, 0
    %901 = vmatprep.subr.mxu0 %v433
    %902 = vmatpush1.msra.mxu0 %v432
    %903 = vmatprep.subr.mxu0 %v435
    %904 = vmatpush1.msra.mxu0 %v434
    %905 = vmatprep.subr.mxu0 %v437
    %906 = vmatpush1.msra.mxu0 %v436
    %907 = vmatprep.subr.mxu0 %v439
    %908 = vmatpush1.msra.mxu0 %v438
    %909 = vmatprep.subr.mxu0 %v441
    %910 = vmatpush1.msra.mxu0 %v440
    %911 = vmatprep.subr.mxu0 %v443
    %912 = vmatpush1.msra.mxu0 %v442
    %913 = vmatprep.subr.mxu0 %v445
    %914 = vmatpush1.msra.mxu0 %v444
    %915 = vmatprep.subr.mxu0 %v447
    %916 = vmatpush1.msra.mxu0 %v446
    %917 = vmatprep.subr.mxu0 0.0
    %918 = vmatpush1.msra.mxu0 0.0
    %919 = vmatprep.subr.mxu0 0.0
    %920 = vmatpush1.msra.mxu0 0.0
    %921 = vmatprep.subr.mxu0 0.0
    %922 = vmatpush1.msra.mxu0 0.0
    %923 = vmatprep.subr.mxu0 0.0
    %924 = vmatpush1.msra.mxu0 0.0
    %925 = vmatprep.subr.mxu0 0.0
    %926 = vmatpush1.msra.mxu0 0.0
    %927 = vmatprep.subr.mxu0 0.0
    %928 = vmatpush1.msra.mxu0 0.0
    %929 = vmatprep.subr.mxu0 0.0
    %930 = vmatpush1.msra.mxu0 0.0
    %931 = vmatprep.subr.mxu0 0.0
    %932 = vmatpush1.msra.mxu0 0.0
    %933 = vmatprep.subr.mxu0 0.0
    %934 = vmatpush1.msra.mxu0 0.0
    %935 = vmatprep.subr.mxu0 0.0
    %936 = vmatpush1.msra.mxu0 0.0
    %937 = vmatprep.subr.mxu0 0.0
    %938 = vmatpush1.msra.mxu0 0.0
    %939 = vmatprep.subr.mxu0 0.0
    %940 = vmatpush1.msra.mxu0 0.0
    %941 = vmatprep.subr.mxu0 0.0
    %942 = vmatpush1.msra.mxu0 0.0
    %943 = vmatprep.subr.mxu0 0.0
    %944 = vmatpush1.msra.mxu0 0.0
    %945 = vmatprep.subr.mxu0 0.0
    %946 = vmatpush1.msra.mxu0 0.0
    %947 = vmatprep.subr.mxu0 0.0
    %948 = vmatpush1.msra.mxu0 0.0
    %949 = vmatprep.subr.mxu0 0.0
    %950 = vmatpush1.msra.mxu0 0.0
    %951 = vmatprep.subr.mxu0 0.0
    %952 = vmatpush1.msra.mxu0 0.0
    %953 = vmatprep.subr.mxu0 0.0
    %954 = vmatpush1.msra.mxu0 0.0
    %955 = vmatprep.subr.mxu0 0.0
    %956 = vmatpush1.msra.mxu0 0.0
    %957 = vmatprep.subr.mxu0 0.0
    %958 = vmatpush1.msra.mxu0 0.0
    %959 = vmatprep.subr.mxu0 0.0
    %960 = vmatpush1.msra.mxu0 0.0
    %961 = vmatprep.subr.mxu0 0.0
    %962 = vmatpush1.msra.mxu0 0.0
    %963 = vmatprep.subr.mxu0 0.0
    %964 = vmatpush1.msra.mxu0 0.0
    %965 = vmatprep.mubr.f32.mxu0 0.0
    %966 = vmatmul.mubr.f32.gmra.mrb[0].mxu0 %v899
    %v967 = vpop.f32.mrb[0].mxu0
    %v968 = vadd.f32 0.0, %v967
    %v969 = vpop.f32.mrb[0].mxu0
    %v970 = vadd.f32 0.0, %v969
    %971 = vdwg.mxu0
    %v972 = vadd.f32 %v970, %v453
    %v973 = vxor.u32 %v972, 2147483648
    %v974 = vmul.f32 %v973, 1.442695
    %v975 = vpow.pop %v974
    %v976 = vadd.f32 %v975, 1.0
    %v977 = vrcp.pop %v976
    %v978 = vmul.f32 1.0, %v977
    %v979 = vtanh.pop %v972
    %v980 = vmul.f32 %v978, %v854
    %982 = vrot.lane.b32.xlu0 %v979, 64
    %v983 = vpop.permute.xlu0 %982
    %v985 = vmul.f32 %v978, %v983
    %987 = vrot.lane.b32.xlu0 %v985, 32
    %v988 = vpop.permute.xlu0 %987
    %v990 = vadd.f32 %v980, %v988
    %v991 = vtanh.pop %v990
    %993 = vrot.lane.b32.xlu0 %v991, 64
    %v994 = vpop.permute.xlu0 %993
    %v996 = vmul.f32 %v978, %v994
    %v997 = vld [vmem:[#allocation2 + $0x20] sm:$0xff]
    %v998 = vadd.f32 %v968, %v997
    %v999 = vxor.u32 %v998, 2147483648
    %v1000 = vmul.f32 %v999, 1.442695
    %v1001 = vpow.pop %v1000
    %v1002 = vadd.f32 %v1001, 1.0
    %v1003 = vrcp.pop %v1002
    %v1004 = vmul.f32 1.0, %v1003
    %v1005 = vtanh.pop %v998
    %v1006 = vmul.f32 %v1004, %v880
    %1008 = vrot.lane.b32.xlu0 %v1005, 64
    %v1009 = vpop.permute.xlu0 %1008
    %v1011 = vmul.f32 %v1004, %v1009
    %1013 = vrot.lane.b32.xlu0 %v1011, 32
    %v1014 = vpop.permute.xlu0 %1013
    %v1016 = vadd.f32 %v1006, %v1014
    %v1017 = vtanh.pop %v1016
    %1019 = vrot.lane.b32.xlu0 %v1017, 64
    %v1020 = vpop.permute.xlu0 %1019
    %v1022 = vmul.f32 %v1004, %v1020
    %1024 = vrot.lane.b32.xlu0 %v1022, 32
    %v1025 = vpop.permute.xlu0 %1024
    %1027 = vst.msk [vmem:[#allocation3] sm:$0xff] %vm486, %v1025
    %1029 = vrot.lane.b32.xlu0 %v996, 64
    %v1030 = vpop.permute.xlu0 %1029
    %1032 = vst.msk [vmem:[#allocation3] sm:$0xff] %vm623, %v1030
    %v1033 = vld [vmem:[#allocation3] sm:$0xff]
    %v1035 = vsel %vm455, %v1033, 0
    %1037 = vmatprep.subr.mxu0 %v433
    %1038 = vmatpush1.msra.mxu0 %v432
    %1039 = vmatprep.subr.mxu0 %v435
    %1040 = vmatpush1.msra.mxu0 %v434
    %1041 = vmatprep.subr.mxu0 %v437
    %1042 = vmatpush1.msra.mxu0 %v436
    %1043 = vmatprep.subr.mxu0 %v439
    %1044 = vmatpush1.msra.mxu0 %v438
    %1045 = vmatprep.subr.mxu0 %v441
    %1046 = vmatpush1.msra.mxu0 %v440
    %1047 = vmatprep.subr.mxu0 %v443
    %1048 = vmatpush1.msra.mxu0 %v442
    %1049 = vmatprep.subr.mxu0 %v445
    %1050 = vmatpush1.msra.mxu0 %v444
    %1051 = vmatprep.subr.mxu0 %v447
    %1052 = vmatpush1.msra.mxu0 %v446
    %1053 = vmatprep.subr.mxu0 0.0
    %1054 = vmatpush1.msra.mxu0 0.0
    %1055 = vmatprep.subr.mxu0 0.0
    %1056 = vmatpush1.msra.mxu0 0.0
    %1057 = vmatprep.subr.mxu0 0.0
    %1058 = vmatpush1.msra.mxu0 0.0
    %1059 = vmatprep.subr.mxu0 0.0
    %1060 = vmatpush1.msra.mxu0 0.0
    %1061 = vmatprep.subr.mxu0 0.0
    %1062 = vmatpush1.msra.mxu0 0.0
    %1063 = vmatprep.subr.mxu0 0.0
    %1064 = vmatpush1.msra.mxu0 0.0
    %1065 = vmatprep.subr.mxu0 0.0
    %1066 = vmatpush1.msra.mxu0 0.0
    %1067 = vmatprep.subr.mxu0 0.0
    %1068 = vmatpush1.msra.mxu0 0.0
    %1069 = vmatprep.subr.mxu0 0.0
    %1070 = vmatpush1.msra.mxu0 0.0
    %1071 = vmatprep.subr.mxu0 0.0
    %1072 = vmatpush1.msra.mxu0 0.0
    %1073 = vmatprep.subr.mxu0 0.0
    %1074 = vmatpush1.msra.mxu0 0.0
    %1075 = vmatprep.subr.mxu0 0.0
    %1076 = vmatpush1.msra.mxu0 0.0
    %1077 = vmatprep.subr.mxu0 0.0
    %1078 = vmatpush1.msra.mxu0 0.0
    %1079 = vmatprep.subr.mxu0 0.0
    %1080 = vmatpush1.msra.mxu0 0.0
    %1081 = vmatprep.subr.mxu0 0.0
    %1082 = vmatpush1.msra.mxu0 0.0
    %1083 = vmatprep.subr.mxu0 0.0
    %1084 = vmatpush1.msra.mxu0 0.0
    %1085 = vmatprep.subr.mxu0 0.0
    %1086 = vmatpush1.msra.mxu0 0.0
    %1087 = vmatprep.subr.mxu0 0.0
    %1088 = vmatpush1.msra.mxu0 0.0
    %1089 = vmatprep.subr.mxu0 0.0
    %1090 = vmatpush1.msra.mxu0 0.0
    %1091 = vmatprep.subr.mxu0 0.0
    %1092 = vmatpush1.msra.mxu0 0.0
    %1093 = vmatprep.subr.mxu0 0.0
    %1094 = vmatpush1.msra.mxu0 0.0
    %1095 = vmatprep.subr.mxu0 0.0
    %1096 = vmatpush1.msra.mxu0 0.0
    %1097 = vmatprep.subr.mxu0 0.0
    %1098 = vmatpush1.msra.mxu0 0.0
    %1099 = vmatprep.subr.mxu0 0.0
    %1100 = vmatpush1.msra.mxu0 0.0
    %1101 = vmatprep.mubr.f32.mxu0 0.0
    %1102 = vmatmul.mubr.f32.gmra.mrb[0].mxu0 %v1035
    %v1103 = vpop.f32.mrb[0].mxu0
    %v1104 = vadd.f32 0.0, %v1103
    %v1105 = vpop.f32.mrb[0].mxu0
    %v1106 = vadd.f32 0.0, %v1105
    %1107 = vdwg.mxu0
    %v1108 = vadd.f32 %v1106, %v453
    %v1109 = vxor.u32 %v1108, 2147483648
    %v1110 = vmul.f32 %v1109, 1.442695
    %v1111 = vpow.pop %v1110
    %v1112 = vadd.f32 %v1111, 1.0
    %v1113 = vrcp.pop %v1112
    %v1114 = vmul.f32 1.0, %v1113
    %v1115 = vtanh.pop %v1108
    %v1116 = vmul.f32 %v1114, %v990
    %1118 = vrot.lane.b32.xlu0 %v1115, 64
    %v1119 = vpop.permute.xlu0 %1118
    %v1121 = vmul.f32 %v1114, %v1119
    %1123 = vrot.lane.b32.xlu0 %v1121, 32
    %v1124 = vpop.permute.xlu0 %1123
    %v1126 = vadd.f32 %v1116, %v1124
    %v1127 = vtanh.pop %v1126
    %1129 = vrot.lane.b32.xlu0 %v1127, 64
    %v1130 = vpop.permute.xlu0 %1129
    %v1132 = vmul.f32 %v1114, %v1130
    %v1133 = vld [vmem:[#allocation2 + $0x28] sm:$0xff]
    %v1134 = vadd.f32 %v1104, %v1133
    %v1135 = vxor.u32 %v1134, 2147483648
    %v1136 = vmul.f32 %v1135, 1.442695
    %v1137 = vpow.pop %v1136
    %v1138 = vadd.f32 %v1137, 1.0
    %v1139 = vrcp.pop %v1138
    %v1140 = vmul.f32 1.0, %v1139
    %v1141 = vtanh.pop %v1134
    %v1142 = vmul.f32 %v1140, %v1016
    %1144 = vrot.lane.b32.xlu0 %v1141, 64
    %v1145 = vpop.permute.xlu0 %1144
    %v1147 = vmul.f32 %v1140, %v1145
    %1149 = vrot.lane.b32.xlu0 %v1147, 32
    %v1150 = vpop.permute.xlu0 %1149
    %v1152 = vadd.f32 %v1142, %v1150
    %v1153 = vtanh.pop %v1152
    %1155 = vrot.lane.b32.xlu0 %v1153, 64
    %v1156 = vpop.permute.xlu0 %1155
    %v1158 = vmul.f32 %v1140, %v1156
    %1160 = vrot.lane.b32.xlu0 %v1158, 32
    %v1161 = vpop.permute.xlu0 %1160
    %1163 = vst.msk [vmem:[#allocation3] sm:$0xff] %vm486, %v1161
    %1165 = vrot.lane.b32.xlu0 %v1132, 64
    %v1166 = vpop.permute.xlu0 %1165
    %1168 = vst.msk [vmem:[#allocation3] sm:$0xff] %vm623, %v1166
    %v1169 = vld [vmem:[#allocation3] sm:$0xff]
    %v1171 = vsel %vm455, %v1169, 0
    %1173 = vmatprep.subr.mxu0 %v433
    %1174 = vmatpush1.msra.mxu0 %v432
    %1175 = vmatprep.subr.mxu0 %v435
    %1176 = vmatpush1.msra.mxu0 %v434
    %1177 = vmatprep.subr.mxu0 %v437
    %1178 = vmatpush1.msra.mxu0 %v436
    %1179 = vmatprep.subr.mxu0 %v439
    %1180 = vmatpush1.msra.mxu0 %v438
    %1181 = vmatprep.subr.mxu0 %v441
    %1182 = vmatpush1.msra.mxu0 %v440
    %1183 = vmatprep.subr.mxu0 %v443
    %1184 = vmatpush1.msra.mxu0 %v442
    %1185 = vmatprep.subr.mxu0 %v445
    %1186 = vmatpush1.msra.mxu0 %v444
    %1187 = vmatprep.subr.mxu0 %v447
    %1188 = vmatpush1.msra.mxu0 %v446
    %1189 = vmatprep.subr.mxu0 0.0
    %1190 = vmatpush1.msra.mxu0 0.0
    %1191 = vmatprep.subr.mxu0 0.0
    %1192 = vmatpush1.msra.mxu0 0.0
    %1193 = vmatprep.subr.mxu0 0.0
    %1194 = vmatpush1.msra.mxu0 0.0
    %1195 = vmatprep.subr.mxu0 0.0
    %1196 = vmatpush1.msra.mxu0 0.0
    %1197 = vmatprep.subr.mxu0 0.0
    %1198 = vmatpush1.msra.mxu0 0.0
    %1199 = vmatprep.subr.mxu0 0.0
    %1200 = vmatpush1.msra.mxu0 0.0
    %1201 = vmatprep.subr.mxu0 0.0
    %1202 = vmatpush1.msra.mxu0 0.0
    %1203 = vmatprep.subr.mxu0 0.0
    %1204 = vmatpush1.msra.mxu0 0.0
    %1205 = vmatprep.subr.mxu0 0.0
    %1206 = vmatpush1.msra.mxu0 0.0
    %1207 = vmatprep.subr.mxu0 0.0
    %1208 = vmatpush1.msra.mxu0 0.0
    %1209 = vmatprep.subr.mxu0 0.0
    %1210 = vmatpush1.msra.mxu0 0.0
    %1211 = vmatprep.subr.mxu0 0.0
    %1212 = vmatpush1.msra.mxu0 0.0
    %1213 = vmatprep.subr.mxu0 0.0
    %1214 = vmatpush1.msra.mxu0 0.0
    %1215 = vmatprep.subr.mxu0 0.0
    %1216 = vmatpush1.msra.mxu0 0.0
    %1217 = vmatprep.subr.mxu0 0.0
    %1218 = vmatpush1.msra.mxu0 0.0
    %1219 = vmatprep.subr.mxu0 0.0
    %1220 = vmatpush1.msra.mxu0 0.0
    %1221 = vmatprep.subr.mxu0 0.0
    %1222 = vmatpush1.msra.mxu0 0.0
    %1223 = vmatprep.subr.mxu0 0.0
    %1224 = vmatpush1.msra.mxu0 0.0
    %1225 = vmatprep.subr.mxu0 0.0
    %1226 = vmatpush1.msra.mxu0 0.0
    %1227 = vmatprep.subr.mxu0 0.0
    %1228 = vmatpush1.msra.mxu0 0.0
    %1229 = vmatprep.subr.mxu0 0.0
    %1230 = vmatpush1.msra.mxu0 0.0
    %1231 = vmatprep.subr.mxu0 0.0
    %1232 = vmatpush1.msra.mxu0 0.0
    %1233 = vmatprep.subr.mxu0 0.0
    %1234 = vmatpush1.msra.mxu0 0.0
    %1235 = vmatprep.subr.mxu0 0.0
    %1236 = vmatpush1.msra.mxu0 0.0
    %1237 = vmatprep.mubr.f32.mxu0 0.0
    %1238 = vmatmul.mubr.f32.gmra.mrb[0].mxu0 %v1171
    %v1239 = vpop.f32.mrb[0].mxu0
    %v1240 = vadd.f32 0.0, %v1239
    %v1241 = vpop.f32.mrb[0].mxu0
    %v1242 = vadd.f32 0.0, %v1241
    %1243 = vdwg.mxu0
    %v1244 = vadd.f32 %v1242, %v453
    %v1245 = vxor.u32 %v1244, 2147483648
    %v1246 = vmul.f32 %v1245, 1.442695
    %v1247 = vpow.pop %v1246
    %v1248 = vadd.f32 %v1247, 1.0
    %v1249 = vrcp.pop %v1248
    %v1250 = vmul.f32 1.0, %v1249
    %v1251 = vtanh.pop %v1244
    %v1252 = vmul.f32 %v1250, %v1126
    %1254 = vrot.lane.b32.xlu0 %v1251, 64
    %v1255 = vpop.permute.xlu0 %1254
    %v1257 = vmul.f32 %v1250, %v1255
    %1259 = vrot.lane.b32.xlu0 %v1257, 32
    %v1260 = vpop.permute.xlu0 %1259
    %v1262 = vadd.f32 %v1252, %v1260
    %v1263 = vtanh.pop %v1262
    %1265 = vrot.lane.b32.xlu0 %v1263, 64
    %v1266 = vpop.permute.xlu0 %1265
    %v1268 = vmul.f32 %v1250, %v1266
    %v1269 = vld [vmem:[#allocation2 + $0x30] sm:$0xff]
    %v1270 = vadd.f32 %v1240, %v1269
    %v1271 = vxor.u32 %v1270, 2147483648
    %v1272 = vmul.f32 %v1271, 1.442695
    %v1273 = vpow.pop %v1272
    %v1274 = vadd.f32 %v1273, 1.0
    %v1275 = vrcp.pop %v1274
    %v1276 = vmul.f32 1.0, %v1275
    %v1277 = vtanh.pop %v1270
    %v1278 = vmul.f32 %v1276, %v1152
    %1280 = vrot.lane.b32.xlu0 %v1277, 64
    %v1281 = vpop.permute.xlu0 %1280
    %v1283 = vmul.f32 %v1276, %v1281
    %1285 = vrot.lane.b32.xlu0 %v1283, 32
    %v1286 = vpop.permute.xlu0 %1285
    %v1288 = vadd.f32 %v1278, %v1286
    %v1289 = vtanh.pop %v1288
    %1291 = vrot.lane.b32.xlu0 %v1289, 64
    %v1292 = vpop.permute.xlu0 %1291
    %v1294 = vmul.f32 %v1276, %v1292
    %1296 = vrot.lane.b32.xlu0 %v1294, 32
    %v1297 = vpop.permute.xlu0 %1296
    %1299 = vst.msk [vmem:[#allocation3] sm:$0xff] %vm486, %v1297
    %1301 = vrot.lane.b32.xlu0 %v1268, 64
    %v1302 = vpop.permute.xlu0 %1301
    %1304 = vst.msk [vmem:[#allocation3] sm:$0xff] %vm623, %v1302
    %v1305 = vld [vmem:[#allocation3] sm:$0xff]
    %v1307 = vsel %vm455, %v1305, 0
    %1309 = vmatprep.subr.mxu0 %v433
    %1310 = vmatpush1.msra.mxu0 %v432
    %1311 = vmatprep.subr.mxu0 %v435
    %1312 = vmatpush1.msra.mxu0 %v434
    %1313 = vmatprep.subr.mxu0 %v437
    %1314 = vmatpush1.msra.mxu0 %v436
    %1315 = vmatprep.subr.mxu0 %v439
    %1316 = vmatpush1.msra.mxu0 %v438
    %1317 = vmatprep.subr.mxu0 %v441
    %1318 = vmatpush1.msra.mxu0 %v440
    %1319 = vmatprep.subr.mxu0 %v443
    %1320 = vmatpush1.msra.mxu0 %v442
    %1321 = vmatprep.subr.mxu0 %v445
    %1322 = vmatpush1.msra.mxu0 %v444
    %1323 = vmatprep.subr.mxu0 %v447
    %1324 = vmatpush1.msra.mxu0 %v446
    %1325 = vmatprep.subr.mxu0 0.0
    %1326 = vmatpush1.msra.mxu0 0.0
    %1327 = vmatprep.subr.mxu0 0.0
    %1328 = vmatpush1.msra.mxu0 0.0
    %1329 = vmatprep.subr.mxu0 0.0
    %1330 = vmatpush1.msra.mxu0 0.0
    %1331 = vmatprep.subr.mxu0 0.0
    %1332 = vmatpush1.msra.mxu0 0.0
    %1333 = vmatprep.subr.mxu0 0.0
    %1334 = vmatpush1.msra.mxu0 0.0
    %1335 = vmatprep.subr.mxu0 0.0
    %1336 = vmatpush1.msra.mxu0 0.0
    %1337 = vmatprep.subr.mxu0 0.0
    %1338 = vmatpush1.msra.mxu0 0.0
    %1339 = vmatprep.subr.mxu0 0.0
    %1340 = vmatpush1.msra.mxu0 0.0
    %1341 = vmatprep.subr.mxu0 0.0
    %1342 = vmatpush1.msra.mxu0 0.0
    %1343 = vmatprep.subr.mxu0 0.0
    %1344 = vmatpush1.msra.mxu0 0.0
    %1345 = vmatprep.subr.mxu0 0.0
    %1346 = vmatpush1.msra.mxu0 0.0
    %1347 = vmatprep.subr.mxu0 0.0
    %1348 = vmatpush1.msra.mxu0 0.0
    %1349 = vmatprep.subr.mxu0 0.0
    %1350 = vmatpush1.msra.mxu0 0.0
    %1351 = vmatprep.subr.mxu0 0.0
    %1352 = vmatpush1.msra.mxu0 0.0
    %1353 = vmatprep.subr.mxu0 0.0
    %1354 = vmatpush1.msra.mxu0 0.0
    %1355 = vmatprep.subr.mxu0 0.0
    %1356 = vmatpush1.msra.mxu0 0.0
    %1357 = vmatprep.subr.mxu0 0.0
    %1358 = vmatpush1.msra.mxu0 0.0
    %1359 = vmatprep.subr.mxu0 0.0
    %1360 = vmatpush1.msra.mxu0 0.0
    %1361 = vmatprep.subr.mxu0 0.0
    %1362 = vmatpush1.msra.mxu0 0.0
    %1363 = vmatprep.subr.mxu0 0.0
    %1364 = vmatpush1.msra.mxu0 0.0
    %1365 = vmatprep.subr.mxu0 0.0
    %1366 = vmatpush1.msra.mxu0 0.0
    %1367 = vmatprep.subr.mxu0 0.0
    %1368 = vmatpush1.msra.mxu0 0.0
    %1369 = vmatprep.subr.mxu0 0.0
    %1370 = vmatpush1.msra.mxu0 0.0
    %1371 = vmatprep.subr.mxu0 0.0
    %1372 = vmatpush1.msra.mxu0 0.0
    %1373 = vmatprep.mubr.f32.mxu0 0.0
    %1374 = vmatmul.mubr.f32.gmra.mrb[0].mxu0 %v1307
    %v1375 = vpop.f32.mrb[0].mxu0
    %v1376 = vadd.f32 0.0, %v1375
    %v1377 = vpop.f32.mrb[0].mxu0
    %v1378 = vadd.f32 0.0, %v1377
    %1379 = vdwg.mxu0
    %v1380 = vadd.f32 %v1378, %v453
    %v1381 = vxor.u32 %v1380, 2147483648
    %v1382 = vmul.f32 %v1381, 1.442695
    %v1383 = vpow.pop %v1382
    %v1384 = vadd.f32 %v1383, 1.0
    %v1385 = vrcp.pop %v1384
    %v1386 = vmul.f32 1.0, %v1385
    %v1387 = vtanh.pop %v1380
    %v1388 = vmul.f32 %v1386, %v1262
    %1390 = vrot.lane.b32.xlu0 %v1387, 64
    %v1391 = vpop.permute.xlu0 %1390
    %v1393 = vmul.f32 %v1386, %v1391
    %1395 = vrot.lane.b32.xlu0 %v1393, 32
    %v1396 = vpop.permute.xlu0 %1395
    %v1398 = vadd.f32 %v1388, %v1396
    %v1399 = vtanh.pop %v1398
    %1401 = vrot.lane.b32.xlu0 %v1399, 64
    %v1402 = vpop.permute.xlu0 %1401
    %v1404 = vmul.f32 %v1386, %v1402
    %v1405 = vld [vmem:[#allocation2 + $0x38] sm:$0xff]
    %v1406 = vadd.f32 %v1376, %v1405
    %v1407 = vxor.u32 %v1406, 2147483648
    %v1408 = vmul.f32 %v1407, 1.442695
    %v1409 = vpow.pop %v1408
    %v1410 = vadd.f32 %v1409, 1.0
    %v1411 = vrcp.pop %v1410
    %v1412 = vmul.f32 1.0, %v1411
    %v1413 = vtanh.pop %v1406
    %v1414 = vmul.f32 %v1412, %v1288
    %1416 = vrot.lane.b32.xlu0 %v1413, 64
    %v1417 = vpop.permute.xlu0 %1416
    %v1419 = vmul.f32 %v1412, %v1417
    %1421 = vrot.lane.b32.xlu0 %v1419, 32
    %v1422 = vpop.permute.xlu0 %1421
    %v1424 = vadd.f32 %v1414, %v1422
    %v1425 = vtanh.pop %v1424
    %1427 = vrot.lane.b32.xlu0 %v1425, 64
    %v1428 = vpop.permute.xlu0 %1427
    %v1430 = vmul.f32 %v1412, %v1428
    %1432 = vrot.lane.b32.xlu0 %v1430, 32
    %v1433 = vpop.permute.xlu0 %1432
    %1435 = vst.msk [vmem:[#allocation3] sm:$0xff] %vm486, %v1433
    %1437 = vrot.lane.b32.xlu0 %v1404, 64
    %v1438 = vpop.permute.xlu0 %1437
    %1440 = vst.msk [vmem:[#allocation3] sm:$0xff] %vm623, %v1438
    %v1441 = vld [vmem:[#allocation3] sm:$0xff]
    %v1443 = vsel %vm455, %v1441, 0
    %1445 = vmatprep.subr.mxu0 %v433
    %1446 = vmatpush1.msra.mxu0 %v432
    %1447 = vmatprep.subr.mxu0 %v435
    %1448 = vmatpush1.msra.mxu0 %v434
    %1449 = vmatprep.subr.mxu0 %v437
    %1450 = vmatpush1.msra.mxu0 %v436
    %1451 = vmatprep.subr.mxu0 %v439
    %1452 = vmatpush1.msra.mxu0 %v438
    %1453 = vmatprep.subr.mxu0 %v441
    %1454 = vmatpush1.msra.mxu0 %v440
    %1455 = vmatprep.subr.mxu0 %v443
    %1456 = vmatpush1.msra.mxu0 %v442
    %1457 = vmatprep.subr.mxu0 %v445
    %1458 = vmatpush1.msra.mxu0 %v444
    %1459 = vmatprep.subr.mxu0 %v447
    %1460 = vmatpush1.msra.mxu0 %v446
    %1461 = vmatprep.subr.mxu0 0.0
    %1462 = vmatpush1.msra.mxu0 0.0
    %1463 = vmatprep.subr.mxu0 0.0
    %1464 = vmatpush1.msra.mxu0 0.0
    %1465 = vmatprep.subr.mxu0 0.0
    %1466 = vmatpush1.msra.mxu0 0.0
    %1467 = vmatprep.subr.mxu0 0.0
    %1468 = vmatpush1.msra.mxu0 0.0
    %1469 = vmatprep.subr.mxu0 0.0
    %1470 = vmatpush1.msra.mxu0 0.0
    %1471 = vmatprep.subr.mxu0 0.0
    %1472 = vmatpush1.msra.mxu0 0.0
    %1473 = vmatprep.subr.mxu0 0.0
    %1474 = vmatpush1.msra.mxu0 0.0
    %1475 = vmatprep.subr.mxu0 0.0
    %1476 = vmatpush1.msra.mxu0 0.0
    %1477 = vmatprep.subr.mxu0 0.0
    %1478 = vmatpush1.msra.mxu0 0.0
    %1479 = vmatprep.subr.mxu0 0.0
    %1480 = vmatpush1.msra.mxu0 0.0
    %1481 = vmatprep.subr.mxu0 0.0
    %1482 = vmatpush1.msra.mxu0 0.0
    %1483 = vmatprep.subr.mxu0 0.0
    %1484 = vmatpush1.msra.mxu0 0.0
    %1485 = vmatprep.subr.mxu0 0.0
    %1486 = vmatpush1.msra.mxu0 0.0
    %1487 = vmatprep.subr.mxu0 0.0
    %1488 = vmatpush1.msra.mxu0 0.0
    %1489 = vmatprep.subr.mxu0 0.0
    %1490 = vmatpush1.msra.mxu0 0.0
    %1491 = vmatprep.subr.mxu0 0.0
    %1492 = vmatpush1.msra.mxu0 0.0
    %1493 = vmatprep.subr.mxu0 0.0
    %1494 = vmatpush1.msra.mxu0 0.0
    %1495 = vmatprep.subr.mxu0 0.0
    %1496 = vmatpush1.msra.mxu0 0.0
    %1497 = vmatprep.subr.mxu0 0.0
    %1498 = vmatpush1.msra.mxu0 0.0
    %1499 = vmatprep.subr.mxu0 0.0
    %1500 = vmatpush1.msra.mxu0 0.0
    %1501 = vmatprep.subr.mxu0 0.0
    %1502 = vmatpush1.msra.mxu0 0.0
    %1503 = vmatprep.subr.mxu0 0.0
    %1504 = vmatpush1.msra.mxu0 0.0
    %1505 = vmatprep.subr.mxu0 0.0
    %1506 = vmatpush1.msra.mxu0 0.0
    %1507 = vmatprep.subr.mxu0 0.0
    %1508 = vmatpush1.msra.mxu0 0.0
    %1509 = vmatprep.mubr.f32.mxu0 0.0
    %1510 = vmatmul.mubr.f32.gmra.mrb[0].mxu0 %v1443
    %v1511 = vpop.f32.mrb[0].mxu0
    %v1512 = vadd.f32 0.0, %v1511
    %v1513 = vpop.f32.mrb[0].mxu0
    %v1514 = vadd.f32 0.0, %v1513
    %1515 = vdwg.mxu0
    %v1516 = vadd.f32 %v1514, %v453
    %v1517 = vxor.u32 %v1516, 2147483648
    %v1518 = vmul.f32 %v1517, 1.442695
    %v1519 = vpow.pop %v1518
    %v1520 = vadd.f32 %v1519, 1.0
    %v1521 = vrcp.pop %v1520
    %v1522 = vmul.f32 1.0, %v1521
    %v1523 = vtanh.pop %v1516
    %v1524 = vmul.f32 %v1522, %v1398
    %1526 = vrot.lane.b32.xlu0 %v1523, 64
    %v1527 = vpop.permute.xlu0 %1526
    %v1529 = vmul.f32 %v1522, %v1527
    %1531 = vrot.lane.b32.xlu0 %v1529, 32
    %v1532 = vpop.permute.xlu0 %1531
    %v1534 = vadd.f32 %v1524, %v1532
    %v1535 = vtanh.pop %v1534
    %1537 = vrot.lane.b32.xlu0 %v1535, 64
    %v1538 = vpop.permute.xlu0 %1537
    %v1540 = vmul.f32 %v1522, %v1538
    %v1541 = vld [vmem:[#allocation2 + $0x40] sm:$0xff]
    %v1542 = vadd.f32 %v1512, %v1541
    %v1543 = vxor.u32 %v1542, 2147483648
    %v1544 = vmul.f32 %v1543, 1.442695
    %v1545 = vpow.pop %v1544
    %v1546 = vadd.f32 %v1545, 1.0
    %v1547 = vrcp.pop %v1546
    %v1548 = vmul.f32 1.0, %v1547
    %v1549 = vtanh.pop %v1542
    %v1550 = vmul.f32 %v1548, %v1424
    %1552 = vrot.lane.b32.xlu0 %v1549, 64
    %v1553 = vpop.permute.xlu0 %1552
    %v1555 = vmul.f32 %v1548, %v1553
    %1557 = vrot.lane.b32.xlu0 %v1555, 32
    %v1558 = vpop.permute.xlu0 %1557
    %v1560 = vadd.f32 %v1550, %v1558
    %v1561 = vtanh.pop %v1560
    %1563 = vrot.lane.b32.xlu0 %v1561, 64
    %v1564 = vpop.permute.xlu0 %1563
    %v1566 = vmul.f32 %v1548, %v1564
    %1568 = vrot.lane.b32.xlu0 %v1566, 32
    %v1569 = vpop.permute.xlu0 %1568
    %1571 = vst.msk [vmem:[#allocation3] sm:$0xff] %vm486, %v1569
    %1573 = vrot.lane.b32.xlu0 %v1540, 64
    %v1574 = vpop.permute.xlu0 %1573
    %1576 = vst.msk [vmem:[#allocation3] sm:$0xff] %vm623, %v1574
    %v1577 = vld [vmem:[#allocation3] sm:$0xff]
    %v1579 = vsel %vm455, %v1577, 0
    %1581 = vmatprep.subr.mxu0 %v433
    %1582 = vmatpush1.msra.mxu0 %v432
    %1583 = vmatprep.subr.mxu0 %v435
    %1584 = vmatpush1.msra.mxu0 %v434
    %1585 = vmatprep.subr.mxu0 %v437
    %1586 = vmatpush1.msra.mxu0 %v436
    %1587 = vmatprep.subr.mxu0 %v439
    %1588 = vmatpush1.msra.mxu0 %v438
    %1589 = vmatprep.subr.mxu0 %v441
    %1590 = vmatpush1.msra.mxu0 %v440
    %1591 = vmatprep.subr.mxu0 %v443
    %1592 = vmatpush1.msra.mxu0 %v442
    %1593 = vmatprep.subr.mxu0 %v445
    %1594 = vmatpush1.msra.mxu0 %v444
    %1595 = vmatprep.subr.mxu0 %v447
    %1596 = vmatpush1.msra.mxu0 %v446
    %1597 = vmatprep.subr.mxu0 0.0
    %1598 = vmatpush1.msra.mxu0 0.0
    %1599 = vmatprep.subr.mxu0 0.0
    %1600 = vmatpush1.msra.mxu0 0.0
    %1601 = vmatprep.subr.mxu0 0.0
    %1602 = vmatpush1.msra.mxu0 0.0
    %1603 = vmatprep.subr.mxu0 0.0
    %1604 = vmatpush1.msra.mxu0 0.0
    %1605 = vmatprep.subr.mxu0 0.0
    %1606 = vmatpush1.msra.mxu0 0.0
    %1607 = vmatprep.subr.mxu0 0.0
    %1608 = vmatpush1.msra.mxu0 0.0
    %1609 = vmatprep.subr.mxu0 0.0
    %1610 = vmatpush1.msra.mxu0 0.0
    %1611 = vmatprep.subr.mxu0 0.0
    %1612 = vmatpush1.msra.mxu0 0.0
    %1613 = vmatprep.subr.mxu0 0.0
    %1614 = vmatpush1.msra.mxu0 0.0
    %1615 = vmatprep.subr.mxu0 0.0
    %1616 = vmatpush1.msra.mxu0 0.0
    %1617 = vmatprep.subr.mxu0 0.0
    %1618 = vmatpush1.msra.mxu0 0.0
    %1619 = vmatprep.subr.mxu0 0.0
    %1620 = vmatpush1.msra.mxu0 0.0
    %1621 = vmatprep.subr.mxu0 0.0
    %1622 = vmatpush1.msra.mxu0 0.0
    %1623 = vmatprep.subr.mxu0 0.0
    %1624 = vmatpush1.msra.mxu0 0.0
    %1625 = vmatprep.subr.mxu0 0.0
    %1626 = vmatpush1.msra.mxu0 0.0
    %1627 = vmatprep.subr.mxu0 0.0
    %1628 = vmatpush1.msra.mxu0 0.0
    %1629 = vmatprep.subr.mxu0 0.0
    %1630 = vmatpush1.msra.mxu0 0.0
    %1631 = vmatprep.subr.mxu0 0.0
    %1632 = vmatpush1.msra.mxu0 0.0
    %1633 = vmatprep.subr.mxu0 0.0
    %1634 = vmatpush1.msra.mxu0 0.0
    %1635 = vmatprep.subr.mxu0 0.0
    %1636 = vmatpush1.msra.mxu0 0.0
    %1637 = vmatprep.subr.mxu0 0.0
    %1638 = vmatpush1.msra.mxu0 0.0
    %1639 = vmatprep.subr.mxu0 0.0
    %1640 = vmatpush1.msra.mxu0 0.0
    %1641 = vmatprep.subr.mxu0 0.0
    %1642 = vmatpush1.msra.mxu0 0.0
    %1643 = vmatprep.subr.mxu0 0.0
    %1644 = vmatpush1.msra.mxu0 0.0
    %1645 = vmatprep.mubr.f32.mxu0 0.0
    %1646 = vmatmul.mubr.f32.gmra.mrb[0].mxu0 %v1579
    %v1647 = vpop.f32.mrb[0].mxu0
    %v1648 = vadd.f32 0.0, %v1647
    %v1649 = vpop.f32.mrb[0].mxu0
    %v1650 = vadd.f32 0.0, %v1649
    %1651 = vdwg.mxu0
    %v1652 = vadd.f32 %v1650, %v453
    %v1653 = vxor.u32 %v1652, 2147483648
    %v1654 = vmul.f32 %v1653, 1.442695
    %v1655 = vpow.pop %v1654
    %v1656 = vadd.f32 %v1655, 1.0
    %v1657 = vrcp.pop %v1656
    %v1658 = vmul.f32 1.0, %v1657
    %v1659 = vtanh.pop %v1652
    %v1660 = vmul.f32 %v1658, %v1534
    %1662 = vrot.lane.b32.xlu0 %v1659, 64
    %v1663 = vpop.permute.xlu0 %1662
    %v1665 = vmul.f32 %v1658, %v1663
    %1667 = vrot.lane.b32.xlu0 %v1665, 32
    %v1668 = vpop.permute.xlu0 %1667
    %v1670 = vadd.f32 %v1660, %v1668
    %v1671 = vtanh.pop %v1670
    %1673 = vrot.lane.b32.xlu0 %v1671, 64
    %v1674 = vpop.permute.xlu0 %1673
    %v1676 = vmul.f32 %v1658, %v1674
    %v1677 = vld [vmem:[#allocation2 + $0x48] sm:$0xff]
    %v1678 = vadd.f32 %v1648, %v1677
    %v1679 = vxor.u32 %v1678, 2147483648
    %v1680 = vmul.f32 %v1679, 1.442695
    %v1681 = vpow.pop %v1680
    %v1682 = vadd.f32 %v1681, 1.0
    %v1683 = vrcp.pop %v1682
    %v1684 = vmul.f32 1.0, %v1683
    %v1685 = vtanh.pop %v1678
    %v1686 = vmul.f32 %v1684, %v1560
    %1688 = vrot.lane.b32.xlu0 %v1685, 64
    %v1689 = vpop.permute.xlu0 %1688
    %v1691 = vmul.f32 %v1684, %v1689
    %1693 = vrot.lane.b32.xlu0 %v1691, 32
    %v1694 = vpop.permute.xlu0 %1693
    %v1696 = vadd.f32 %v1686, %v1694
    %v1697 = vtanh.pop %v1696
    %1699 = vrot.lane.b32.xlu0 %v1697, 64
    %v1700 = vpop.permute.xlu0 %1699
    %v1702 = vmul.f32 %v1684, %v1700
    %1704 = vrot.lane.b32.xlu0 %v1702, 32
    %v1705 = vpop.permute.xlu0 %1704
    %1707 = vst.msk [vmem:[#allocation3] sm:$0xff] %vm486, %v1705
    %1709 = vrot.lane.b32.xlu0 %v1676, 64
    %v1710 = vpop.permute.xlu0 %1709
    %1712 = vst.msk [vmem:[#allocation3] sm:$0xff] %vm623, %v1710
    %v1713 = vld [vmem:[#allocation3] sm:$0xff]
    %v1715 = vsel %vm455, %v1713, 0
    %1717 = vmatprep.subr.mxu0 %v433
    %1718 = vmatpush1.msra.mxu0 %v432
    %1719 = vmatprep.subr.mxu0 %v435
    %1720 = vmatpush1.msra.mxu0 %v434
    %1721 = vmatprep.subr.mxu0 %v437
    %1722 = vmatpush1.msra.mxu0 %v436
    %1723 = vmatprep.subr.mxu0 %v439
    %1724 = vmatpush1.msra.mxu0 %v438
    %1725 = vmatprep.subr.mxu0 %v441
    %1726 = vmatpush1.msra.mxu0 %v440
    %1727 = vmatprep.subr.mxu0 %v443
    %1728 = vmatpush1.msra.mxu0 %v442
    %1729 = vmatprep.subr.mxu0 %v445
    %1730 = vmatpush1.msra.mxu0 %v444
    %1731 = vmatprep.subr.mxu0 %v447
    %1732 = vmatpush1.msra.mxu0 %v446
    %1733 = vmatprep.subr.mxu0 0.0
    %1734 = vmatpush1.msra.mxu0 0.0
    %1735 = vmatprep.subr.mxu0 0.0
    %1736 = vmatpush1.msra.mxu0 0.0
    %1737 = vmatprep.subr.mxu0 0.0
    %1738 = vmatpush1.msra.mxu0 0.0
    %1739 = vmatprep.subr.mxu0 0.0
    %1740 = vmatpush1.msra.mxu0 0.0
    %1741 = vmatprep.subr.mxu0 0.0
    %1742 = vmatpush1.msra.mxu0 0.0
    %1743 = vmatprep.subr.mxu0 0.0
    %1744 = vmatpush1.msra.mxu0 0.0
    %1745 = vmatprep.subr.mxu0 0.0
    %1746 = vmatpush1.msra.mxu0 0.0
    %1747 = vmatprep.subr.mxu0 0.0
    %1748 = vmatpush1.msra.mxu0 0.0
    %1749 = vmatprep.subr.mxu0 0.0
    %1750 = vmatpush1.msra.mxu0 0.0
    %1751 = vmatprep.subr.mxu0 0.0
    %1752 = vmatpush1.msra.mxu0 0.0
    %1753 = vmatprep.subr.mxu0 0.0
    %1754 = vmatpush1.msra.mxu0 0.0
    %1755 = vmatprep.subr.mxu0 0.0
    %1756 = vmatpush1.msra.mxu0 0.0
    %1757 = vmatprep.subr.mxu0 0.0
    %1758 = vmatpush1.msra.mxu0 0.0
    %1759 = vmatprep.subr.mxu0 0.0
    %1760 = vmatpush1.msra.mxu0 0.0
    %1761 = vmatprep.subr.mxu0 0.0
    %1762 = vmatpush1.msra.mxu0 0.0
    %1763 = vmatprep.subr.mxu0 0.0
    %1764 = vmatpush1.msra.mxu0 0.0
    %1765 = vmatprep.subr.mxu0 0.0
    %1766 = vmatpush1.msra.mxu0 0.0
    %1767 = vmatprep.subr.mxu0 0.0
    %1768 = vmatpush1.msra.mxu0 0.0
    %1769 = vmatprep.subr.mxu0 0.0
    %1770 = vmatpush1.msra.mxu0 0.0
    %1771 = vmatprep.subr.mxu0 0.0
    %1772 = vmatpush1.msra.mxu0 0.0
    %1773 = vmatprep.subr.mxu0 0.0
    %1774 = vmatpush1.msra.mxu0 0.0
    %1775 = vmatprep.subr.mxu0 0.0
    %1776 = vmatpush1.msra.mxu0 0.0
    %1777 = vmatprep.subr.mxu0 0.0
    %1778 = vmatpush1.msra.mxu0 0.0
    %1779 = vmatprep.subr.mxu0 0.0
    %1780 = vmatpush1.msra.mxu0 0.0
    %1781 = vmatprep.mubr.f32.mxu0 0.0
    %1782 = vmatmul.mubr.f32.gmra.mrb[0].mxu0 %v1715
    %v1783 = vpop.f32.mrb[0].mxu0
    %v1784 = vadd.f32 0.0, %v1783
    %v1785 = vpop.f32.mrb[0].mxu0
    %v1786 = vadd.f32 0.0, %v1785
    %1787 = vdwg.mxu0
    %v1788 = vadd.f32 %v1786, %v453
    %v1789 = vxor.u32 %v1788, 2147483648
    %v1790 = vmul.f32 %v1789, 1.442695
    %v1791 = vpow.pop %v1790
    %v1792 = vadd.f32 %v1791, 1.0
    %v1793 = vrcp.pop %v1792
    %v1794 = vmul.f32 1.0, %v1793
    %v1795 = vtanh.pop %v1788
    %v1796 = vmul.f32 %v1794, %v1670
    %1798 = vrot.lane.b32.xlu0 %v1795, 64
    %v1799 = vpop.permute.xlu0 %1798
    %v1801 = vmul.f32 %v1794, %v1799
    %1803 = vrot.lane.b32.xlu0 %v1801, 32
    %v1804 = vpop.permute.xlu0 %1803
    %v1806 = vadd.f32 %v1796, %v1804
    %v1807 = vtanh.pop %v1806
    %1809 = vrot.lane.b32.xlu0 %v1807, 64
    %v1810 = vpop.permute.xlu0 %1809
    %v1812 = vmul.f32 %v1794, %v1810
    %v1813 = vld [vmem:[#allocation2 + $0x50] sm:$0xff]
    %v1814 = vadd.f32 %v1784, %v1813
    %v1815 = vxor.u32 %v1814, 2147483648
    %v1816 = vmul.f32 %v1815, 1.442695
    %v1817 = vpow.pop %v1816
    %v1818 = vadd.f32 %v1817, 1.0
    %v1819 = vrcp.pop %v1818
    %v1820 = vmul.f32 1.0, %v1819
    %v1821 = vtanh.pop %v1814
    %v1822 = vmul.f32 %v1820, %v1696
    %1824 = vrot.lane.b32.xlu0 %v1821, 64
    %v1825 = vpop.permute.xlu0 %1824
    %v1827 = vmul.f32 %v1820, %v1825
    %1829 = vrot.lane.b32.xlu0 %v1827, 32
    %v1830 = vpop.permute.xlu0 %1829
    %v1832 = vadd.f32 %v1822, %v1830
    %v1833 = vtanh.pop %v1832
    %1835 = vrot.lane.b32.xlu0 %v1833, 64
    %v1836 = vpop.permute.xlu0 %1835
    %v1838 = vmul.f32 %v1820, %v1836
    %1840 = vrot.lane.b32.xlu0 %v1838, 32
    %v1841 = vpop.permute.xlu0 %1840
    %1843 = vst.msk [vmem:[#allocation3] sm:$0xff] %vm486, %v1841
    %1845 = vrot.lane.b32.xlu0 %v1812, 64
    %v1846 = vpop.permute.xlu0 %1845
    %1848 = vst.msk [vmem:[#allocation3] sm:$0xff] %vm623, %v1846
    %v1849 = vld [vmem:[#allocation3] sm:$0xff]
    %v1851 = vsel %vm455, %v1849, 0
    %1853 = vmatprep.subr.mxu0 %v433
    %1854 = vmatpush1.msra.mxu0 %v432
    %1855 = vmatprep.subr.mxu0 %v435
    %1856 = vmatpush1.msra.mxu0 %v434
    %1857 = vmatprep.subr.mxu0 %v437
    %1858 = vmatpush1.msra.mxu0 %v436
    %1859 = vmatprep.subr.mxu0 %v439
    %1860 = vmatpush1.msra.mxu0 %v438
    %1861 = vmatprep.subr.mxu0 %v441
    %1862 = vmatpush1.msra.mxu0 %v440
    %1863 = vmatprep.subr.mxu0 %v443
    %1864 = vmatpush1.msra.mxu0 %v442
    %1865 = vmatprep.subr.mxu0 %v445
    %1866 = vmatpush1.msra.mxu0 %v444
    %1867 = vmatprep.subr.mxu0 %v447
    %1868 = vmatpush1.msra.mxu0 %v446
    %1869 = vmatprep.subr.mxu0 0.0
    %1870 = vmatpush1.msra.mxu0 0.0
    %1871 = vmatprep.subr.mxu0 0.0
    %1872 = vmatpush1.msra.mxu0 0.0
    %1873 = vmatprep.subr.mxu0 0.0
    %1874 = vmatpush1.msra.mxu0 0.0
    %1875 = vmatprep.subr.mxu0 0.0
    %1876 = vmatpush1.msra.mxu0 0.0
    %1877 = vmatprep.subr.mxu0 0.0
    %1878 = vmatpush1.msra.mxu0 0.0
    %1879 = vmatprep.subr.mxu0 0.0
    %1880 = vmatpush1.msra.mxu0 0.0
    %1881 = vmatprep.subr.mxu0 0.0
    %1882 = vmatpush1.msra.mxu0 0.0
    %1883 = vmatprep.subr.mxu0 0.0
    %1884 = vmatpush1.msra.mxu0 0.0
    %1885 = vmatprep.subr.mxu0 0.0
    %1886 = vmatpush1.msra.mxu0 0.0
    %1887 = vmatprep.subr.mxu0 0.0
    %1888 = vmatpush1.msra.mxu0 0.0
    %1889 = vmatprep.subr.mxu0 0.0
    %1890 = vmatpush1.msra.mxu0 0.0
    %1891 = vmatprep.subr.mxu0 0.0
    %1892 = vmatpush1.msra.mxu0 0.0
    %1893 = vmatprep.subr.mxu0 0.0
    %1894 = vmatpush1.msra.mxu0 0.0
    %1895 = vmatprep.subr.mxu0 0.0
    %1896 = vmatpush1.msra.mxu0 0.0
    %1897 = vmatprep.subr.mxu0 0.0
    %1898 = vmatpush1.msra.mxu0 0.0
    %1899 = vmatprep.subr.mxu0 0.0
    %1900 = vmatpush1.msra.mxu0 0.0
    %1901 = vmatprep.subr.mxu0 0.0
    %1902 = vmatpush1.msra.mxu0 0.0
    %1903 = vmatprep.subr.mxu0 0.0
    %1904 = vmatpush1.msra.mxu0 0.0
    %1905 = vmatprep.subr.mxu0 0.0
    %1906 = vmatpush1.msra.mxu0 0.0
    %1907 = vmatprep.subr.mxu0 0.0
    %1908 = vmatpush1.msra.mxu0 0.0
    %1909 = vmatprep.subr.mxu0 0.0
    %1910 = vmatpush1.msra.mxu0 0.0
    %1911 = vmatprep.subr.mxu0 0.0
    %1912 = vmatpush1.msra.mxu0 0.0
    %1913 = vmatprep.subr.mxu0 0.0
    %1914 = vmatpush1.msra.mxu0 0.0
    %1915 = vmatprep.subr.mxu0 0.0
    %1916 = vmatpush1.msra.mxu0 0.0
    %1917 = vmatprep.mubr.f32.mxu0 0.0
    %1918 = vmatmul.mubr.f32.gmra.mrb[0].mxu0 %v1851
    %v1919 = vpop.f32.mrb[0].mxu0
    %v1920 = vadd.f32 0.0, %v1919
    %v1921 = vpop.f32.mrb[0].mxu0
    %v1922 = vadd.f32 0.0, %v1921
    %1923 = vdwg.mxu0
    %v1924 = vadd.f32 %v1922, %v453
    %v1925 = vxor.u32 %v1924, 2147483648
    %v1926 = vmul.f32 %v1925, 1.442695
    %v1927 = vpow.pop %v1926
    %v1928 = vadd.f32 %v1927, 1.0
    %v1929 = vrcp.pop %v1928
    %v1930 = vmul.f32 1.0, %v1929
    %v1931 = vtanh.pop %v1924
    %v1932 = vmul.f32 %v1930, %v1806
    %1934 = vrot.lane.b32.xlu0 %v1931, 64
    %v1935 = vpop.permute.xlu0 %1934
    %v1937 = vmul.f32 %v1930, %v1935
    %1939 = vrot.lane.b32.xlu0 %v1937, 32
    %v1940 = vpop.permute.xlu0 %1939
    %v1942 = vadd.f32 %v1932, %v1940
    %v1943 = vtanh.pop %v1942
    %1945 = vrot.lane.b32.xlu0 %v1943, 64
    %v1946 = vpop.permute.xlu0 %1945
    %v1948 = vmul.f32 %v1930, %v1946
    %v1949 = vld [vmem:[#allocation2 + $0x58] sm:$0xff]
    %v1950 = vadd.f32 %v1920, %v1949
    %v1951 = vxor.u32 %v1950, 2147483648
    %v1952 = vmul.f32 %v1951, 1.442695
    %v1953 = vpow.pop %v1952
    %v1954 = vadd.f32 %v1953, 1.0
    %v1955 = vrcp.pop %v1954
    %v1956 = vmul.f32 1.0, %v1955
    %v1957 = vtanh.pop %v1950
    %v1958 = vmul.f32 %v1956, %v1832
    %1960 = vrot.lane.b32.xlu0 %v1957, 64
    %v1961 = vpop.permute.xlu0 %1960
    %v1963 = vmul.f32 %v1956, %v1961
    %1965 = vrot.lane.b32.xlu0 %v1963, 32
    %v1966 = vpop.permute.xlu0 %1965
    %v1968 = vadd.f32 %v1958, %v1966
    %v1969 = vtanh.pop %v1968
    %1971 = vrot.lane.b32.xlu0 %v1969, 64
    %v1972 = vpop.permute.xlu0 %1971
    %v1974 = vmul.f32 %v1956, %v1972
    %1976 = vrot.lane.b32.xlu0 %v1974, 32
    %v1977 = vpop.permute.xlu0 %1976
    %1979 = vst.msk [vmem:[#allocation3] sm:$0xff] %vm486, %v1977
    %1981 = vrot.lane.b32.xlu0 %v1948, 64
    %v1982 = vpop.permute.xlu0 %1981
    %1984 = vst.msk [vmem:[#allocation3] sm:$0xff] %vm623, %v1982
    %v1985 = vld [vmem:[#allocation3] sm:$0xff]
    %v1987 = vsel %vm455, %v1985, 0
    %1989 = vmatprep.subr.mxu0 %v433
    %1990 = vmatpush1.msra.mxu0 %v432
    %1991 = vmatprep.subr.mxu0 %v435
    %1992 = vmatpush1.msra.mxu0 %v434
    %1993 = vmatprep.subr.mxu0 %v437
    %1994 = vmatpush1.msra.mxu0 %v436
    %1995 = vmatprep.subr.mxu0 %v439
    %1996 = vmatpush1.msra.mxu0 %v438
    %1997 = vmatprep.subr.mxu0 %v441
    %1998 = vmatpush1.msra.mxu0 %v440
    %1999 = vmatprep.subr.mxu0 %v443
    %2000 = vmatpush1.msra.mxu0 %v442
    %2001 = vmatprep.subr.mxu0 %v445
    %2002 = vmatpush1.msra.mxu0 %v444
    %2003 = vmatprep.subr.mxu0 %v447
    %2004 = vmatpush1.msra.mxu0 %v446
    %2005 = vmatprep.subr.mxu0 0.0
    %2006 = vmatpush1.msra.mxu0 0.0
    %2007 = vmatprep.subr.mxu0 0.0
    %2008 = vmatpush1.msra.mxu0 0.0
    %2009 = vmatprep.subr.mxu0 0.0
    %2010 = vmatpush1.msra.mxu0 0.0
    %2011 = vmatprep.subr.mxu0 0.0
    %2012 = vmatpush1.msra.mxu0 0.0
    %2013 = vmatprep.subr.mxu0 0.0
    %2014 = vmatpush1.msra.mxu0 0.0
    %2015 = vmatprep.subr.mxu0 0.0
    %2016 = vmatpush1.msra.mxu0 0.0
    %2017 = vmatprep.subr.mxu0 0.0
    %2018 = vmatpush1.msra.mxu0 0.0
    %2019 = vmatprep.subr.mxu0 0.0
    %2020 = vmatpush1.msra.mxu0 0.0
    %2021 = vmatprep.subr.mxu0 0.0
    %2022 = vmatpush1.msra.mxu0 0.0
    %2023 = vmatprep.subr.mxu0 0.0
    %2024 = vmatpush1.msra.mxu0 0.0
    %2025 = vmatprep.subr.mxu0 0.0
    %2026 = vmatpush1.msra.mxu0 0.0
    %2027 = vmatprep.subr.mxu0 0.0
    %2028 = vmatpush1.msra.mxu0 0.0
    %2029 = vmatprep.subr.mxu0 0.0
    %2030 = vmatpush1.msra.mxu0 0.0
    %2031 = vmatprep.subr.mxu0 0.0
    %2032 = vmatpush1.msra.mxu0 0.0
    %2033 = vmatprep.subr.mxu0 0.0
    %2034 = vmatpush1.msra.mxu0 0.0
    %2035 = vmatprep.subr.mxu0 0.0
    %2036 = vmatpush1.msra.mxu0 0.0
    %2037 = vmatprep.subr.mxu0 0.0
    %2038 = vmatpush1.msra.mxu0 0.0
    %2039 = vmatprep.subr.mxu0 0.0
    %2040 = vmatpush1.msra.mxu0 0.0
    %2041 = vmatprep.subr.mxu0 0.0
    %2042 = vmatpush1.msra.mxu0 0.0
    %2043 = vmatprep.subr.mxu0 0.0
    %2044 = vmatpush1.msra.mxu0 0.0
    %2045 = vmatprep.subr.mxu0 0.0
    %2046 = vmatpush1.msra.mxu0 0.0
    %2047 = vmatprep.subr.mxu0 0.0
    %2048 = vmatpush1.msra.mxu0 0.0
    %2049 = vmatprep.subr.mxu0 0.0
    %2050 = vmatpush1.msra.mxu0 0.0
    %2051 = vmatprep.subr.mxu0 0.0
    %2052 = vmatpush1.msra.mxu0 0.0
    %2053 = vmatprep.mubr.f32.mxu0 0.0
    %2054 = vmatmul.mubr.f32.gmra.mrb[0].mxu0 %v1987
    %v2055 = vpop.f32.mrb[0].mxu0
    %v2056 = vadd.f32 0.0, %v2055
    %v2057 = vpop.f32.mrb[0].mxu0
    %v2058 = vadd.f32 0.0, %v2057
    %2059 = vdwg.mxu0
    %v2060 = vadd.f32 %v2058, %v453
    %v2061 = vxor.u32 %v2060, 2147483648
    %v2062 = vmul.f32 %v2061, 1.442695
    %v2063 = vpow.pop %v2062
    %v2064 = vadd.f32 %v2063, 1.0
    %v2065 = vrcp.pop %v2064
    %v2066 = vmul.f32 1.0, %v2065
    %v2067 = vtanh.pop %v2060
    %v2068 = vmul.f32 %v2066, %v1942
    %2070 = vrot.lane.b32.xlu0 %v2067, 64
    %v2071 = vpop.permute.xlu0 %2070
    %v2073 = vmul.f32 %v2066, %v2071
    %2075 = vrot.lane.b32.xlu0 %v2073, 32
    %v2076 = vpop.permute.xlu0 %2075
    %v2078 = vadd.f32 %v2068, %v2076
    %v2079 = vtanh.pop %v2078
    %2081 = vrot.lane.b32.xlu0 %v2079, 64
    %v2082 = vpop.permute.xlu0 %2081
    %v2084 = vmul.f32 %v2066, %v2082
    %v2085 = vld [vmem:[#allocation2 + $0x60] sm:$0xff]
    %v2086 = vadd.f32 %v2056, %v2085
    %v2087 = vxor.u32 %v2086, 2147483648
    %v2088 = vmul.f32 %v2087, 1.442695
    %v2089 = vpow.pop %v2088
    %v2090 = vadd.f32 %v2089, 1.0
    %v2091 = vrcp.pop %v2090
    %v2092 = vmul.f32 1.0, %v2091
    %v2093 = vtanh.pop %v2086
    %v2094 = vmul.f32 %v2092, %v1968
    %2096 = vrot.lane.b32.xlu0 %v2093, 64
    %v2097 = vpop.permute.xlu0 %2096
    %v2099 = vmul.f32 %v2092, %v2097
    %2101 = vrot.lane.b32.xlu0 %v2099, 32
    %v2102 = vpop.permute.xlu0 %2101
    %v2104 = vadd.f32 %v2094, %v2102
    %v2105 = vtanh.pop %v2104
    %2107 = vrot.lane.b32.xlu0 %v2105, 64
    %v2108 = vpop.permute.xlu0 %2107
    %v2110 = vmul.f32 %v2092, %v2108
    %2112 = vrot.lane.b32.xlu0 %v2110, 32
    %v2113 = vpop.permute.xlu0 %2112
    %2115 = vst.msk [vmem:[#allocation3] sm:$0xff] %vm486, %v2113
    %2117 = vrot.lane.b32.xlu0 %v2084, 64
    %v2118 = vpop.permute.xlu0 %2117
    %2120 = vst.msk [vmem:[#allocation3] sm:$0xff] %vm623, %v2118
    %v2121 = vld [vmem:[#allocation3] sm:$0xff]
    %v2123 = vsel %vm455, %v2121, 0
    %2125 = vmatprep.subr.mxu0 %v433
    %2126 = vmatpush1.msra.mxu0 %v432
    %2127 = vmatprep.subr.mxu0 %v435
    %2128 = vmatpush1.msra.mxu0 %v434
    %2129 = vmatprep.subr.mxu0 %v437
    %2130 = vmatpush1.msra.mxu0 %v436
    %2131 = vmatprep.subr.mxu0 %v439
    %2132 = vmatpush1.msra.mxu0 %v438
    %2133 = vmatprep.subr.mxu0 %v441
    %2134 = vmatpush1.msra.mxu0 %v440
    %2135 = vmatprep.subr.mxu0 %v443
    %2136 = vmatpush1.msra.mxu0 %v442
    %2137 = vmatprep.subr.mxu0 %v445
    %2138 = vmatpush1.msra.mxu0 %v444
    %2139 = vmatprep.subr.mxu0 %v447
    %2140 = vmatpush1.msra.mxu0 %v446
    %2141 = vmatprep.subr.mxu0 0.0
    %2142 = vmatpush1.msra.mxu0 0.0
    %2143 = vmatprep.subr.mxu0 0.0
    %2144 = vmatpush1.msra.mxu0 0.0
    %2145 = vmatprep.subr.mxu0 0.0
    %2146 = vmatpush1.msra.mxu0 0.0
    %2147 = vmatprep.subr.mxu0 0.0
    %2148 = vmatpush1.msra.mxu0 0.0
    %2149 = vmatprep.subr.mxu0 0.0
    %2150 = vmatpush1.msra.mxu0 0.0
    %2151 = vmatprep.subr.mxu0 0.0
    %2152 = vmatpush1.msra.mxu0 0.0
    %2153 = vmatprep.subr.mxu0 0.0
    %2154 = vmatpush1.msra.mxu0 0.0
    %2155 = vmatprep.subr.mxu0 0.0
    %2156 = vmatpush1.msra.mxu0 0.0
    %2157 = vmatprep.subr.mxu0 0.0
    %2158 = vmatpush1.msra.mxu0 0.0
    %2159 = vmatprep.subr.mxu0 0.0
    %2160 = vmatpush1.msra.mxu0 0.0
    %2161 = vmatprep.subr.mxu0 0.0
    %2162 = vmatpush1.msra.mxu0 0.0
    %2163 = vmatprep.subr.mxu0 0.0
    %2164 = vmatpush1.msra.mxu0 0.0
    %2165 = vmatprep.subr.mxu0 0.0
    %2166 = vmatpush1.msra.mxu0 0.0
    %2167 = vmatprep.subr.mxu0 0.0
    %2168 = vmatpush1.msra.mxu0 0.0
    %2169 = vmatprep.subr.mxu0 0.0
    %2170 = vmatpush1.msra.mxu0 0.0
    %2171 = vmatprep.subr.mxu0 0.0
    %2172 = vmatpush1.msra.mxu0 0.0
    %2173 = vmatprep.subr.mxu0 0.0
    %2174 = vmatpush1.msra.mxu0 0.0
    %2175 = vmatprep.subr.mxu0 0.0
    %2176 = vmatpush1.msra.mxu0 0.0
    %2177 = vmatprep.subr.mxu0 0.0
    %2178 = vmatpush1.msra.mxu0 0.0
    %2179 = vmatprep.subr.mxu0 0.0
    %2180 = vmatpush1.msra.mxu0 0.0
    %2181 = vmatprep.subr.mxu0 0.0
    %2182 = vmatpush1.msra.mxu0 0.0
    %2183 = vmatprep.subr.mxu0 0.0
    %2184 = vmatpush1.msra.mxu0 0.0
    %2185 = vmatprep.subr.mxu0 0.0
    %2186 = vmatpush1.msra.mxu0 0.0
    %2187 = vmatprep.subr.mxu0 0.0
    %2188 = vmatpush1.msra.mxu0 0.0
    %2189 = vmatprep.mubr.f32.mxu0 0.0
    %2190 = vmatmul.mubr.f32.gmra.mrb[0].mxu0 %v2123
    %v2191 = vpop.f32.mrb[0].mxu0
    %v2192 = vadd.f32 0.0, %v2191
    %v2193 = vpop.f32.mrb[0].mxu0
    %v2194 = vadd.f32 0.0, %v2193
    %2195 = vdwg.mxu0
    %v2196 = vadd.f32 %v2194, %v453
    %v2197 = vxor.u32 %v2196, 2147483648
    %v2198 = vmul.f32 %v2197, 1.442695
    %v2199 = vpow.pop %v2198
    %v2200 = vadd.f32 %v2199, 1.0
    %v2201 = vrcp.pop %v2200
    %v2202 = vmul.f32 1.0, %v2201
    %v2203 = vtanh.pop %v2196
    %v2204 = vmul.f32 %v2202, %v2078
    %2206 = vrot.lane.b32.xlu0 %v2203, 64
    %v2207 = vpop.permute.xlu0 %2206
    %v2209 = vmul.f32 %v2202, %v2207
    %2211 = vrot.lane.b32.xlu0 %v2209, 32
    %v2212 = vpop.permute.xlu0 %2211
    %v2214 = vadd.f32 %v2204, %v2212
    %v2215 = vtanh.pop %v2214
    %2217 = vrot.lane.b32.xlu0 %v2215, 64
    %v2218 = vpop.permute.xlu0 %2217
    %v2220 = vmul.f32 %v2202, %v2218
    %v2221 = vld [vmem:[#allocation2 + $0x68] sm:$0xff]
    %v2222 = vadd.f32 %v2192, %v2221
    %v2223 = vxor.u32 %v2222, 2147483648
    %v2224 = vmul.f32 %v2223, 1.442695
    %v2225 = vpow.pop %v2224
    %v2226 = vadd.f32 %v2225, 1.0
    %v2227 = vrcp.pop %v2226
    %v2228 = vmul.f32 1.0, %v2227
    %v2229 = vtanh.pop %v2222
    %v2230 = vmul.f32 %v2228, %v2104
    %2232 = vrot.lane.b32.xlu0 %v2229, 64
    %v2233 = vpop.permute.xlu0 %2232
    %v2235 = vmul.f32 %v2228, %v2233
    %2237 = vrot.lane.b32.xlu0 %v2235, 32
    %v2238 = vpop.permute.xlu0 %2237
    %v2240 = vadd.f32 %v2230, %v2238
    %v2241 = vtanh.pop %v2240
    %2243 = vrot.lane.b32.xlu0 %v2241, 64
    %v2244 = vpop.permute.xlu0 %2243
    %v2246 = vmul.f32 %v2228, %v2244
    %2248 = vrot.lane.b32.xlu0 %v2246, 32
    %v2249 = vpop.permute.xlu0 %2248
    %2251 = vst.msk [vmem:[#allocation3] sm:$0xff] %vm486, %v2249
    %2253 = vrot.lane.b32.xlu0 %v2220, 64
    %v2254 = vpop.permute.xlu0 %2253
    %2256 = vst.msk [vmem:[#allocation3] sm:$0xff] %vm623, %v2254
    %v2257 = vld [vmem:[#allocation3] sm:$0xff]
    %v2259 = vsel %vm455, %v2257, 0
    %2261 = vmatprep.subr.mxu0 %v433
    %2262 = vmatpush1.msra.mxu0 %v432
    %2263 = vmatprep.subr.mxu0 %v435
    %2264 = vmatpush1.msra.mxu0 %v434
    %2265 = vmatprep.subr.mxu0 %v437
    %2266 = vmatpush1.msra.mxu0 %v436
    %2267 = vmatprep.subr.mxu0 %v439
    %2268 = vmatpush1.msra.mxu0 %v438
    %2269 = vmatprep.subr.mxu0 %v441
    %2270 = vmatpush1.msra.mxu0 %v440
    %2271 = vmatprep.subr.mxu0 %v443
    %2272 = vmatpush1.msra.mxu0 %v442
    %2273 = vmatprep.subr.mxu0 %v445
    %2274 = vmatpush1.msra.mxu0 %v444
    %2275 = vmatprep.subr.mxu0 %v447
    %2276 = vmatpush1.msra.mxu0 %v446
    %2277 = vmatprep.subr.mxu0 0.0
    %2278 = vmatpush1.msra.mxu0 0.0
    %2279 = vmatprep.subr.mxu0 0.0
    %2280 = vmatpush1.msra.mxu0 0.0
    %2281 = vmatprep.subr.mxu0 0.0
    %2282 = vmatpush1.msra.mxu0 0.0
    %2283 = vmatprep.subr.mxu0 0.0
    %2284 = vmatpush1.msra.mxu0 0.0
    %2285 = vmatprep.subr.mxu0 0.0
    %2286 = vmatpush1.msra.mxu0 0.0
    %2287 = vmatprep.subr.mxu0 0.0
    %2288 = vmatpush1.msra.mxu0 0.0
    %2289 = vmatprep.subr.mxu0 0.0
    %2290 = vmatpush1.msra.mxu0 0.0
    %2291 = vmatprep.subr.mxu0 0.0
    %2292 = vmatpush1.msra.mxu0 0.0
    %2293 = vmatprep.subr.mxu0 0.0
    %2294 = vmatpush1.msra.mxu0 0.0
    %2295 = vmatprep.subr.mxu0 0.0
    %2296 = vmatpush1.msra.mxu0 0.0
    %2297 = vmatprep.subr.mxu0 0.0
    %2298 = vmatpush1.msra.mxu0 0.0
    %2299 = vmatprep.subr.mxu0 0.0
    %2300 = vmatpush1.msra.mxu0 0.0
    %2301 = vmatprep.subr.mxu0 0.0
    %2302 = vmatpush1.msra.mxu0 0.0
    %2303 = vmatprep.subr.mxu0 0.0
    %2304 = vmatpush1.msra.mxu0 0.0
    %2305 = vmatprep.subr.mxu0 0.0
    %2306 = vmatpush1.msra.mxu0 0.0
    %2307 = vmatprep.subr.mxu0 0.0
    %2308 = vmatpush1.msra.mxu0 0.0
    %2309 = vmatprep.subr.mxu0 0.0
    %2310 = vmatpush1.msra.mxu0 0.0
    %2311 = vmatprep.subr.mxu0 0.0
    %2312 = vmatpush1.msra.mxu0 0.0
    %2313 = vmatprep.subr.mxu0 0.0
    %2314 = vmatpush1.msra.mxu0 0.0
    %2315 = vmatprep.subr.mxu0 0.0
    %2316 = vmatpush1.msra.mxu0 0.0
    %2317 = vmatprep.subr.mxu0 0.0
    %2318 = vmatpush1.msra.mxu0 0.0
    %2319 = vmatprep.subr.mxu0 0.0
    %2320 = vmatpush1.msra.mxu0 0.0
    %2321 = vmatprep.subr.mxu0 0.0
    %2322 = vmatpush1.msra.mxu0 0.0
    %2323 = vmatprep.subr.mxu0 0.0
    %2324 = vmatpush1.msra.mxu0 0.0
    %2325 = vmatprep.mubr.f32.mxu0 0.0
    %2326 = vmatmul.mubr.f32.gmra.mrb[0].mxu0 %v2259
    %v2327 = vpop.f32.mrb[0].mxu0
    %v2328 = vadd.f32 0.0, %v2327
    %v2329 = vpop.f32.mrb[0].mxu0
    %v2330 = vadd.f32 0.0, %v2329
    %2331 = vdwg.mxu0
    %v2332 = vadd.f32 %v2330, %v453
    %v2333 = vxor.u32 %v2332, 2147483648
    %v2334 = vmul.f32 %v2333, 1.442695
    %v2335 = vpow.pop %v2334
    %v2336 = vadd.f32 %v2335, 1.0
    %v2337 = vrcp.pop %v2336
    %v2338 = vmul.f32 1.0, %v2337
    %v2339 = vtanh.pop %v2332
    %v2340 = vmul.f32 %v2338, %v2214
    %2342 = vrot.lane.b32.xlu0 %v2339, 64
    %v2343 = vpop.permute.xlu0 %2342
    %v2345 = vmul.f32 %v2338, %v2343
    %2347 = vrot.lane.b32.xlu0 %v2345, 32
    %v2348 = vpop.permute.xlu0 %2347
    %v2350 = vadd.f32 %v2340, %v2348
    %v2351 = vtanh.pop %v2350
    %2353 = vrot.lane.b32.xlu0 %v2351, 64
    %v2354 = vpop.permute.xlu0 %2353
    %v2356 = vmul.f32 %v2338, %v2354
    %v2357 = vld [vmem:[#allocation2 + $0x70] sm:$0xff]
    %v2358 = vadd.f32 %v2328, %v2357
    %v2359 = vxor.u32 %v2358, 2147483648
    %v2360 = vmul.f32 %v2359, 1.442695
    %v2361 = vpow.pop %v2360
    %v2362 = vadd.f32 %v2361, 1.0
    %v2363 = vrcp.pop %v2362
    %v2364 = vmul.f32 1.0, %v2363
    %v2365 = vtanh.pop %v2358
    %v2366 = vmul.f32 %v2364, %v2240
    %2368 = vrot.lane.b32.xlu0 %v2365, 64
    %v2369 = vpop.permute.xlu0 %2368
    %v2371 = vmul.f32 %v2364, %v2369
    %2373 = vrot.lane.b32.xlu0 %v2371, 32
    %v2374 = vpop.permute.xlu0 %2373
    %v2376 = vadd.f32 %v2366, %v2374
    %v2377 = vtanh.pop %v2376
    %2379 = vrot.lane.b32.xlu0 %v2377, 64
    %v2380 = vpop.permute.xlu0 %2379
    %v2382 = vmul.f32 %v2364, %v2380
    %2384 = vrot.lane.b32.xlu0 %v2382, 32
    %v2385 = vpop.permute.xlu0 %2384
    %2387 = vst.msk [vmem:[#allocation3] sm:$0xff] %vm486, %v2385
    %2389 = vrot.lane.b32.xlu0 %v2356, 64
    %v2390 = vpop.permute.xlu0 %2389
    %2392 = vst.msk [vmem:[#allocation3] sm:$0xff] %vm623, %v2390
    %v2393 = vld [vmem:[#allocation3] sm:$0xff]
    %v2395 = vsel %vm455, %v2393, 0
    %2397 = vmatprep.subr.mxu0 %v433
    %2398 = vmatpush1.msra.mxu0 %v432
    %2399 = vmatprep.subr.mxu0 %v435
    %2400 = vmatpush1.msra.mxu0 %v434
    %2401 = vmatprep.subr.mxu0 %v437
    %2402 = vmatpush1.msra.mxu0 %v436
    %2403 = vmatprep.subr.mxu0 %v439
    %2404 = vmatpush1.msra.mxu0 %v438
    %2405 = vmatprep.subr.mxu0 %v441
    %2406 = vmatpush1.msra.mxu0 %v440
    %2407 = vmatprep.subr.mxu0 %v443
    %2408 = vmatpush1.msra.mxu0 %v442
    %2409 = vmatprep.subr.mxu0 %v445
    %2410 = vmatpush1.msra.mxu0 %v444
    %2411 = vmatprep.subr.mxu0 %v447
    %2412 = vmatpush1.msra.mxu0 %v446
    %2413 = vmatprep.subr.mxu0 0.0
    %2414 = vmatpush1.msra.mxu0 0.0
    %2415 = vmatprep.subr.mxu0 0.0
    %2416 = vmatpush1.msra.mxu0 0.0
    %2417 = vmatprep.subr.mxu0 0.0
    %2418 = vmatpush1.msra.mxu0 0.0
    %2419 = vmatprep.subr.mxu0 0.0
    %2420 = vmatpush1.msra.mxu0 0.0
    %2421 = vmatprep.subr.mxu0 0.0
    %2422 = vmatpush1.msra.mxu0 0.0
    %2423 = vmatprep.subr.mxu0 0.0
    %2424 = vmatpush1.msra.mxu0 0.0
    %2425 = vmatprep.subr.mxu0 0.0
    %2426 = vmatpush1.msra.mxu0 0.0
    %2427 = vmatprep.subr.mxu0 0.0
    %2428 = vmatpush1.msra.mxu0 0.0
    %2429 = vmatprep.subr.mxu0 0.0
    %2430 = vmatpush1.msra.mxu0 0.0
    %2431 = vmatprep.subr.mxu0 0.0
    %2432 = vmatpush1.msra.mxu0 0.0
    %2433 = vmatprep.subr.mxu0 0.0
    %2434 = vmatpush1.msra.mxu0 0.0
    %2435 = vmatprep.subr.mxu0 0.0
    %2436 = vmatpush1.msra.mxu0 0.0
    %2437 = vmatprep.subr.mxu0 0.0
    %2438 = vmatpush1.msra.mxu0 0.0
    %2439 = vmatprep.subr.mxu0 0.0
    %2440 = vmatpush1.msra.mxu0 0.0
    %2441 = vmatprep.subr.mxu0 0.0
    %2442 = vmatpush1.msra.mxu0 0.0
    %2443 = vmatprep.subr.mxu0 0.0
    %2444 = vmatpush1.msra.mxu0 0.0
    %2445 = vmatprep.subr.mxu0 0.0
    %2446 = vmatpush1.msra.mxu0 0.0
    %2447 = vmatprep.subr.mxu0 0.0
    %2448 = vmatpush1.msra.mxu0 0.0
    %2449 = vmatprep.subr.mxu0 0.0
    %2450 = vmatpush1.msra.mxu0 0.0
    %2451 = vmatprep.subr.mxu0 0.0
    %2452 = vmatpush1.msra.mxu0 0.0
    %2453 = vmatprep.subr.mxu0 0.0
    %2454 = vmatpush1.msra.mxu0 0.0
    %2455 = vmatprep.subr.mxu0 0.0
    %2456 = vmatpush1.msra.mxu0 0.0
    %2457 = vmatprep.subr.mxu0 0.0
    %2458 = vmatpush1.msra.mxu0 0.0
    %2459 = vmatprep.subr.mxu0 0.0
    %2460 = vmatpush1.msra.mxu0 0.0
    %2461 = vmatprep.mubr.f32.mxu0 0.0
    %2462 = vmatmul.mubr.f32.gmra.mrb[0].mxu0 %v2395
    %v2463 = vpop.f32.mrb[0].mxu0
    %v2464 = vadd.f32 0.0, %v2463
    %v2465 = vpop.f32.mrb[0].mxu0
    %v2466 = vadd.f32 0.0, %v2465
    %2467 = vdwg.mxu0
    %v2468 = vadd.f32 %v2466, %v453
    %v2469 = vxor.u32 %v2468, 2147483648
    %v2470 = vmul.f32 %v2469, 1.442695
    %v2471 = vpow.pop %v2470
    %v2472 = vadd.f32 %v2471, 1.0
    %v2473 = vrcp.pop %v2472
    %v2474 = vmul.f32 1.0, %v2473
    %v2475 = vtanh.pop %v2468
    %v2476 = vmul.f32 %v2474, %v2350
    %2478 = vrot.lane.b32.xlu0 %v2475, 64
    %v2479 = vpop.permute.xlu0 %2478
    %v2481 = vmul.f32 %v2474, %v2479
    %2483 = vrot.lane.b32.xlu0 %v2481, 32
    %v2484 = vpop.permute.xlu0 %2483
    %v2486 = vadd.f32 %v2476, %v2484
    %v2487 = vtanh.pop %v2486
    %2489 = vrot.lane.b32.xlu0 %v2487, 64
    %v2490 = vpop.permute.xlu0 %2489
    %v2492 = vmul.f32 %v2474, %v2490
    %v2493 = vld [vmem:[#allocation2 + $0x78] sm:$0xff]
    %v2494 = vadd.f32 %v2464, %v2493
    %v2495 = vxor.u32 %v2494, 2147483648
    %v2496 = vmul.f32 %v2495, 1.442695
    %v2497 = vpow.pop %v2496
    %v2498 = vadd.f32 %v2497, 1.0
    %v2499 = vrcp.pop %v2498
    %v2500 = vmul.f32 1.0, %v2499
    %v2501 = vtanh.pop %v2494
    %v2502 = vmul.f32 %v2500, %v2376
    %2504 = vrot.lane.b32.xlu0 %v2501, 64
    %v2505 = vpop.permute.xlu0 %2504
    %v2507 = vmul.f32 %v2500, %v2505
    %2509 = vrot.lane.b32.xlu0 %v2507, 32
    %v2510 = vpop.permute.xlu0 %2509
    %v2512 = vadd.f32 %v2502, %v2510
    %v2513 = vtanh.pop %v2512
    %2515 = vrot.lane.b32.xlu0 %v2513, 64
    %v2516 = vpop.permute.xlu0 %2515
    %v2518 = vmul.f32 %v2500, %v2516
    %2520 = vrot.lane.b32.xlu0 %v2518, 32
    %v2521 = vpop.permute.xlu0 %2520
    %2523 = vst.msk [vmem:[#allocation3] sm:$0xff] %vm486, %v2521
    %2525 = vrot.lane.b32.xlu0 %v2492, 64
    %v2526 = vpop.permute.xlu0 %2525
    %2528 = vst.msk [vmem:[#allocation3] sm:$0xff] %vm623, %v2526
    %v2529 = vld [vmem:[#allocation3] sm:$0xff]
    %v2531 = vsel %vm455, %v2529, 0
    %2533 = vmatprep.subr.mxu0 %v433
    %2534 = vmatpush1.msra.mxu0 %v432
    %2535 = vmatprep.subr.mxu0 %v435
    %2536 = vmatpush1.msra.mxu0 %v434
    %2537 = vmatprep.subr.mxu0 %v437
    %2538 = vmatpush1.msra.mxu0 %v436
    %2539 = vmatprep.subr.mxu0 %v439
    %2540 = vmatpush1.msra.mxu0 %v438
    %2541 = vmatprep.subr.mxu0 %v441
    %2542 = vmatpush1.msra.mxu0 %v440
    %2543 = vmatprep.subr.mxu0 %v443
    %2544 = vmatpush1.msra.mxu0 %v442
    %2545 = vmatprep.subr.mxu0 %v445
    %2546 = vmatpush1.msra.mxu0 %v444
    %2547 = vmatprep.subr.mxu0 %v447
    %2548 = vmatpush1.msra.mxu0 %v446
    %2549 = vmatprep.subr.mxu0 0.0
    %2550 = vmatpush1.msra.mxu0 0.0
    %2551 = vmatprep.subr.mxu0 0.0
    %2552 = vmatpush1.msra.mxu0 0.0
    %2553 = vmatprep.subr.mxu0 0.0
    %2554 = vmatpush1.msra.mxu0 0.0
    %2555 = vmatprep.subr.mxu0 0.0
    %2556 = vmatpush1.msra.mxu0 0.0
    %2557 = vmatprep.subr.mxu0 0.0
    %2558 = vmatpush1.msra.mxu0 0.0
    %2559 = vmatprep.subr.mxu0 0.0
    %2560 = vmatpush1.msra.mxu0 0.0
    %2561 = vmatprep.subr.mxu0 0.0
    %2562 = vmatpush1.msra.mxu0 0.0
    %2563 = vmatprep.subr.mxu0 0.0
    %2564 = vmatpush1.msra.mxu0 0.0
    %2565 = vmatprep.subr.mxu0 0.0
    %2566 = vmatpush1.msra.mxu0 0.0
    %2567 = vmatprep.subr.mxu0 0.0
    %2568 = vmatpush1.msra.mxu0 0.0
    %2569 = vmatprep.subr.mxu0 0.0
    %2570 = vmatpush1.msra.mxu0 0.0
    %2571 = vmatprep.subr.mxu0 0.0
    %2572 = vmatpush1.msra.mxu0 0.0
    %2573 = vmatprep.subr.mxu0 0.0
    %2574 = vmatpush1.msra.mxu0 0.0
    %2575 = vmatprep.subr.mxu0 0.0
    %2576 = vmatpush1.msra.mxu0 0.0
    %2577 = vmatprep.subr.mxu0 0.0
    %2578 = vmatpush1.msra.mxu0 0.0
    %2579 = vmatprep.subr.mxu0 0.0
    %2580 = vmatpush1.msra.mxu0 0.0
    %2581 = vmatprep.subr.mxu0 0.0
    %2582 = vmatpush1.msra.mxu0 0.0
    %2583 = vmatprep.subr.mxu0 0.0
    %2584 = vmatpush1.msra.mxu0 0.0
    %2585 = vmatprep.subr.mxu0 0.0
    %2586 = vmatpush1.msra.mxu0 0.0
    %2587 = vmatprep.subr.mxu0 0.0
    %2588 = vmatpush1.msra.mxu0 0.0
    %2589 = vmatprep.subr.mxu0 0.0
    %2590 = vmatpush1.msra.mxu0 0.0
    %2591 = vmatprep.subr.mxu0 0.0
    %2592 = vmatpush1.msra.mxu0 0.0
    %2593 = vmatprep.subr.mxu0 0.0
    %2594 = vmatpush1.msra.mxu0 0.0
    %2595 = vmatprep.subr.mxu0 0.0
    %2596 = vmatpush1.msra.mxu0 0.0
    %2597 = vmatprep.mubr.f32.mxu0 0.0
    %2598 = vmatmul.mubr.f32.gmra.mrb[0].mxu0 %v2531
    %v2599 = vpop.f32.mrb[0].mxu0
    %v2600 = vadd.f32 0.0, %v2599
    %v2601 = vpop.f32.mrb[0].mxu0
    %v2602 = vadd.f32 0.0, %v2601
    %2603 = vdwg.mxu0
    %v2604 = vadd.f32 %v2602, %v453
    %v2605 = vxor.u32 %v2604, 2147483648
    %v2606 = vmul.f32 %v2605, 1.442695
    %v2607 = vpow.pop %v2606
    %v2608 = vadd.f32 %v2607, 1.0
    %v2609 = vrcp.pop %v2608
    %v2610 = vmul.f32 1.0, %v2609
    %v2611 = vtanh.pop %v2604
    %v2612 = vmul.f32 %v2610, %v2486
    %2614 = vrot.lane.b32.xlu0 %v2611, 64
    %v2615 = vpop.permute.xlu0 %2614
    %v2617 = vmul.f32 %v2610, %v2615
    %2619 = vrot.lane.b32.xlu0 %v2617, 32
    %v2620 = vpop.permute.xlu0 %2619
    %v2622 = vadd.f32 %v2612, %v2620
    %v2623 = vtanh.pop %v2622
    %2625 = vrot.lane.b32.xlu0 %v2623, 64
    %v2626 = vpop.permute.xlu0 %2625
    %v2628 = vmul.f32 %v2610, %v2626
    %v2629 = vld [vmem:[#allocation2 + $0x80] sm:$0xff]
    %v2630 = vadd.f32 %v2600, %v2629
    %v2631 = vxor.u32 %v2630, 2147483648
    %v2632 = vmul.f32 %v2631, 1.442695
    %v2633 = vpow.pop %v2632
    %v2634 = vadd.f32 %v2633, 1.0
    %v2635 = vrcp.pop %v2634
    %v2636 = vmul.f32 1.0, %v2635
    %v2637 = vtanh.pop %v2630
    %v2638 = vmul.f32 %v2636, %v2512
    %2640 = vrot.lane.b32.xlu0 %v2637, 64
    %v2641 = vpop.permute.xlu0 %2640
    %v2643 = vmul.f32 %v2636, %v2641
    %2645 = vrot.lane.b32.xlu0 %v2643, 32
    %v2646 = vpop.permute.xlu0 %2645
    %v2648 = vadd.f32 %v2638, %v2646
    %v2649 = vtanh.pop %v2648
    %2651 = vrot.lane.b32.xlu0 %v2649, 64
    %v2652 = vpop.permute.xlu0 %2651
    %v2654 = vmul.f32 %v2636, %v2652
    %2656 = vrot.lane.b32.xlu0 %v2654, 32
    %v2657 = vpop.permute.xlu0 %2656
    %2659 = vst.msk [vmem:[#allocation3] sm:$0xff] %vm486, %v2657
    %2661 = vrot.lane.b32.xlu0 %v2628, 64
    %v2662 = vpop.permute.xlu0 %2661
    %2664 = vst.msk [vmem:[#allocation3] sm:$0xff] %vm623, %v2662
    %v2665 = vld [vmem:[#allocation3] sm:$0xff]
    %v2667 = vsel %vm455, %v2665, 0
    %2669 = vmatprep.subr.mxu0 %v433
    %2670 = vmatpush1.msra.mxu0 %v432
    %2671 = vmatprep.subr.mxu0 %v435
    %2672 = vmatpush1.msra.mxu0 %v434
    %2673 = vmatprep.subr.mxu0 %v437
    %2674 = vmatpush1.msra.mxu0 %v436
    %2675 = vmatprep.subr.mxu0 %v439
    %2676 = vmatpush1.msra.mxu0 %v438
    %2677 = vmatprep.subr.mxu0 %v441
    %2678 = vmatpush1.msra.mxu0 %v440
    %2679 = vmatprep.subr.mxu0 %v443
    %2680 = vmatpush1.msra.mxu0 %v442
    %2681 = vmatprep.subr.mxu0 %v445
    %2682 = vmatpush1.msra.mxu0 %v444
    %2683 = vmatprep.subr.mxu0 %v447
    %2684 = vmatpush1.msra.mxu0 %v446
    %2685 = vmatprep.subr.mxu0 0.0
    %2686 = vmatpush1.msra.mxu0 0.0
    %2687 = vmatprep.subr.mxu0 0.0
    %2688 = vmatpush1.msra.mxu0 0.0
    %2689 = vmatprep.subr.mxu0 0.0
    %2690 = vmatpush1.msra.mxu0 0.0
    %2691 = vmatprep.subr.mxu0 0.0
    %2692 = vmatpush1.msra.mxu0 0.0
    %2693 = vmatprep.subr.mxu0 0.0
    %2694 = vmatpush1.msra.mxu0 0.0
    %2695 = vmatprep.subr.mxu0 0.0
    %2696 = vmatpush1.msra.mxu0 0.0
    %2697 = vmatprep.subr.mxu0 0.0
    %2698 = vmatpush1.msra.mxu0 0.0
    %2699 = vmatprep.subr.mxu0 0.0
    %2700 = vmatpush1.msra.mxu0 0.0
    %2701 = vmatprep.subr.mxu0 0.0
    %2702 = vmatpush1.msra.mxu0 0.0
    %2703 = vmatprep.subr.mxu0 0.0
    %2704 = vmatpush1.msra.mxu0 0.0
    %2705 = vmatprep.subr.mxu0 0.0
    %2706 = vmatpush1.msra.mxu0 0.0
    %2707 = vmatprep.subr.mxu0 0.0
    %2708 = vmatpush1.msra.mxu0 0.0
    %2709 = vmatprep.subr.mxu0 0.0
    %2710 = vmatpush1.msra.mxu0 0.0
    %2711 = vmatprep.subr.mxu0 0.0
    %2712 = vmatpush1.msra.mxu0 0.0
    %2713 = vmatprep.subr.mxu0 0.0
    %2714 = vmatpush1.msra.mxu0 0.0
    %2715 = vmatprep.subr.mxu0 0.0
    %2716 = vmatpush1.msra.mxu0 0.0
    %2717 = vmatprep.subr.mxu0 0.0
    %2718 = vmatpush1.msra.mxu0 0.0
    %2719 = vmatprep.subr.mxu0 0.0
    %2720 = vmatpush1.msra.mxu0 0.0
    %2721 = vmatprep.subr.mxu0 0.0
    %2722 = vmatpush1.msra.mxu0 0.0
    %2723 = vmatprep.subr.mxu0 0.0
    %2724 = vmatpush1.msra.mxu0 0.0
    %2725 = vmatprep.subr.mxu0 0.0
    %2726 = vmatpush1.msra.mxu0 0.0
    %2727 = vmatprep.subr.mxu0 0.0
    %2728 = vmatpush1.msra.mxu0 0.0
    %2729 = vmatprep.subr.mxu0 0.0
    %2730 = vmatpush1.msra.mxu0 0.0
    %2731 = vmatprep.subr.mxu0 0.0
    %2732 = vmatpush1.msra.mxu0 0.0
    %2733 = vmatprep.mubr.f32.mxu0 0.0
    %2734 = vmatmul.mubr.f32.gmra.mrb[0].mxu0 %v2667
    %v2735 = vpop.f32.mrb[0].mxu0
    %v2736 = vadd.f32 0.0, %v2735
    %v2737 = vpop.f32.mrb[0].mxu0
    %v2738 = vadd.f32 0.0, %v2737
    %2739 = vdwg.mxu0
    %v2740 = vadd.f32 %v2738, %v453
    %v2741 = vxor.u32 %v2740, 2147483648
    %v2742 = vmul.f32 %v2741, 1.442695
    %v2743 = vpow.pop %v2742
    %v2744 = vadd.f32 %v2743, 1.0
    %v2745 = vrcp.pop %v2744
    %v2746 = vmul.f32 1.0, %v2745
    %v2747 = vtanh.pop %v2740
    %v2748 = vmul.f32 %v2746, %v2622
    %2750 = vrot.lane.b32.xlu0 %v2747, 64
    %v2751 = vpop.permute.xlu0 %2750
    %v2753 = vmul.f32 %v2746, %v2751
    %2755 = vrot.lane.b32.xlu0 %v2753, 32
    %v2756 = vpop.permute.xlu0 %2755
    %v2758 = vadd.f32 %v2748, %v2756
    %v2759 = vtanh.pop %v2758
    %2761 = vrot.lane.b32.xlu0 %v2759, 64
    %v2762 = vpop.permute.xlu0 %2761
    %v2764 = vmul.f32 %v2746, %v2762
    %v2765 = vld [vmem:[#allocation2 + $0x88] sm:$0xff]
    %v2766 = vadd.f32 %v2736, %v2765
    %v2767 = vxor.u32 %v2766, 2147483648
    %v2768 = vmul.f32 %v2767, 1.442695
    %v2769 = vpow.pop %v2768
    %v2770 = vadd.f32 %v2769, 1.0
    %v2771 = vrcp.pop %v2770
    %v2772 = vmul.f32 1.0, %v2771
    %v2773 = vtanh.pop %v2766
    %v2774 = vmul.f32 %v2772, %v2648
    %2776 = vrot.lane.b32.xlu0 %v2773, 64
    %v2777 = vpop.permute.xlu0 %2776
    %v2779 = vmul.f32 %v2772, %v2777
    %2781 = vrot.lane.b32.xlu0 %v2779, 32
    %v2782 = vpop.permute.xlu0 %2781
    %v2784 = vadd.f32 %v2774, %v2782
    %v2785 = vtanh.pop %v2784
    %2787 = vrot.lane.b32.xlu0 %v2785, 64
    %v2788 = vpop.permute.xlu0 %2787
    %v2790 = vmul.f32 %v2772, %v2788
    %2792 = vrot.lane.b32.xlu0 %v2790, 32
    %v2793 = vpop.permute.xlu0 %2792
    %2795 = vst.msk [vmem:[#allocation3] sm:$0xff] %vm486, %v2793
    %2797 = vrot.lane.b32.xlu0 %v2764, 64
    %v2798 = vpop.permute.xlu0 %2797
    %2800 = vst.msk [vmem:[#allocation3] sm:$0xff] %vm623, %v2798
    %v2801 = vld [vmem:[#allocation3] sm:$0xff]
    %v2803 = vsel %vm455, %v2801, 0
    %2805 = vmatprep.subr.mxu0 %v433
    %2806 = vmatpush1.msra.mxu0 %v432
    %2807 = vmatprep.subr.mxu0 %v435
    %2808 = vmatpush1.msra.mxu0 %v434
    %2809 = vmatprep.subr.mxu0 %v437
    %2810 = vmatpush1.msra.mxu0 %v436
    %2811 = vmatprep.subr.mxu0 %v439
    %2812 = vmatpush1.msra.mxu0 %v438
    %2813 = vmatprep.subr.mxu0 %v441
    %2814 = vmatpush1.msra.mxu0 %v440
    %2815 = vmatprep.subr.mxu0 %v443
    %2816 = vmatpush1.msra.mxu0 %v442
    %2817 = vmatprep.subr.mxu0 %v445
    %2818 = vmatpush1.msra.mxu0 %v444
    %2819 = vmatprep.subr.mxu0 %v447
    %2820 = vmatpush1.msra.mxu0 %v446
    %2821 = vmatprep.subr.mxu0 0.0
    %2822 = vmatpush1.msra.mxu0 0.0
    %2823 = vmatprep.subr.mxu0 0.0
    %2824 = vmatpush1.msra.mxu0 0.0
    %2825 = vmatprep.subr.mxu0 0.0
    %2826 = vmatpush1.msra.mxu0 0.0
    %2827 = vmatprep.subr.mxu0 0.0
    %2828 = vmatpush1.msra.mxu0 0.0
    %2829 = vmatprep.subr.mxu0 0.0
    %2830 = vmatpush1.msra.mxu0 0.0
    %2831 = vmatprep.subr.mxu0 0.0
    %2832 = vmatpush1.msra.mxu0 0.0
    %2833 = vmatprep.subr.mxu0 0.0
    %2834 = vmatpush1.msra.mxu0 0.0
    %2835 = vmatprep.subr.mxu0 0.0
    %2836 = vmatpush1.msra.mxu0 0.0
    %2837 = vmatprep.subr.mxu0 0.0
    %2838 = vmatpush1.msra.mxu0 0.0
    %2839 = vmatprep.subr.mxu0 0.0
    %2840 = vmatpush1.msra.mxu0 0.0
    %2841 = vmatprep.subr.mxu0 0.0
    %2842 = vmatpush1.msra.mxu0 0.0
    %2843 = vmatprep.subr.mxu0 0.0
    %2844 = vmatpush1.msra.mxu0 0.0
    %2845 = vmatprep.subr.mxu0 0.0
    %2846 = vmatpush1.msra.mxu0 0.0
    %2847 = vmatprep.subr.mxu0 0.0
    %2848 = vmatpush1.msra.mxu0 0.0
    %2849 = vmatprep.subr.mxu0 0.0
    %2850 = vmatpush1.msra.mxu0 0.0
    %2851 = vmatprep.subr.mxu0 0.0
    %2852 = vmatpush1.msra.mxu0 0.0
    %2853 = vmatprep.subr.mxu0 0.0
    %2854 = vmatpush1.msra.mxu0 0.0
    %2855 = vmatprep.subr.mxu0 0.0
    %2856 = vmatpush1.msra.mxu0 0.0
    %2857 = vmatprep.subr.mxu0 0.0
    %2858 = vmatpush1.msra.mxu0 0.0
    %2859 = vmatprep.subr.mxu0 0.0
    %2860 = vmatpush1.msra.mxu0 0.0
    %2861 = vmatprep.subr.mxu0 0.0
    %2862 = vmatpush1.msra.mxu0 0.0
    %2863 = vmatprep.subr.mxu0 0.0
    %2864 = vmatpush1.msra.mxu0 0.0
    %2865 = vmatprep.subr.mxu0 0.0
    %2866 = vmatpush1.msra.mxu0 0.0
    %2867 = vmatprep.subr.mxu0 0.0
    %2868 = vmatpush1.msra.mxu0 0.0
    %2869 = vmatprep.mubr.f32.mxu0 0.0
    %2870 = vmatmul.mubr.f32.gmra.mrb[0].mxu0 %v2803
    %v2871 = vpop.f32.mrb[0].mxu0
    %v2872 = vadd.f32 0.0, %v2871
    %v2873 = vpop.f32.mrb[0].mxu0
    %v2874 = vadd.f32 0.0, %v2873
    %2875 = vdwg.mxu0
    %v2876 = vadd.f32 %v2874, %v453
    %v2877 = vxor.u32 %v2876, 2147483648
    %v2878 = vmul.f32 %v2877, 1.442695
    %v2879 = vpow.pop %v2878
    %v2880 = vadd.f32 %v2879, 1.0
    %v2881 = vrcp.pop %v2880
    %v2882 = vmul.f32 1.0, %v2881
    %v2883 = vtanh.pop %v2876
    %v2884 = vmul.f32 %v2882, %v2758
    %2886 = vrot.lane.b32.xlu0 %v2883, 64
    %v2887 = vpop.permute.xlu0 %2886
    %v2889 = vmul.f32 %v2882, %v2887
    %2891 = vrot.lane.b32.xlu0 %v2889, 32
    %v2892 = vpop.permute.xlu0 %2891
    %v2894 = vadd.f32 %v2884, %v2892
    %v2895 = vtanh.pop %v2894
    %2897 = vrot.lane.b32.xlu0 %v2895, 64
    %v2898 = vpop.permute.xlu0 %2897
    %v2900 = vmul.f32 %v2882, %v2898
    %v2901 = vld [vmem:[#allocation2 + $0x90] sm:$0xff]
    %v2902 = vadd.f32 %v2872, %v2901
    %v2903 = vxor.u32 %v2902, 2147483648
    %v2904 = vmul.f32 %v2903, 1.442695
    %v2905 = vpow.pop %v2904
    %v2906 = vadd.f32 %v2905, 1.0
    %v2907 = vrcp.pop %v2906
    %v2908 = vmul.f32 1.0, %v2907
    %v2909 = vtanh.pop %v2902
    %v2910 = vmul.f32 %v2908, %v2784
    %2912 = vrot.lane.b32.xlu0 %v2909, 64
    %v2913 = vpop.permute.xlu0 %2912
    %v2915 = vmul.f32 %v2908, %v2913
    %2917 = vrot.lane.b32.xlu0 %v2915, 32
    %v2918 = vpop.permute.xlu0 %2917
    %v2920 = vadd.f32 %v2910, %v2918
    %v2921 = vtanh.pop %v2920
    %2923 = vrot.lane.b32.xlu0 %v2921, 64
    %v2924 = vpop.permute.xlu0 %2923
    %v2926 = vmul.f32 %v2908, %v2924
    %2928 = vrot.lane.b32.xlu0 %v2926, 32
    %v2929 = vpop.permute.xlu0 %2928
    %2931 = vst.msk [vmem:[#allocation3] sm:$0xff] %vm486, %v2929
    %2933 = vrot.lane.b32.xlu0 %v2900, 64
    %v2934 = vpop.permute.xlu0 %2933
    %2936 = vst.msk [vmem:[#allocation3] sm:$0xff] %vm623, %v2934
    %v2937 = vld [vmem:[#allocation3] sm:$0xff]
    %v2939 = vsel %vm455, %v2937, 0
    %2941 = vmatprep.subr.mxu0 %v433
    %2942 = vmatpush1.msra.mxu0 %v432
    %2943 = vmatprep.subr.mxu0 %v435
    %2944 = vmatpush1.msra.mxu0 %v434
    %2945 = vmatprep.subr.mxu0 %v437
    %2946 = vmatpush1.msra.mxu0 %v436
    %2947 = vmatprep.subr.mxu0 %v439
    %2948 = vmatpush1.msra.mxu0 %v438
    %2949 = vmatprep.subr.mxu0 %v441
    %2950 = vmatpush1.msra.mxu0 %v440
    %2951 = vmatprep.subr.mxu0 %v443
    %2952 = vmatpush1.msra.mxu0 %v442
    %2953 = vmatprep.subr.mxu0 %v445
    %2954 = vmatpush1.msra.mxu0 %v444
    %2955 = vmatprep.subr.mxu0 %v447
    %2956 = vmatpush1.msra.mxu0 %v446
    %2957 = vmatprep.subr.mxu0 0.0
    %2958 = vmatpush1.msra.mxu0 0.0
    %2959 = vmatprep.subr.mxu0 0.0
    %2960 = vmatpush1.msra.mxu0 0.0
    %2961 = vmatprep.subr.mxu0 0.0
    %2962 = vmatpush1.msra.mxu0 0.0
    %2963 = vmatprep.subr.mxu0 0.0
    %2964 = vmatpush1.msra.mxu0 0.0
    %2965 = vmatprep.subr.mxu0 0.0
    %2966 = vmatpush1.msra.mxu0 0.0
    %2967 = vmatprep.subr.mxu0 0.0
    %2968 = vmatpush1.msra.mxu0 0.0
    %2969 = vmatprep.subr.mxu0 0.0
    %2970 = vmatpush1.msra.mxu0 0.0
    %2971 = vmatprep.subr.mxu0 0.0
    %2972 = vmatpush1.msra.mxu0 0.0
    %2973 = vmatprep.subr.mxu0 0.0
    %2974 = vmatpush1.msra.mxu0 0.0
    %2975 = vmatprep.subr.mxu0 0.0
    %2976 = vmatpush1.msra.mxu0 0.0
    %2977 = vmatprep.subr.mxu0 0.0
    %2978 = vmatpush1.msra.mxu0 0.0
    %2979 = vmatprep.subr.mxu0 0.0
    %2980 = vmatpush1.msra.mxu0 0.0
    %2981 = vmatprep.subr.mxu0 0.0
    %2982 = vmatpush1.msra.mxu0 0.0
    %2983 = vmatprep.subr.mxu0 0.0
    %2984 = vmatpush1.msra.mxu0 0.0
    %2985 = vmatprep.subr.mxu0 0.0
    %2986 = vmatpush1.msra.mxu0 0.0
    %2987 = vmatprep.subr.mxu0 0.0
    %2988 = vmatpush1.msra.mxu0 0.0
    %2989 = vmatprep.subr.mxu0 0.0
    %2990 = vmatpush1.msra.mxu0 0.0
    %2991 = vmatprep.subr.mxu0 0.0
    %2992 = vmatpush1.msra.mxu0 0.0
    %2993 = vmatprep.subr.mxu0 0.0
    %2994 = vmatpush1.msra.mxu0 0.0
    %2995 = vmatprep.subr.mxu0 0.0
    %2996 = vmatpush1.msra.mxu0 0.0
    %2997 = vmatprep.subr.mxu0 0.0
    %2998 = vmatpush1.msra.mxu0 0.0
    %2999 = vmatprep.subr.mxu0 0.0
    %3000 = vmatpush1.msra.mxu0 0.0
    %3001 = vmatprep.subr.mxu0 0.0
    %3002 = vmatpush1.msra.mxu0 0.0
    %3003 = vmatprep.subr.mxu0 0.0
    %3004 = vmatpush1.msra.mxu0 0.0
    %3005 = vmatprep.mubr.f32.mxu0 0.0
    %3006 = vmatmul.mubr.f32.gmra.mrb[0].mxu0 %v2939
    %v3007 = vpop.f32.mrb[0].mxu0
    %v3008 = vadd.f32 0.0, %v3007
    %v3009 = vpop.f32.mrb[0].mxu0
    %v3010 = vadd.f32 0.0, %v3009
    %3011 = vdwg.mxu0
    %v3012 = vadd.f32 %v3010, %v453
    %v3013 = vxor.u32 %v3012, 2147483648
    %v3014 = vmul.f32 %v3013, 1.442695
    %v3015 = vpow.pop %v3014
    %v3016 = vadd.f32 %v3015, 1.0
    %v3017 = vrcp.pop %v3016
    %v3018 = vmul.f32 1.0, %v3017
    %v3019 = vtanh.pop %v3012
    %v3020 = vmul.f32 %v3018, %v2894
    %3022 = vrot.lane.b32.xlu0 %v3019, 64
    %v3023 = vpop.permute.xlu0 %3022
    %v3025 = vmul.f32 %v3018, %v3023
    %3027 = vrot.lane.b32.xlu0 %v3025, 32
    %v3028 = vpop.permute.xlu0 %3027
    %v3030 = vadd.f32 %v3020, %v3028
    %v3031 = vtanh.pop %v3030
    %3033 = vrot.lane.b32.xlu0 %v3031, 64
    %v3034 = vpop.permute.xlu0 %3033
    %v3036 = vmul.f32 %v3018, %v3034
    %v3037 = vld [vmem:[#allocation2 + $0x98] sm:$0xff]
    %v3038 = vadd.f32 %v3008, %v3037
    %v3039 = vxor.u32 %v3038, 2147483648
    %v3040 = vmul.f32 %v3039, 1.442695
    %v3041 = vpow.pop %v3040
    %v3042 = vadd.f32 %v3041, 1.0
    %v3043 = vrcp.pop %v3042
    %v3044 = vmul.f32 1.0, %v3043
    %v3045 = vtanh.pop %v3038
    %v3046 = vmul.f32 %v3044, %v2920
    %3048 = vrot.lane.b32.xlu0 %v3045, 64
    %v3049 = vpop.permute.xlu0 %3048
    %v3051 = vmul.f32 %v3044, %v3049
    %3053 = vrot.lane.b32.xlu0 %v3051, 32
    %v3054 = vpop.permute.xlu0 %3053
    %v3056 = vadd.f32 %v3046, %v3054
    %v3057 = vtanh.pop %v3056
    %3059 = vrot.lane.b32.xlu0 %v3057, 64
    %v3060 = vpop.permute.xlu0 %3059
    %v3062 = vmul.f32 %v3044, %v3060
    %3064 = vrot.lane.b32.xlu0 %v3062, 32
    %v3065 = vpop.permute.xlu0 %3064
    %3067 = vst.msk [vmem:[#allocation3] sm:$0xff] %vm486, %v3065
    %3069 = vrot.lane.b32.xlu0 %v3036, 64
    %v3070 = vpop.permute.xlu0 %3069
    %3072 = vst.msk [vmem:[#allocation3] sm:$0xff] %vm623, %v3070
    %v3073 = vld [vmem:[#allocation3] sm:$0xff]
    %v3075 = vsel %vm455, %v3073, 0
    %3077 = vmatprep.subr.mxu0 %v433
    %3078 = vmatpush1.msra.mxu0 %v432
    %3079 = vmatprep.subr.mxu0 %v435
    %3080 = vmatpush1.msra.mxu0 %v434
    %3081 = vmatprep.subr.mxu0 %v437
    %3082 = vmatpush1.msra.mxu0 %v436
    %3083 = vmatprep.subr.mxu0 %v439
    %3084 = vmatpush1.msra.mxu0 %v438
    %3085 = vmatprep.subr.mxu0 %v441
    %3086 = vmatpush1.msra.mxu0 %v440
    %3087 = vmatprep.subr.mxu0 %v443
    %3088 = vmatpush1.msra.mxu0 %v442
    %3089 = vmatprep.subr.mxu0 %v445
    %3090 = vmatpush1.msra.mxu0 %v444
    %3091 = vmatprep.subr.mxu0 %v447
    %3092 = vmatpush1.msra.mxu0 %v446
    %3093 = vmatprep.subr.mxu0 0.0
    %3094 = vmatpush1.msra.mxu0 0.0
    %3095 = vmatprep.subr.mxu0 0.0
    %3096 = vmatpush1.msra.mxu0 0.0
    %3097 = vmatprep.subr.mxu0 0.0
    %3098 = vmatpush1.msra.mxu0 0.0
    %3099 = vmatprep.subr.mxu0 0.0
    %3100 = vmatpush1.msra.mxu0 0.0
    %3101 = vmatprep.subr.mxu0 0.0
    %3102 = vmatpush1.msra.mxu0 0.0
    %3103 = vmatprep.subr.mxu0 0.0
    %3104 = vmatpush1.msra.mxu0 0.0
    %3105 = vmatprep.subr.mxu0 0.0
    %3106 = vmatpush1.msra.mxu0 0.0
    %3107 = vmatprep.subr.mxu0 0.0
    %3108 = vmatpush1.msra.mxu0 0.0
    %3109 = vmatprep.subr.mxu0 0.0
    %3110 = vmatpush1.msra.mxu0 0.0
    %3111 = vmatprep.subr.mxu0 0.0
    %3112 = vmatpush1.msra.mxu0 0.0
    %3113 = vmatprep.subr.mxu0 0.0
    %3114 = vmatpush1.msra.mxu0 0.0
    %3115 = vmatprep.subr.mxu0 0.0
    %3116 = vmatpush1.msra.mxu0 0.0
    %3117 = vmatprep.subr.mxu0 0.0
    %3118 = vmatpush1.msra.mxu0 0.0
    %3119 = vmatprep.subr.mxu0 0.0
    %3120 = vmatpush1.msra.mxu0 0.0
    %3121 = vmatprep.subr.mxu0 0.0
    %3122 = vmatpush1.msra.mxu0 0.0
    %3123 = vmatprep.subr.mxu0 0.0
    %3124 = vmatpush1.msra.mxu0 0.0
    %3125 = vmatprep.subr.mxu0 0.0
    %3126 = vmatpush1.msra.mxu0 0.0
    %3127 = vmatprep.subr.mxu0 0.0
    %3128 = vmatpush1.msra.mxu0 0.0
    %3129 = vmatprep.subr.mxu0 0.0
    %3130 = vmatpush1.msra.mxu0 0.0
    %3131 = vmatprep.subr.mxu0 0.0
    %3132 = vmatpush1.msra.mxu0 0.0
    %3133 = vmatprep.subr.mxu0 0.0
    %3134 = vmatpush1.msra.mxu0 0.0
    %3135 = vmatprep.subr.mxu0 0.0
    %3136 = vmatpush1.msra.mxu0 0.0
    %3137 = vmatprep.subr.mxu0 0.0
    %3138 = vmatpush1.msra.mxu0 0.0
    %3139 = vmatprep.subr.mxu0 0.0
    %3140 = vmatpush1.msra.mxu0 0.0
    %3141 = vmatprep.mubr.f32.mxu0 0.0
    %3142 = vmatmul.mubr.f32.gmra.mrb[0].mxu0 %v3075
    %v3143 = vpop.f32.mrb[0].mxu0
    %v3144 = vadd.f32 0.0, %v3143
    %v3145 = vpop.f32.mrb[0].mxu0
    %v3146 = vadd.f32 0.0, %v3145
    %3147 = vdwg.mxu0
    %v3148 = vadd.f32 %v3146, %v453
    %v3149 = vxor.u32 %v3148, 2147483648
    %v3150 = vmul.f32 %v3149, 1.442695
    %v3151 = vpow.pop %v3150
    %v3152 = vadd.f32 %v3151, 1.0
    %v3153 = vrcp.pop %v3152
    %v3154 = vmul.f32 1.0, %v3153
    %v3155 = vtanh.pop %v3148
    %v3156 = vmul.f32 %v3154, %v3030
    %3158 = vrot.lane.b32.xlu0 %v3155, 64
    %v3159 = vpop.permute.xlu0 %3158
    %v3161 = vmul.f32 %v3154, %v3159
    %3163 = vrot.lane.b32.xlu0 %v3161, 32
    %v3164 = vpop.permute.xlu0 %3163
    %v3166 = vadd.f32 %v3156, %v3164
    %v3167 = vtanh.pop %v3166
    %3169 = vrot.lane.b32.xlu0 %v3167, 64
    %v3170 = vpop.permute.xlu0 %3169
    %v3172 = vmul.f32 %v3154, %v3170
    %v3173 = vld [vmem:[#allocation2 + $0xa0] sm:$0xff]
    %v3174 = vadd.f32 %v3144, %v3173
    %v3175 = vxor.u32 %v3174, 2147483648
    %v3176 = vmul.f32 %v3175, 1.442695
    %v3177 = vpow.pop %v3176
    %v3178 = vadd.f32 %v3177, 1.0
    %v3179 = vrcp.pop %v3178
    %v3180 = vmul.f32 1.0, %v3179
    %v3181 = vtanh.pop %v3174
    %v3182 = vmul.f32 %v3180, %v3056
    %3184 = vrot.lane.b32.xlu0 %v3181, 64
    %v3185 = vpop.permute.xlu0 %3184
    %v3187 = vmul.f32 %v3180, %v3185
    %3189 = vrot.lane.b32.xlu0 %v3187, 32
    %v3190 = vpop.permute.xlu0 %3189
    %v3192 = vadd.f32 %v3182, %v3190
    %v3193 = vtanh.pop %v3192
    %3195 = vrot.lane.b32.xlu0 %v3193, 64
    %v3196 = vpop.permute.xlu0 %3195
    %v3198 = vmul.f32 %v3180, %v3196
    %3200 = vrot.lane.b32.xlu0 %v3198, 32
    %v3201 = vpop.permute.xlu0 %3200
    %3203 = vst.msk [vmem:[#allocation3] sm:$0xff] %vm486, %v3201
    %3205 = vrot.lane.b32.xlu0 %v3172, 64
    %v3206 = vpop.permute.xlu0 %3205
    %3208 = vst.msk [vmem:[#allocation3] sm:$0xff] %vm623, %v3206
    %v3209 = vld [vmem:[#allocation3] sm:$0xff]
    %v3211 = vsel %vm455, %v3209, 0
    %3213 = vmatprep.subr.mxu0 %v433
    %3214 = vmatpush1.msra.mxu0 %v432
    %3215 = vmatprep.subr.mxu0 %v435
    %3216 = vmatpush1.msra.mxu0 %v434
    %3217 = vmatprep.subr.mxu0 %v437
    %3218 = vmatpush1.msra.mxu0 %v436
    %3219 = vmatprep.subr.mxu0 %v439
    %3220 = vmatpush1.msra.mxu0 %v438
    %3221 = vmatprep.subr.mxu0 %v441
    %3222 = vmatpush1.msra.mxu0 %v440
    %3223 = vmatprep.subr.mxu0 %v443
    %3224 = vmatpush1.msra.mxu0 %v442
    %3225 = vmatprep.subr.mxu0 %v445
    %3226 = vmatpush1.msra.mxu0 %v444
    %3227 = vmatprep.subr.mxu0 %v447
    %3228 = vmatpush1.msra.mxu0 %v446
    %3229 = vmatprep.subr.mxu0 0.0
    %3230 = vmatpush1.msra.mxu0 0.0
    %3231 = vmatprep.subr.mxu0 0.0
    %3232 = vmatpush1.msra.mxu0 0.0
    %3233 = vmatprep.subr.mxu0 0.0
    %3234 = vmatpush1.msra.mxu0 0.0
    %3235 = vmatprep.subr.mxu0 0.0
    %3236 = vmatpush1.msra.mxu0 0.0
    %3237 = vmatprep.subr.mxu0 0.0
    %3238 = vmatpush1.msra.mxu0 0.0
    %3239 = vmatprep.subr.mxu0 0.0
    %3240 = vmatpush1.msra.mxu0 0.0
    %3241 = vmatprep.subr.mxu0 0.0
    %3242 = vmatpush1.msra.mxu0 0.0
    %3243 = vmatprep.subr.mxu0 0.0
    %3244 = vmatpush1.msra.mxu0 0.0
    %3245 = vmatprep.subr.mxu0 0.0
    %3246 = vmatpush1.msra.mxu0 0.0
    %3247 = vmatprep.subr.mxu0 0.0
    %3248 = vmatpush1.msra.mxu0 0.0
    %3249 = vmatprep.subr.mxu0 0.0
    %3250 = vmatpush1.msra.mxu0 0.0
    %3251 = vmatprep.subr.mxu0 0.0
    %3252 = vmatpush1.msra.mxu0 0.0
    %3253 = vmatprep.subr.mxu0 0.0
    %3254 = vmatpush1.msra.mxu0 0.0
    %3255 = vmatprep.subr.mxu0 0.0
    %3256 = vmatpush1.msra.mxu0 0.0
    %3257 = vmatprep.subr.mxu0 0.0
    %3258 = vmatpush1.msra.mxu0 0.0
    %3259 = vmatprep.subr.mxu0 0.0
    %3260 = vmatpush1.msra.mxu0 0.0
    %3261 = vmatprep.subr.mxu0 0.0
    %3262 = vmatpush1.msra.mxu0 0.0
    %3263 = vmatprep.subr.mxu0 0.0
    %3264 = vmatpush1.msra.mxu0 0.0
    %3265 = vmatprep.subr.mxu0 0.0
    %3266 = vmatpush1.msra.mxu0 0.0
    %3267 = vmatprep.subr.mxu0 0.0
    %3268 = vmatpush1.msra.mxu0 0.0
    %3269 = vmatprep.subr.mxu0 0.0
    %3270 = vmatpush1.msra.mxu0 0.0
    %3271 = vmatprep.subr.mxu0 0.0
    %3272 = vmatpush1.msra.mxu0 0.0
    %3273 = vmatprep.subr.mxu0 0.0
    %3274 = vmatpush1.msra.mxu0 0.0
    %3275 = vmatprep.subr.mxu0 0.0
    %3276 = vmatpush1.msra.mxu0 0.0
    %3277 = vmatprep.mubr.f32.mxu0 0.0
    %3278 = vmatmul.mubr.f32.gmra.mrb[0].mxu0 %v3211
    %v3279 = vpop.f32.mrb[0].mxu0
    %v3280 = vadd.f32 0.0, %v3279
    %v3281 = vpop.f32.mrb[0].mxu0
    %v3282 = vadd.f32 0.0, %v3281
    %3283 = vdwg.mxu0
    %v3284 = vadd.f32 %v3282, %v453
    %v3285 = vxor.u32 %v3284, 2147483648
    %v3286 = vmul.f32 %v3285, 1.442695
    %v3287 = vpow.pop %v3286
    %v3288 = vadd.f32 %v3287, 1.0
    %v3289 = vrcp.pop %v3288
    %v3290 = vmul.f32 1.0, %v3289
    %v3291 = vtanh.pop %v3284
    %v3292 = vmul.f32 %v3290, %v3166
    %3294 = vrot.lane.b32.xlu0 %v3291, 64
    %v3295 = vpop.permute.xlu0 %3294
    %v3297 = vmul.f32 %v3290, %v3295
    %3299 = vrot.lane.b32.xlu0 %v3297, 32
    %v3300 = vpop.permute.xlu0 %3299
    %v3302 = vadd.f32 %v3292, %v3300
    %v3303 = vtanh.pop %v3302
    %3305 = vrot.lane.b32.xlu0 %v3303, 64
    %v3306 = vpop.permute.xlu0 %3305
    %v3308 = vmul.f32 %v3290, %v3306
    %v3309 = vld [vmem:[#allocation2 + $0xa8] sm:$0xff]
    %v3310 = vadd.f32 %v3280, %v3309
    %v3311 = vxor.u32 %v3310, 2147483648
    %v3312 = vmul.f32 %v3311, 1.442695
    %v3313 = vpow.pop %v3312
    %v3314 = vadd.f32 %v3313, 1.0
    %v3315 = vrcp.pop %v3314
    %v3316 = vmul.f32 1.0, %v3315
    %v3317 = vtanh.pop %v3310
    %v3318 = vmul.f32 %v3316, %v3192
    %3320 = vrot.lane.b32.xlu0 %v3317, 64
    %v3321 = vpop.permute.xlu0 %3320
    %v3323 = vmul.f32 %v3316, %v3321
    %3325 = vrot.lane.b32.xlu0 %v3323, 32
    %v3326 = vpop.permute.xlu0 %3325
    %v3328 = vadd.f32 %v3318, %v3326
    %v3329 = vtanh.pop %v3328
    %3331 = vrot.lane.b32.xlu0 %v3329, 64
    %v3332 = vpop.permute.xlu0 %3331
    %v3334 = vmul.f32 %v3316, %v3332
    %3336 = vrot.lane.b32.xlu0 %v3334, 32
    %v3337 = vpop.permute.xlu0 %3336
    %3339 = vst.msk [vmem:[#allocation3] sm:$0xff] %vm486, %v3337
    %3341 = vrot.lane.b32.xlu0 %v3308, 64
    %v3342 = vpop.permute.xlu0 %3341
    %3344 = vst.msk [vmem:[#allocation3] sm:$0xff] %vm623, %v3342
    %v3345 = vld [vmem:[#allocation3] sm:$0xff]
    %v3347 = vsel %vm455, %v3345, 0
    %3349 = vmatprep.subr.mxu0 %v433
    %3350 = vmatpush1.msra.mxu0 %v432
    %3351 = vmatprep.subr.mxu0 %v435
    %3352 = vmatpush1.msra.mxu0 %v434
    %3353 = vmatprep.subr.mxu0 %v437
    %3354 = vmatpush1.msra.mxu0 %v436
    %3355 = vmatprep.subr.mxu0 %v439
    %3356 = vmatpush1.msra.mxu0 %v438
    %3357 = vmatprep.subr.mxu0 %v441
    %3358 = vmatpush1.msra.mxu0 %v440
    %3359 = vmatprep.subr.mxu0 %v443
    %3360 = vmatpush1.msra.mxu0 %v442
    %3361 = vmatprep.subr.mxu0 %v445
    %3362 = vmatpush1.msra.mxu0 %v444
    %3363 = vmatprep.subr.mxu0 %v447
    %3364 = vmatpush1.msra.mxu0 %v446
    %3365 = vmatprep.subr.mxu0 0.0
    %3366 = vmatpush1.msra.mxu0 0.0
    %3367 = vmatprep.subr.mxu0 0.0
    %3368 = vmatpush1.msra.mxu0 0.0
    %3369 = vmatprep.subr.mxu0 0.0
    %3370 = vmatpush1.msra.mxu0 0.0
    %3371 = vmatprep.subr.mxu0 0.0
    %3372 = vmatpush1.msra.mxu0 0.0
    %3373 = vmatprep.subr.mxu0 0.0
    %3374 = vmatpush1.msra.mxu0 0.0
    %3375 = vmatprep.subr.mxu0 0.0
    %3376 = vmatpush1.msra.mxu0 0.0
    %3377 = vmatprep.subr.mxu0 0.0
    %3378 = vmatpush1.msra.mxu0 0.0
    %3379 = vmatprep.subr.mxu0 0.0
    %3380 = vmatpush1.msra.mxu0 0.0
    %3381 = vmatprep.subr.mxu0 0.0
    %3382 = vmatpush1.msra.mxu0 0.0
    %3383 = vmatprep.subr.mxu0 0.0
    %3384 = vmatpush1.msra.mxu0 0.0
    %3385 = vmatprep.subr.mxu0 0.0
    %3386 = vmatpush1.msra.mxu0 0.0
    %3387 = vmatprep.subr.mxu0 0.0
    %3388 = vmatpush1.msra.mxu0 0.0
    %3389 = vmatprep.subr.mxu0 0.0
    %3390 = vmatpush1.msra.mxu0 0.0
    %3391 = vmatprep.subr.mxu0 0.0
    %3392 = vmatpush1.msra.mxu0 0.0
    %3393 = vmatprep.subr.mxu0 0.0
    %3394 = vmatpush1.msra.mxu0 0.0
    %3395 = vmatprep.subr.mxu0 0.0
    %3396 = vmatpush1.msra.mxu0 0.0
    %3397 = vmatprep.subr.mxu0 0.0
    %3398 = vmatpush1.msra.mxu0 0.0
    %3399 = vmatprep.subr.mxu0 0.0
    %3400 = vmatpush1.msra.mxu0 0.0
    %3401 = vmatprep.subr.mxu0 0.0
    %3402 = vmatpush1.msra.mxu0 0.0
    %3403 = vmatprep.subr.mxu0 0.0
    %3404 = vmatpush1.msra.mxu0 0.0
    %3405 = vmatprep.subr.mxu0 0.0
    %3406 = vmatpush1.msra.mxu0 0.0
    %3407 = vmatprep.subr.mxu0 0.0
    %3408 = vmatpush1.msra.mxu0 0.0
    %3409 = vmatprep.subr.mxu0 0.0
    %3410 = vmatpush1.msra.mxu0 0.0
    %3411 = vmatprep.subr.mxu0 0.0
    %3412 = vmatpush1.msra.mxu0 0.0
    %3413 = vmatprep.mubr.f32.mxu0 0.0
    %3414 = vmatmul.mubr.f32.gmra.mrb[0].mxu0 %v3347
    %v3415 = vpop.f32.mrb[0].mxu0
    %v3416 = vadd.f32 0.0, %v3415
    %v3417 = vpop.f32.mrb[0].mxu0
    %v3418 = vadd.f32 0.0, %v3417
    %3419 = vdwg.mxu0
    %v3420 = vadd.f32 %v3418, %v453
    %v3421 = vxor.u32 %v3420, 2147483648
    %v3422 = vmul.f32 %v3421, 1.442695
    %v3423 = vpow.pop %v3422
    %v3424 = vadd.f32 %v3423, 1.0
    %v3425 = vrcp.pop %v3424
    %v3426 = vmul.f32 1.0, %v3425
    %v3427 = vtanh.pop %v3420
    %v3428 = vmul.f32 %v3426, %v3302
    %3430 = vrot.lane.b32.xlu0 %v3427, 64
    %v3431 = vpop.permute.xlu0 %3430
    %v3433 = vmul.f32 %v3426, %v3431
    %3435 = vrot.lane.b32.xlu0 %v3433, 32
    %v3436 = vpop.permute.xlu0 %3435
    %v3438 = vadd.f32 %v3428, %v3436
    %v3439 = vtanh.pop %v3438
    %3441 = vrot.lane.b32.xlu0 %v3439, 64
    %v3442 = vpop.permute.xlu0 %3441
    %v3444 = vmul.f32 %v3426, %v3442
    %v3445 = vld [vmem:[#allocation2 + $0xb0] sm:$0xff]
    %v3446 = vadd.f32 %v3416, %v3445
    %v3447 = vxor.u32 %v3446, 2147483648
    %v3448 = vmul.f32 %v3447, 1.442695
    %v3449 = vpow.pop %v3448
    %v3450 = vadd.f32 %v3449, 1.0
    %v3451 = vrcp.pop %v3450
    %v3452 = vmul.f32 1.0, %v3451
    %v3453 = vtanh.pop %v3446
    %v3454 = vmul.f32 %v3452, %v3328
    %3456 = vrot.lane.b32.xlu0 %v3453, 64
    %v3457 = vpop.permute.xlu0 %3456
    %v3459 = vmul.f32 %v3452, %v3457
    %3461 = vrot.lane.b32.xlu0 %v3459, 32
    %v3462 = vpop.permute.xlu0 %3461
    %v3464 = vadd.f32 %v3454, %v3462
    %v3465 = vtanh.pop %v3464
    %3467 = vrot.lane.b32.xlu0 %v3465, 64
    %v3468 = vpop.permute.xlu0 %3467
    %v3470 = vmul.f32 %v3452, %v3468
    %3472 = vrot.lane.b32.xlu0 %v3470, 32
    %v3473 = vpop.permute.xlu0 %3472
    %3475 = vst.msk [vmem:[#allocation3] sm:$0xff] %vm486, %v3473
    %3477 = vrot.lane.b32.xlu0 %v3444, 64
    %v3478 = vpop.permute.xlu0 %3477
    %3480 = vst.msk [vmem:[#allocation3] sm:$0xff] %vm623, %v3478
    %v3481 = vld [vmem:[#allocation3] sm:$0xff]
    %v3483 = vsel %vm455, %v3481, 0
    %3485 = vmatprep.subr.mxu0 %v433
    %3486 = vmatpush1.msra.mxu0 %v432
    %3487 = vmatprep.subr.mxu0 %v435
    %3488 = vmatpush1.msra.mxu0 %v434
    %3489 = vmatprep.subr.mxu0 %v437
    %3490 = vmatpush1.msra.mxu0 %v436
    %3491 = vmatprep.subr.mxu0 %v439
    %3492 = vmatpush1.msra.mxu0 %v438
    %3493 = vmatprep.subr.mxu0 %v441
    %3494 = vmatpush1.msra.mxu0 %v440
    %3495 = vmatprep.subr.mxu0 %v443
    %3496 = vmatpush1.msra.mxu0 %v442
    %3497 = vmatprep.subr.mxu0 %v445
    %3498 = vmatpush1.msra.mxu0 %v444
    %3499 = vmatprep.subr.mxu0 %v447
    %3500 = vmatpush1.msra.mxu0 %v446
    %3501 = vmatprep.subr.mxu0 0.0
    %3502 = vmatpush1.msra.mxu0 0.0
    %3503 = vmatprep.subr.mxu0 0.0
    %3504 = vmatpush1.msra.mxu0 0.0
    %3505 = vmatprep.subr.mxu0 0.0
    %3506 = vmatpush1.msra.mxu0 0.0
    %3507 = vmatprep.subr.mxu0 0.0
    %3508 = vmatpush1.msra.mxu0 0.0
    %3509 = vmatprep.subr.mxu0 0.0
    %3510 = vmatpush1.msra.mxu0 0.0
    %3511 = vmatprep.subr.mxu0 0.0
    %3512 = vmatpush1.msra.mxu0 0.0
    %3513 = vmatprep.subr.mxu0 0.0
    %3514 = vmatpush1.msra.mxu0 0.0
    %3515 = vmatprep.subr.mxu0 0.0
    %3516 = vmatpush1.msra.mxu0 0.0
    %3517 = vmatprep.subr.mxu0 0.0
    %3518 = vmatpush1.msra.mxu0 0.0
    %3519 = vmatprep.subr.mxu0 0.0
    %3520 = vmatpush1.msra.mxu0 0.0
    %3521 = vmatprep.subr.mxu0 0.0
    %3522 = vmatpush1.msra.mxu0 0.0
    %3523 = vmatprep.subr.mxu0 0.0
    %3524 = vmatpush1.msra.mxu0 0.0
    %3525 = vmatprep.subr.mxu0 0.0
    %3526 = vmatpush1.msra.mxu0 0.0
    %3527 = vmatprep.subr.mxu0 0.0
    %3528 = vmatpush1.msra.mxu0 0.0
    %3529 = vmatprep.subr.mxu0 0.0
    %3530 = vmatpush1.msra.mxu0 0.0
    %3531 = vmatprep.subr.mxu0 0.0
    %3532 = vmatpush1.msra.mxu0 0.0
    %3533 = vmatprep.subr.mxu0 0.0
    %3534 = vmatpush1.msra.mxu0 0.0
    %3535 = vmatprep.subr.mxu0 0.0
    %3536 = vmatpush1.msra.mxu0 0.0
    %3537 = vmatprep.subr.mxu0 0.0
    %3538 = vmatpush1.msra.mxu0 0.0
    %3539 = vmatprep.subr.mxu0 0.0
    %3540 = vmatpush1.msra.mxu0 0.0
    %3541 = vmatprep.subr.mxu0 0.0
    %3542 = vmatpush1.msra.mxu0 0.0
    %3543 = vmatprep.subr.mxu0 0.0
    %3544 = vmatpush1.msra.mxu0 0.0
    %3545 = vmatprep.subr.mxu0 0.0
    %3546 = vmatpush1.msra.mxu0 0.0
    %3547 = vmatprep.subr.mxu0 0.0
    %3548 = vmatpush1.msra.mxu0 0.0
    %3549 = vmatprep.mubr.f32.mxu0 0.0
    %3550 = vmatmul.mubr.f32.gmra.mrb[0].mxu0 %v3483
    %v3551 = vpop.f32.mrb[0].mxu0
    %v3552 = vadd.f32 0.0, %v3551
    %v3553 = vpop.f32.mrb[0].mxu0
    %v3554 = vadd.f32 0.0, %v3553
    %3555 = vdwg.mxu0
    %v3556 = vadd.f32 %v3554, %v453
    %v3557 = vxor.u32 %v3556, 2147483648
    %v3558 = vmul.f32 %v3557, 1.442695
    %v3559 = vpow.pop %v3558
    %v3560 = vadd.f32 %v3559, 1.0
    %v3561 = vrcp.pop %v3560
    %v3562 = vmul.f32 1.0, %v3561
    %v3563 = vtanh.pop %v3556
    %v3564 = vmul.f32 %v3562, %v3438
    %3566 = vrot.lane.b32.xlu0 %v3563, 64
    %v3567 = vpop.permute.xlu0 %3566
    %v3569 = vmul.f32 %v3562, %v3567
    %3571 = vrot.lane.b32.xlu0 %v3569, 32
    %v3572 = vpop.permute.xlu0 %3571
    %v3574 = vadd.f32 %v3564, %v3572
    %v3575 = vtanh.pop %v3574
    %3577 = vrot.lane.b32.xlu0 %v3575, 64
    %v3578 = vpop.permute.xlu0 %3577
    %v3580 = vmul.f32 %v3562, %v3578
    %v3581 = vld [vmem:[#allocation2 + $0xb8] sm:$0xff]
    %v3582 = vadd.f32 %v3552, %v3581
    %v3583 = vxor.u32 %v3582, 2147483648
    %v3584 = vmul.f32 %v3583, 1.442695
    %v3585 = vpow.pop %v3584
    %v3586 = vadd.f32 %v3585, 1.0
    %v3587 = vrcp.pop %v3586
    %v3588 = vmul.f32 1.0, %v3587
    %v3589 = vtanh.pop %v3582
    %v3590 = vmul.f32 %v3588, %v3464
    %3592 = vrot.lane.b32.xlu0 %v3589, 64
    %v3593 = vpop.permute.xlu0 %3592
    %v3595 = vmul.f32 %v3588, %v3593
    %3597 = vrot.lane.b32.xlu0 %v3595, 32
    %v3598 = vpop.permute.xlu0 %3597
    %v3600 = vadd.f32 %v3590, %v3598
    %v3601 = vtanh.pop %v3600
    %3603 = vrot.lane.b32.xlu0 %v3601, 64
    %v3604 = vpop.permute.xlu0 %3603
    %v3606 = vmul.f32 %v3588, %v3604
    %3608 = vrot.lane.b32.xlu0 %v3606, 32
    %v3609 = vpop.permute.xlu0 %3608
    %3611 = vst.msk [vmem:[#allocation3] sm:$0xff] %vm486, %v3609
    %3613 = vrot.lane.b32.xlu0 %v3580, 64
    %v3614 = vpop.permute.xlu0 %3613
    %3616 = vst.msk [vmem:[#allocation3] sm:$0xff] %vm623, %v3614
    %v3617 = vld [vmem:[#allocation3] sm:$0xff]
    %v3619 = vsel %vm455, %v3617, 0
    %3621 = vmatprep.subr.mxu0 %v433
    %3622 = vmatpush1.msra.mxu0 %v432
    %3623 = vmatprep.subr.mxu0 %v435
    %3624 = vmatpush1.msra.mxu0 %v434
    %3625 = vmatprep.subr.mxu0 %v437
    %3626 = vmatpush1.msra.mxu0 %v436
    %3627 = vmatprep.subr.mxu0 %v439
    %3628 = vmatpush1.msra.mxu0 %v438
    %3629 = vmatprep.subr.mxu0 %v441
    %3630 = vmatpush1.msra.mxu0 %v440
    %3631 = vmatprep.subr.mxu0 %v443
    %3632 = vmatpush1.msra.mxu0 %v442
    %3633 = vmatprep.subr.mxu0 %v445
    %3634 = vmatpush1.msra.mxu0 %v444
    %3635 = vmatprep.subr.mxu0 %v447
    %3636 = vmatpush1.msra.mxu0 %v446
    %3637 = vmatprep.subr.mxu0 0.0
    %3638 = vmatpush1.msra.mxu0 0.0
    %3639 = vmatprep.subr.mxu0 0.0
    %3640 = vmatpush1.msra.mxu0 0.0
    %3641 = vmatprep.subr.mxu0 0.0
    %3642 = vmatpush1.msra.mxu0 0.0
    %3643 = vmatprep.subr.mxu0 0.0
    %3644 = vmatpush1.msra.mxu0 0.0
    %3645 = vmatprep.subr.mxu0 0.0
    %3646 = vmatpush1.msra.mxu0 0.0
    %3647 = vmatprep.subr.mxu0 0.0
    %3648 = vmatpush1.msra.mxu0 0.0
    %3649 = vmatprep.subr.mxu0 0.0
    %3650 = vmatpush1.msra.mxu0 0.0
    %3651 = vmatprep.subr.mxu0 0.0
    %3652 = vmatpush1.msra.mxu0 0.0
    %3653 = vmatprep.subr.mxu0 0.0
    %3654 = vmatpush1.msra.mxu0 0.0
    %3655 = vmatprep.subr.mxu0 0.0
    %3656 = vmatpush1.msra.mxu0 0.0
    %3657 = vmatprep.subr.mxu0 0.0
    %3658 = vmatpush1.msra.mxu0 0.0
    %3659 = vmatprep.subr.mxu0 0.0
    %3660 = vmatpush1.msra.mxu0 0.0
    %3661 = vmatprep.subr.mxu0 0.0
    %3662 = vmatpush1.msra.mxu0 0.0
    %3663 = vmatprep.subr.mxu0 0.0
    %3664 = vmatpush1.msra.mxu0 0.0
    %3665 = vmatprep.subr.mxu0 0.0
    %3666 = vmatpush1.msra.mxu0 0.0
    %3667 = vmatprep.subr.mxu0 0.0
    %3668 = vmatpush1.msra.mxu0 0.0
    %3669 = vmatprep.subr.mxu0 0.0
    %3670 = vmatpush1.msra.mxu0 0.0
    %3671 = vmatprep.subr.mxu0 0.0
    %3672 = vmatpush1.msra.mxu0 0.0
    %3673 = vmatprep.subr.mxu0 0.0
    %3674 = vmatpush1.msra.mxu0 0.0
    %3675 = vmatprep.subr.mxu0 0.0
    %3676 = vmatpush1.msra.mxu0 0.0
    %3677 = vmatprep.subr.mxu0 0.0
    %3678 = vmatpush1.msra.mxu0 0.0
    %3679 = vmatprep.subr.mxu0 0.0
    %3680 = vmatpush1.msra.mxu0 0.0
    %3681 = vmatprep.subr.mxu0 0.0
    %3682 = vmatpush1.msra.mxu0 0.0
    %3683 = vmatprep.subr.mxu0 0.0
    %3684 = vmatpush1.msra.mxu0 0.0
    %3685 = vmatprep.mubr.f32.mxu0 0.0
    %3686 = vmatmul.mubr.f32.gmra.mrb[0].mxu0 %v3619
    %v3687 = vpop.f32.mrb[0].mxu0
    %v3688 = vadd.f32 0.0, %v3687
    %v3689 = vpop.f32.mrb[0].mxu0
    %v3690 = vadd.f32 0.0, %v3689
    %3691 = vdwg.mxu0
    %v3692 = vadd.f32 %v3690, %v453
    %v3693 = vxor.u32 %v3692, 2147483648
    %v3694 = vmul.f32 %v3693, 1.442695
    %v3695 = vpow.pop %v3694
    %v3696 = vadd.f32 %v3695, 1.0
    %v3697 = vrcp.pop %v3696
    %v3698 = vmul.f32 1.0, %v3697
    %v3699 = vtanh.pop %v3692
    %v3700 = vmul.f32 %v3698, %v3574
    %3702 = vrot.lane.b32.xlu0 %v3699, 64
    %v3703 = vpop.permute.xlu0 %3702
    %v3705 = vmul.f32 %v3698, %v3703
    %3707 = vrot.lane.b32.xlu0 %v3705, 32
    %v3708 = vpop.permute.xlu0 %3707
    %v3710 = vadd.f32 %v3700, %v3708
    %v3711 = vtanh.pop %v3710
    %3713 = vrot.lane.b32.xlu0 %v3711, 64
    %v3714 = vpop.permute.xlu0 %3713
    %v3716 = vmul.f32 %v3698, %v3714
    %v3717 = vld [vmem:[#allocation2 + $0xc0] sm:$0xff]
    %v3718 = vadd.f32 %v3688, %v3717
    %v3719 = vxor.u32 %v3718, 2147483648
    %v3720 = vmul.f32 %v3719, 1.442695
    %v3721 = vpow.pop %v3720
    %v3722 = vadd.f32 %v3721, 1.0
    %v3723 = vrcp.pop %v3722
    %v3724 = vmul.f32 1.0, %v3723
    %v3725 = vtanh.pop %v3718
    %v3726 = vmul.f32 %v3724, %v3600
    %3728 = vrot.lane.b32.xlu0 %v3725, 64
    %v3729 = vpop.permute.xlu0 %3728
    %v3731 = vmul.f32 %v3724, %v3729
    %3733 = vrot.lane.b32.xlu0 %v3731, 32
    %v3734 = vpop.permute.xlu0 %3733
    %v3736 = vadd.f32 %v3726, %v3734
    %v3737 = vtanh.pop %v3736
    %3739 = vrot.lane.b32.xlu0 %v3737, 64
    %v3740 = vpop.permute.xlu0 %3739
    %v3742 = vmul.f32 %v3724, %v3740
    %3744 = vrot.lane.b32.xlu0 %v3742, 32
    %v3745 = vpop.permute.xlu0 %3744
    %3747 = vst.msk [vmem:[#allocation3] sm:$0xff] %vm486, %v3745
    %3749 = vrot.lane.b32.xlu0 %v3716, 64
    %v3750 = vpop.permute.xlu0 %3749
    %3752 = vst.msk [vmem:[#allocation3] sm:$0xff] %vm623, %v3750
    %v3753 = vld [vmem:[#allocation3] sm:$0xff]
    %v3755 = vsel %vm455, %v3753, 0
    %3757 = vmatprep.subr.mxu0 %v433
    %3758 = vmatpush1.msra.mxu0 %v432
    %3759 = vmatprep.subr.mxu0 %v435
    %3760 = vmatpush1.msra.mxu0 %v434
    %3761 = vmatprep.subr.mxu0 %v437
    %3762 = vmatpush1.msra.mxu0 %v436
    %3763 = vmatprep.subr.mxu0 %v439
    %3764 = vmatpush1.msra.mxu0 %v438
    %3765 = vmatprep.subr.mxu0 %v441
    %3766 = vmatpush1.msra.mxu0 %v440
    %3767 = vmatprep.subr.mxu0 %v443
    %3768 = vmatpush1.msra.mxu0 %v442
    %3769 = vmatprep.subr.mxu0 %v445
    %3770 = vmatpush1.msra.mxu0 %v444
    %3771 = vmatprep.subr.mxu0 %v447
    %3772 = vmatpush1.msra.mxu0 %v446
    %3773 = vmatprep.subr.mxu0 0.0
    %3774 = vmatpush1.msra.mxu0 0.0
    %3775 = vmatprep.subr.mxu0 0.0
    %3776 = vmatpush1.msra.mxu0 0.0
    %3777 = vmatprep.subr.mxu0 0.0
    %3778 = vmatpush1.msra.mxu0 0.0
    %3779 = vmatprep.subr.mxu0 0.0
    %3780 = vmatpush1.msra.mxu0 0.0
    %3781 = vmatprep.subr.mxu0 0.0
    %3782 = vmatpush1.msra.mxu0 0.0
    %3783 = vmatprep.subr.mxu0 0.0
    %3784 = vmatpush1.msra.mxu0 0.0
    %3785 = vmatprep.subr.mxu0 0.0
    %3786 = vmatpush1.msra.mxu0 0.0
    %3787 = vmatprep.subr.mxu0 0.0
    %3788 = vmatpush1.msra.mxu0 0.0
    %3789 = vmatprep.subr.mxu0 0.0
    %3790 = vmatpush1.msra.mxu0 0.0
    %3791 = vmatprep.subr.mxu0 0.0
    %3792 = vmatpush1.msra.mxu0 0.0
    %3793 = vmatprep.subr.mxu0 0.0
    %3794 = vmatpush1.msra.mxu0 0.0
    %3795 = vmatprep.subr.mxu0 0.0
    %3796 = vmatpush1.msra.mxu0 0.0
    %3797 = vmatprep.subr.mxu0 0.0
    %3798 = vmatpush1.msra.mxu0 0.0
    %3799 = vmatprep.subr.mxu0 0.0
    %3800 = vmatpush1.msra.mxu0 0.0
    %3801 = vmatprep.subr.mxu0 0.0
    %3802 = vmatpush1.msra.mxu0 0.0
    %3803 = vmatprep.subr.mxu0 0.0
    %3804 = vmatpush1.msra.mxu0 0.0
    %3805 = vmatprep.subr.mxu0 0.0
    %3806 = vmatpush1.msra.mxu0 0.0
    %3807 = vmatprep.subr.mxu0 0.0
    %3808 = vmatpush1.msra.mxu0 0.0
    %3809 = vmatprep.subr.mxu0 0.0
    %3810 = vmatpush1.msra.mxu0 0.0
    %3811 = vmatprep.subr.mxu0 0.0
    %3812 = vmatpush1.msra.mxu0 0.0
    %3813 = vmatprep.subr.mxu0 0.0
    %3814 = vmatpush1.msra.mxu0 0.0
    %3815 = vmatprep.subr.mxu0 0.0
    %3816 = vmatpush1.msra.mxu0 0.0
    %3817 = vmatprep.subr.mxu0 0.0
    %3818 = vmatpush1.msra.mxu0 0.0
    %3819 = vmatprep.subr.mxu0 0.0
    %3820 = vmatpush1.msra.mxu0 0.0
    %3821 = vmatprep.mubr.f32.mxu0 0.0
    %3822 = vmatmul.mubr.f32.gmra.mrb[0].mxu0 %v3755
    %v3823 = vpop.f32.mrb[0].mxu0
    %v3824 = vadd.f32 0.0, %v3823
    %v3825 = vpop.f32.mrb[0].mxu0
    %v3826 = vadd.f32 0.0, %v3825
    %3827 = vdwg.mxu0
    %v3828 = vadd.f32 %v3826, %v453
    %v3829 = vxor.u32 %v3828, 2147483648
    %v3830 = vmul.f32 %v3829, 1.442695
    %v3831 = vpow.pop %v3830
    %v3832 = vadd.f32 %v3831, 1.0
    %v3833 = vrcp.pop %v3832
    %v3834 = vmul.f32 1.0, %v3833
    %v3835 = vtanh.pop %v3828
    %v3836 = vmul.f32 %v3834, %v3710
    %3838 = vrot.lane.b32.xlu0 %v3835, 64
    %v3839 = vpop.permute.xlu0 %3838
    %v3841 = vmul.f32 %v3834, %v3839
    %3843 = vrot.lane.b32.xlu0 %v3841, 32
    %v3844 = vpop.permute.xlu0 %3843
    %v3846 = vadd.f32 %v3836, %v3844
    %v3847 = vtanh.pop %v3846
    %3849 = vrot.lane.b32.xlu0 %v3847, 64
    %v3850 = vpop.permute.xlu0 %3849
    %v3852 = vmul.f32 %v3834, %v3850
    %v3853 = vld [vmem:[#allocation2 + $0xc8] sm:$0xff]
    %v3854 = vadd.f32 %v3824, %v3853
    %v3855 = vxor.u32 %v3854, 2147483648
    %v3856 = vmul.f32 %v3855, 1.442695
    %v3857 = vpow.pop %v3856
    %v3858 = vadd.f32 %v3857, 1.0
    %v3859 = vrcp.pop %v3858
    %v3860 = vmul.f32 1.0, %v3859
    %v3861 = vtanh.pop %v3854
    %v3862 = vmul.f32 %v3860, %v3736
    %3864 = vrot.lane.b32.xlu0 %v3861, 64
    %v3865 = vpop.permute.xlu0 %3864
    %v3867 = vmul.f32 %v3860, %v3865
    %3869 = vrot.lane.b32.xlu0 %v3867, 32
    %v3870 = vpop.permute.xlu0 %3869
    %v3872 = vadd.f32 %v3862, %v3870
    %v3873 = vtanh.pop %v3872
    %3875 = vrot.lane.b32.xlu0 %v3873, 64
    %v3876 = vpop.permute.xlu0 %3875
    %v3878 = vmul.f32 %v3860, %v3876
    %3880 = vrot.lane.b32.xlu0 %v3878, 32
    %v3881 = vpop.permute.xlu0 %3880
    %3883 = vst.msk [vmem:[#allocation3] sm:$0xff] %vm486, %v3881
    %3885 = vrot.lane.b32.xlu0 %v3852, 64
    %v3886 = vpop.permute.xlu0 %3885
    %3888 = vst.msk [vmem:[#allocation3] sm:$0xff] %vm623, %v3886
    %v3889 = vld [vmem:[#allocation3] sm:$0xff]
    %v3891 = vsel %vm455, %v3889, 0
    %3893 = vmatprep.subr.mxu0 %v433
    %3894 = vmatpush1.msra.mxu0 %v432
    %3895 = vmatprep.subr.mxu0 %v435
    %3896 = vmatpush1.msra.mxu0 %v434
    %3897 = vmatprep.subr.mxu0 %v437
    %3898 = vmatpush1.msra.mxu0 %v436
    %3899 = vmatprep.subr.mxu0 %v439
    %3900 = vmatpush1.msra.mxu0 %v438
    %3901 = vmatprep.subr.mxu0 %v441
    %3902 = vmatpush1.msra.mxu0 %v440
    %3903 = vmatprep.subr.mxu0 %v443
    %3904 = vmatpush1.msra.mxu0 %v442
    %3905 = vmatprep.subr.mxu0 %v445
    %3906 = vmatpush1.msra.mxu0 %v444
    %3907 = vmatprep.subr.mxu0 %v447
    %3908 = vmatpush1.msra.mxu0 %v446
    %3909 = vmatprep.subr.mxu0 0.0
    %3910 = vmatpush1.msra.mxu0 0.0
    %3911 = vmatprep.subr.mxu0 0.0
    %3912 = vmatpush1.msra.mxu0 0.0
    %3913 = vmatprep.subr.mxu0 0.0
    %3914 = vmatpush1.msra.mxu0 0.0
    %3915 = vmatprep.subr.mxu0 0.0
    %3916 = vmatpush1.msra.mxu0 0.0
    %3917 = vmatprep.subr.mxu0 0.0
    %3918 = vmatpush1.msra.mxu0 0.0
    %3919 = vmatprep.subr.mxu0 0.0
    %3920 = vmatpush1.msra.mxu0 0.0
    %3921 = vmatprep.subr.mxu0 0.0
    %3922 = vmatpush1.msra.mxu0 0.0
    %3923 = vmatprep.subr.mxu0 0.0
    %3924 = vmatpush1.msra.mxu0 0.0
    %3925 = vmatprep.subr.mxu0 0.0
    %3926 = vmatpush1.msra.mxu0 0.0
    %3927 = vmatprep.subr.mxu0 0.0
    %3928 = vmatpush1.msra.mxu0 0.0
    %3929 = vmatprep.subr.mxu0 0.0
    %3930 = vmatpush1.msra.mxu0 0.0
    %3931 = vmatprep.subr.mxu0 0.0
    %3932 = vmatpush1.msra.mxu0 0.0
    %3933 = vmatprep.subr.mxu0 0.0
    %3934 = vmatpush1.msra.mxu0 0.0
    %3935 = vmatprep.subr.mxu0 0.0
    %3936 = vmatpush1.msra.mxu0 0.0
    %3937 = vmatprep.subr.mxu0 0.0
    %3938 = vmatpush1.msra.mxu0 0.0
    %3939 = vmatprep.subr.mxu0 0.0
    %3940 = vmatpush1.msra.mxu0 0.0
    %3941 = vmatprep.subr.mxu0 0.0
    %3942 = vmatpush1.msra.mxu0 0.0
    %3943 = vmatprep.subr.mxu0 0.0
    %3944 = vmatpush1.msra.mxu0 0.0
    %3945 = vmatprep.subr.mxu0 0.0
    %3946 = vmatpush1.msra.mxu0 0.0
    %3947 = vmatprep.subr.mxu0 0.0
    %3948 = vmatpush1.msra.mxu0 0.0
    %3949 = vmatprep.subr.mxu0 0.0
    %3950 = vmatpush1.msra.mxu0 0.0
    %3951 = vmatprep.subr.mxu0 0.0
    %3952 = vmatpush1.msra.mxu0 0.0
    %3953 = vmatprep.subr.mxu0 0.0
    %3954 = vmatpush1.msra.mxu0 0.0
    %3955 = vmatprep.subr.mxu0 0.0
    %3956 = vmatpush1.msra.mxu0 0.0
    %3957 = vmatprep.mubr.f32.mxu0 0.0
    %3958 = vmatmul.mubr.f32.gmra.mrb[0].mxu0 %v3891
    %v3959 = vpop.f32.mrb[0].mxu0
    %v3960 = vadd.f32 0.0, %v3959
    %v3961 = vpop.f32.mrb[0].mxu0
    %v3962 = vadd.f32 0.0, %v3961
    %3963 = vdwg.mxu0
    %v3964 = vadd.f32 %v3962, %v453
    %v3965 = vxor.u32 %v3964, 2147483648
    %v3966 = vmul.f32 %v3965, 1.442695
    %v3967 = vpow.pop %v3966
    %v3968 = vadd.f32 %v3967, 1.0
    %v3969 = vrcp.pop %v3968
    %v3970 = vmul.f32 1.0, %v3969
    %v3971 = vtanh.pop %v3964
    %v3972 = vmul.f32 %v3970, %v3846
    %3974 = vrot.lane.b32.xlu0 %v3971, 64
    %v3975 = vpop.permute.xlu0 %3974
    %v3977 = vmul.f32 %v3970, %v3975
    %3979 = vrot.lane.b32.xlu0 %v3977, 32
    %v3980 = vpop.permute.xlu0 %3979
    %v3982 = vadd.f32 %v3972, %v3980
    %v3983 = vtanh.pop %v3982
    %3985 = vrot.lane.b32.xlu0 %v3983, 64
    %v3986 = vpop.permute.xlu0 %3985
    %v3988 = vmul.f32 %v3970, %v3986
    %v3989 = vld [vmem:[#allocation2 + $0xd0] sm:$0xff]
    %v3990 = vadd.f32 %v3960, %v3989
    %v3991 = vxor.u32 %v3990, 2147483648
    %v3992 = vmul.f32 %v3991, 1.442695
    %v3993 = vpow.pop %v3992
    %v3994 = vadd.f32 %v3993, 1.0
    %v3995 = vrcp.pop %v3994
    %v3996 = vmul.f32 1.0, %v3995
    %v3997 = vtanh.pop %v3990
    %v3998 = vmul.f32 %v3996, %v3872
    %4000 = vrot.lane.b32.xlu0 %v3997, 64
    %v4001 = vpop.permute.xlu0 %4000
    %v4003 = vmul.f32 %v3996, %v4001
    %4005 = vrot.lane.b32.xlu0 %v4003, 32
    %v4006 = vpop.permute.xlu0 %4005
    %v4008 = vadd.f32 %v3998, %v4006
    %v4009 = vtanh.pop %v4008
    %4011 = vrot.lane.b32.xlu0 %v4009, 64
    %v4012 = vpop.permute.xlu0 %4011
    %v4014 = vmul.f32 %v3996, %v4012
    %4016 = vrot.lane.b32.xlu0 %v4014, 32
    %v4017 = vpop.permute.xlu0 %4016
    %4019 = vst.msk [vmem:[#allocation3] sm:$0xff] %vm486, %v4017
    %4021 = vrot.lane.b32.xlu0 %v3988, 64
    %v4022 = vpop.permute.xlu0 %4021
    %4024 = vst.msk [vmem:[#allocation3] sm:$0xff] %vm623, %v4022
    %v4025 = vld [vmem:[#allocation3] sm:$0xff]
    %v4027 = vsel %vm455, %v4025, 0
    %4029 = vmatprep.subr.mxu0 %v433
    %4030 = vmatpush1.msra.mxu0 %v432
    %4031 = vmatprep.subr.mxu0 %v435
    %4032 = vmatpush1.msra.mxu0 %v434
    %4033 = vmatprep.subr.mxu0 %v437
    %4034 = vmatpush1.msra.mxu0 %v436
    %4035 = vmatprep.subr.mxu0 %v439
    %4036 = vmatpush1.msra.mxu0 %v438
    %4037 = vmatprep.subr.mxu0 %v441
    %4038 = vmatpush1.msra.mxu0 %v440
    %4039 = vmatprep.subr.mxu0 %v443
    %4040 = vmatpush1.msra.mxu0 %v442
    %4041 = vmatprep.subr.mxu0 %v445
    %4042 = vmatpush1.msra.mxu0 %v444
    %4043 = vmatprep.subr.mxu0 %v447
    %4044 = vmatpush1.msra.mxu0 %v446
    %4045 = vmatprep.subr.mxu0 0.0
    %4046 = vmatpush1.msra.mxu0 0.0
    %4047 = vmatprep.subr.mxu0 0.0
    %4048 = vmatpush1.msra.mxu0 0.0
    %4049 = vmatprep.subr.mxu0 0.0
    %4050 = vmatpush1.msra.mxu0 0.0
    %4051 = vmatprep.subr.mxu0 0.0
    %4052 = vmatpush1.msra.mxu0 0.0
    %4053 = vmatprep.subr.mxu0 0.0
    %4054 = vmatpush1.msra.mxu0 0.0
    %4055 = vmatprep.subr.mxu0 0.0
    %4056 = vmatpush1.msra.mxu0 0.0
    %4057 = vmatprep.subr.mxu0 0.0
    %4058 = vmatpush1.msra.mxu0 0.0
    %4059 = vmatprep.subr.mxu0 0.0
    %4060 = vmatpush1.msra.mxu0 0.0
    %4061 = vmatprep.subr.mxu0 0.0
    %4062 = vmatpush1.msra.mxu0 0.0
    %4063 = vmatprep.subr.mxu0 0.0
    %4064 = vmatpush1.msra.mxu0 0.0
    %4065 = vmatprep.subr.mxu0 0.0
    %4066 = vmatpush1.msra.mxu0 0.0
    %4067 = vmatprep.subr.mxu0 0.0
    %4068 = vmatpush1.msra.mxu0 0.0
    %4069 = vmatprep.subr.mxu0 0.0
    %4070 = vmatpush1.msra.mxu0 0.0
    %4071 = vmatprep.subr.mxu0 0.0
    %4072 = vmatpush1.msra.mxu0 0.0
    %4073 = vmatprep.subr.mxu0 0.0
    %4074 = vmatpush1.msra.mxu0 0.0
    %4075 = vmatprep.subr.mxu0 0.0
    %4076 = vmatpush1.msra.mxu0 0.0
    %4077 = vmatprep.subr.mxu0 0.0
    %4078 = vmatpush1.msra.mxu0 0.0
    %4079 = vmatprep.subr.mxu0 0.0
    %4080 = vmatpush1.msra.mxu0 0.0
    %4081 = vmatprep.subr.mxu0 0.0
    %4082 = vmatpush1.msra.mxu0 0.0
    %4083 = vmatprep.subr.mxu0 0.0
    %4084 = vmatpush1.msra.mxu0 0.0
    %4085 = vmatprep.subr.mxu0 0.0
    %4086 = vmatpush1.msra.mxu0 0.0
    %4087 = vmatprep.subr.mxu0 0.0
    %4088 = vmatpush1.msra.mxu0 0.0
    %4089 = vmatprep.subr.mxu0 0.0
    %4090 = vmatpush1.msra.mxu0 0.0
    %4091 = vmatprep.subr.mxu0 0.0
    %4092 = vmatpush1.msra.mxu0 0.0
    %4093 = vmatprep.mubr.f32.mxu0 0.0
    %4094 = vmatmul.mubr.f32.gmra.mrb[0].mxu0 %v4027
    %v4095 = vpop.f32.mrb[0].mxu0
    %v4096 = vadd.f32 0.0, %v4095
    %v4097 = vpop.f32.mrb[0].mxu0
    %v4098 = vadd.f32 0.0, %v4097
    %4099 = vdwg.mxu0
    %v4100 = vadd.f32 %v4098, %v453
    %v4101 = vxor.u32 %v4100, 2147483648
    %v4102 = vmul.f32 %v4101, 1.442695
    %v4103 = vpow.pop %v4102
    %v4104 = vadd.f32 %v4103, 1.0
    %v4105 = vrcp.pop %v4104
    %v4106 = vmul.f32 1.0, %v4105
    %v4107 = vtanh.pop %v4100
    %v4108 = vmul.f32 %v4106, %v3982
    %4110 = vrot.lane.b32.xlu0 %v4107, 64
    %v4111 = vpop.permute.xlu0 %4110
    %v4113 = vmul.f32 %v4106, %v4111
    %4115 = vrot.lane.b32.xlu0 %v4113, 32
    %v4116 = vpop.permute.xlu0 %4115
    %v4118 = vadd.f32 %v4108, %v4116
    %v4119 = vtanh.pop %v4118
    %4121 = vrot.lane.b32.xlu0 %v4119, 64
    %v4122 = vpop.permute.xlu0 %4121
    %v4124 = vmul.f32 %v4106, %v4122
    %v4125 = vld [vmem:[#allocation2 + $0xd8] sm:$0xff]
    %v4126 = vadd.f32 %v4096, %v4125
    %v4127 = vxor.u32 %v4126, 2147483648
    %v4128 = vmul.f32 %v4127, 1.442695
    %v4129 = vpow.pop %v4128
    %v4130 = vadd.f32 %v4129, 1.0
    %v4131 = vrcp.pop %v4130
    %v4132 = vmul.f32 1.0, %v4131
    %v4133 = vtanh.pop %v4126
    %v4134 = vmul.f32 %v4132, %v4008
    %4136 = vrot.lane.b32.xlu0 %v4133, 64
    %v4137 = vpop.permute.xlu0 %4136
    %v4139 = vmul.f32 %v4132, %v4137
    %4141 = vrot.lane.b32.xlu0 %v4139, 32
    %v4142 = vpop.permute.xlu0 %4141
    %v4144 = vadd.f32 %v4134, %v4142
    %v4145 = vtanh.pop %v4144
    %4147 = vrot.lane.b32.xlu0 %v4145, 64
    %v4148 = vpop.permute.xlu0 %4147
    %v4150 = vmul.f32 %v4132, %v4148
    %4152 = vrot.lane.b32.xlu0 %v4150, 32
    %v4153 = vpop.permute.xlu0 %4152
    %4155 = vst.msk [vmem:[#allocation3] sm:$0xff] %vm486, %v4153
    %4157 = vrot.lane.b32.xlu0 %v4124, 64
    %v4158 = vpop.permute.xlu0 %4157
    %4160 = vst.msk [vmem:[#allocation3] sm:$0xff] %vm623, %v4158
    %v4161 = vld [vmem:[#allocation3] sm:$0xff]
    %v4163 = vsel %vm455, %v4161, 0
    %4165 = vmatprep.subr.mxu0 %v433
    %4166 = vmatpush1.msra.mxu0 %v432
    %4167 = vmatprep.subr.mxu0 %v435
    %4168 = vmatpush1.msra.mxu0 %v434
    %4169 = vmatprep.subr.mxu0 %v437
    %4170 = vmatpush1.msra.mxu0 %v436
    %4171 = vmatprep.subr.mxu0 %v439
    %4172 = vmatpush1.msra.mxu0 %v438
    %4173 = vmatprep.subr.mxu0 %v441
    %4174 = vmatpush1.msra.mxu0 %v440
    %4175 = vmatprep.subr.mxu0 %v443
    %4176 = vmatpush1.msra.mxu0 %v442
    %4177 = vmatprep.subr.mxu0 %v445
    %4178 = vmatpush1.msra.mxu0 %v444
    %4179 = vmatprep.subr.mxu0 %v447
    %4180 = vmatpush1.msra.mxu0 %v446
    %4181 = vmatprep.subr.mxu0 0.0
    %4182 = vmatpush1.msra.mxu0 0.0
    %4183 = vmatprep.subr.mxu0 0.0
    %4184 = vmatpush1.msra.mxu0 0.0
    %4185 = vmatprep.subr.mxu0 0.0
    %4186 = vmatpush1.msra.mxu0 0.0
    %4187 = vmatprep.subr.mxu0 0.0
    %4188 = vmatpush1.msra.mxu0 0.0
    %4189 = vmatprep.subr.mxu0 0.0
    %4190 = vmatpush1.msra.mxu0 0.0
    %4191 = vmatprep.subr.mxu0 0.0
    %4192 = vmatpush1.msra.mxu0 0.0
    %4193 = vmatprep.subr.mxu0 0.0
    %4194 = vmatpush1.msra.mxu0 0.0
    %4195 = vmatprep.subr.mxu0 0.0
    %4196 = vmatpush1.msra.mxu0 0.0
    %4197 = vmatprep.subr.mxu0 0.0
    %4198 = vmatpush1.msra.mxu0 0.0
    %4199 = vmatprep.subr.mxu0 0.0
    %4200 = vmatpush1.msra.mxu0 0.0
    %4201 = vmatprep.subr.mxu0 0.0
    %4202 = vmatpush1.msra.mxu0 0.0
    %4203 = vmatprep.subr.mxu0 0.0
    %4204 = vmatpush1.msra.mxu0 0.0
    %4205 = vmatprep.subr.mxu0 0.0
    %4206 = vmatpush1.msra.mxu0 0.0
    %4207 = vmatprep.subr.mxu0 0.0
    %4208 = vmatpush1.msra.mxu0 0.0
    %4209 = vmatprep.subr.mxu0 0.0
    %4210 = vmatpush1.msra.mxu0 0.0
    %4211 = vmatprep.subr.mxu0 0.0
    %4212 = vmatpush1.msra.mxu0 0.0
    %4213 = vmatprep.subr.mxu0 0.0
    %4214 = vmatpush1.msra.mxu0 0.0
    %4215 = vmatprep.subr.mxu0 0.0
    %4216 = vmatpush1.msra.mxu0 0.0
    %4217 = vmatprep.subr.mxu0 0.0
    %4218 = vmatpush1.msra.mxu0 0.0
    %4219 = vmatprep.subr.mxu0 0.0
    %4220 = vmatpush1.msra.mxu0 0.0
    %4221 = vmatprep.subr.mxu0 0.0
    %4222 = vmatpush1.msra.mxu0 0.0
    %4223 = vmatprep.subr.mxu0 0.0
    %4224 = vmatpush1.msra.mxu0 0.0
    %4225 = vmatprep.subr.mxu0 0.0
    %4226 = vmatpush1.msra.mxu0 0.0
    %4227 = vmatprep.subr.mxu0 0.0
    %4228 = vmatpush1.msra.mxu0 0.0
    %4229 = vmatprep.mubr.f32.mxu0 0.0
    %4230 = vmatmul.mubr.f32.gmra.mrb[0].mxu0 %v4163
    %v4231 = vpop.f32.mrb[0].mxu0
    %v4232 = vadd.f32 0.0, %v4231
    %v4233 = vpop.f32.mrb[0].mxu0
    %v4234 = vadd.f32 0.0, %v4233
    %4235 = vdwg.mxu0
    %v4236 = vadd.f32 %v4234, %v453
    %v4237 = vxor.u32 %v4236, 2147483648
    %v4238 = vmul.f32 %v4237, 1.442695
    %v4239 = vpow.pop %v4238
    %v4240 = vadd.f32 %v4239, 1.0
    %v4241 = vrcp.pop %v4240
    %v4242 = vmul.f32 1.0, %v4241
    %v4243 = vtanh.pop %v4236
    %v4244 = vmul.f32 %v4242, %v4118
    %4246 = vrot.lane.b32.xlu0 %v4243, 64
    %v4247 = vpop.permute.xlu0 %4246
    %v4249 = vmul.f32 %v4242, %v4247
    %4251 = vrot.lane.b32.xlu0 %v4249, 32
    %v4252 = vpop.permute.xlu0 %4251
    %v4254 = vadd.f32 %v4244, %v4252
    %v4255 = vtanh.pop %v4254
    %4257 = vrot.lane.b32.xlu0 %v4255, 64
    %v4258 = vpop.permute.xlu0 %4257
    %v4260 = vmul.f32 %v4242, %v4258
    %v4261 = vld [vmem:[#allocation2 + $0xe0] sm:$0xff]
    %v4262 = vadd.f32 %v4232, %v4261
    %v4263 = vxor.u32 %v4262, 2147483648
    %v4264 = vmul.f32 %v4263, 1.442695
    %v4265 = vpow.pop %v4264
    %v4266 = vadd.f32 %v4265, 1.0
    %v4267 = vrcp.pop %v4266
    %v4268 = vmul.f32 1.0, %v4267
    %v4269 = vtanh.pop %v4262
    %v4270 = vmul.f32 %v4268, %v4144
    %4272 = vrot.lane.b32.xlu0 %v4269, 64
    %v4273 = vpop.permute.xlu0 %4272
    %v4275 = vmul.f32 %v4268, %v4273
    %4277 = vrot.lane.b32.xlu0 %v4275, 32
    %v4278 = vpop.permute.xlu0 %4277
    %v4280 = vadd.f32 %v4270, %v4278
    %v4281 = vtanh.pop %v4280
    %4283 = vrot.lane.b32.xlu0 %v4281, 64
    %v4284 = vpop.permute.xlu0 %4283
    %v4286 = vmul.f32 %v4268, %v4284
    %4288 = vrot.lane.b32.xlu0 %v4286, 32
    %v4289 = vpop.permute.xlu0 %4288
    %4291 = vst.msk [vmem:[#allocation3] sm:$0xff] %vm486, %v4289
    %4293 = vrot.lane.b32.xlu0 %v4260, 64
    %v4294 = vpop.permute.xlu0 %4293
    %4296 = vst.msk [vmem:[#allocation3] sm:$0xff] %vm623, %v4294
    %v4297 = vld [vmem:[#allocation3] sm:$0xff]
    %v4299 = vsel %vm455, %v4297, 0
    %4301 = vmatprep.subr.mxu0 %v433
    %4302 = vmatpush1.msra.mxu0 %v432
    %4303 = vmatprep.subr.mxu0 %v435
    %4304 = vmatpush1.msra.mxu0 %v434
    %4305 = vmatprep.subr.mxu0 %v437
    %4306 = vmatpush1.msra.mxu0 %v436
    %4307 = vmatprep.subr.mxu0 %v439
    %4308 = vmatpush1.msra.mxu0 %v438
    %4309 = vmatprep.subr.mxu0 %v441
    %4310 = vmatpush1.msra.mxu0 %v440
    %4311 = vmatprep.subr.mxu0 %v443
    %4312 = vmatpush1.msra.mxu0 %v442
    %4313 = vmatprep.subr.mxu0 %v445
    %4314 = vmatpush1.msra.mxu0 %v444
    %4315 = vmatprep.subr.mxu0 %v447
    %4316 = vmatpush1.msra.mxu0 %v446
    %4317 = vmatprep.subr.mxu0 0.0
    %4318 = vmatpush1.msra.mxu0 0.0
    %4319 = vmatprep.subr.mxu0 0.0
    %4320 = vmatpush1.msra.mxu0 0.0
    %4321 = vmatprep.subr.mxu0 0.0
    %4322 = vmatpush1.msra.mxu0 0.0
    %4323 = vmatprep.subr.mxu0 0.0
    %4324 = vmatpush1.msra.mxu0 0.0
    %4325 = vmatprep.subr.mxu0 0.0
    %4326 = vmatpush1.msra.mxu0 0.0
    %4327 = vmatprep.subr.mxu0 0.0
    %4328 = vmatpush1.msra.mxu0 0.0
    %4329 = vmatprep.subr.mxu0 0.0
    %4330 = vmatpush1.msra.mxu0 0.0
    %4331 = vmatprep.subr.mxu0 0.0
    %4332 = vmatpush1.msra.mxu0 0.0
    %4333 = vmatprep.subr.mxu0 0.0
    %4334 = vmatpush1.msra.mxu0 0.0
    %4335 = vmatprep.subr.mxu0 0.0
    %4336 = vmatpush1.msra.mxu0 0.0
    %4337 = vmatprep.subr.mxu0 0.0
    %4338 = vmatpush1.msra.mxu0 0.0
    %4339 = vmatprep.subr.mxu0 0.0
    %4340 = vmatpush1.msra.mxu0 0.0
    %4341 = vmatprep.subr.mxu0 0.0
    %4342 = vmatpush1.msra.mxu0 0.0
    %4343 = vmatprep.subr.mxu0 0.0
    %4344 = vmatpush1.msra.mxu0 0.0
    %4345 = vmatprep.subr.mxu0 0.0
    %4346 = vmatpush1.msra.mxu0 0.0
    %4347 = vmatprep.subr.mxu0 0.0
    %4348 = vmatpush1.msra.mxu0 0.0
    %4349 = vmatprep.subr.mxu0 0.0
    %4350 = vmatpush1.msra.mxu0 0.0
    %4351 = vmatprep.subr.mxu0 0.0
    %4352 = vmatpush1.msra.mxu0 0.0
    %4353 = vmatprep.subr.mxu0 0.0
    %4354 = vmatpush1.msra.mxu0 0.0
    %4355 = vmatprep.subr.mxu0 0.0
    %4356 = vmatpush1.msra.mxu0 0.0
    %4357 = vmatprep.subr.mxu0 0.0
    %4358 = vmatpush1.msra.mxu0 0.0
    %4359 = vmatprep.subr.mxu0 0.0
    %4360 = vmatpush1.msra.mxu0 0.0
    %4361 = vmatprep.subr.mxu0 0.0
    %4362 = vmatpush1.msra.mxu0 0.0
    %4363 = vmatprep.subr.mxu0 0.0
    %4364 = vmatpush1.msra.mxu0 0.0
    %4365 = vmatprep.mubr.f32.mxu0 0.0
    %4366 = vmatmul.mubr.f32.gmra.mrb[0].mxu0 %v4299
    %v4367 = vpop.f32.mrb[0].mxu0
    %v4368 = vadd.f32 0.0, %v4367
    %v4369 = vpop.f32.mrb[0].mxu0
    %v4370 = vadd.f32 0.0, %v4369
    %4371 = vdwg.mxu0
    %v4372 = vadd.f32 %v4370, %v453
    %v4373 = vxor.u32 %v4372, 2147483648
    %v4374 = vmul.f32 %v4373, 1.442695
    %v4375 = vpow.pop %v4374
    %v4376 = vadd.f32 %v4375, 1.0
    %v4377 = vrcp.pop %v4376
    %v4378 = vmul.f32 1.0, %v4377
    %v4379 = vtanh.pop %v4372
    %v4380 = vmul.f32 %v4378, %v4254
    %4382 = vrot.lane.b32.xlu0 %v4379, 64
    %v4383 = vpop.permute.xlu0 %4382
    %v4385 = vmul.f32 %v4378, %v4383
    %4387 = vrot.lane.b32.xlu0 %v4385, 32
    %v4388 = vpop.permute.xlu0 %4387
    %v4390 = vadd.f32 %v4380, %v4388
    %v4391 = vtanh.pop %v4390
    %4393 = vrot.lane.b32.xlu0 %v4391, 64
    %v4394 = vpop.permute.xlu0 %4393
    %v4396 = vmul.f32 %v4378, %v4394
    %v4397 = vld [vmem:[#allocation2 + $0xe8] sm:$0xff]
    %v4398 = vadd.f32 %v4368, %v4397
    %v4399 = vxor.u32 %v4398, 2147483648
    %v4400 = vmul.f32 %v4399, 1.442695
    %v4401 = vpow.pop %v4400
    %v4402 = vadd.f32 %v4401, 1.0
    %v4403 = vrcp.pop %v4402
    %v4404 = vmul.f32 1.0, %v4403
    %v4405 = vtanh.pop %v4398
    %v4406 = vmul.f32 %v4404, %v4280
    %4408 = vrot.lane.b32.xlu0 %v4405, 64
    %v4409 = vpop.permute.xlu0 %4408
    %v4411 = vmul.f32 %v4404, %v4409
    %4413 = vrot.lane.b32.xlu0 %v4411, 32
    %v4414 = vpop.permute.xlu0 %4413
    %v4416 = vadd.f32 %v4406, %v4414
    %v4417 = vtanh.pop %v4416
    %4419 = vrot.lane.b32.xlu0 %v4417, 64
    %v4420 = vpop.permute.xlu0 %4419
    %v4422 = vmul.f32 %v4404, %v4420
    %4424 = vrot.lane.b32.xlu0 %v4422, 32
    %v4425 = vpop.permute.xlu0 %4424
    %4427 = vst.msk [vmem:[#allocation3] sm:$0xff] %vm486, %v4425
    %4429 = vrot.lane.b32.xlu0 %v4396, 64
    %v4430 = vpop.permute.xlu0 %4429
    %4432 = vst.msk [vmem:[#allocation3] sm:$0xff] %vm623, %v4430
    %v4433 = vld [vmem:[#allocation3] sm:$0xff]
    %v4435 = vsel %vm455, %v4433, 0
    %4437 = vmatprep.subr.mxu0 %v433
    %4438 = vmatpush1.msra.mxu0 %v432
    %4439 = vmatprep.subr.mxu0 %v435
    %4440 = vmatpush1.msra.mxu0 %v434
    %4441 = vmatprep.subr.mxu0 %v437
    %4442 = vmatpush1.msra.mxu0 %v436
    %4443 = vmatprep.subr.mxu0 %v439
    %4444 = vmatpush1.msra.mxu0 %v438
    %4445 = vmatprep.subr.mxu0 %v441
    %4446 = vmatpush1.msra.mxu0 %v440
    %4447 = vmatprep.subr.mxu0 %v443
    %4448 = vmatpush1.msra.mxu0 %v442
    %4449 = vmatprep.subr.mxu0 %v445
    %4450 = vmatpush1.msra.mxu0 %v444
    %4451 = vmatprep.subr.mxu0 %v447
    %4452 = vmatpush1.msra.mxu0 %v446
    %4453 = vmatprep.subr.mxu0 0.0
    %4454 = vmatpush1.msra.mxu0 0.0
    %4455 = vmatprep.subr.mxu0 0.0
    %4456 = vmatpush1.msra.mxu0 0.0
    %4457 = vmatprep.subr.mxu0 0.0
    %4458 = vmatpush1.msra.mxu0 0.0
    %4459 = vmatprep.subr.mxu0 0.0
    %4460 = vmatpush1.msra.mxu0 0.0
    %4461 = vmatprep.subr.mxu0 0.0
    %4462 = vmatpush1.msra.mxu0 0.0
    %4463 = vmatprep.subr.mxu0 0.0
    %4464 = vmatpush1.msra.mxu0 0.0
    %4465 = vmatprep.subr.mxu0 0.0
    %4466 = vmatpush1.msra.mxu0 0.0
    %4467 = vmatprep.subr.mxu0 0.0
    %4468 = vmatpush1.msra.mxu0 0.0
    %4469 = vmatprep.subr.mxu0 0.0
    %4470 = vmatpush1.msra.mxu0 0.0
    %4471 = vmatprep.subr.mxu0 0.0
    %4472 = vmatpush1.msra.mxu0 0.0
    %4473 = vmatprep.subr.mxu0 0.0
    %4474 = vmatpush1.msra.mxu0 0.0
    %4475 = vmatprep.subr.mxu0 0.0
    %4476 = vmatpush1.msra.mxu0 0.0
    %4477 = vmatprep.subr.mxu0 0.0
    %4478 = vmatpush1.msra.mxu0 0.0
    %4479 = vmatprep.subr.mxu0 0.0
    %4480 = vmatpush1.msra.mxu0 0.0
    %4481 = vmatprep.subr.mxu0 0.0
    %4482 = vmatpush1.msra.mxu0 0.0
    %4483 = vmatprep.subr.mxu0 0.0
    %4484 = vmatpush1.msra.mxu0 0.0
    %4485 = vmatprep.subr.mxu0 0.0
    %4486 = vmatpush1.msra.mxu0 0.0
    %4487 = vmatprep.subr.mxu0 0.0
    %4488 = vmatpush1.msra.mxu0 0.0
    %4489 = vmatprep.subr.mxu0 0.0
    %4490 = vmatpush1.msra.mxu0 0.0
    %4491 = vmatprep.subr.mxu0 0.0
    %4492 = vmatpush1.msra.mxu0 0.0
    %4493 = vmatprep.subr.mxu0 0.0
    %4494 = vmatpush1.msra.mxu0 0.0
    %4495 = vmatprep.subr.mxu0 0.0
    %4496 = vmatpush1.msra.mxu0 0.0
    %4497 = vmatprep.subr.mxu0 0.0
    %4498 = vmatpush1.msra.mxu0 0.0
    %4499 = vmatprep.subr.mxu0 0.0
    %4500 = vmatpush1.msra.mxu0 0.0
    %4501 = vmatprep.mubr.f32.mxu0 0.0
    %4502 = vmatmul.mubr.f32.gmra.mrb[0].mxu0 %v4435
    %v4503 = vpop.f32.mrb[0].mxu0
    %v4504 = vadd.f32 0.0, %v4503
    %v4505 = vpop.f32.mrb[0].mxu0
    %v4506 = vadd.f32 0.0, %v4505
    %4507 = vdwg.mxu0
    %v4508 = vadd.f32 %v4506, %v453
    %v4509 = vxor.u32 %v4508, 2147483648
    %v4510 = vmul.f32 %v4509, 1.442695
    %v4511 = vpow.pop %v4510
    %v4512 = vadd.f32 %v4511, 1.0
    %v4513 = vrcp.pop %v4512
    %v4514 = vmul.f32 1.0, %v4513
    %v4515 = vtanh.pop %v4508
    %v4516 = vmul.f32 %v4514, %v4390
    %4518 = vrot.lane.b32.xlu0 %v4515, 64
    %v4519 = vpop.permute.xlu0 %4518
    %v4521 = vmul.f32 %v4514, %v4519
    %4523 = vrot.lane.b32.xlu0 %v4521, 32
    %v4524 = vpop.permute.xlu0 %4523
    %v4526 = vadd.f32 %v4516, %v4524
    %v4527 = vtanh.pop %v4526
    %4529 = vrot.lane.b32.xlu0 %v4527, 64
    %v4530 = vpop.permute.xlu0 %4529
    %v4532 = vmul.f32 %v4514, %v4530
    %v4533 = vld [vmem:[#allocation2 + $0xf0] sm:$0xff]
    %v4534 = vadd.f32 %v4504, %v4533
    %v4535 = vxor.u32 %v4534, 2147483648
    %v4536 = vmul.f32 %v4535, 1.442695
    %v4537 = vpow.pop %v4536
    %v4538 = vadd.f32 %v4537, 1.0
    %v4539 = vrcp.pop %v4538
    %v4540 = vmul.f32 1.0, %v4539
    %v4541 = vtanh.pop %v4534
    %v4542 = vmul.f32 %v4540, %v4416
    %4544 = vrot.lane.b32.xlu0 %v4541, 64
    %v4545 = vpop.permute.xlu0 %4544
    %v4547 = vmul.f32 %v4540, %v4545
    %4549 = vrot.lane.b32.xlu0 %v4547, 32
    %v4550 = vpop.permute.xlu0 %4549
    %v4552 = vadd.f32 %v4542, %v4550
    %v4553 = vtanh.pop %v4552
    %4555 = vrot.lane.b32.xlu0 %v4553, 64
    %v4556 = vpop.permute.xlu0 %4555
    %v4558 = vmul.f32 %v4540, %v4556
    %4560 = vrot.lane.b32.xlu0 %v4558, 32
    %v4561 = vpop.permute.xlu0 %4560
    %4563 = vst.msk [vmem:[#allocation3] sm:$0xff] %vm486, %v4561
    %4565 = vrot.lane.b32.xlu0 %v4532, 64
    %v4566 = vpop.permute.xlu0 %4565
    %4568 = vst.msk [vmem:[#allocation3] sm:$0xff] %vm623, %v4566
    %v4569 = vld [vmem:[#allocation3] sm:$0xff]
    %v4571 = vsel %vm455, %v4569, 0
    %4573 = vmatprep.subr.mxu0 %v433
    %4574 = vmatpush1.msra.mxu0 %v432
    %4575 = vmatprep.subr.mxu0 %v435
    %4576 = vmatpush1.msra.mxu0 %v434
    %4577 = vmatprep.subr.mxu0 %v437
    %4578 = vmatpush1.msra.mxu0 %v436
    %4579 = vmatprep.subr.mxu0 %v439
    %4580 = vmatpush1.msra.mxu0 %v438
    %4581 = vmatprep.subr.mxu0 %v441
    %4582 = vmatpush1.msra.mxu0 %v440
    %4583 = vmatprep.subr.mxu0 %v443
    %4584 = vmatpush1.msra.mxu0 %v442
    %4585 = vmatprep.subr.mxu0 %v445
    %4586 = vmatpush1.msra.mxu0 %v444
    %4587 = vmatprep.subr.mxu0 %v447
    %4588 = vmatpush1.msra.mxu0 %v446
    %4589 = vmatprep.subr.mxu0 0.0
    %4590 = vmatpush1.msra.mxu0 0.0
    %4591 = vmatprep.subr.mxu0 0.0
    %4592 = vmatpush1.msra.mxu0 0.0
    %4593 = vmatprep.subr.mxu0 0.0
    %4594 = vmatpush1.msra.mxu0 0.0
    %4595 = vmatprep.subr.mxu0 0.0
    %4596 = vmatpush1.msra.mxu0 0.0
    %4597 = vmatprep.subr.mxu0 0.0
    %4598 = vmatpush1.msra.mxu0 0.0
    %4599 = vmatprep.subr.mxu0 0.0
    %4600 = vmatpush1.msra.mxu0 0.0
    %4601 = vmatprep.subr.mxu0 0.0
    %4602 = vmatpush1.msra.mxu0 0.0
    %4603 = vmatprep.subr.mxu0 0.0
    %4604 = vmatpush1.msra.mxu0 0.0
    %4605 = vmatprep.subr.mxu0 0.0
    %4606 = vmatpush1.msra.mxu0 0.0
    %4607 = vmatprep.subr.mxu0 0.0
    %4608 = vmatpush1.msra.mxu0 0.0
    %4609 = vmatprep.subr.mxu0 0.0
    %4610 = vmatpush1.msra.mxu0 0.0
    %4611 = vmatprep.subr.mxu0 0.0
    %4612 = vmatpush1.msra.mxu0 0.0
    %4613 = vmatprep.subr.mxu0 0.0
    %4614 = vmatpush1.msra.mxu0 0.0
    %4615 = vmatprep.subr.mxu0 0.0
    %4616 = vmatpush1.msra.mxu0 0.0
    %4617 = vmatprep.subr.mxu0 0.0
    %4618 = vmatpush1.msra.mxu0 0.0
    %4619 = vmatprep.subr.mxu0 0.0
    %4620 = vmatpush1.msra.mxu0 0.0
    %4621 = vmatprep.subr.mxu0 0.0
    %4622 = vmatpush1.msra.mxu0 0.0
    %4623 = vmatprep.subr.mxu0 0.0
    %4624 = vmatpush1.msra.mxu0 0.0
    %4625 = vmatprep.subr.mxu0 0.0
    %4626 = vmatpush1.msra.mxu0 0.0
    %4627 = vmatprep.subr.mxu0 0.0
    %4628 = vmatpush1.msra.mxu0 0.0
    %4629 = vmatprep.subr.mxu0 0.0
    %4630 = vmatpush1.msra.mxu0 0.0
    %4631 = vmatprep.subr.mxu0 0.0
    %4632 = vmatpush1.msra.mxu0 0.0
    %4633 = vmatprep.subr.mxu0 0.0
    %4634 = vmatpush1.msra.mxu0 0.0
    %4635 = vmatprep.subr.mxu0 0.0
    %4636 = vmatpush1.msra.mxu0 0.0
    %4637 = vmatprep.mubr.f32.mxu0 0.0
    %4638 = vmatmul.mubr.f32.gmra.mrb[0].mxu0 %v4571
    %v4639 = vpop.f32.mrb[0].mxu0
    %v4640 = vadd.f32 0.0, %v4639
    %v4641 = vpop.f32.mrb[0].mxu0
    %v4642 = vadd.f32 0.0, %v4641
    %4643 = vdwg.mxu0
    %v4644 = vadd.f32 %v4642, %v453
    %v4645 = vxor.u32 %v4644, 2147483648
    %v4646 = vmul.f32 %v4645, 1.442695
    %v4647 = vpow.pop %v4646
    %v4648 = vadd.f32 %v4647, 1.0
    %v4649 = vrcp.pop %v4648
    %v4650 = vmul.f32 1.0, %v4649
    %v4651 = vtanh.pop %v4644
    %v4652 = vmul.f32 %v4650, %v4526
    %4654 = vrot.lane.b32.xlu0 %v4651, 64
    %v4655 = vpop.permute.xlu0 %4654
    %v4657 = vmul.f32 %v4650, %v4655
    %4659 = vrot.lane.b32.xlu0 %v4657, 32
    %v4660 = vpop.permute.xlu0 %4659
    %v4662 = vadd.f32 %v4652, %v4660
    %v4663 = vtanh.pop %v4662
    %4665 = vrot.lane.b32.xlu0 %v4663, 64
    %v4666 = vpop.permute.xlu0 %4665
    %v4668 = vmul.f32 %v4650, %v4666
    %v4669 = vld [vmem:[#allocation2 + $0xf8] sm:$0xff]
    %v4670 = vadd.f32 %v4640, %v4669
    %v4671 = vxor.u32 %v4670, 2147483648
    %v4672 = vmul.f32 %v4671, 1.442695
    %v4673 = vpow.pop %v4672
    %v4674 = vadd.f32 %v4673, 1.0
    %v4675 = vrcp.pop %v4674
    %v4676 = vmul.f32 1.0, %v4675
    %v4677 = vtanh.pop %v4670
    %v4678 = vmul.f32 %v4676, %v4552
    %4680 = vrot.lane.b32.xlu0 %v4677, 64
    %v4681 = vpop.permute.xlu0 %4680
    %v4683 = vmul.f32 %v4676, %v4681
    %4685 = vrot.lane.b32.xlu0 %v4683, 32
    %v4686 = vpop.permute.xlu0 %4685
    %v4688 = vadd.f32 %v4678, %v4686
    %v4689 = vtanh.pop %v4688
    %4691 = vrot.lane.b32.xlu0 %v4689, 64
    %v4692 = vpop.permute.xlu0 %4691
    %v4694 = vmul.f32 %v4676, %v4692
    %4696 = vrot.lane.b32.xlu0 %v4694, 32
    %v4697 = vpop.permute.xlu0 %4696
    %4699 = vst.msk [vmem:[#allocation3] sm:$0xff] %vm486, %v4697
    %4701 = vrot.lane.b32.xlu0 %v4668, 64
    %v4702 = vpop.permute.xlu0 %4701
    %4704 = vst.msk [vmem:[#allocation3] sm:$0xff] %vm623, %v4702
    %v4705 = vld [vmem:[#allocation3] sm:$0xff]
    %v4707 = vsel %vm455, %v4705, 0
    %4709 = vmatprep.subr.mxu0 %v433
    %4710 = vmatpush1.msra.mxu0 %v432
    %4711 = vmatprep.subr.mxu0 %v435
    %4712 = vmatpush1.msra.mxu0 %v434
    %4713 = vmatprep.subr.mxu0 %v437
    %4714 = vmatpush1.msra.mxu0 %v436
    %4715 = vmatprep.subr.mxu0 %v439
    %4716 = vmatpush1.msra.mxu0 %v438
    %4717 = vmatprep.subr.mxu0 %v441
    %4718 = vmatpush1.msra.mxu0 %v440
    %4719 = vmatprep.subr.mxu0 %v443
    %4720 = vmatpush1.msra.mxu0 %v442
    %4721 = vmatprep.subr.mxu0 %v445
    %4722 = vmatpush1.msra.mxu0 %v444
    %4723 = vmatprep.subr.mxu0 %v447
    %4724 = vmatpush1.msra.mxu0 %v446
    %4725 = vmatprep.subr.mxu0 0.0
    %4726 = vmatpush1.msra.mxu0 0.0
    %4727 = vmatprep.subr.mxu0 0.0
    %4728 = vmatpush1.msra.mxu0 0.0
    %4729 = vmatprep.subr.mxu0 0.0
    %4730 = vmatpush1.msra.mxu0 0.0
    %4731 = vmatprep.subr.mxu0 0.0
    %4732 = vmatpush1.msra.mxu0 0.0
    %4733 = vmatprep.subr.mxu0 0.0
    %4734 = vmatpush1.msra.mxu0 0.0
    %4735 = vmatprep.subr.mxu0 0.0
    %4736 = vmatpush1.msra.mxu0 0.0
    %4737 = vmatprep.subr.mxu0 0.0
    %4738 = vmatpush1.msra.mxu0 0.0
    %4739 = vmatprep.subr.mxu0 0.0
    %4740 = vmatpush1.msra.mxu0 0.0
    %4741 = vmatprep.subr.mxu0 0.0
    %4742 = vmatpush1.msra.mxu0 0.0
    %4743 = vmatprep.subr.mxu0 0.0
    %4744 = vmatpush1.msra.mxu0 0.0
    %4745 = vmatprep.subr.mxu0 0.0
    %4746 = vmatpush1.msra.mxu0 0.0
    %4747 = vmatprep.subr.mxu0 0.0
    %4748 = vmatpush1.msra.mxu0 0.0
    %4749 = vmatprep.subr.mxu0 0.0
    %4750 = vmatpush1.msra.mxu0 0.0
    %4751 = vmatprep.subr.mxu0 0.0
    %4752 = vmatpush1.msra.mxu0 0.0
    %4753 = vmatprep.subr.mxu0 0.0
    %4754 = vmatpush1.msra.mxu0 0.0
    %4755 = vmatprep.subr.mxu0 0.0
    %4756 = vmatpush1.msra.mxu0 0.0
    %4757 = vmatprep.subr.mxu0 0.0
    %4758 = vmatpush1.msra.mxu0 0.0
    %4759 = vmatprep.subr.mxu0 0.0
    %4760 = vmatpush1.msra.mxu0 0.0
    %4761 = vmatprep.subr.mxu0 0.0
    %4762 = vmatpush1.msra.mxu0 0.0
    %4763 = vmatprep.subr.mxu0 0.0
    %4764 = vmatpush1.msra.mxu0 0.0
    %4765 = vmatprep.subr.mxu0 0.0
    %4766 = vmatpush1.msra.mxu0 0.0
    %4767 = vmatprep.subr.mxu0 0.0
    %4768 = vmatpush1.msra.mxu0 0.0
    %4769 = vmatprep.subr.mxu0 0.0
    %4770 = vmatpush1.msra.mxu0 0.0
    %4771 = vmatprep.subr.mxu0 0.0
    %4772 = vmatpush1.msra.mxu0 0.0
    %4773 = vmatprep.mubr.f32.mxu0 0.0
    %4774 = vmatmul.mubr.f32.gmra.mrb[0].mxu0 %v4707
    %v4775 = vpop.f32.mrb[0].mxu0
    %v4776 = vpop.f32.mrb[0].mxu0
    %v4777 = vadd.f32 0.0, %v4776
    %4778 = vdwg.mxu0
    %v4779 = vadd.f32 %v4777, %v453
    %v4780 = vxor.u32 %v4779, 2147483648
    %v4781 = vmul.f32 %v4780, 1.442695
    %v4782 = vpow.pop %v4781
    %v4783 = vadd.f32 %v4782, 1.0
    %v4784 = vrcp.pop %v4783
    %v4785 = vmul.f32 1.0, %v4784
    %v4786 = vtanh.pop %v4779
    %v4787 = vmul.f32 %v4785, %v4662
    %4789 = vrot.lane.b32.xlu0 %v4786, 64
    %v4790 = vpop.permute.xlu0 %4789
    %v4792 = vmul.f32 %v4785, %v4790
    %4794 = vrot.lane.b32.xlu0 %v4792, 32
    %v4795 = vpop.permute.xlu0 %4794
    %v4797 = vadd.f32 %v4787, %v4795
    %v4798 = vtanh.pop %v4797
    %4800 = vrot.lane.b32.xlu0 %v4798, 64
    %v4801 = vpop.permute.xlu0 %4800
    %v4803 = vmul.f32 %v4785, %v4801
    %v4804 = vld [vmem:[%s5] sm:$0xff]
    %v4805 = vld [vmem:[%s5 + $0x8] sm:$0xff]
    %v4806 = vld [vmem:[%s5 + $0x10] sm:$0xff]
    %v4807 = vld [vmem:[%s5 + $0x18] sm:$0xff]
    %v4808 = vld [vmem:[%s6] sm:$0x1]
    %v4810 = vlaneseq
    %v4811 = vshrl.u32 %v4810, 7
    %v4812 = vsub.s32 0, %v4811
    %v4813 = vrot.slane %v4808, %v4812
    %4816 = vrot.lane.b32.xlu0 %v4803, 32
    %v4817 = vpop.permute.xlu0 %4816
    %v4818 = vsel %vm486, %v4817, 0
    %4820 = vmatprep.subr.mxu0 0.0
    %4821 = vmatpush1.msra.mxu0 %v4804
    %4822 = vmatprep.subr.mxu0 0.0
    %4823 = vmatpush1.msra.mxu0 %v4805
    %4824 = vmatprep.subr.mxu0 0.0
    %4825 = vmatpush1.msra.mxu0 %v4806
    %4826 = vmatprep.subr.mxu0 0.0
    %4827 = vmatpush1.msra.mxu0 %v4807
    %4828 = vmatprep.subr.mxu0 0.0
    %4829 = vmatpush1.msra.mxu0 0.0
    %4830 = vmatprep.subr.mxu0 0.0
    %4831 = vmatpush1.msra.mxu0 0.0
    %4832 = vmatprep.subr.mxu0 0.0
    %4833 = vmatpush1.msra.mxu0 0.0
    %4834 = vmatprep.subr.mxu0 0.0
    %4835 = vmatpush1.msra.mxu0 0.0
    %4836 = vmatprep.subr.mxu0 0.0
    %4837 = vmatpush1.msra.mxu0 0.0
    %4838 = vmatprep.subr.mxu0 0.0
    %4839 = vmatpush1.msra.mxu0 0.0
    %4840 = vmatprep.subr.mxu0 0.0
    %4841 = vmatpush1.msra.mxu0 0.0
    %4842 = vmatprep.subr.mxu0 0.0
    %4843 = vmatpush1.msra.mxu0 0.0
    %4844 = vmatprep.subr.mxu0 0.0
    %4845 = vmatpush1.msra.mxu0 0.0
    %4846 = vmatprep.subr.mxu0 0.0
    %4847 = vmatpush1.msra.mxu0 0.0
    %4848 = vmatprep.subr.mxu0 0.0
    %4849 = vmatpush1.msra.mxu0 0.0
    %4850 = vmatprep.subr.mxu0 0.0
    %4851 = vmatpush1.msra.mxu0 0.0
    %4852 = vmatprep.subr.mxu0 0.0
    %4853 = vmatpush1.msra.mxu0 0.0
    %4854 = vmatprep.subr.mxu0 0.0
    %4855 = vmatpush1.msra.mxu0 0.0
    %4856 = vmatprep.subr.mxu0 0.0
    %4857 = vmatpush1.msra.mxu0 0.0
    %4858 = vmatprep.subr.mxu0 0.0
    %4859 = vmatpush1.msra.mxu0 0.0
    %4860 = vmatprep.subr.mxu0 0.0
    %4861 = vmatpush1.msra.mxu0 0.0
    %4862 = vmatprep.subr.mxu0 0.0
    %4863 = vmatpush1.msra.mxu0 0.0
    %4864 = vmatprep.subr.mxu0 0.0
    %4865 = vmatpush1.msra.mxu0 0.0
    %4866 = vmatprep.subr.mxu0 0.0
    %4867 = vmatpush1.msra.mxu0 0.0
    %4868 = vmatprep.subr.mxu0 0.0
    %4869 = vmatpush1.msra.mxu0 0.0
    %4870 = vmatprep.subr.mxu0 0.0
    %4871 = vmatpush1.msra.mxu0 0.0
    %4872 = vmatprep.subr.mxu0 0.0
    %4873 = vmatpush1.msra.mxu0 0.0
    %4874 = vmatprep.subr.mxu0 0.0
    %4875 = vmatpush1.msra.mxu0 0.0
    %4876 = vmatprep.subr.mxu0 0.0
    %4877 = vmatpush1.msra.mxu0 0.0
    %4878 = vmatprep.subr.mxu0 0.0
    %4879 = vmatpush1.msra.mxu0 0.0
    %4880 = vmatprep.subr.mxu0 0.0
    %4881 = vmatpush1.msra.mxu0 0.0
    %4882 = vmatprep.subr.mxu0 0.0
    %4883 = vmatpush1.msra.mxu0 0.0
    %4884 = vmatprep.mubr.f32.mxu0 0.0
    %4885 = vmatmul.mubr.f32.gmra.mrb[0].mxu0 %v4818
    %v4886 = vpop.f32.mrb[0].mxu0
    %v4887 = vadd.f32 %v4813, %v4886
    %v4888 = vpop.f32.mrb[0].mxu0
    %4889 = vdwg.mxu0
    %vm4890 = vcmask 80896
    %4891 = vst.msk [vmem:[#allocation4] sm:$0xff] %vm4890, %v4887
    // Predicated region
    $region30: #{tpu_custom_call.1} parent=1 // pred_check
      _
    $region31: #{tpu_custom_call.1} parent=1 // pred_check_branch
      %4893 = sbr.rel (0) target = $region33
    $region32: #{tpu_custom_call.1} parent=1 // pred_region
      %s4895 = ssub.s32 128, 128
      %4896 = vsyncadd [#allocation5], %s4895
      %s4898 = sshll.u32 [#allocation4], 4
      %s4899 = int_to_ptr.vmem [resolvable:$true] %s4898
      %4901 = dma.vmem_to_hbm [thread:$0]  %s4899, 128, %s7, [#allocation5]
    $region33: #{tpu_custom_call.1} parent=1 // pred_fallthru
      _
    // Predicated region
    $region34: #{tpu_custom_call.1} parent=1 // pred_check
      _
    $region35: #{tpu_custom_call.1} parent=1 // pred_check_branch
      %4903 = sbr.rel (0) target = $region37
    $region36: #{tpu_custom_call.1} parent=1 // pred_region
      %4904 = dma.done [#allocation5], 128
    $region37: #{tpu_custom_call.1} parent=1 // pred_fallthru
      _
    %4905 = vsyncpa [#allocation5], 1

</llo_original>
